<compile_context>
chip_gen: v5e
topology: v5e:2x2
jax: 0.10.0
libtpu: 0.0.40
codegen_flags: <defaults>
</compile_context>

<pallas_src>
import functools

import jax
import jax.numpy as jnp
import numpy as np
from jax import lax
from jax.experimental import pallas as pl
from jax.experimental.pallas import tpu as pltpu


def _round_up(x, m):
    return (x + m - 1) // m * m


def _double_conv_kernel(x_ref, w1_ref, b1_ref, w2_ref, b2_ref, mask_ref,
                        o_ref, s2, *, H, W, Wp):
    # x_ref:    (1, (H+3)*Wp, C1p) f32  spatially padded input, flat row pitch Wp
    # w*_ref:   (3, 3, Cin_p, Cout_p)   bf16, BN scale already folded in
    # b*_ref:   (1, Cout_p) f32         folded BN bias
    # mask_ref: (H*Wp, 1) f32           1.0 where column index < W else 0.0
    # o_ref:    (1, H*Wp, C3p) f32      full padded-width output (wrapper trims)
    # s2:       ((H+3)*Wp, C2p) f32     padded intermediate activation
    m = H * Wp

    def conv3x3(load_block, w_ref, b_ref):
        # Nine dense (m, 128k) x (128k, 128k) bf16 matmuls with f32 accumulation.
        acc = None
        for ky in range(3):
            for kx in range(3):
                blk = load_block(ky * Wp + kx)           # contiguous window
                prod = jnp.dot(blk, w_ref[ky, kx],
                               preferred_element_type=jnp.float32)
                acc = prod if acc is None else acc + prod
        return jnp.maximum(acc + b_ref[...], 0.0)        # bias + ReLU (f32)

    # ---- conv1 + BN1 + ReLU: reads the pre-padded input block directly ----
    y1 = conv3x3(lambda s: x_ref[0, pl.ds(s, m), :].astype(jnp.bfloat16),
                 w1_ref, b1_ref)

    # ---- re-pad the intermediate for conv2 ---------------------------------
    # One dense store of the column-masked activation + two small zero stores
    # for the halo rows.  Every cell of s2 is rewritten every grid step, so no
    # cross-step scratch state (megacore / "parallel" safe).
    c2 = s2.shape[1]
    s2[pl.ds(0, Wp + 1), :] = jnp.zeros((Wp + 1, c2), jnp.float32)
    s2[pl.ds((H + 1) * Wp + 1, 2 * Wp - 1), :] = jnp.zeros((2 * Wp - 1, c2),
                                                           jnp.float32)
    s2[pl.ds(Wp + 1, m), :] = y1 * mask_ref[...]

    # ---- conv2 + BN2 + ReLU ----
    y2 = conv3x3(lambda s: s2[pl.ds(s, m), :].astype(jnp.bfloat16),
                 w2_ref, b2_ref)

    # Lane-dense output store; junk columns (x >= W) are sliced off outside.
    o_ref[0] = y2.astype(o_ref.dtype)


def double_conv(x_nchw, w1_oihw, bn1, w2_oihw, bn2, *, eps=1e-5):
    """DoubleConv forward (eval-mode BN). x: (N, Cin, H, W) f32 -> (N, Cout, H, W)."""
    N, Cin, H, W = x_nchw.shape
    Cmid = w1_oihw.shape[0]
    Cout = w2_oihw.shape[0]
    C1p = _round_up(Cin, 128)
    C2p = _round_up(Cmid, 128)
    C3p = _round_up(Cout, 128)
    Wp = _round_up(W + 2, 8)            # padded row pitch (keeps slices aligned)
    R = (H + 3) * Wp                    # flattened padded rows (+ slice slack)

    def fold(w_oihw, bn, cin_p, cout_p):
        gamma, beta, mean, var = bn
        scale = gamma / jnp.sqrt(var + eps)
        bias = beta - mean * scale
        w = w_oihw * scale[:, None, None, None]          # fold BN scale into conv
        w = jnp.transpose(w, (2, 3, 1, 0))               # OIHW -> HWIO
        w = jnp.pad(w, ((0, 0), (0, 0),
                        (0, cin_p - w.shape[2]), (0, cout_p - w.shape[3])))
        b = jnp.pad(bias, (0, cout_p - bias.shape[0])).reshape(1, cout_p)
        return w.astype(jnp.bfloat16), b.astype(jnp.float32)

    w1m, b1v = fold(w1_oihw, bn1, C1p, C2p)
    w2m, b2v = fold(w2_oihw, bn2, C2p, C3p)

    # NCHW -> NHWC + spatial pad + channel pad in one fused relayout pass,
    # then a free reshape to the flat row-pitch form the kernel consumes.
    # TODO(synk): stage activations in bf16 in HBM as well; kept f32 here so all
    # misaligned sublane-offset ref loads stay on the plain 32-bit path.
    x_nhwc = jnp.transpose(x_nchw, (0, 2, 3, 1)).astype(jnp.float32)
    x_pad = jnp.pad(x_nhwc, ((0, 0), (1, 2), (1, Wp - W - 1), (0, C1p - Cin)))
    x_flat = x_pad.reshape(N, R, C1p)

    col = jnp.arange(H * Wp, dtype=jnp.int32) % Wp
    mask = (col < W).astype(jnp.float32).reshape(H * Wp, 1)

    kernel = functools.partial(_double_conv_kernel, H=H, W=W, Wp=Wp)

    out = pl.pallas_call(
        kernel,
        out_shape=jax.ShapeDtypeStruct((N, H * Wp, C3p), jnp.float32),
        grid_spec=pltpu.PrefetchScalarGridSpec(
            num_scalar_prefetch=0,
            grid=(N,),
            in_specs=[
                pl.BlockSpec((1, R, C1p), lambda n: (n, 0, 0)),
                pl.BlockSpec((3, 3, C1p, C2p), lambda n: (0, 0, 0, 0)),
                pl.BlockSpec((1, C2p), lambda n: (0, 0)),
                pl.BlockSpec((3, 3, C2p, C3p), lambda n: (0, 0, 0, 0)),
                pl.BlockSpec((1, C3p), lambda n: (0, 0)),
                pl.BlockSpec((H * Wp, 1), lambda n: (0, 0)),
            ],
            out_specs=pl.BlockSpec((1, H * Wp, C3p), lambda n: (n, 0, 0)),
            scratch_shapes=[pltpu.VMEM((R, C2p), jnp.float32)],
        ),
        compiler_params=pltpu.CompilerParams(
            dimension_semantics=("parallel",),   # batch across TCs (v7x)
            vmem_limit_bytes=32 * 1024 * 1024,
        ),
    )(x_flat, w1m, b1v, w2m, b2v, mask)

    # TODO(synk): for realistic UNet sizes add a spatially tiled grid with a
    # 1-row halo (manual DMA) so blocks fit v7x's 64 MiB VMEM.
    out = out.reshape(N, H, Wp, C3p)[:, :, :W, :Cout]
    return jnp.transpose(out, (0, 3, 1, 2))     # back to NCHW


def _reference(x_nchw, w1, bn1, w2, bn2, eps=1e-5):
    """Pure-JAX f32 reference (lax.conv) for correctness check."""
    def conv_bn_relu(x, w, bn):
        y = lax.conv_general_dilated(
            x, w, window_strides=(1, 1), padding=((1, 1), (1, 1)),
            dimension_numbers=("NCHW", "OIHW", "NCHW"))
        gamma, beta, mean, var = bn
        scale = (gamma / jnp.sqrt(var + eps)).reshape(1, -1, 1, 1)
        bias = (beta - mean * gamma / jnp.sqrt(var + eps)).reshape(1, -1, 1, 1)
        return jnp.maximum(y * scale + bias, 0.0)
    return conv_bn_relu(conv_bn_relu(x_nchw, w1, bn1), w2, bn2)


if __name__ == "__main__":
    N, Cin, Cout, H, W = 2, 4, 8, 16, 16
    Cmid = Cout  # mid_channels defaults to out_channels

    key = jax.random.PRNGKey(0)
    ks = jax.random.split(key, 12)

    x = jax.random.normal(ks[0], (N, Cin, H, W), jnp.float32)
    w1 = jax.random.normal(ks[1], (Cmid, Cin, 3, 3), jnp.float32) * 0.1
    w2 = jax.random.normal(ks[2], (Cout, Cmid, 3, 3), jnp.float32) * 0.1

    # TODO(synk): BatchNorm is eval mode (running stats); training-mode batch
    # statistics are not reproduced here.
    bn1 = (1.0 + 0.1 * jax.random.normal(ks[3], (Cmid,), jnp.float32),
           0.1 * jax.random.normal(ks[4], (Cmid,), jnp.float32),
           0.1 * jax.random.normal(ks[5], (Cmid,), jnp.float32),
           jnp.abs(1.0 + 0.1 * jax.random.normal(ks[6], (Cmid,), jnp.float32)))
    bn2 = (1.0 + 0.1 * jax.random.normal(ks[7], (Cout,), jnp.float32),
           0.1 * jax.random.normal(ks[8], (Cout,), jnp.float32),
           0.1 * jax.random.normal(ks[9], (Cout,), jnp.float32),
           jnp.abs(1.0 + 0.1 * jax.random.normal(ks[10], (Cout,), jnp.float32)))

    out = jax.block_until_ready(jax.jit(double_conv)(x, w1, bn1, w2, bn2))
    ref = jax.block_until_ready(_reference(x, w1, bn1, w2, bn2))

    assert out.shape == (N, Cout, H, W)
    err = float(np.max(np.abs(np.asarray(out) - np.asarray(ref))))
    # bf16 MXU operands vs. pure-f32 reference -> loose-but-bug-catching tol.
    assert np.allclose(np.asarray(out), np.asarray(ref),
                       atol=5e-2, rtol=5e-2), f"max abs err {err}"

    print("KERNEL_OK")
</pallas_src>

<mosaic_0001>
module attributes {stable_mosaic.version = 11 : i64} {
  func.func @_double_conv_kernel(%arg0: i32, %arg1: memref<1x456x128xf32, #tpu.memory_space<vmem>>, %arg2: memref<3x3x128x128xbf16, #tpu.memory_space<vmem>>, %arg3: memref<1x128xf32, #tpu.memory_space<vmem>>, %arg4: memref<3x3x128x128xbf16, #tpu.memory_space<vmem>>, %arg5: memref<1x128xf32, #tpu.memory_space<vmem>>, %arg6: memref<384x1xf32, #tpu.memory_space<vmem>>, %arg7: memref<1x384x128xf32, #tpu.memory_space<vmem>>, %arg8: memref<456x128xf32, #tpu.memory_space<vmem>>) attributes {dimension_semantics = [#tpu.dimension_semantics<parallel>], iteration_bounds = array<i64: 2>, scalar_prefetch = 0 : i64, scratch_operands = 1 : i64, tpu.core_type = #tpu.core_type<tc>, window_params = [{transform_indices = @transform_0, window_bounds = array<i64: 1, 456, 128>}, {pipeline_mode = #tpu.pipeline_mode<synchronous>, transform_indices = @transform_1, window_bounds = array<i64: 3, 3, 128, 128>}, {pipeline_mode = #tpu.pipeline_mode<synchronous>, transform_indices = @transform_2, window_bounds = array<i64: 1, 128>}, {pipeline_mode = #tpu.pipeline_mode<synchronous>, transform_indices = @transform_3, window_bounds = array<i64: 3, 3, 128, 128>}, {pipeline_mode = #tpu.pipeline_mode<synchronous>, transform_indices = @transform_4, window_bounds = array<i64: 1, 128>}, {pipeline_mode = #tpu.pipeline_mode<synchronous>, transform_indices = @transform_5, window_bounds = array<i64: 384, 1>}, {transform_indices = @transform_6, window_bounds = array<i64: 1, 384, 128>}]} {
    %c0 = arith.constant 0 : index
    %c0_0 = arith.constant 0 : index
    %c0_1 = arith.constant 0 : index
    %0 = vector.load %arg1[%c0, %c0_0, %c0_1] : memref<1x456x128xf32, #tpu.memory_space<vmem>>, vector<1x384x128xf32>
    %1 = vector.shape_cast %0 : vector<1x384x128xf32> to vector<384x128xf32>
    %2 = arith.truncf %1 : vector<384x128xf32> to vector<384x128xbf16>
    %c0_2 = arith.constant 0 : index
    %c0_3 = arith.constant 0 : index
    %c0_4 = arith.constant 0 : index
    %c0_5 = arith.constant 0 : index
    %3 = vector.load %arg2[%c0_2, %c0_3, %c0_4, %c0_5] : memref<3x3x128x128xbf16, #tpu.memory_space<vmem>>, vector<1x1x128x128xbf16>
    %4 = vector.shape_cast %3 : vector<1x1x128x128xbf16> to vector<128x128xbf16>
    %cst = arith.constant dense<0.000000e+00> : vector<384x128xf32>
    %5 = tpu.matmul %2, %4, %cst {dimension_numbers = #tpu.dot_dimension_numbers<[1], [0], [0], [1], [0, 0, 1, 1], [], []>} : vector<384x128xbf16>, vector<128x128xbf16>, vector<384x128xf32> -> vector<384x128xf32>
    %c0_6 = arith.constant 0 : index
    %c1 = arith.constant 1 : index
    %c0_7 = arith.constant 0 : index
    %6 = vector.load %arg1[%c0_6, %c1, %c0_7] : memref<1x456x128xf32, #tpu.memory_space<vmem>>, vector<1x384x128xf32>
    %7 = vector.shape_cast %6 : vector<1x384x128xf32> to vector<384x128xf32>
    %8 = arith.truncf %7 : vector<384x128xf32> to vector<384x128xbf16>
    %c0_8 = arith.constant 0 : index
    %c1_9 = arith.constant 1 : index
    %c0_10 = arith.constant 0 : index
    %c0_11 = arith.constant 0 : index
    %9 = vector.load %arg2[%c0_8, %c1_9, %c0_10, %c0_11] : memref<3x3x128x128xbf16, #tpu.memory_space<vmem>>, vector<1x1x128x128xbf16>
    %10 = vector.shape_cast %9 : vector<1x1x128x128xbf16> to vector<128x128xbf16>
    %cst_12 = arith.constant dense<0.000000e+00> : vector<384x128xf32>
    %11 = tpu.matmul %8, %10, %cst_12 {dimension_numbers = #tpu.dot_dimension_numbers<[1], [0], [0], [1], [0, 0, 1, 1], [], []>} : vector<384x128xbf16>, vector<128x128xbf16>, vector<384x128xf32> -> vector<384x128xf32>
    %12 = arith.addf %5, %11 : vector<384x128xf32>
    %c0_13 = arith.constant 0 : index
    %c2 = arith.constant 2 : index
    %c0_14 = arith.constant 0 : index
    %13 = vector.load %arg1[%c0_13, %c2, %c0_14] : memref<1x456x128xf32, #tpu.memory_space<vmem>>, vector<1x384x128xf32>
    %14 = vector.shape_cast %13 : vector<1x384x128xf32> to vector<384x128xf32>
    %15 = arith.truncf %14 : vector<384x128xf32> to vector<384x128xbf16>
    %c0_15 = arith.constant 0 : index
    %c2_16 = arith.constant 2 : index
    %c0_17 = arith.constant 0 : index
    %c0_18 = arith.constant 0 : index
    %16 = vector.load %arg2[%c0_15, %c2_16, %c0_17, %c0_18] : memref<3x3x128x128xbf16, #tpu.memory_space<vmem>>, vector<1x1x128x128xbf16>
    %17 = vector.shape_cast %16 : vector<1x1x128x128xbf16> to vector<128x128xbf16>
    %cst_19 = arith.constant dense<0.000000e+00> : vector<384x128xf32>
    %18 = tpu.matmul %15, %17, %cst_19 {dimension_numbers = #tpu.dot_dimension_numbers<[1], [0], [0], [1], [0, 0, 1, 1], [], []>} : vector<384x128xbf16>, vector<128x128xbf16>, vector<384x128xf32> -> vector<384x128xf32>
    %19 = arith.addf %12, %18 : vector<384x128xf32>
    %c0_20 = arith.constant 0 : index
    %c24 = arith.constant 24 : index
    %c0_21 = arith.constant 0 : index
    %20 = vector.load %arg1[%c0_20, %c24, %c0_21] : memref<1x456x128xf32, #tpu.memory_space<vmem>>, vector<1x384x128xf32>
    %21 = vector.shape_cast %20 : vector<1x384x128xf32> to vector<384x128xf32>
    %22 = arith.truncf %21 : vector<384x128xf32> to vector<384x128xbf16>
    %c1_22 = arith.constant 1 : index
    %c0_23 = arith.constant 0 : index
    %c0_24 = arith.constant 0 : index
    %c0_25 = arith.constant 0 : index
    %23 = vector.load %arg2[%c1_22, %c0_23, %c0_24, %c0_25] : memref<3x3x128x128xbf16, #tpu.memory_space<vmem>>, vector<1x1x128x128xbf16>
    %24 = vector.shape_cast %23 : vector<1x1x128x128xbf16> to vector<128x128xbf16>
    %cst_26 = arith.constant dense<0.000000e+00> : vector<384x128xf32>
    %25 = tpu.matmul %22, %24, %cst_26 {dimension_numbers = #tpu.dot_dimension_numbers<[1], [0], [0], [1], [0, 0, 1, 1], [], []>} : vector<384x128xbf16>, vector<128x128xbf16>, vector<384x128xf32> -> vector<384x128xf32>
    %26 = arith.addf %19, %25 : vector<384x128xf32>
    %c0_27 = arith.constant 0 : index
    %c25 = arith.constant 25 : index
    %c0_28 = arith.constant 0 : index
    %27 = vector.load %arg1[%c0_27, %c25, %c0_28] : memref<1x456x128xf32, #tpu.memory_space<vmem>>, vector<1x384x128xf32>
    %28 = vector.shape_cast %27 : vector<1x384x128xf32> to vector<384x128xf32>
    %29 = arith.truncf %28 : vector<384x128xf32> to vector<384x128xbf16>
    %c1_29 = arith.constant 1 : index
    %c1_30 = arith.constant 1 : index
    %c0_31 = arith.constant 0 : index
    %c0_32 = arith.constant 0 : index
    %30 = vector.load %arg2[%c1_29, %c1_30, %c0_31, %c0_32] : memref<3x3x128x128xbf16, #tpu.memory_space<vmem>>, vector<1x1x128x128xbf16>
    %31 = vector.shape_cast %30 : vector<1x1x128x128xbf16> to vector<128x128xbf16>
    %cst_33 = arith.constant dense<0.000000e+00> : vector<384x128xf32>
    %32 = tpu.matmul %29, %31, %cst_33 {dimension_numbers = #tpu.dot_dimension_numbers<[1], [0], [0], [1], [0, 0, 1, 1], [], []>} : vector<384x128xbf16>, vector<128x128xbf16>, vector<384x128xf32> -> vector<384x128xf32>
    %33 = arith.addf %26, %32 : vector<384x128xf32>
    %c0_34 = arith.constant 0 : index
    %c26 = arith.constant 26 : index
    %c0_35 = arith.constant 0 : index
    %34 = vector.load %arg1[%c0_34, %c26, %c0_35] : memref<1x456x128xf32, #tpu.memory_space<vmem>>, vector<1x384x128xf32>
    %35 = vector.shape_cast %34 : vector<1x384x128xf32> to vector<384x128xf32>
    %36 = arith.truncf %35 : vector<384x128xf32> to vector<384x128xbf16>
    %c1_36 = arith.constant 1 : index
    %c2_37 = arith.constant 2 : index
    %c0_38 = arith.constant 0 : index
    %c0_39 = arith.constant 0 : index
    %37 = vector.load %arg2[%c1_36, %c2_37, %c0_38, %c0_39] : memref<3x3x128x128xbf16, #tpu.memory_space<vmem>>, vector<1x1x128x128xbf16>
    %38 = vector.shape_cast %37 : vector<1x1x128x128xbf16> to vector<128x128xbf16>
    %cst_40 = arith.constant dense<0.000000e+00> : vector<384x128xf32>
    %39 = tpu.matmul %36, %38, %cst_40 {dimension_numbers = #tpu.dot_dimension_numbers<[1], [0], [0], [1], [0, 0, 1, 1], [], []>} : vector<384x128xbf16>, vector<128x128xbf16>, vector<384x128xf32> -> vector<384x128xf32>
    %40 = arith.addf %33, %39 : vector<384x128xf32>
    %c0_41 = arith.constant 0 : index
    %c48 = arith.constant 48 : index
    %c0_42 = arith.constant 0 : index
    %41 = vector.load %arg1[%c0_41, %c48, %c0_42] : memref<1x456x128xf32, #tpu.memory_space<vmem>>, vector<1x384x128xf32>
    %42 = vector.shape_cast %41 : vector<1x384x128xf32> to vector<384x128xf32>
    %43 = arith.truncf %42 : vector<384x128xf32> to vector<384x128xbf16>
    %c2_43 = arith.constant 2 : index
    %c0_44 = arith.constant 0 : index
    %c0_45 = arith.constant 0 : index
    %c0_46 = arith.constant 0 : index
    %44 = vector.load %arg2[%c2_43, %c0_44, %c0_45, %c0_46] : memref<3x3x128x128xbf16, #tpu.memory_space<vmem>>, vector<1x1x128x128xbf16>
    %45 = vector.shape_cast %44 : vector<1x1x128x128xbf16> to vector<128x128xbf16>
    %cst_47 = arith.constant dense<0.000000e+00> : vector<384x128xf32>
    %46 = tpu.matmul %43, %45, %cst_47 {dimension_numbers = #tpu.dot_dimension_numbers<[1], [0], [0], [1], [0, 0, 1, 1], [], []>} : vector<384x128xbf16>, vector<128x128xbf16>, vector<384x128xf32> -> vector<384x128xf32>
    %47 = arith.addf %40, %46 : vector<384x128xf32>
    %c0_48 = arith.constant 0 : index
    %c49 = arith.constant 49 : index
    %c0_49 = arith.constant 0 : index
    %48 = vector.load %arg1[%c0_48, %c49, %c0_49] : memref<1x456x128xf32, #tpu.memory_space<vmem>>, vector<1x384x128xf32>
    %49 = vector.shape_cast %48 : vector<1x384x128xf32> to vector<384x128xf32>
    %50 = arith.truncf %49 : vector<384x128xf32> to vector<384x128xbf16>
    %c2_50 = arith.constant 2 : index
    %c1_51 = arith.constant 1 : index
    %c0_52 = arith.constant 0 : index
    %c0_53 = arith.constant 0 : index
    %51 = vector.load %arg2[%c2_50, %c1_51, %c0_52, %c0_53] : memref<3x3x128x128xbf16, #tpu.memory_space<vmem>>, vector<1x1x128x128xbf16>
    %52 = vector.shape_cast %51 : vector<1x1x128x128xbf16> to vector<128x128xbf16>
    %cst_54 = arith.constant dense<0.000000e+00> : vector<384x128xf32>
    %53 = tpu.matmul %50, %52, %cst_54 {dimension_numbers = #tpu.dot_dimension_numbers<[1], [0], [0], [1], [0, 0, 1, 1], [], []>} : vector<384x128xbf16>, vector<128x128xbf16>, vector<384x128xf32> -> vector<384x128xf32>
    %54 = arith.addf %47, %53 : vector<384x128xf32>
    %c0_55 = arith.constant 0 : index
    %c50 = arith.constant 50 : index
    %c0_56 = arith.constant 0 : index
    %55 = vector.load %arg1[%c0_55, %c50, %c0_56] : memref<1x456x128xf32, #tpu.memory_space<vmem>>, vector<1x384x128xf32>
    %56 = vector.shape_cast %55 : vector<1x384x128xf32> to vector<384x128xf32>
    %57 = arith.truncf %56 : vector<384x128xf32> to vector<384x128xbf16>
    %c2_57 = arith.constant 2 : index
    %c2_58 = arith.constant 2 : index
    %c0_59 = arith.constant 0 : index
    %c0_60 = arith.constant 0 : index
    %58 = vector.load %arg2[%c2_57, %c2_58, %c0_59, %c0_60] : memref<3x3x128x128xbf16, #tpu.memory_space<vmem>>, vector<1x1x128x128xbf16>
    %59 = vector.shape_cast %58 : vector<1x1x128x128xbf16> to vector<128x128xbf16>
    %cst_61 = arith.constant dense<0.000000e+00> : vector<384x128xf32>
    %60 = tpu.matmul %57, %59, %cst_61 {dimension_numbers = #tpu.dot_dimension_numbers<[1], [0], [0], [1], [0, 0, 1, 1], [], []>} : vector<384x128xbf16>, vector<128x128xbf16>, vector<384x128xf32> -> vector<384x128xf32>
    %61 = arith.addf %54, %60 : vector<384x128xf32>
    %c0_62 = arith.constant 0 : index
    %c0_63 = arith.constant 0 : index
    %62 = vector.load %arg3[%c0_62, %c0_63] : memref<1x128xf32, #tpu.memory_space<vmem>>, vector<1x128xf32>
    %63 = vector.broadcast %62 : vector<1x128xf32> to vector<384x128xf32>
    %64 = arith.addf %61, %63 : vector<384x128xf32>
    %cst_64 = arith.constant 0.000000e+00 : f32
    %65 = vector.broadcast %cst_64 : f32 to vector<384x128xf32>
    %66 = arith.maximumf %64, %65 : vector<384x128xf32>
    %cst_65 = arith.constant 0.000000e+00 : f32
    %67 = vector.broadcast %cst_65 : f32 to vector<25x128xf32>
    %c0_66 = arith.constant 0 : index
    %c0_67 = arith.constant 0 : index
    %68 = vector.load %arg8[%c0_66, %c0_67] : memref<456x128xf32, #tpu.memory_space<vmem>>, vector<25x128xf32>
    tpu.vector_store %arg8[%c0_66, %c0_67], %67 {strides = array<i32>} : memref<456x128xf32, #tpu.memory_space<vmem>>, vector<25x128xf32>,
    %cst_68 = arith.constant 0.000000e+00 : f32
    %69 = vector.broadcast %cst_68 : f32 to vector<47x128xf32>
    %c409 = arith.constant 409 : index
    %c0_69 = arith.constant 0 : index
    %70 = vector.load %arg8[%c409, %c0_69] : memref<456x128xf32, #tpu.memory_space<vmem>>, vector<47x128xf32>
    tpu.vector_store %arg8[%c409, %c0_69], %69 {strides = array<i32>} : memref<456x128xf32, #tpu.memory_space<vmem>>, vector<47x128xf32>,
    %c0_70 = arith.constant 0 : index
    %c0_71 = arith.constant 0 : index
    %71 = vector.load %arg6[%c0_70, %c0_71] : memref<384x1xf32, #tpu.memory_space<vmem>>, vector<384x1xf32>
    %72 = vector.broadcast %71 : vector<384x1xf32> to vector<384x128xf32>
    %73 = arith.mulf %66, %72 : vector<384x128xf32>
    %c25_72 = arith.constant 25 : index
    %c0_73 = arith.constant 0 : index
    %74 = vector.load %arg8[%c25_72, %c0_73] : memref<456x128xf32, #tpu.memory_space<vmem>>, vector<384x128xf32>
    tpu.vector_store %arg8[%c25_72, %c0_73], %73 {strides = array<i32>} : memref<456x128xf32, #tpu.memory_space<vmem>>, vector<384x128xf32>,
    %c0_74 = arith.constant 0 : index
    %c0_75 = arith.constant 0 : index
    %75 = vector.load %arg8[%c0_74, %c0_75] : memref<456x128xf32, #tpu.memory_space<vmem>>, vector<384x128xf32>
    %76 = arith.truncf %75 : vector<384x128xf32> to vector<384x128xbf16>
    %c0_76 = arith.constant 0 : index
    %c0_77 = arith.constant 0 : index
    %c0_78 = arith.constant 0 : index
    %c0_79 = arith.constant 0 : index
    %77 = vector.load %arg4[%c0_76, %c0_77, %c0_78, %c0_79] : memref<3x3x128x128xbf16, #tpu.memory_space<vmem>>, vector<1x1x128x128xbf16>
    %78 = vector.shape_cast %77 : vector<1x1x128x128xbf16> to vector<128x128xbf16>
    %cst_80 = arith.constant dense<0.000000e+00> : vector<384x128xf32>
    %79 = tpu.matmul %76, %78, %cst_80 {dimension_numbers = #tpu.dot_dimension_numbers<[1], [0], [0], [1], [0, 0, 1, 1], [], []>} : vector<384x128xbf16>, vector<128x128xbf16>, vector<384x128xf32> -> vector<384x128xf32>
    %c1_81 = arith.constant 1 : index
    %c0_82 = arith.constant 0 : index
    %80 = vector.load %arg8[%c1_81, %c0_82] : memref<456x128xf32, #tpu.memory_space<vmem>>, vector<384x128xf32>
    %81 = arith.truncf %80 : vector<384x128xf32> to vector<384x128xbf16>
    %c0_83 = arith.constant 0 : index
    %c1_84 = arith.constant 1 : index
    %c0_85 = arith.constant 0 : index
    %c0_86 = arith.constant 0 : index
    %82 = vector.load %arg4[%c0_83, %c1_84, %c0_85, %c0_86] : memref<3x3x128x128xbf16, #tpu.memory_space<vmem>>, vector<1x1x128x128xbf16>
    %83 = vector.shape_cast %82 : vector<1x1x128x128xbf16> to vector<128x128xbf16>
    %cst_87 = arith.constant dense<0.000000e+00> : vector<384x128xf32>
    %84 = tpu.matmul %81, %83, %cst_87 {dimension_numbers = #tpu.dot_dimension_numbers<[1], [0], [0], [1], [0, 0, 1, 1], [], []>} : vector<384x128xbf16>, vector<128x128xbf16>, vector<384x128xf32> -> vector<384x128xf32>
    %85 = arith.addf %79, %84 : vector<384x128xf32>
    %c2_88 = arith.constant 2 : index
    %c0_89 = arith.constant 0 : index
    %86 = vector.load %arg8[%c2_88, %c0_89] : memref<456x128xf32, #tpu.memory_space<vmem>>, vector<384x128xf32>
    %87 = arith.truncf %86 : vector<384x128xf32> to vector<384x128xbf16>
    %c0_90 = arith.constant 0 : index
    %c2_91 = arith.constant 2 : index
    %c0_92 = arith.constant 0 : index
    %c0_93 = arith.constant 0 : index
    %88 = vector.load %arg4[%c0_90, %c2_91, %c0_92, %c0_93] : memref<3x3x128x128xbf16, #tpu.memory_space<vmem>>, vector<1x1x128x128xbf16>
    %89 = vector.shape_cast %88 : vector<1x1x128x128xbf16> to vector<128x128xbf16>
    %cst_94 = arith.constant dense<0.000000e+00> : vector<384x128xf32>
    %90 = tpu.matmul %87, %89, %cst_94 {dimension_numbers = #tpu.dot_dimension_numbers<[1], [0], [0], [1], [0, 0, 1, 1], [], []>} : vector<384x128xbf16>, vector<128x128xbf16>, vector<384x128xf32> -> vector<384x128xf32>
    %91 = arith.addf %85, %90 : vector<384x128xf32>
    %c24_95 = arith.constant 24 : index
    %c0_96 = arith.constant 0 : index
    %92 = vector.load %arg8[%c24_95, %c0_96] : memref<456x128xf32, #tpu.memory_space<vmem>>, vector<384x128xf32>
    %93 = arith.truncf %92 : vector<384x128xf32> to vector<384x128xbf16>
    %c1_97 = arith.constant 1 : index
    %c0_98 = arith.constant 0 : index
    %c0_99 = arith.constant 0 : index
    %c0_100 = arith.constant 0 : index
    %94 = vector.load %arg4[%c1_97, %c0_98, %c0_99, %c0_100] : memref<3x3x128x128xbf16, #tpu.memory_space<vmem>>, vector<1x1x128x128xbf16>
    %95 = vector.shape_cast %94 : vector<1x1x128x128xbf16> to vector<128x128xbf16>
    %cst_101 = arith.constant dense<0.000000e+00> : vector<384x128xf32>
    %96 = tpu.matmul %93, %95, %cst_101 {dimension_numbers = #tpu.dot_dimension_numbers<[1], [0], [0], [1], [0, 0, 1, 1], [], []>} : vector<384x128xbf16>, vector<128x128xbf16>, vector<384x128xf32> -> vector<384x128xf32>
    %97 = arith.addf %91, %96 : vector<384x128xf32>
    %c25_102 = arith.constant 25 : index
    %c0_103 = arith.constant 0 : index
    %98 = vector.load %arg8[%c25_102, %c0_103] : memref<456x128xf32, #tpu.memory_space<vmem>>, vector<384x128xf32>
    %99 = arith.truncf %98 : vector<384x128xf32> to vector<384x128xbf16>
    %c1_104 = arith.constant 1 : index
    %c1_105 = arith.constant 1 : index
    %c0_106 = arith.constant 0 : index
    %c0_107 = arith.constant 0 : index
    %100 = vector.load %arg4[%c1_104, %c1_105, %c0_106, %c0_107] : memref<3x3x128x128xbf16, #tpu.memory_space<vmem>>, vector<1x1x128x128xbf16>
    %101 = vector.shape_cast %100 : vector<1x1x128x128xbf16> to vector<128x128xbf16>
    %cst_108 = arith.constant dense<0.000000e+00> : vector<384x128xf32>
    %102 = tpu.matmul %99, %101, %cst_108 {dimension_numbers = #tpu.dot_dimension_numbers<[1], [0], [0], [1], [0, 0, 1, 1], [], []>} : vector<384x128xbf16>, vector<128x128xbf16>, vector<384x128xf32> -> vector<384x128xf32>
    %103 = arith.addf %97, %102 : vector<384x128xf32>
    %c26_109 = arith.constant 26 : index
    %c0_110 = arith.constant 0 : index
    %104 = vector.load %arg8[%c26_109, %c0_110] : memref<456x128xf32, #tpu.memory_space<vmem>>, vector<384x128xf32>
    %105 = arith.truncf %104 : vector<384x128xf32> to vector<384x128xbf16>
    %c1_111 = arith.constant 1 : index
    %c2_112 = arith.constant 2 : index
    %c0_113 = arith.constant 0 : index
    %c0_114 = arith.constant 0 : index
    %106 = vector.load %arg4[%c1_111, %c2_112, %c0_113, %c0_114] : memref<3x3x128x128xbf16, #tpu.memory_space<vmem>>, vector<1x1x128x128xbf16>
    %107 = vector.shape_cast %106 : vector<1x1x128x128xbf16> to vector<128x128xbf16>
    %cst_115 = arith.constant dense<0.000000e+00> : vector<384x128xf32>
    %108 = tpu.matmul %105, %107, %cst_115 {dimension_numbers = #tpu.dot_dimension_numbers<[1], [0], [0], [1], [0, 0, 1, 1], [], []>} : vector<384x128xbf16>, vector<128x128xbf16>, vector<384x128xf32> -> vector<384x128xf32>
    %109 = arith.addf %103, %108 : vector<384x128xf32>
    %c48_116 = arith.constant 48 : index
    %c0_117 = arith.constant 0 : index
    %110 = vector.load %arg8[%c48_116, %c0_117] : memref<456x128xf32, #tpu.memory_space<vmem>>, vector<384x128xf32>
    %111 = arith.truncf %110 : vector<384x128xf32> to vector<384x128xbf16>
    %c2_118 = arith.constant 2 : index
    %c0_119 = arith.constant 0 : index
    %c0_120 = arith.constant 0 : index
    %c0_121 = arith.constant 0 : index
    %112 = vector.load %arg4[%c2_118, %c0_119, %c0_120, %c0_121] : memref<3x3x128x128xbf16, #tpu.memory_space<vmem>>, vector<1x1x128x128xbf16>
    %113 = vector.shape_cast %112 : vector<1x1x128x128xbf16> to vector<128x128xbf16>
    %cst_122 = arith.constant dense<0.000000e+00> : vector<384x128xf32>
    %114 = tpu.matmul %111, %113, %cst_122 {dimension_numbers = #tpu.dot_dimension_numbers<[1], [0], [0], [1], [0, 0, 1, 1], [], []>} : vector<384x128xbf16>, vector<128x128xbf16>, vector<384x128xf32> -> vector<384x128xf32>
    %115 = arith.addf %109, %114 : vector<384x128xf32>
    %c49_123 = arith.constant 49 : index
    %c0_124 = arith.constant 0 : index
    %116 = vector.load %arg8[%c49_123, %c0_124] : memref<456x128xf32, #tpu.memory_space<vmem>>, vector<384x128xf32>
    %117 = arith.truncf %116 : vector<384x128xf32> to vector<384x128xbf16>
    %c2_125 = arith.constant 2 : index
    %c1_126 = arith.constant 1 : index
    %c0_127 = arith.constant 0 : index
    %c0_128 = arith.constant 0 : index
    %118 = vector.load %arg4[%c2_125, %c1_126, %c0_127, %c0_128] : memref<3x3x128x128xbf16, #tpu.memory_space<vmem>>, vector<1x1x128x128xbf16>
    %119 = vector.shape_cast %118 : vector<1x1x128x128xbf16> to vector<128x128xbf16>
    %cst_129 = arith.constant dense<0.000000e+00> : vector<384x128xf32>
    %120 = tpu.matmul %117, %119, %cst_129 {dimension_numbers = #tpu.dot_dimension_numbers<[1], [0], [0], [1], [0, 0, 1, 1], [], []>} : vector<384x128xbf16>, vector<128x128xbf16>, vector<384x128xf32> -> vector<384x128xf32>
    %121 = arith.addf %115, %120 : vector<384x128xf32>
    %c50_130 = arith.constant 50 : index
    %c0_131 = arith.constant 0 : index
    %122 = vector.load %arg8[%c50_130, %c0_131] : memref<456x128xf32, #tpu.memory_space<vmem>>, vector<384x128xf32>
    %123 = arith.truncf %122 : vector<384x128xf32> to vector<384x128xbf16>
    %c2_132 = arith.constant 2 : index
    %c2_133 = arith.constant 2 : index
    %c0_134 = arith.constant 0 : index
    %c0_135 = arith.constant 0 : index
    %124 = vector.load %arg4[%c2_132, %c2_133, %c0_134, %c0_135] : memref<3x3x128x128xbf16, #tpu.memory_space<vmem>>, vector<1x1x128x128xbf16>
    %125 = vector.shape_cast %124 : vector<1x1x128x128xbf16> to vector<128x128xbf16>
    %cst_136 = arith.constant dense<0.000000e+00> : vector<384x128xf32>
    %126 = tpu.matmul %123, %125, %cst_136 {dimension_numbers = #tpu.dot_dimension_numbers<[1], [0], [0], [1], [0, 0, 1, 1], [], []>} : vector<384x128xbf16>, vector<128x128xbf16>, vector<384x128xf32> -> vector<384x128xf32>
    %127 = arith.addf %121, %126 : vector<384x128xf32>
    %c0_137 = arith.constant 0 : index
    %c0_138 = arith.constant 0 : index
    %128 = vector.load %arg5[%c0_137, %c0_138] : memref<1x128xf32, #tpu.memory_space<vmem>>, vector<1x128xf32>
    %129 = vector.broadcast %128 : vector<1x128xf32> to vector<384x128xf32>
    %130 = arith.addf %127, %129 : vector<384x128xf32>
    %cst_139 = arith.constant 0.000000e+00 : f32
    %131 = vector.broadcast %cst_139 : f32 to vector<384x128xf32>
    %132 = arith.maximumf %130, %131 : vector<384x128xf32>
    %c0_140 = arith.constant 0 : index
    %c0_141 = arith.constant 0 : index
    %c0_142 = arith.constant 0 : index
    %133 = vector.load %arg7[%c0_140, %c0_141, %c0_142] : memref<1x384x128xf32, #tpu.memory_space<vmem>>, vector<1x384x128xf32>
    %134 = vector.shape_cast %133 : vector<1x384x128xf32> to vector<384x128xf32>
    %135 = vector.shape_cast %132 : vector<384x128xf32> to vector<1x384x128xf32>
    tpu.vector_store %arg7[%c0_140, %c0_141, %c0_142], %135 {strides = array<i32>} : memref<1x384x128xf32, #tpu.memory_space<vmem>>, vector<1x384x128xf32>,
    return
  }
  func.func @transform_0(%arg0: i32) -> (i32, i32, i32) {
    %c0_i32 = arith.constant 0 : i32
    %c0_i32_0 = arith.constant 0 : i32
    %c0_i32_1 = arith.constant 0 : i32
    return %arg0, %c0_i32, %c0_i32_0 : i32, i32, i32
  }
  func.func @transform_1(%arg0: i32) -> (i32, i32, i32, i32) {
    %c0_i32 = arith.constant 0 : i32
    %c0_i32_0 = arith.constant 0 : i32
    %c0_i32_1 = arith.constant 0 : i32
    %c0_i32_2 = arith.constant 0 : i32
    %c0_i32_3 = arith.constant 0 : i32
    return %c0_i32, %c0_i32_0, %c0_i32_1, %c0_i32_2 : i32, i32, i32, i32
  }
  func.func @transform_2(%arg0: i32) -> (i32, i32) {
    %c0_i32 = arith.constant 0 : i32
    %c0_i32_0 = arith.constant 0 : i32
    %c0_i32_1 = arith.constant 0 : i32
    return %c0_i32, %c0_i32_0 : i32, i32
  }
  func.func @transform_3(%arg0: i32) -> (i32, i32, i32, i32) {
    %c0_i32 = arith.constant 0 : i32
    %c0_i32_0 = arith.constant 0 : i32
    %c0_i32_1 = arith.constant 0 : i32
    %c0_i32_2 = arith.constant 0 : i32
    %c0_i32_3 = arith.constant 0 : i32
    return %c0_i32, %c0_i32_0, %c0_i32_1, %c0_i32_2 : i32, i32, i32, i32
  }
  func.func @transform_4(%arg0: i32) -> (i32, i32) {
    %c0_i32 = arith.constant 0 : i32
    %c0_i32_0 = arith.constant 0 : i32
    %c0_i32_1 = arith.constant 0 : i32
    return %c0_i32, %c0_i32_0 : i32, i32
  }
  func.func @transform_5(%arg0: i32) -> (i32, i32) {
    %c0_i32 = arith.constant 0 : i32
    %c0_i32_0 = arith.constant 0 : i32
    %c0_i32_1 = arith.constant 0 : i32
    return %c0_i32, %c0_i32_0 : i32, i32
  }
  func.func @transform_6(%arg0: i32) -> (i32, i32, i32) {
    %c0_i32 = arith.constant 0 : i32
    %c0_i32_0 = arith.constant 0 : i32
    %c0_i32_1 = arith.constant 0 : i32
    return %arg0, %c0_i32, %c0_i32_0 : i32, i32, i32
  }
}

</mosaic_0001>

<llo_original>
// kernel: double_conv.1
$region0: #{double_conv.1}
  #allocation0 [shape = 'u32[]', space=smem, size = 0x4, offset = 0x4, fixed_abs, tag = 'smem constant byte address 0x4 - core index']
  #allocation1 [shape = 'u32[72,128]{1,0:T(1,128)}', space=vmem, size = 0x9000, scoped, tag = 'internal scratch']
  #allocation2 [shape = 'f32[456,128]{1,0:T(8,128)}', space=vmem, size = 0x39000, scoped, tag = 'scratch operand']
  %s0 = inlined_call_operand.vmem [shape: f32[2,456,128], index: 0, kind: input, shape index: {}]
  %s1 = inlined_call_operand.vmem [shape: bf16[3,3,128,128], index: 1, kind: input, shape index: {}]
  %s2 = inlined_call_operand.vmem [shape: f32[1,128], index: 2, kind: input, shape index: {}]
  %s3 = inlined_call_operand.vmem [shape: bf16[3,3,128,128], index: 3, kind: input, shape index: {}]
  %s4 = inlined_call_operand.vmem [shape: f32[1,128], index: 4, kind: input, shape index: {}]
  %s5 = inlined_call_operand.vmem [shape: f32[384,1], index: 5, kind: input, shape index: {}]
  %s6 = inlined_call_operand.vmem [shape: f32[2,384,128], index: 6, kind: output, shape index: {}]
  %s7 = sld [smem:[#allocation0]]
  $region57: #{double_conv.1} parent=0
    _
  %s9 = ssub.s32 1, %s7
  %s10 = scalar_select 0, %s9, %s7
  loop: start=0, step=1, limit=4
  $region2: #{double_conv.1} parent=0 // loop_pre_header
    _
  $region3: #{double_conv.1} parent=0 // loop_header
    %s12 = sphi 0, %s16
    %p13 = scmp.ge.s32.totalorder %s12, 4
    %s22 = sphi 0, %s24
    %s25 = sphi 0, %s22
    %s26 = sphi 0, %s25
    %s42 = sphi 0, %s26
    %s46 = sphi 0, %s46
    %s48 = sphi 0, %s46
    %s49 = sphi 0, %s48
    %s63 = sphi 0, %s49
    %s67 = sphi 0, %s67
    %s69 = sphi 0, %s67
    %s70 = sphi 0, %s69
    %s84 = sphi 0, %s70
    %s88 = sphi 0, %s88
    %s90 = sphi 0, %s88
    %s91 = sphi 0, %s90
    %s105 = sphi 0, %s91
    %s109 = sphi 0, %s109
    %s111 = sphi 0, %s109
    %s112 = sphi 0, %s111
    %s126 = sphi 0, %s112
    %s130 = sphi 0, %s130
    %s132 = sphi 0, %s130
    %s133 = sphi 0, %s132
    %s147 = sphi 0, %s133
    %s153 = sphi 0, %s155
    %s156 = sphi 0, %s153
    %s157 = sphi 0, %s156
    %s173 = sphi 0, %s157
  $region4: #{double_conv.1} parent=0 // loop_header_branch
    %15 = sbr.rel (%p13) target = $region8
  $region5: #{double_conv.1} parent=0 // loop_body
    %s17 = ssub.s32 %s12, 1
    %s18 = ssub.s32 %s12, 2
    %s19 = sadd.s32 %s12, 1
    %s20 = ssub.s32 %s12, %s19
    %p21 = scmp.eq.s32.totalorder %s20, 0
    %s23 = sadd.s32 %s22, 1
    %s24 = scalar_select %p21, %s22, %s23
    %p27 = pneg %p21
    %p28 = scmp.eq.s32.totalorder %s12, 1
    %p29 = por %p27, %p28
    %p30 = scmp.ne.s32.totalorder %s22, %s25
    %p31 = scmp.eq.s32.totalorder %s12, 0
    %p32 = por %p30, %p31
    %p33 = scmp.ne.s32.totalorder %s22, %s25
    %p34 = scmp.eq.s32.totalorder %s17, 1
    %p35 = por %p33, %p34
    %p36 = scmp.ne.s32.totalorder %s25, %s26
    %p37 = scmp.eq.s32.totalorder %s17, 0
    %p38 = por %p36, %p37
    %p39 = scmp.ne.s32.totalorder %s25, %s26
    %p40 = scmp.eq.s32.totalorder %s18, 1
    %p41 = por %p39, %p40
    %p43 = scmp.ne.s32.totalorder %s26, %s42
    %p44 = scmp.eq.s32.totalorder %s18, 0
    %p45 = por %p43, %p44
    %s47 = sadd.s32 %s46, 1
    %p50 = scmp.eq.s32.totalorder %s12, 1
    %p51 = scmp.ne.s32.totalorder %s46, %s48
    %p52 = scmp.eq.s32.totalorder %s12, 0
    %p53 = por %p51, %p52
    %p54 = scmp.ne.s32.totalorder %s46, %s48
    %p55 = scmp.eq.s32.totalorder %s17, 1
    %p56 = por %p54, %p55
    %p57 = scmp.ne.s32.totalorder %s48, %s49
    %p58 = scmp.eq.s32.totalorder %s17, 0
    %p59 = por %p57, %p58
    %p60 = scmp.ne.s32.totalorder %s48, %s49
    %p61 = scmp.eq.s32.totalorder %s18, 1
    %p62 = por %p60, %p61
    %p64 = scmp.ne.s32.totalorder %s49, %s63
    %p65 = scmp.eq.s32.totalorder %s18, 0
    %p66 = por %p64, %p65
    %s68 = sadd.s32 %s67, 1
    %p71 = scmp.eq.s32.totalorder %s12, 1
    %p72 = scmp.ne.s32.totalorder %s67, %s69
    %p73 = scmp.eq.s32.totalorder %s12, 0
    %p74 = por %p72, %p73
    %p75 = scmp.ne.s32.totalorder %s67, %s69
    %p76 = scmp.eq.s32.totalorder %s17, 1
    %p77 = por %p75, %p76
    %p78 = scmp.ne.s32.totalorder %s69, %s70
    %p79 = scmp.eq.s32.totalorder %s17, 0
    %p80 = por %p78, %p79
    %p81 = scmp.ne.s32.totalorder %s69, %s70
    %p82 = scmp.eq.s32.totalorder %s18, 1
    %p83 = por %p81, %p82
    %p85 = scmp.ne.s32.totalorder %s70, %s84
    %p86 = scmp.eq.s32.totalorder %s18, 0
    %p87 = por %p85, %p86
    %s89 = sadd.s32 %s88, 1
    %p92 = scmp.eq.s32.totalorder %s12, 1
    %p93 = scmp.ne.s32.totalorder %s88, %s90
    %p94 = scmp.eq.s32.totalorder %s12, 0
    %p95 = por %p93, %p94
    %p96 = scmp.ne.s32.totalorder %s88, %s90
    %p97 = scmp.eq.s32.totalorder %s17, 1
    %p98 = por %p96, %p97
    %p99 = scmp.ne.s32.totalorder %s90, %s91
    %p100 = scmp.eq.s32.totalorder %s17, 0
    %p101 = por %p99, %p100
    %p102 = scmp.ne.s32.totalorder %s90, %s91
    %p103 = scmp.eq.s32.totalorder %s18, 1
    %p104 = por %p102, %p103
    %p106 = scmp.ne.s32.totalorder %s91, %s105
    %p107 = scmp.eq.s32.totalorder %s18, 0
    %p108 = por %p106, %p107
    %s110 = sadd.s32 %s109, 1
    %p113 = scmp.eq.s32.totalorder %s12, 1
    %p114 = scmp.ne.s32.totalorder %s109, %s111
    %p115 = scmp.eq.s32.totalorder %s12, 0
    %p116 = por %p114, %p115
    %p117 = scmp.ne.s32.totalorder %s109, %s111
    %p118 = scmp.eq.s32.totalorder %s17, 1
    %p119 = por %p117, %p118
    %p120 = scmp.ne.s32.totalorder %s111, %s112
    %p121 = scmp.eq.s32.totalorder %s17, 0
    %p122 = por %p120, %p121
    %p123 = scmp.ne.s32.totalorder %s111, %s112
    %p124 = scmp.eq.s32.totalorder %s18, 1
    %p125 = por %p123, %p124
    %p127 = scmp.ne.s32.totalorder %s112, %s126
    %p128 = scmp.eq.s32.totalorder %s18, 0
    %p129 = por %p127, %p128
    %s131 = sadd.s32 %s130, 1
    %p134 = scmp.eq.s32.totalorder %s12, 1
    %p135 = scmp.ne.s32.totalorder %s130, %s132
    %p136 = scmp.eq.s32.totalorder %s12, 0
    %p137 = por %p135, %p136
    %p138 = scmp.ne.s32.totalorder %s130, %s132
    %p139 = scmp.eq.s32.totalorder %s17, 1
    %p140 = por %p138, %p139
    %p141 = scmp.ne.s32.totalorder %s132, %s133
    %p142 = scmp.eq.s32.totalorder %s17, 0
    %p143 = por %p141, %p142
    %p144 = scmp.ne.s32.totalorder %s132, %s133
    %p145 = scmp.eq.s32.totalorder %s18, 1
    %p146 = por %p144, %p145
    %p148 = scmp.ne.s32.totalorder %s133, %s147
    %p149 = scmp.eq.s32.totalorder %s18, 0
    %p150 = por %p148, %p149
    %s151 = ssub.s32 %s12, %s19
    %p152 = scmp.eq.s32.totalorder %s151, 0
    %s154 = sadd.s32 %s153, 1
    %s155 = scalar_select %p152, %s153, %s154
    %p158 = pneg %p152
    %p159 = scmp.eq.s32.totalorder %s12, 1
    %p160 = por %p158, %p159
    %p161 = scmp.ne.s32.totalorder %s153, %s156
    %p162 = scmp.eq.s32.totalorder %s12, 0
    %p163 = por %p161, %p162
    %p164 = scmp.ne.s32.totalorder %s153, %s156
    %p165 = scmp.eq.s32.totalorder %s17, 1
    %p166 = por %p164, %p165
    %p167 = scmp.ne.s32.totalorder %s156, %s157
    %p168 = scmp.eq.s32.totalorder %s17, 0
    %p169 = por %p167, %p168
    %p170 = scmp.ne.s32.totalorder %s156, %s157
    %p171 = scmp.eq.s32.totalorder %s18, 1
    %p172 = por %p170, %p171
    %p174 = scmp.ne.s32.totalorder %s157, %s173
    %p175 = scmp.eq.s32.totalorder %s18, 0
    %p176 = por %p174, %p175
    %p177 = scmp.le.s32.totalorder 1, %s12
    %p178 = scmp.lt.s32.totalorder %s12, 3
    %p179 = pnand %p177, %p178
    %p180 = pneg %p179
    // Predicated region
    $region9: #{double_conv.1} parent=5 // pred_check
      _
    $region10: #{double_conv.1} parent=5 // pred_check_branch
      %182 = sbr.rel (%p179) target = $region12
    $region11: #{double_conv.1} parent=5 // pred_region
      %s183 = ssub.s32 %s12, 1
      // Predicated region
      $region13: #{double_conv.1} parent=11 // pred_check
        %p184 = pneg %p59
      $region14: #{double_conv.1} parent=11 // pred_check_branch
        %186 = sbr.rel (%p184) target = $region16
      $region15: #{double_conv.1} parent=11 // pred_region
        _
      $region16: #{double_conv.1} parent=11 // pred_fallthru
        _
      // Predicated region
      $region17: #{double_conv.1} parent=11 // pred_check
        %p187 = pneg %p80
      $region18: #{double_conv.1} parent=11 // pred_check_branch
        %189 = sbr.rel (%p187) target = $region20
      $region19: #{double_conv.1} parent=11 // pred_region
        _
      $region20: #{double_conv.1} parent=11 // pred_fallthru
        _
      // Predicated region
      $region21: #{double_conv.1} parent=11 // pred_check
        %p190 = pneg %p101
      $region22: #{double_conv.1} parent=11 // pred_check_branch
        %192 = sbr.rel (%p190) target = $region24
      $region23: #{double_conv.1} parent=11 // pred_region
        _
      $region24: #{double_conv.1} parent=11 // pred_fallthru
        _
      // Predicated region
      $region25: #{double_conv.1} parent=11 // pred_check
        %p193 = pneg %p122
      $region26: #{double_conv.1} parent=11 // pred_check_branch
        %195 = sbr.rel (%p193) target = $region28
      $region27: #{double_conv.1} parent=11 // pred_region
        _
      $region28: #{double_conv.1} parent=11 // pred_fallthru
        _
      // Predicated region
      $region29: #{double_conv.1} parent=11 // pred_check
        %p196 = pneg %p143
      $region30: #{double_conv.1} parent=11 // pred_check_branch
        %198 = sbr.rel (%p196) target = $region32
      $region31: #{double_conv.1} parent=11 // pred_region
        _
      $region32: #{double_conv.1} parent=11 // pred_fallthru
        _
    $region12: #{double_conv.1} parent=5 // pred_fallthru
      _
    %p199 = scmp.lt.s32.totalorder %s12, 2
    // Predicated region
    $region33: #{double_conv.1} parent=5 // pred_check
      %p200 = pneg %p199
    $region34: #{double_conv.1} parent=5 // pred_check_branch
      %202 = sbr.rel (%p200) target = $region36
    $region35: #{double_conv.1} parent=5 // pred_region
      // Predicated region
      $region37: #{double_conv.1} parent=35 // pred_check
        %p203 = pneg %p32
      $region38: #{double_conv.1} parent=35 // pred_check_branch
        %205 = sbr.rel (%p203) target = $region40
      $region39: #{double_conv.1} parent=35 // pred_region
        %p206 = scmp.lt.s32.totalorder %s12, 1
        %s207 = scalar_select %p206, %s12, 1
        %s208 = smul.addr %s207, 57
        %s209 = smul.addr %s208, 8
        %s210 = scalar_lea.vmem %s0, %s209
      $region40: #{double_conv.1} parent=35 // pred_fallthru
        _
    $region36: #{double_conv.1} parent=5 // pred_fallthru
      _
    %p211 = scmp.le.s32.totalorder 1, %s12
    %p212 = scmp.lt.s32.totalorder %s12, 3
    %p213 = pnand %p211, %p212
    %p214 = pneg %p213
    // Predicated region
    $region41: #{double_conv.1} parent=5 // pred_check
      _
    $region42: #{double_conv.1} parent=5 // pred_check_branch
      %216 = sbr.rel (%p213) target = $region44
    $region43: #{double_conv.1} parent=5 // pred_region
      %s217 = ssub.s32 %s12, 1
      %p218 = scmp.lt.s32.totalorder %s17, 1
      %s219 = scalar_select %p218, %s17, 1
      %s220 = smul.addr %s219, 57
      %s221 = smul.addr %s220, 8
      %s222 = scalar_lea.vmem %s0, %s221
      %p223 = pneg %p38
      %p224 = pneg %p35
      %p225 = pneg %p59
      %p226 = pneg %p56
      %p227 = pneg %p80
      %p228 = pneg %p77
      %p229 = pneg %p101
      %p230 = pneg %p98
      %p231 = pneg %p122
      %p232 = pneg %p119
      %p233 = pneg %p143
      %p234 = pneg %p140
      %p235 = pneg %p169
      %p236 = pneg %p166
      %p237 = scmp.lt.s32.totalorder %s17, 1
      %s238 = scalar_select %p237, %s17, 1
      %s239 = smul.addr %s238, 48
      %s240 = smul.addr %s239, 8
      %s241 = scalar_lea.vmem %s6, %s240
      %p242 = scmp.lt.s32.totalorder %s17, 1
      %s243 = scalar_select %p242, %s17, 1
      %s244 = smul.addr %s243, 57
      %s245 = smul.addr %s244, 8
      %s246 = scalar_lea.vmem %s0, %s245
      %p247 = scmp.lt.s32.totalorder %s17, 1
      %s248 = scalar_select %p247, %s17, 1
      %s249 = smul.addr %s248, 48
      %s250 = smul.addr %s249, 8
      %s251 = scalar_lea.vmem %s6, %s250
      %v252 = vld [vmem:[%s246] sm:$0xff]
      %v253 = vld [vmem:[%s246 + $0x8] sm:$0xff]
      %v254 = vld [vmem:[%s246 + $0x10] sm:$0xff]
      %v255 = vld [vmem:[%s246 + $0x18] sm:$0xff]
      %v256 = vld [vmem:[%s246 + $0x20] sm:$0xff]
      %v257 = vld [vmem:[%s246 + $0x28] sm:$0xff]
      %v258 = vld [vmem:[%s246 + $0x30] sm:$0xff]
      %v259 = vld [vmem:[%s246 + $0x38] sm:$0xff]
      %v260 = vld [vmem:[%s246 + $0x40] sm:$0xff]
      %v261 = vld [vmem:[%s246 + $0x48] sm:$0xff]
      %v262 = vld [vmem:[%s246 + $0x50] sm:$0xff]
      %v263 = vld [vmem:[%s246 + $0x58] sm:$0xff]
      %v264 = vld [vmem:[%s246 + $0x60] sm:$0xff]
      %v265 = vld [vmem:[%s246 + $0x68] sm:$0xff]
      %v266 = vld [vmem:[%s246 + $0x70] sm:$0xff]
      %v267 = vld [vmem:[%s246 + $0x78] sm:$0xff]
      %v268 = vld [vmem:[%s246 + $0x80] sm:$0xff]
      %v269 = vld [vmem:[%s246 + $0x88] sm:$0xff]
      %v270 = vld [vmem:[%s246 + $0x90] sm:$0xff]
      %v271 = vld [vmem:[%s246 + $0x98] sm:$0xff]
      %v272 = vld [vmem:[%s246 + $0xa0] sm:$0xff]
      %v273 = vld [vmem:[%s246 + $0xa8] sm:$0xff]
      %v274 = vld [vmem:[%s246 + $0xb0] sm:$0xff]
      %v275 = vld [vmem:[%s246 + $0xb8] sm:$0xff]
      %v276 = vld [vmem:[%s246 + $0xc0] sm:$0xff]
      %v277 = vld [vmem:[%s246 + $0xc8] sm:$0xff]
      %v278 = vld [vmem:[%s246 + $0xd0] sm:$0xff]
      %v279 = vld [vmem:[%s246 + $0xd8] sm:$0xff]
      %v280 = vld [vmem:[%s246 + $0xe0] sm:$0xff]
      %v281 = vld [vmem:[%s246 + $0xe8] sm:$0xff]
      %v282 = vld [vmem:[%s246 + $0xf0] sm:$0xff]
      %v283 = vld [vmem:[%s246 + $0xf8] sm:$0xff]
      %v284 = vld [vmem:[%s246 + $0x100] sm:$0xff]
      %v285 = vld [vmem:[%s246 + $0x108] sm:$0xff]
      %v286 = vld [vmem:[%s246 + $0x110] sm:$0xff]
      %v287 = vld [vmem:[%s246 + $0x118] sm:$0xff]
      %v288 = vld [vmem:[%s246 + $0x120] sm:$0xff]
      %v289 = vld [vmem:[%s246 + $0x128] sm:$0xff]
      %v290 = vld [vmem:[%s246 + $0x130] sm:$0xff]
      %v291 = vld [vmem:[%s246 + $0x138] sm:$0xff]
      %v292 = vld [vmem:[%s246 + $0x140] sm:$0xff]
      %v293 = vld [vmem:[%s246 + $0x148] sm:$0xff]
      %v294 = vld [vmem:[%s246 + $0x150] sm:$0xff]
      %v295 = vld [vmem:[%s246 + $0x158] sm:$0xff]
      %v296 = vld [vmem:[%s246 + $0x160] sm:$0xff]
      %v297 = vld [vmem:[%s246 + $0x168] sm:$0xff]
      %v298 = vld [vmem:[%s246 + $0x170] sm:$0xff]
      %v299 = vld [vmem:[%s246 + $0x178] sm:$0xff]
      %v300 = vpack.c.bf16 %v253, %v252
      %v301 = vpack.c.bf16 %v255, %v254
      %v302 = vpack.c.bf16 %v257, %v256
      %v303 = vpack.c.bf16 %v259, %v258
      %v304 = vpack.c.bf16 %v261, %v260
      %v305 = vpack.c.bf16 %v263, %v262
      %v306 = vpack.c.bf16 %v265, %v264
      %v307 = vpack.c.bf16 %v267, %v266
      %v308 = vpack.c.bf16 %v269, %v268
      %v309 = vpack.c.bf16 %v271, %v270
      %v310 = vpack.c.bf16 %v273, %v272
      %v311 = vpack.c.bf16 %v275, %v274
      %v312 = vpack.c.bf16 %v277, %v276
      %v313 = vpack.c.bf16 %v279, %v278
      %v314 = vpack.c.bf16 %v281, %v280
      %v315 = vpack.c.bf16 %v283, %v282
      %v316 = vpack.c.bf16 %v285, %v284
      %v317 = vpack.c.bf16 %v287, %v286
      %v318 = vpack.c.bf16 %v289, %v288
      %v319 = vpack.c.bf16 %v291, %v290
      %v320 = vpack.c.bf16 %v293, %v292
      %v321 = vpack.c.bf16 %v295, %v294
      %v322 = vpack.c.bf16 %v297, %v296
      %v323 = vpack.c.bf16 %v299, %v298
      %v324 = vld [vmem:[%s1] sm:$0xf]
      %v325 = vld [vmem:[%s1 + $0x4] sm:$0xf]
      %v326 = vld [vmem:[%s1 + $0x8] sm:$0xf]
      %v327 = vld [vmem:[%s1 + $0xc] sm:$0xf]
      %v328 = vld [vmem:[%s1 + $0x10] sm:$0xf]
      %v329 = vld [vmem:[%s1 + $0x14] sm:$0xf]
      %v330 = vld [vmem:[%s1 + $0x18] sm:$0xf]
      %v331 = vld [vmem:[%s1 + $0x1c] sm:$0xf]
      %v332 = vld [vmem:[%s1 + $0x20] sm:$0xf]
      %v333 = vld [vmem:[%s1 + $0x24] sm:$0xf]
      %v334 = vld [vmem:[%s1 + $0x28] sm:$0xf]
      %v335 = vld [vmem:[%s1 + $0x2c] sm:$0xf]
      %v336 = vld [vmem:[%s1 + $0x30] sm:$0xf]
      %v337 = vld [vmem:[%s1 + $0x34] sm:$0xf]
      %v338 = vld [vmem:[%s1 + $0x38] sm:$0xf]
      %v339 = vld [vmem:[%s1 + $0x3c] sm:$0xf]
      %v340 = vld [vmem:[%s246 + $0x1] sm:$0xff]
      %v341 = vld [vmem:[%s246 + $0x9] sm:$0xff]
      %v342 = vld [vmem:[%s246 + $0x11] sm:$0xff]
      %v343 = vld [vmem:[%s246 + $0x19] sm:$0xff]
      %v344 = vld [vmem:[%s246 + $0x21] sm:$0xff]
      %v345 = vld [vmem:[%s246 + $0x29] sm:$0xff]
      %v346 = vld [vmem:[%s246 + $0x31] sm:$0xff]
      %v347 = vld [vmem:[%s246 + $0x39] sm:$0xff]
      %v348 = vld [vmem:[%s246 + $0x41] sm:$0xff]
      %v349 = vld [vmem:[%s246 + $0x49] sm:$0xff]
      %v350 = vld [vmem:[%s246 + $0x51] sm:$0xff]
      %v351 = vld [vmem:[%s246 + $0x59] sm:$0xff]
      %v352 = vld [vmem:[%s246 + $0x61] sm:$0xff]
      %v353 = vld [vmem:[%s246 + $0x69] sm:$0xff]
      %v354 = vld [vmem:[%s246 + $0x71] sm:$0xff]
      %v355 = vld [vmem:[%s246 + $0x79] sm:$0xff]
      %v356 = vld [vmem:[%s246 + $0x81] sm:$0xff]
      %v357 = vld [vmem:[%s246 + $0x89] sm:$0xff]
      %v358 = vld [vmem:[%s246 + $0x91] sm:$0xff]
      %v359 = vld [vmem:[%s246 + $0x99] sm:$0xff]
      %v360 = vld [vmem:[%s246 + $0xa1] sm:$0xff]
      %v361 = vld [vmem:[%s246 + $0xa9] sm:$0xff]
      %v362 = vld [vmem:[%s246 + $0xb1] sm:$0xff]
      %v363 = vld [vmem:[%s246 + $0xb9] sm:$0xff]
      %v364 = vld [vmem:[%s246 + $0xc1] sm:$0xff]
      %v365 = vld [vmem:[%s246 + $0xc9] sm:$0xff]
      %v366 = vld [vmem:[%s246 + $0xd1] sm:$0xff]
      %v367 = vld [vmem:[%s246 + $0xd9] sm:$0xff]
      %v368 = vld [vmem:[%s246 + $0xe1] sm:$0xff]
      %v369 = vld [vmem:[%s246 + $0xe9] sm:$0xff]
      %v370 = vld [vmem:[%s246 + $0xf1] sm:$0xff]
      %v371 = vld [vmem:[%s246 + $0xf9] sm:$0xff]
      %v372 = vld [vmem:[%s246 + $0x101] sm:$0xff]
      %v373 = vld [vmem:[%s246 + $0x109] sm:$0xff]
      %v374 = vld [vmem:[%s246 + $0x111] sm:$0xff]
      %v375 = vld [vmem:[%s246 + $0x119] sm:$0xff]
      %v376 = vld [vmem:[%s246 + $0x121] sm:$0xff]
      %v377 = vld [vmem:[%s246 + $0x129] sm:$0xff]
      %v378 = vld [vmem:[%s246 + $0x131] sm:$0xff]
      %v379 = vld [vmem:[%s246 + $0x139] sm:$0xff]
      %v380 = vld [vmem:[%s246 + $0x141] sm:$0xff]
      %v381 = vld [vmem:[%s246 + $0x149] sm:$0xff]
      %v382 = vld [vmem:[%s246 + $0x151] sm:$0xff]
      %v383 = vld [vmem:[%s246 + $0x159] sm:$0xff]
      %v384 = vld [vmem:[%s246 + $0x161] sm:$0xff]
      %v385 = vld [vmem:[%s246 + $0x169] sm:$0xff]
      %v386 = vld [vmem:[%s246 + $0x171] sm:$0xff]
      %v387 = vld [vmem:[%s246 + $0x179] sm:$0xff]
      %v388 = vpack.c.bf16 %v341, %v340
      %v389 = vpack.c.bf16 %v343, %v342
      %v390 = vpack.c.bf16 %v345, %v344
      %v391 = vpack.c.bf16 %v347, %v346
      %v392 = vpack.c.bf16 %v349, %v348
      %v393 = vpack.c.bf16 %v351, %v350
      %v394 = vpack.c.bf16 %v353, %v352
      %v395 = vpack.c.bf16 %v355, %v354
      %v396 = vpack.c.bf16 %v357, %v356
      %v397 = vpack.c.bf16 %v359, %v358
      %v398 = vpack.c.bf16 %v361, %v360
      %v399 = vpack.c.bf16 %v363, %v362
      %v400 = vpack.c.bf16 %v365, %v364
      %v401 = vpack.c.bf16 %v367, %v366
      %v402 = vpack.c.bf16 %v369, %v368
      %v403 = vpack.c.bf16 %v371, %v370
      %v404 = vpack.c.bf16 %v373, %v372
      %v405 = vpack.c.bf16 %v375, %v374
      %v406 = vpack.c.bf16 %v377, %v376
      %v407 = vpack.c.bf16 %v379, %v378
      %v408 = vpack.c.bf16 %v381, %v380
      %v409 = vpack.c.bf16 %v383, %v382
      %v410 = vpack.c.bf16 %v385, %v384
      %v411 = vpack.c.bf16 %v387, %v386
      %s412 = scalar_lea.vmem %s1, 64
      %v413 = vld [vmem:[%s412] sm:$0xf]
      %v414 = vld [vmem:[%s412 + $0x4] sm:$0xf]
      %v415 = vld [vmem:[%s412 + $0x8] sm:$0xf]
      %v416 = vld [vmem:[%s412 + $0xc] sm:$0xf]
      %v417 = vld [vmem:[%s412 + $0x10] sm:$0xf]
      %v418 = vld [vmem:[%s412 + $0x14] sm:$0xf]
      %v419 = vld [vmem:[%s412 + $0x18] sm:$0xf]
      %v420 = vld [vmem:[%s412 + $0x1c] sm:$0xf]
      %v421 = vld [vmem:[%s412 + $0x20] sm:$0xf]
      %v422 = vld [vmem:[%s412 + $0x24] sm:$0xf]
      %v423 = vld [vmem:[%s412 + $0x28] sm:$0xf]
      %v424 = vld [vmem:[%s412 + $0x2c] sm:$0xf]
      %v425 = vld [vmem:[%s412 + $0x30] sm:$0xf]
      %v426 = vld [vmem:[%s412 + $0x34] sm:$0xf]
      %v427 = vld [vmem:[%s412 + $0x38] sm:$0xf]
      %v428 = vld [vmem:[%s412 + $0x3c] sm:$0xf]
      %v445 = vunpack.c.l.b16 %v413
      %v446 = vunpack.c.l.b16 %v414
      %v447 = vunpack.c.l.b16 %v415
      %v448 = vunpack.c.l.b16 %v416
      %v449 = vunpack.c.l.b16 %v417
      %v450 = vunpack.c.l.b16 %v418
      %v451 = vunpack.c.l.b16 %v419
      %v452 = vunpack.c.l.b16 %v420
      %v453 = vunpack.c.l.b16 %v421
      %v454 = vunpack.c.l.b16 %v422
      %v455 = vunpack.c.l.b16 %v423
      %v456 = vunpack.c.l.b16 %v424
      %v457 = vunpack.c.l.b16 %v425
      %v458 = vunpack.c.l.b16 %v426
      %v459 = vunpack.c.l.b16 %v427
      %v460 = vunpack.c.l.b16 %v428
      %v461 = vpack.c.b16 %v446, %v445
      %v462 = vpack.c.b16 %v448, %v447
      %v463 = vpack.c.b16 %v450, %v449
      %v464 = vpack.c.b16 %v452, %v451
      %v465 = vpack.c.b16 %v454, %v453
      %v466 = vpack.c.b16 %v456, %v455
      %v467 = vpack.c.b16 %v458, %v457
      %v468 = vpack.c.b16 %v460, %v459
      %477 = vmatpush.bf16.msra.mxu0 %v468
      %478 = vmatpush.bf16.msra.mxu0 %v467
      %479 = vmatpush.bf16.msra.mxu0 %v466
      %480 = vmatpush.bf16.msra.mxu0 %v465
      %481 = vmatpush.bf16.msra.mxu0 %v464
      %482 = vmatpush.bf16.msra.mxu0 %v463
      %483 = vmatpush.bf16.msra.mxu0 %v462
      %484 = vmatpush.bf16.msra.mxu0 %v461
      %485 = vmatmul.bf16.gmra.mxu0 %v388
      %v486 = vpop.f32.mrf.mxu0
      %v487 = vadd.f32 0.0, %v486
      %v488 = vpop.f32.mrf.mxu0
      %v489 = vadd.f32 0.0, %v488
      %490 = vmatmul.bf16.gmra.mxu0 %v389
      %v491 = vpop.f32.mrf.mxu0
      %v492 = vadd.f32 0.0, %v491
      %v493 = vpop.f32.mrf.mxu0
      %v494 = vadd.f32 0.0, %v493
      %495 = vmatmul.bf16.gmra.mxu0 %v390
      %v496 = vpop.f32.mrf.mxu0
      %v497 = vadd.f32 0.0, %v496
      %v498 = vpop.f32.mrf.mxu0
      %v499 = vadd.f32 0.0, %v498
      %500 = vmatmul.bf16.gmra.mxu0 %v391
      %v501 = vpop.f32.mrf.mxu0
      %v502 = vadd.f32 0.0, %v501
      %v503 = vpop.f32.mrf.mxu0
      %v504 = vadd.f32 0.0, %v503
      %505 = vmatmul.bf16.gmra.mxu0 %v392
      %v506 = vpop.f32.mrf.mxu0
      %v507 = vadd.f32 0.0, %v506
      %v508 = vpop.f32.mrf.mxu0
      %v509 = vadd.f32 0.0, %v508
      %510 = vmatmul.bf16.gmra.mxu0 %v393
      %v511 = vpop.f32.mrf.mxu0
      %v512 = vadd.f32 0.0, %v511
      %v513 = vpop.f32.mrf.mxu0
      %v514 = vadd.f32 0.0, %v513
      %515 = vmatmul.bf16.gmra.mxu0 %v394
      %v516 = vpop.f32.mrf.mxu0
      %v517 = vadd.f32 0.0, %v516
      %v518 = vpop.f32.mrf.mxu0
      %v519 = vadd.f32 0.0, %v518
      %520 = vmatmul.bf16.gmra.mxu0 %v395
      %v521 = vpop.f32.mrf.mxu0
      %v522 = vadd.f32 0.0, %v521
      %v523 = vpop.f32.mrf.mxu0
      %v524 = vadd.f32 0.0, %v523
      %525 = vmatmul.bf16.gmra.mxu0 %v396
      %v526 = vpop.f32.mrf.mxu0
      %v527 = vadd.f32 0.0, %v526
      %v528 = vpop.f32.mrf.mxu0
      %v529 = vadd.f32 0.0, %v528
      %530 = vmatmul.bf16.gmra.mxu0 %v397
      %v531 = vpop.f32.mrf.mxu0
      %v532 = vadd.f32 0.0, %v531
      %v533 = vpop.f32.mrf.mxu0
      %v534 = vadd.f32 0.0, %v533
      %535 = vmatmul.bf16.gmra.mxu0 %v398
      %v536 = vpop.f32.mrf.mxu0
      %v537 = vadd.f32 0.0, %v536
      %v538 = vpop.f32.mrf.mxu0
      %v539 = vadd.f32 0.0, %v538
      %540 = vmatmul.bf16.gmra.mxu0 %v399
      %v541 = vpop.f32.mrf.mxu0
      %v542 = vadd.f32 0.0, %v541
      %v543 = vpop.f32.mrf.mxu0
      %v544 = vadd.f32 0.0, %v543
      %545 = vmatmul.bf16.gmra.mxu0 %v400
      %v546 = vpop.f32.mrf.mxu0
      %v547 = vadd.f32 0.0, %v546
      %v548 = vpop.f32.mrf.mxu0
      %v549 = vadd.f32 0.0, %v548
      %550 = vmatmul.bf16.gmra.mxu0 %v401
      %v551 = vpop.f32.mrf.mxu0
      %v552 = vadd.f32 0.0, %v551
      %v553 = vpop.f32.mrf.mxu0
      %v554 = vadd.f32 0.0, %v553
      %555 = vmatmul.bf16.gmra.mxu0 %v402
      %v556 = vpop.f32.mrf.mxu0
      %v557 = vadd.f32 0.0, %v556
      %v558 = vpop.f32.mrf.mxu0
      %v559 = vadd.f32 0.0, %v558
      %560 = vmatmul.bf16.gmra.mxu0 %v403
      %v561 = vpop.f32.mrf.mxu0
      %v562 = vadd.f32 0.0, %v561
      %v563 = vpop.f32.mrf.mxu0
      %v564 = vadd.f32 0.0, %v563
      %565 = vmatmul.bf16.gmra.mxu0 %v404
      %v566 = vpop.f32.mrf.mxu0
      %v567 = vadd.f32 0.0, %v566
      %v568 = vpop.f32.mrf.mxu0
      %v569 = vadd.f32 0.0, %v568
      %570 = vmatmul.bf16.gmra.mxu0 %v405
      %v571 = vpop.f32.mrf.mxu0
      %v572 = vadd.f32 0.0, %v571
      %v573 = vpop.f32.mrf.mxu0
      %v574 = vadd.f32 0.0, %v573
      %575 = vmatmul.bf16.gmra.mxu0 %v406
      %v576 = vpop.f32.mrf.mxu0
      %v577 = vadd.f32 0.0, %v576
      %v578 = vpop.f32.mrf.mxu0
      %v579 = vadd.f32 0.0, %v578
      %580 = vmatmul.bf16.gmra.mxu0 %v407
      %v581 = vpop.f32.mrf.mxu0
      %v582 = vadd.f32 0.0, %v581
      %v583 = vpop.f32.mrf.mxu0
      %v584 = vadd.f32 0.0, %v583
      %585 = vmatmul.bf16.gmra.mxu0 %v408
      %v586 = vpop.f32.mrf.mxu0
      %v587 = vadd.f32 0.0, %v586
      %v588 = vpop.f32.mrf.mxu0
      %v589 = vadd.f32 0.0, %v588
      %590 = vmatmul.bf16.gmra.mxu0 %v409
      %v591 = vpop.f32.mrf.mxu0
      %v592 = vadd.f32 0.0, %v591
      %v593 = vpop.f32.mrf.mxu0
      %v594 = vadd.f32 0.0, %v593
      %595 = vmatmul.bf16.gmra.mxu0 %v410
      %v596 = vpop.f32.mrf.mxu0
      %v597 = vadd.f32 0.0, %v596
      %v598 = vpop.f32.mrf.mxu0
      %v599 = vadd.f32 0.0, %v598
      %600 = vmatmul.bf16.gmra.mxu0 %v411
      %v601 = vpop.f32.mrf.mxu0
      %v602 = vadd.f32 0.0, %v601
      %v603 = vpop.f32.mrf.mxu0
      %v604 = vadd.f32 0.0, %v603
      %605 = vdwg.mxu0
      %v622 = vunpack.c.l.b16 %v324
      %v623 = vunpack.c.l.b16 %v325
      %v624 = vunpack.c.l.b16 %v326
      %v625 = vunpack.c.l.b16 %v327
      %v626 = vunpack.c.l.b16 %v328
      %v627 = vunpack.c.l.b16 %v329
      %v628 = vunpack.c.l.b16 %v330
      %v629 = vunpack.c.l.b16 %v331
      %v630 = vunpack.c.l.b16 %v332
      %v631 = vunpack.c.l.b16 %v333
      %v632 = vunpack.c.l.b16 %v334
      %v633 = vunpack.c.l.b16 %v335
      %v634 = vunpack.c.l.b16 %v336
      %v635 = vunpack.c.l.b16 %v337
      %v636 = vunpack.c.l.b16 %v338
      %v637 = vunpack.c.l.b16 %v339
      %v638 = vpack.c.b16 %v623, %v622
      %v639 = vpack.c.b16 %v625, %v624
      %v640 = vpack.c.b16 %v627, %v626
      %v641 = vpack.c.b16 %v629, %v628
      %v642 = vpack.c.b16 %v631, %v630
      %v643 = vpack.c.b16 %v633, %v632
      %v644 = vpack.c.b16 %v635, %v634
      %v645 = vpack.c.b16 %v637, %v636
      %654 = vmatpush.bf16.msra.mxu0 %v645
      %655 = vmatpush.bf16.msra.mxu0 %v644
      %656 = vmatpush.bf16.msra.mxu0 %v643
      %657 = vmatpush.bf16.msra.mxu0 %v642
      %658 = vmatpush.bf16.msra.mxu0 %v641
      %659 = vmatpush.bf16.msra.mxu0 %v640
      %660 = vmatpush.bf16.msra.mxu0 %v639
      %661 = vmatpush.bf16.msra.mxu0 %v638
      %662 = vmatmul.bf16.gmra.mxu0 %v300
      %v663 = vpop.f32.mrf.mxu0
      %v664 = vadd.f32 %v487, %v663
      %v665 = vpop.f32.mrf.mxu0
      %v666 = vadd.f32 %v489, %v665
      %667 = vmatmul.bf16.gmra.mxu0 %v301
      %v668 = vpop.f32.mrf.mxu0
      %v669 = vadd.f32 %v492, %v668
      %v670 = vpop.f32.mrf.mxu0
      %v671 = vadd.f32 %v494, %v670
      %672 = vmatmul.bf16.gmra.mxu0 %v302
      %v673 = vpop.f32.mrf.mxu0
      %v674 = vadd.f32 %v497, %v673
      %v675 = vpop.f32.mrf.mxu0
      %v676 = vadd.f32 %v499, %v675
      %677 = vmatmul.bf16.gmra.mxu0 %v303
      %v678 = vpop.f32.mrf.mxu0
      %v679 = vadd.f32 %v502, %v678
      %v680 = vpop.f32.mrf.mxu0
      %v681 = vadd.f32 %v504, %v680
      %682 = vmatmul.bf16.gmra.mxu0 %v304
      %v683 = vpop.f32.mrf.mxu0
      %v684 = vadd.f32 %v507, %v683
      %v685 = vpop.f32.mrf.mxu0
      %v686 = vadd.f32 %v509, %v685
      %687 = vmatmul.bf16.gmra.mxu0 %v305
      %v688 = vpop.f32.mrf.mxu0
      %v689 = vadd.f32 %v512, %v688
      %v690 = vpop.f32.mrf.mxu0
      %v691 = vadd.f32 %v514, %v690
      %692 = vmatmul.bf16.gmra.mxu0 %v306
      %v693 = vpop.f32.mrf.mxu0
      %v694 = vadd.f32 %v517, %v693
      %v695 = vpop.f32.mrf.mxu0
      %v696 = vadd.f32 %v519, %v695
      %697 = vmatmul.bf16.gmra.mxu0 %v307
      %v698 = vpop.f32.mrf.mxu0
      %v699 = vadd.f32 %v522, %v698
      %v700 = vpop.f32.mrf.mxu0
      %v701 = vadd.f32 %v524, %v700
      %702 = vmatmul.bf16.gmra.mxu0 %v308
      %v703 = vpop.f32.mrf.mxu0
      %v704 = vadd.f32 %v527, %v703
      %v705 = vpop.f32.mrf.mxu0
      %v706 = vadd.f32 %v529, %v705
      %707 = vmatmul.bf16.gmra.mxu0 %v309
      %v708 = vpop.f32.mrf.mxu0
      %v709 = vadd.f32 %v532, %v708
      %v710 = vpop.f32.mrf.mxu0
      %v711 = vadd.f32 %v534, %v710
      %712 = vmatmul.bf16.gmra.mxu0 %v310
      %v713 = vpop.f32.mrf.mxu0
      %v714 = vadd.f32 %v537, %v713
      %v715 = vpop.f32.mrf.mxu0
      %v716 = vadd.f32 %v539, %v715
      %717 = vmatmul.bf16.gmra.mxu0 %v311
      %v718 = vpop.f32.mrf.mxu0
      %v719 = vadd.f32 %v542, %v718
      %v720 = vpop.f32.mrf.mxu0
      %v721 = vadd.f32 %v544, %v720
      %722 = vmatmul.bf16.gmra.mxu0 %v312
      %v723 = vpop.f32.mrf.mxu0
      %v724 = vadd.f32 %v547, %v723
      %v725 = vpop.f32.mrf.mxu0
      %v726 = vadd.f32 %v549, %v725
      %727 = vmatmul.bf16.gmra.mxu0 %v313
      %v728 = vpop.f32.mrf.mxu0
      %v729 = vadd.f32 %v552, %v728
      %v730 = vpop.f32.mrf.mxu0
      %v731 = vadd.f32 %v554, %v730
      %732 = vmatmul.bf16.gmra.mxu0 %v314
      %v733 = vpop.f32.mrf.mxu0
      %v734 = vadd.f32 %v557, %v733
      %v735 = vpop.f32.mrf.mxu0
      %v736 = vadd.f32 %v559, %v735
      %737 = vmatmul.bf16.gmra.mxu0 %v315
      %v738 = vpop.f32.mrf.mxu0
      %v739 = vadd.f32 %v562, %v738
      %v740 = vpop.f32.mrf.mxu0
      %v741 = vadd.f32 %v564, %v740
      %742 = vmatmul.bf16.gmra.mxu0 %v316
      %v743 = vpop.f32.mrf.mxu0
      %v744 = vadd.f32 %v567, %v743
      %v745 = vpop.f32.mrf.mxu0
      %v746 = vadd.f32 %v569, %v745
      %747 = vmatmul.bf16.gmra.mxu0 %v317
      %v748 = vpop.f32.mrf.mxu0
      %v749 = vadd.f32 %v572, %v748
      %v750 = vpop.f32.mrf.mxu0
      %v751 = vadd.f32 %v574, %v750
      %752 = vmatmul.bf16.gmra.mxu0 %v318
      %v753 = vpop.f32.mrf.mxu0
      %v754 = vadd.f32 %v577, %v753
      %v755 = vpop.f32.mrf.mxu0
      %v756 = vadd.f32 %v579, %v755
      %757 = vmatmul.bf16.gmra.mxu0 %v319
      %v758 = vpop.f32.mrf.mxu0
      %v759 = vadd.f32 %v582, %v758
      %v760 = vpop.f32.mrf.mxu0
      %v761 = vadd.f32 %v584, %v760
      %762 = vmatmul.bf16.gmra.mxu0 %v320
      %v763 = vpop.f32.mrf.mxu0
      %v764 = vadd.f32 %v587, %v763
      %v765 = vpop.f32.mrf.mxu0
      %v766 = vadd.f32 %v589, %v765
      %767 = vmatmul.bf16.gmra.mxu0 %v321
      %v768 = vpop.f32.mrf.mxu0
      %v769 = vadd.f32 %v592, %v768
      %v770 = vpop.f32.mrf.mxu0
      %v771 = vadd.f32 %v594, %v770
      %772 = vmatmul.bf16.gmra.mxu0 %v322
      %v773 = vpop.f32.mrf.mxu0
      %v774 = vadd.f32 %v597, %v773
      %v775 = vpop.f32.mrf.mxu0
      %v776 = vadd.f32 %v599, %v775
      %777 = vmatmul.bf16.gmra.mxu0 %v323
      %v778 = vpop.f32.mrf.mxu0
      %v779 = vadd.f32 %v602, %v778
      %v780 = vpop.f32.mrf.mxu0
      %v781 = vadd.f32 %v604, %v780
      %782 = vdwg.mxu0
      %v783 = vld [vmem:[%s246 + $0x2] sm:$0xff]
      %v784 = vld [vmem:[%s246 + $0xa] sm:$0xff]
      %v785 = vld [vmem:[%s246 + $0x12] sm:$0xff]
      %v786 = vld [vmem:[%s246 + $0x1a] sm:$0xff]
      %v787 = vld [vmem:[%s246 + $0x22] sm:$0xff]
      %v788 = vld [vmem:[%s246 + $0x2a] sm:$0xff]
      %v789 = vld [vmem:[%s246 + $0x32] sm:$0xff]
      %v790 = vld [vmem:[%s246 + $0x3a] sm:$0xff]
      %v791 = vld [vmem:[%s246 + $0x42] sm:$0xff]
      %v792 = vld [vmem:[%s246 + $0x4a] sm:$0xff]
      %v793 = vld [vmem:[%s246 + $0x52] sm:$0xff]
      %v794 = vld [vmem:[%s246 + $0x5a] sm:$0xff]
      %v795 = vld [vmem:[%s246 + $0x62] sm:$0xff]
      %v796 = vld [vmem:[%s246 + $0x6a] sm:$0xff]
      %v797 = vld [vmem:[%s246 + $0x72] sm:$0xff]
      %v798 = vld [vmem:[%s246 + $0x7a] sm:$0xff]
      %v799 = vld [vmem:[%s246 + $0x82] sm:$0xff]
      %v800 = vld [vmem:[%s246 + $0x8a] sm:$0xff]
      %v801 = vld [vmem:[%s246 + $0x92] sm:$0xff]
      %v802 = vld [vmem:[%s246 + $0x9a] sm:$0xff]
      %v803 = vld [vmem:[%s246 + $0xa2] sm:$0xff]
      %v804 = vld [vmem:[%s246 + $0xaa] sm:$0xff]
      %v805 = vld [vmem:[%s246 + $0xb2] sm:$0xff]
      %v806 = vld [vmem:[%s246 + $0xba] sm:$0xff]
      %v807 = vld [vmem:[%s246 + $0xc2] sm:$0xff]
      %v808 = vld [vmem:[%s246 + $0xca] sm:$0xff]
      %v809 = vld [vmem:[%s246 + $0xd2] sm:$0xff]
      %v810 = vld [vmem:[%s246 + $0xda] sm:$0xff]
      %v811 = vld [vmem:[%s246 + $0xe2] sm:$0xff]
      %v812 = vld [vmem:[%s246 + $0xea] sm:$0xff]
      %v813 = vld [vmem:[%s246 + $0xf2] sm:$0xff]
      %v814 = vld [vmem:[%s246 + $0xfa] sm:$0xff]
      %v815 = vld [vmem:[%s246 + $0x102] sm:$0xff]
      %v816 = vld [vmem:[%s246 + $0x10a] sm:$0xff]
      %v817 = vld [vmem:[%s246 + $0x112] sm:$0xff]
      %v818 = vld [vmem:[%s246 + $0x11a] sm:$0xff]
      %v819 = vld [vmem:[%s246 + $0x122] sm:$0xff]
      %v820 = vld [vmem:[%s246 + $0x12a] sm:$0xff]
      %v821 = vld [vmem:[%s246 + $0x132] sm:$0xff]
      %v822 = vld [vmem:[%s246 + $0x13a] sm:$0xff]
      %v823 = vld [vmem:[%s246 + $0x142] sm:$0xff]
      %v824 = vld [vmem:[%s246 + $0x14a] sm:$0xff]
      %v825 = vld [vmem:[%s246 + $0x152] sm:$0xff]
      %v826 = vld [vmem:[%s246 + $0x15a] sm:$0xff]
      %v827 = vld [vmem:[%s246 + $0x162] sm:$0xff]
      %v828 = vld [vmem:[%s246 + $0x16a] sm:$0xff]
      %v829 = vld [vmem:[%s246 + $0x172] sm:$0xff]
      %v830 = vld [vmem:[%s246 + $0x17a] sm:$0xff]
      %v831 = vpack.c.bf16 %v784, %v783
      %v832 = vpack.c.bf16 %v786, %v785
      %v833 = vpack.c.bf16 %v788, %v787
      %v834 = vpack.c.bf16 %v790, %v789
      %v835 = vpack.c.bf16 %v792, %v791
      %v836 = vpack.c.bf16 %v794, %v793
      %v837 = vpack.c.bf16 %v796, %v795
      %v838 = vpack.c.bf16 %v798, %v797
      %v839 = vpack.c.bf16 %v800, %v799
      %v840 = vpack.c.bf16 %v802, %v801
      %v841 = vpack.c.bf16 %v804, %v803
      %v842 = vpack.c.bf16 %v806, %v805
      %v843 = vpack.c.bf16 %v808, %v807
      %v844 = vpack.c.bf16 %v810, %v809
      %v845 = vpack.c.bf16 %v812, %v811
      %v846 = vpack.c.bf16 %v814, %v813
      %v847 = vpack.c.bf16 %v816, %v815
      %v848 = vpack.c.bf16 %v818, %v817
      %v849 = vpack.c.bf16 %v820, %v819
      %v850 = vpack.c.bf16 %v822, %v821
      %v851 = vpack.c.bf16 %v824, %v823
      %v852 = vpack.c.bf16 %v826, %v825
      %v853 = vpack.c.bf16 %v828, %v827
      %v854 = vpack.c.bf16 %v830, %v829
      %s855 = scalar_lea.vmem %s1, 128
      %v856 = vld [vmem:[%s855] sm:$0xf]
      %v857 = vld [vmem:[%s855 + $0x4] sm:$0xf]
      %v858 = vld [vmem:[%s855 + $0x8] sm:$0xf]
      %v859 = vld [vmem:[%s855 + $0xc] sm:$0xf]
      %v860 = vld [vmem:[%s855 + $0x10] sm:$0xf]
      %v861 = vld [vmem:[%s855 + $0x14] sm:$0xf]
      %v862 = vld [vmem:[%s855 + $0x18] sm:$0xf]
      %v863 = vld [vmem:[%s855 + $0x1c] sm:$0xf]
      %v864 = vld [vmem:[%s855 + $0x20] sm:$0xf]
      %v865 = vld [vmem:[%s855 + $0x24] sm:$0xf]
      %v866 = vld [vmem:[%s855 + $0x28] sm:$0xf]
      %v867 = vld [vmem:[%s855 + $0x2c] sm:$0xf]
      %v868 = vld [vmem:[%s855 + $0x30] sm:$0xf]
      %v869 = vld [vmem:[%s855 + $0x34] sm:$0xf]
      %v870 = vld [vmem:[%s855 + $0x38] sm:$0xf]
      %v871 = vld [vmem:[%s855 + $0x3c] sm:$0xf]
      %v888 = vunpack.c.l.b16 %v856
      %v889 = vunpack.c.l.b16 %v857
      %v890 = vunpack.c.l.b16 %v858
      %v891 = vunpack.c.l.b16 %v859
      %v892 = vunpack.c.l.b16 %v860
      %v893 = vunpack.c.l.b16 %v861
      %v894 = vunpack.c.l.b16 %v862
      %v895 = vunpack.c.l.b16 %v863
      %v896 = vunpack.c.l.b16 %v864
      %v897 = vunpack.c.l.b16 %v865
      %v898 = vunpack.c.l.b16 %v866
      %v899 = vunpack.c.l.b16 %v867
      %v900 = vunpack.c.l.b16 %v868
      %v901 = vunpack.c.l.b16 %v869
      %v902 = vunpack.c.l.b16 %v870
      %v903 = vunpack.c.l.b16 %v871
      %v904 = vpack.c.b16 %v889, %v888
      %v905 = vpack.c.b16 %v891, %v890
      %v906 = vpack.c.b16 %v893, %v892
      %v907 = vpack.c.b16 %v895, %v894
      %v908 = vpack.c.b16 %v897, %v896
      %v909 = vpack.c.b16 %v899, %v898
      %v910 = vpack.c.b16 %v901, %v900
      %v911 = vpack.c.b16 %v903, %v902
      %920 = vmatpush.bf16.msra.mxu0 %v911
      %921 = vmatpush.bf16.msra.mxu0 %v910
      %922 = vmatpush.bf16.msra.mxu0 %v909
      %923 = vmatpush.bf16.msra.mxu0 %v908
      %924 = vmatpush.bf16.msra.mxu0 %v907
      %925 = vmatpush.bf16.msra.mxu0 %v906
      %926 = vmatpush.bf16.msra.mxu0 %v905
      %927 = vmatpush.bf16.msra.mxu0 %v904
      %928 = vmatmul.bf16.gmra.mxu0 %v831
      %v929 = vpop.f32.mrf.mxu0
      %v930 = vadd.f32 0.0, %v929
      %v931 = vpop.f32.mrf.mxu0
      %v932 = vadd.f32 0.0, %v931
      %933 = vmatmul.bf16.gmra.mxu0 %v832
      %v934 = vpop.f32.mrf.mxu0
      %v935 = vadd.f32 0.0, %v934
      %v936 = vpop.f32.mrf.mxu0
      %v937 = vadd.f32 0.0, %v936
      %938 = vmatmul.bf16.gmra.mxu0 %v833
      %v939 = vpop.f32.mrf.mxu0
      %v940 = vadd.f32 0.0, %v939
      %v941 = vpop.f32.mrf.mxu0
      %v942 = vadd.f32 0.0, %v941
      %943 = vmatmul.bf16.gmra.mxu0 %v834
      %v944 = vpop.f32.mrf.mxu0
      %v945 = vadd.f32 0.0, %v944
      %v946 = vpop.f32.mrf.mxu0
      %v947 = vadd.f32 0.0, %v946
      %948 = vmatmul.bf16.gmra.mxu0 %v835
      %v949 = vpop.f32.mrf.mxu0
      %v950 = vadd.f32 0.0, %v949
      %v951 = vpop.f32.mrf.mxu0
      %v952 = vadd.f32 0.0, %v951
      %953 = vmatmul.bf16.gmra.mxu0 %v836
      %v954 = vpop.f32.mrf.mxu0
      %v955 = vadd.f32 0.0, %v954
      %v956 = vpop.f32.mrf.mxu0
      %v957 = vadd.f32 0.0, %v956
      %958 = vmatmul.bf16.gmra.mxu0 %v837
      %v959 = vpop.f32.mrf.mxu0
      %v960 = vadd.f32 0.0, %v959
      %v961 = vpop.f32.mrf.mxu0
      %v962 = vadd.f32 0.0, %v961
      %963 = vmatmul.bf16.gmra.mxu0 %v838
      %v964 = vpop.f32.mrf.mxu0
      %v965 = vadd.f32 0.0, %v964
      %v966 = vpop.f32.mrf.mxu0
      %v967 = vadd.f32 0.0, %v966
      %968 = vmatmul.bf16.gmra.mxu0 %v839
      %v969 = vpop.f32.mrf.mxu0
      %v970 = vadd.f32 0.0, %v969
      %v971 = vpop.f32.mrf.mxu0
      %v972 = vadd.f32 0.0, %v971
      %973 = vmatmul.bf16.gmra.mxu0 %v840
      %v974 = vpop.f32.mrf.mxu0
      %v975 = vadd.f32 0.0, %v974
      %v976 = vpop.f32.mrf.mxu0
      %v977 = vadd.f32 0.0, %v976
      %978 = vmatmul.bf16.gmra.mxu0 %v841
      %v979 = vpop.f32.mrf.mxu0
      %v980 = vadd.f32 0.0, %v979
      %v981 = vpop.f32.mrf.mxu0
      %v982 = vadd.f32 0.0, %v981
      %983 = vmatmul.bf16.gmra.mxu0 %v842
      %v984 = vpop.f32.mrf.mxu0
      %v985 = vadd.f32 0.0, %v984
      %v986 = vpop.f32.mrf.mxu0
      %v987 = vadd.f32 0.0, %v986
      %988 = vmatmul.bf16.gmra.mxu0 %v843
      %v989 = vpop.f32.mrf.mxu0
      %v990 = vadd.f32 0.0, %v989
      %v991 = vpop.f32.mrf.mxu0
      %v992 = vadd.f32 0.0, %v991
      %993 = vmatmul.bf16.gmra.mxu0 %v844
      %v994 = vpop.f32.mrf.mxu0
      %v995 = vadd.f32 0.0, %v994
      %v996 = vpop.f32.mrf.mxu0
      %v997 = vadd.f32 0.0, %v996
      %998 = vmatmul.bf16.gmra.mxu0 %v845
      %v999 = vpop.f32.mrf.mxu0
      %v1000 = vadd.f32 0.0, %v999
      %v1001 = vpop.f32.mrf.mxu0
      %v1002 = vadd.f32 0.0, %v1001
      %1003 = vmatmul.bf16.gmra.mxu0 %v846
      %v1004 = vpop.f32.mrf.mxu0
      %v1005 = vadd.f32 0.0, %v1004
      %v1006 = vpop.f32.mrf.mxu0
      %v1007 = vadd.f32 0.0, %v1006
      %1008 = vmatmul.bf16.gmra.mxu0 %v847
      %v1009 = vpop.f32.mrf.mxu0
      %v1010 = vadd.f32 0.0, %v1009
      %v1011 = vpop.f32.mrf.mxu0
      %v1012 = vadd.f32 0.0, %v1011
      %1013 = vmatmul.bf16.gmra.mxu0 %v848
      %v1014 = vpop.f32.mrf.mxu0
      %v1015 = vadd.f32 0.0, %v1014
      %v1016 = vpop.f32.mrf.mxu0
      %v1017 = vadd.f32 0.0, %v1016
      %1018 = vmatmul.bf16.gmra.mxu0 %v849
      %v1019 = vpop.f32.mrf.mxu0
      %v1020 = vadd.f32 0.0, %v1019
      %v1021 = vpop.f32.mrf.mxu0
      %v1022 = vadd.f32 0.0, %v1021
      %1023 = vmatmul.bf16.gmra.mxu0 %v850
      %v1024 = vpop.f32.mrf.mxu0
      %v1025 = vadd.f32 0.0, %v1024
      %v1026 = vpop.f32.mrf.mxu0
      %v1027 = vadd.f32 0.0, %v1026
      %1028 = vmatmul.bf16.gmra.mxu0 %v851
      %v1029 = vpop.f32.mrf.mxu0
      %v1030 = vadd.f32 0.0, %v1029
      %v1031 = vpop.f32.mrf.mxu0
      %v1032 = vadd.f32 0.0, %v1031
      %1033 = vmatmul.bf16.gmra.mxu0 %v852
      %v1034 = vpop.f32.mrf.mxu0
      %v1035 = vadd.f32 0.0, %v1034
      %v1036 = vpop.f32.mrf.mxu0
      %v1037 = vadd.f32 0.0, %v1036
      %1038 = vmatmul.bf16.gmra.mxu0 %v853
      %v1039 = vpop.f32.mrf.mxu0
      %v1040 = vadd.f32 0.0, %v1039
      %v1041 = vpop.f32.mrf.mxu0
      %v1042 = vadd.f32 0.0, %v1041
      %1043 = vmatmul.bf16.gmra.mxu0 %v854
      %v1044 = vpop.f32.mrf.mxu0
      %v1045 = vadd.f32 0.0, %v1044
      %v1046 = vpop.f32.mrf.mxu0
      %v1047 = vadd.f32 0.0, %v1046
      %1048 = vdwg.mxu0
      %v1049 = vadd.f32 %v664, %v930
      %v1050 = vadd.f32 %v666, %v932
      %v1051 = vadd.f32 %v669, %v935
      %v1052 = vadd.f32 %v671, %v937
      %v1053 = vadd.f32 %v674, %v940
      %v1054 = vadd.f32 %v676, %v942
      %v1055 = vadd.f32 %v679, %v945
      %v1056 = vadd.f32 %v681, %v947
      %v1057 = vadd.f32 %v684, %v950
      %v1058 = vadd.f32 %v686, %v952
      %v1059 = vadd.f32 %v689, %v955
      %v1060 = vadd.f32 %v691, %v957
      %v1061 = vadd.f32 %v694, %v960
      %v1062 = vadd.f32 %v696, %v962
      %v1063 = vadd.f32 %v699, %v965
      %v1064 = vadd.f32 %v701, %v967
      %v1065 = vadd.f32 %v704, %v970
      %v1066 = vadd.f32 %v706, %v972
      %v1067 = vadd.f32 %v709, %v975
      %v1068 = vadd.f32 %v711, %v977
      %v1069 = vadd.f32 %v714, %v980
      %v1070 = vadd.f32 %v716, %v982
      %v1071 = vadd.f32 %v719, %v985
      %v1072 = vadd.f32 %v721, %v987
      %v1073 = vadd.f32 %v724, %v990
      %v1074 = vadd.f32 %v726, %v992
      %v1075 = vadd.f32 %v729, %v995
      %v1076 = vadd.f32 %v731, %v997
      %v1077 = vadd.f32 %v734, %v1000
      %v1078 = vadd.f32 %v736, %v1002
      %v1079 = vadd.f32 %v739, %v1005
      %v1080 = vadd.f32 %v741, %v1007
      %v1081 = vadd.f32 %v744, %v1010
      %v1082 = vadd.f32 %v746, %v1012
      %v1083 = vadd.f32 %v749, %v1015
      %v1084 = vadd.f32 %v751, %v1017
      %v1085 = vadd.f32 %v754, %v1020
      %v1086 = vadd.f32 %v756, %v1022
      %v1087 = vadd.f32 %v759, %v1025
      %v1088 = vadd.f32 %v761, %v1027
      %v1089 = vadd.f32 %v764, %v1030
      %v1090 = vadd.f32 %v766, %v1032
      %v1091 = vadd.f32 %v769, %v1035
      %v1092 = vadd.f32 %v771, %v1037
      %v1093 = vadd.f32 %v774, %v1040
      %v1094 = vadd.f32 %v776, %v1042
      %v1095 = vadd.f32 %v779, %v1045
      %v1096 = vadd.f32 %v781, %v1047
      %v1097 = vld [vmem:[%s246 + $0x18] sm:$0xff]
      %v1098 = vld [vmem:[%s246 + $0x20] sm:$0xff]
      %v1099 = vld [vmem:[%s246 + $0x28] sm:$0xff]
      %v1100 = vld [vmem:[%s246 + $0x30] sm:$0xff]
      %v1101 = vld [vmem:[%s246 + $0x38] sm:$0xff]
      %v1102 = vld [vmem:[%s246 + $0x40] sm:$0xff]
      %v1103 = vld [vmem:[%s246 + $0x48] sm:$0xff]
      %v1104 = vld [vmem:[%s246 + $0x50] sm:$0xff]
      %v1105 = vld [vmem:[%s246 + $0x58] sm:$0xff]
      %v1106 = vld [vmem:[%s246 + $0x60] sm:$0xff]
      %v1107 = vld [vmem:[%s246 + $0x68] sm:$0xff]
      %v1108 = vld [vmem:[%s246 + $0x70] sm:$0xff]
      %v1109 = vld [vmem:[%s246 + $0x78] sm:$0xff]
      %v1110 = vld [vmem:[%s246 + $0x80] sm:$0xff]
      %v1111 = vld [vmem:[%s246 + $0x88] sm:$0xff]
      %v1112 = vld [vmem:[%s246 + $0x90] sm:$0xff]
      %v1113 = vld [vmem:[%s246 + $0x98] sm:$0xff]
      %v1114 = vld [vmem:[%s246 + $0xa0] sm:$0xff]
      %v1115 = vld [vmem:[%s246 + $0xa8] sm:$0xff]
      %v1116 = vld [vmem:[%s246 + $0xb0] sm:$0xff]
      %v1117 = vld [vmem:[%s246 + $0xb8] sm:$0xff]
      %v1118 = vld [vmem:[%s246 + $0xc0] sm:$0xff]
      %v1119 = vld [vmem:[%s246 + $0xc8] sm:$0xff]
      %v1120 = vld [vmem:[%s246 + $0xd0] sm:$0xff]
      %v1121 = vld [vmem:[%s246 + $0xd8] sm:$0xff]
      %v1122 = vld [vmem:[%s246 + $0xe0] sm:$0xff]
      %v1123 = vld [vmem:[%s246 + $0xe8] sm:$0xff]
      %v1124 = vld [vmem:[%s246 + $0xf0] sm:$0xff]
      %v1125 = vld [vmem:[%s246 + $0xf8] sm:$0xff]
      %v1126 = vld [vmem:[%s246 + $0x100] sm:$0xff]
      %v1127 = vld [vmem:[%s246 + $0x108] sm:$0xff]
      %v1128 = vld [vmem:[%s246 + $0x110] sm:$0xff]
      %v1129 = vld [vmem:[%s246 + $0x118] sm:$0xff]
      %v1130 = vld [vmem:[%s246 + $0x120] sm:$0xff]
      %v1131 = vld [vmem:[%s246 + $0x128] sm:$0xff]
      %v1132 = vld [vmem:[%s246 + $0x130] sm:$0xff]
      %v1133 = vld [vmem:[%s246 + $0x138] sm:$0xff]
      %v1134 = vld [vmem:[%s246 + $0x140] sm:$0xff]
      %v1135 = vld [vmem:[%s246 + $0x148] sm:$0xff]
      %v1136 = vld [vmem:[%s246 + $0x150] sm:$0xff]
      %v1137 = vld [vmem:[%s246 + $0x158] sm:$0xff]
      %v1138 = vld [vmem:[%s246 + $0x160] sm:$0xff]
      %v1139 = vld [vmem:[%s246 + $0x168] sm:$0xff]
      %v1140 = vld [vmem:[%s246 + $0x170] sm:$0xff]
      %v1141 = vld [vmem:[%s246 + $0x178] sm:$0xff]
      %v1142 = vld [vmem:[%s246 + $0x180] sm:$0xff]
      %v1143 = vld [vmem:[%s246 + $0x188] sm:$0xff]
      %v1144 = vld [vmem:[%s246 + $0x190] sm:$0xff]
      %v1145 = vpack.c.bf16 %v1098, %v1097
      %v1146 = vpack.c.bf16 %v1100, %v1099
      %v1147 = vpack.c.bf16 %v1102, %v1101
      %v1148 = vpack.c.bf16 %v1104, %v1103
      %v1149 = vpack.c.bf16 %v1106, %v1105
      %v1150 = vpack.c.bf16 %v1108, %v1107
      %v1151 = vpack.c.bf16 %v1110, %v1109
      %v1152 = vpack.c.bf16 %v1112, %v1111
      %v1153 = vpack.c.bf16 %v1114, %v1113
      %v1154 = vpack.c.bf16 %v1116, %v1115
      %v1155 = vpack.c.bf16 %v1118, %v1117
      %v1156 = vpack.c.bf16 %v1120, %v1119
      %v1157 = vpack.c.bf16 %v1122, %v1121
      %v1158 = vpack.c.bf16 %v1124, %v1123
      %v1159 = vpack.c.bf16 %v1126, %v1125
      %v1160 = vpack.c.bf16 %v1128, %v1127
      %v1161 = vpack.c.bf16 %v1130, %v1129
      %v1162 = vpack.c.bf16 %v1132, %v1131
      %v1163 = vpack.c.bf16 %v1134, %v1133
      %v1164 = vpack.c.bf16 %v1136, %v1135
      %v1165 = vpack.c.bf16 %v1138, %v1137
      %v1166 = vpack.c.bf16 %v1140, %v1139
      %v1167 = vpack.c.bf16 %v1142, %v1141
      %v1168 = vpack.c.bf16 %v1144, %v1143
      %s1169 = scalar_lea.vmem %s1, 192
      %v1170 = vld [vmem:[%s1169] sm:$0xf]
      %v1171 = vld [vmem:[%s1169 + $0x4] sm:$0xf]
      %v1172 = vld [vmem:[%s1169 + $0x8] sm:$0xf]
      %v1173 = vld [vmem:[%s1169 + $0xc] sm:$0xf]
      %v1174 = vld [vmem:[%s1169 + $0x10] sm:$0xf]
      %v1175 = vld [vmem:[%s1169 + $0x14] sm:$0xf]
      %v1176 = vld [vmem:[%s1169 + $0x18] sm:$0xf]
      %v1177 = vld [vmem:[%s1169 + $0x1c] sm:$0xf]
      %v1178 = vld [vmem:[%s1169 + $0x20] sm:$0xf]
      %v1179 = vld [vmem:[%s1169 + $0x24] sm:$0xf]
      %v1180 = vld [vmem:[%s1169 + $0x28] sm:$0xf]
      %v1181 = vld [vmem:[%s1169 + $0x2c] sm:$0xf]
      %v1182 = vld [vmem:[%s1169 + $0x30] sm:$0xf]
      %v1183 = vld [vmem:[%s1169 + $0x34] sm:$0xf]
      %v1184 = vld [vmem:[%s1169 + $0x38] sm:$0xf]
      %v1185 = vld [vmem:[%s1169 + $0x3c] sm:$0xf]
      %v1202 = vunpack.c.l.b16 %v1170
      %v1203 = vunpack.c.l.b16 %v1171
      %v1204 = vunpack.c.l.b16 %v1172
      %v1205 = vunpack.c.l.b16 %v1173
      %v1206 = vunpack.c.l.b16 %v1174
      %v1207 = vunpack.c.l.b16 %v1175
      %v1208 = vunpack.c.l.b16 %v1176
      %v1209 = vunpack.c.l.b16 %v1177
      %v1210 = vunpack.c.l.b16 %v1178
      %v1211 = vunpack.c.l.b16 %v1179
      %v1212 = vunpack.c.l.b16 %v1180
      %v1213 = vunpack.c.l.b16 %v1181
      %v1214 = vunpack.c.l.b16 %v1182
      %v1215 = vunpack.c.l.b16 %v1183
      %v1216 = vunpack.c.l.b16 %v1184
      %v1217 = vunpack.c.l.b16 %v1185
      %v1218 = vpack.c.b16 %v1203, %v1202
      %v1219 = vpack.c.b16 %v1205, %v1204
      %v1220 = vpack.c.b16 %v1207, %v1206
      %v1221 = vpack.c.b16 %v1209, %v1208
      %v1222 = vpack.c.b16 %v1211, %v1210
      %v1223 = vpack.c.b16 %v1213, %v1212
      %v1224 = vpack.c.b16 %v1215, %v1214
      %v1225 = vpack.c.b16 %v1217, %v1216
      %1234 = vmatpush.bf16.msra.mxu0 %v1225
      %1235 = vmatpush.bf16.msra.mxu0 %v1224
      %1236 = vmatpush.bf16.msra.mxu0 %v1223
      %1237 = vmatpush.bf16.msra.mxu0 %v1222
      %1238 = vmatpush.bf16.msra.mxu0 %v1221
      %1239 = vmatpush.bf16.msra.mxu0 %v1220
      %1240 = vmatpush.bf16.msra.mxu0 %v1219
      %1241 = vmatpush.bf16.msra.mxu0 %v1218
      %1242 = vmatmul.bf16.gmra.mxu0 %v1145
      %v1243 = vpop.f32.mrf.mxu0
      %v1244 = vadd.f32 0.0, %v1243
      %v1245 = vpop.f32.mrf.mxu0
      %v1246 = vadd.f32 0.0, %v1245
      %1247 = vmatmul.bf16.gmra.mxu0 %v1146
      %v1248 = vpop.f32.mrf.mxu0
      %v1249 = vadd.f32 0.0, %v1248
      %v1250 = vpop.f32.mrf.mxu0
      %v1251 = vadd.f32 0.0, %v1250
      %1252 = vmatmul.bf16.gmra.mxu0 %v1147
      %v1253 = vpop.f32.mrf.mxu0
      %v1254 = vadd.f32 0.0, %v1253
      %v1255 = vpop.f32.mrf.mxu0
      %v1256 = vadd.f32 0.0, %v1255
      %1257 = vmatmul.bf16.gmra.mxu0 %v1148
      %v1258 = vpop.f32.mrf.mxu0
      %v1259 = vadd.f32 0.0, %v1258
      %v1260 = vpop.f32.mrf.mxu0
      %v1261 = vadd.f32 0.0, %v1260
      %1262 = vmatmul.bf16.gmra.mxu0 %v1149
      %v1263 = vpop.f32.mrf.mxu0
      %v1264 = vadd.f32 0.0, %v1263
      %v1265 = vpop.f32.mrf.mxu0
      %v1266 = vadd.f32 0.0, %v1265
      %1267 = vmatmul.bf16.gmra.mxu0 %v1150
      %v1268 = vpop.f32.mrf.mxu0
      %v1269 = vadd.f32 0.0, %v1268
      %v1270 = vpop.f32.mrf.mxu0
      %v1271 = vadd.f32 0.0, %v1270
      %1272 = vmatmul.bf16.gmra.mxu0 %v1151
      %v1273 = vpop.f32.mrf.mxu0
      %v1274 = vadd.f32 0.0, %v1273
      %v1275 = vpop.f32.mrf.mxu0
      %v1276 = vadd.f32 0.0, %v1275
      %1277 = vmatmul.bf16.gmra.mxu0 %v1152
      %v1278 = vpop.f32.mrf.mxu0
      %v1279 = vadd.f32 0.0, %v1278
      %v1280 = vpop.f32.mrf.mxu0
      %v1281 = vadd.f32 0.0, %v1280
      %1282 = vmatmul.bf16.gmra.mxu0 %v1153
      %v1283 = vpop.f32.mrf.mxu0
      %v1284 = vadd.f32 0.0, %v1283
      %v1285 = vpop.f32.mrf.mxu0
      %v1286 = vadd.f32 0.0, %v1285
      %1287 = vmatmul.bf16.gmra.mxu0 %v1154
      %v1288 = vpop.f32.mrf.mxu0
      %v1289 = vadd.f32 0.0, %v1288
      %v1290 = vpop.f32.mrf.mxu0
      %v1291 = vadd.f32 0.0, %v1290
      %1292 = vmatmul.bf16.gmra.mxu0 %v1155
      %v1293 = vpop.f32.mrf.mxu0
      %v1294 = vadd.f32 0.0, %v1293
      %v1295 = vpop.f32.mrf.mxu0
      %v1296 = vadd.f32 0.0, %v1295
      %1297 = vmatmul.bf16.gmra.mxu0 %v1156
      %v1298 = vpop.f32.mrf.mxu0
      %v1299 = vadd.f32 0.0, %v1298
      %v1300 = vpop.f32.mrf.mxu0
      %v1301 = vadd.f32 0.0, %v1300
      %1302 = vmatmul.bf16.gmra.mxu0 %v1157
      %v1303 = vpop.f32.mrf.mxu0
      %v1304 = vadd.f32 0.0, %v1303
      %v1305 = vpop.f32.mrf.mxu0
      %v1306 = vadd.f32 0.0, %v1305
      %1307 = vmatmul.bf16.gmra.mxu0 %v1158
      %v1308 = vpop.f32.mrf.mxu0
      %v1309 = vadd.f32 0.0, %v1308
      %v1310 = vpop.f32.mrf.mxu0
      %v1311 = vadd.f32 0.0, %v1310
      %1312 = vmatmul.bf16.gmra.mxu0 %v1159
      %v1313 = vpop.f32.mrf.mxu0
      %v1314 = vadd.f32 0.0, %v1313
      %v1315 = vpop.f32.mrf.mxu0
      %v1316 = vadd.f32 0.0, %v1315
      %1317 = vmatmul.bf16.gmra.mxu0 %v1160
      %v1318 = vpop.f32.mrf.mxu0
      %v1319 = vadd.f32 0.0, %v1318
      %v1320 = vpop.f32.mrf.mxu0
      %v1321 = vadd.f32 0.0, %v1320
      %1322 = vmatmul.bf16.gmra.mxu0 %v1161
      %v1323 = vpop.f32.mrf.mxu0
      %v1324 = vadd.f32 0.0, %v1323
      %v1325 = vpop.f32.mrf.mxu0
      %v1326 = vadd.f32 0.0, %v1325
      %1327 = vmatmul.bf16.gmra.mxu0 %v1162
      %v1328 = vpop.f32.mrf.mxu0
      %v1329 = vadd.f32 0.0, %v1328
      %v1330 = vpop.f32.mrf.mxu0
      %v1331 = vadd.f32 0.0, %v1330
      %1332 = vmatmul.bf16.gmra.mxu0 %v1163
      %v1333 = vpop.f32.mrf.mxu0
      %v1334 = vadd.f32 0.0, %v1333
      %v1335 = vpop.f32.mrf.mxu0
      %v1336 = vadd.f32 0.0, %v1335
      %1337 = vmatmul.bf16.gmra.mxu0 %v1164
      %v1338 = vpop.f32.mrf.mxu0
      %v1339 = vadd.f32 0.0, %v1338
      %v1340 = vpop.f32.mrf.mxu0
      %v1341 = vadd.f32 0.0, %v1340
      %1342 = vmatmul.bf16.gmra.mxu0 %v1165
      %v1343 = vpop.f32.mrf.mxu0
      %v1344 = vadd.f32 0.0, %v1343
      %v1345 = vpop.f32.mrf.mxu0
      %v1346 = vadd.f32 0.0, %v1345
      %1347 = vmatmul.bf16.gmra.mxu0 %v1166
      %v1348 = vpop.f32.mrf.mxu0
      %v1349 = vadd.f32 0.0, %v1348
      %v1350 = vpop.f32.mrf.mxu0
      %v1351 = vadd.f32 0.0, %v1350
      %1352 = vmatmul.bf16.gmra.mxu0 %v1167
      %v1353 = vpop.f32.mrf.mxu0
      %v1354 = vadd.f32 0.0, %v1353
      %v1355 = vpop.f32.mrf.mxu0
      %v1356 = vadd.f32 0.0, %v1355
      %1357 = vmatmul.bf16.gmra.mxu0 %v1168
      %v1358 = vpop.f32.mrf.mxu0
      %v1359 = vadd.f32 0.0, %v1358
      %v1360 = vpop.f32.mrf.mxu0
      %v1361 = vadd.f32 0.0, %v1360
      %1362 = vdwg.mxu0
      %v1363 = vadd.f32 %v1049, %v1244
      %v1364 = vadd.f32 %v1050, %v1246
      %v1365 = vadd.f32 %v1051, %v1249
      %v1366 = vadd.f32 %v1052, %v1251
      %v1367 = vadd.f32 %v1053, %v1254
      %v1368 = vadd.f32 %v1054, %v1256
      %v1369 = vadd.f32 %v1055, %v1259
      %v1370 = vadd.f32 %v1056, %v1261
      %v1371 = vadd.f32 %v1057, %v1264
      %v1372 = vadd.f32 %v1058, %v1266
      %v1373 = vadd.f32 %v1059, %v1269
      %v1374 = vadd.f32 %v1060, %v1271
      %v1375 = vadd.f32 %v1061, %v1274
      %v1376 = vadd.f32 %v1062, %v1276
      %v1377 = vadd.f32 %v1063, %v1279
      %v1378 = vadd.f32 %v1064, %v1281
      %v1379 = vadd.f32 %v1065, %v1284
      %v1380 = vadd.f32 %v1066, %v1286
      %v1381 = vadd.f32 %v1067, %v1289
      %v1382 = vadd.f32 %v1068, %v1291
      %v1383 = vadd.f32 %v1069, %v1294
      %v1384 = vadd.f32 %v1070, %v1296
      %v1385 = vadd.f32 %v1071, %v1299
      %v1386 = vadd.f32 %v1072, %v1301
      %v1387 = vadd.f32 %v1073, %v1304
      %v1388 = vadd.f32 %v1074, %v1306
      %v1389 = vadd.f32 %v1075, %v1309
      %v1390 = vadd.f32 %v1076, %v1311
      %v1391 = vadd.f32 %v1077, %v1314
      %v1392 = vadd.f32 %v1078, %v1316
      %v1393 = vadd.f32 %v1079, %v1319
      %v1394 = vadd.f32 %v1080, %v1321
      %v1395 = vadd.f32 %v1081, %v1324
      %v1396 = vadd.f32 %v1082, %v1326
      %v1397 = vadd.f32 %v1083, %v1329
      %v1398 = vadd.f32 %v1084, %v1331
      %v1399 = vadd.f32 %v1085, %v1334
      %v1400 = vadd.f32 %v1086, %v1336
      %v1401 = vadd.f32 %v1087, %v1339
      %v1402 = vadd.f32 %v1088, %v1341
      %v1403 = vadd.f32 %v1089, %v1344
      %v1404 = vadd.f32 %v1090, %v1346
      %v1405 = vadd.f32 %v1091, %v1349
      %v1406 = vadd.f32 %v1092, %v1351
      %v1407 = vadd.f32 %v1093, %v1354
      %v1408 = vadd.f32 %v1094, %v1356
      %v1409 = vadd.f32 %v1095, %v1359
      %v1410 = vadd.f32 %v1096, %v1361
      %v1411 = vld [vmem:[%s246 + $0x19] sm:$0xff]
      %v1412 = vld [vmem:[%s246 + $0x21] sm:$0xff]
      %v1413 = vld [vmem:[%s246 + $0x29] sm:$0xff]
      %v1414 = vld [vmem:[%s246 + $0x31] sm:$0xff]
      %v1415 = vld [vmem:[%s246 + $0x39] sm:$0xff]
      %v1416 = vld [vmem:[%s246 + $0x41] sm:$0xff]
      %v1417 = vld [vmem:[%s246 + $0x49] sm:$0xff]
      %v1418 = vld [vmem:[%s246 + $0x51] sm:$0xff]
      %v1419 = vld [vmem:[%s246 + $0x59] sm:$0xff]
      %v1420 = vld [vmem:[%s246 + $0x61] sm:$0xff]
      %v1421 = vld [vmem:[%s246 + $0x69] sm:$0xff]
      %v1422 = vld [vmem:[%s246 + $0x71] sm:$0xff]
      %v1423 = vld [vmem:[%s246 + $0x79] sm:$0xff]
      %v1424 = vld [vmem:[%s246 + $0x81] sm:$0xff]
      %v1425 = vld [vmem:[%s246 + $0x89] sm:$0xff]
      %v1426 = vld [vmem:[%s246 + $0x91] sm:$0xff]
      %v1427 = vld [vmem:[%s246 + $0x99] sm:$0xff]
      %v1428 = vld [vmem:[%s246 + $0xa1] sm:$0xff]
      %v1429 = vld [vmem:[%s246 + $0xa9] sm:$0xff]
      %v1430 = vld [vmem:[%s246 + $0xb1] sm:$0xff]
      %v1431 = vld [vmem:[%s246 + $0xb9] sm:$0xff]
      %v1432 = vld [vmem:[%s246 + $0xc1] sm:$0xff]
      %v1433 = vld [vmem:[%s246 + $0xc9] sm:$0xff]
      %v1434 = vld [vmem:[%s246 + $0xd1] sm:$0xff]
      %v1435 = vld [vmem:[%s246 + $0xd9] sm:$0xff]
      %v1436 = vld [vmem:[%s246 + $0xe1] sm:$0xff]
      %v1437 = vld [vmem:[%s246 + $0xe9] sm:$0xff]
      %v1438 = vld [vmem:[%s246 + $0xf1] sm:$0xff]
      %v1439 = vld [vmem:[%s246 + $0xf9] sm:$0xff]
      %v1440 = vld [vmem:[%s246 + $0x101] sm:$0xff]
      %v1441 = vld [vmem:[%s246 + $0x109] sm:$0xff]
      %v1442 = vld [vmem:[%s246 + $0x111] sm:$0xff]
      %v1443 = vld [vmem:[%s246 + $0x119] sm:$0xff]
      %v1444 = vld [vmem:[%s246 + $0x121] sm:$0xff]
      %v1445 = vld [vmem:[%s246 + $0x129] sm:$0xff]
      %v1446 = vld [vmem:[%s246 + $0x131] sm:$0xff]
      %v1447 = vld [vmem:[%s246 + $0x139] sm:$0xff]
      %v1448 = vld [vmem:[%s246 + $0x141] sm:$0xff]
      %v1449 = vld [vmem:[%s246 + $0x149] sm:$0xff]
      %v1450 = vld [vmem:[%s246 + $0x151] sm:$0xff]
      %v1451 = vld [vmem:[%s246 + $0x159] sm:$0xff]
      %v1452 = vld [vmem:[%s246 + $0x161] sm:$0xff]
      %v1453 = vld [vmem:[%s246 + $0x169] sm:$0xff]
      %v1454 = vld [vmem:[%s246 + $0x171] sm:$0xff]
      %v1455 = vld [vmem:[%s246 + $0x179] sm:$0xff]
      %v1456 = vld [vmem:[%s246 + $0x181] sm:$0xff]
      %v1457 = vld [vmem:[%s246 + $0x189] sm:$0xff]
      %v1458 = vld [vmem:[%s246 + $0x191] sm:$0xff]
      %v1459 = vpack.c.bf16 %v1412, %v1411
      %v1460 = vpack.c.bf16 %v1414, %v1413
      %v1461 = vpack.c.bf16 %v1416, %v1415
      %v1462 = vpack.c.bf16 %v1418, %v1417
      %v1463 = vpack.c.bf16 %v1420, %v1419
      %v1464 = vpack.c.bf16 %v1422, %v1421
      %v1465 = vpack.c.bf16 %v1424, %v1423
      %v1466 = vpack.c.bf16 %v1426, %v1425
      %v1467 = vpack.c.bf16 %v1428, %v1427
      %v1468 = vpack.c.bf16 %v1430, %v1429
      %v1469 = vpack.c.bf16 %v1432, %v1431
      %v1470 = vpack.c.bf16 %v1434, %v1433
      %v1471 = vpack.c.bf16 %v1436, %v1435
      %v1472 = vpack.c.bf16 %v1438, %v1437
      %v1473 = vpack.c.bf16 %v1440, %v1439
      %v1474 = vpack.c.bf16 %v1442, %v1441
      %v1475 = vpack.c.bf16 %v1444, %v1443
      %v1476 = vpack.c.bf16 %v1446, %v1445
      %v1477 = vpack.c.bf16 %v1448, %v1447
      %v1478 = vpack.c.bf16 %v1450, %v1449
      %v1479 = vpack.c.bf16 %v1452, %v1451
      %v1480 = vpack.c.bf16 %v1454, %v1453
      %v1481 = vpack.c.bf16 %v1456, %v1455
      %v1482 = vpack.c.bf16 %v1458, %v1457
      %s1483 = scalar_lea.vmem %s1, 256
      %v1484 = vld [vmem:[%s1483] sm:$0xf]
      %v1485 = vld [vmem:[%s1483 + $0x4] sm:$0xf]
      %v1486 = vld [vmem:[%s1483 + $0x8] sm:$0xf]
      %v1487 = vld [vmem:[%s1483 + $0xc] sm:$0xf]
      %v1488 = vld [vmem:[%s1483 + $0x10] sm:$0xf]
      %v1489 = vld [vmem:[%s1483 + $0x14] sm:$0xf]
      %v1490 = vld [vmem:[%s1483 + $0x18] sm:$0xf]
      %v1491 = vld [vmem:[%s1483 + $0x1c] sm:$0xf]
      %v1492 = vld [vmem:[%s1483 + $0x20] sm:$0xf]
      %v1493 = vld [vmem:[%s1483 + $0x24] sm:$0xf]
      %v1494 = vld [vmem:[%s1483 + $0x28] sm:$0xf]
      %v1495 = vld [vmem:[%s1483 + $0x2c] sm:$0xf]
      %v1496 = vld [vmem:[%s1483 + $0x30] sm:$0xf]
      %v1497 = vld [vmem:[%s1483 + $0x34] sm:$0xf]
      %v1498 = vld [vmem:[%s1483 + $0x38] sm:$0xf]
      %v1499 = vld [vmem:[%s1483 + $0x3c] sm:$0xf]
      %v1516 = vunpack.c.l.b16 %v1484
      %v1517 = vunpack.c.l.b16 %v1485
      %v1518 = vunpack.c.l.b16 %v1486
      %v1519 = vunpack.c.l.b16 %v1487
      %v1520 = vunpack.c.l.b16 %v1488
      %v1521 = vunpack.c.l.b16 %v1489
      %v1522 = vunpack.c.l.b16 %v1490
      %v1523 = vunpack.c.l.b16 %v1491
      %v1524 = vunpack.c.l.b16 %v1492
      %v1525 = vunpack.c.l.b16 %v1493
      %v1526 = vunpack.c.l.b16 %v1494
      %v1527 = vunpack.c.l.b16 %v1495
      %v1528 = vunpack.c.l.b16 %v1496
      %v1529 = vunpack.c.l.b16 %v1497
      %v1530 = vunpack.c.l.b16 %v1498
      %v1531 = vunpack.c.l.b16 %v1499
      %v1532 = vpack.c.b16 %v1517, %v1516
      %v1533 = vpack.c.b16 %v1519, %v1518
      %v1534 = vpack.c.b16 %v1521, %v1520
      %v1535 = vpack.c.b16 %v1523, %v1522
      %v1536 = vpack.c.b16 %v1525, %v1524
      %v1537 = vpack.c.b16 %v1527, %v1526
      %v1538 = vpack.c.b16 %v1529, %v1528
      %v1539 = vpack.c.b16 %v1531, %v1530
      %1548 = vmatpush.bf16.msra.mxu0 %v1539
      %1549 = vmatpush.bf16.msra.mxu0 %v1538
      %1550 = vmatpush.bf16.msra.mxu0 %v1537
      %1551 = vmatpush.bf16.msra.mxu0 %v1536
      %1552 = vmatpush.bf16.msra.mxu0 %v1535
      %1553 = vmatpush.bf16.msra.mxu0 %v1534
      %1554 = vmatpush.bf16.msra.mxu0 %v1533
      %1555 = vmatpush.bf16.msra.mxu0 %v1532
      %1556 = vmatmul.bf16.gmra.mxu0 %v1459
      %v1557 = vpop.f32.mrf.mxu0
      %v1558 = vadd.f32 0.0, %v1557
      %v1559 = vpop.f32.mrf.mxu0
      %v1560 = vadd.f32 0.0, %v1559
      %1561 = vmatmul.bf16.gmra.mxu0 %v1460
      %v1562 = vpop.f32.mrf.mxu0
      %v1563 = vadd.f32 0.0, %v1562
      %v1564 = vpop.f32.mrf.mxu0
      %v1565 = vadd.f32 0.0, %v1564
      %1566 = vmatmul.bf16.gmra.mxu0 %v1461
      %v1567 = vpop.f32.mrf.mxu0
      %v1568 = vadd.f32 0.0, %v1567
      %v1569 = vpop.f32.mrf.mxu0
      %v1570 = vadd.f32 0.0, %v1569
      %1571 = vmatmul.bf16.gmra.mxu0 %v1462
      %v1572 = vpop.f32.mrf.mxu0
      %v1573 = vadd.f32 0.0, %v1572
      %v1574 = vpop.f32.mrf.mxu0
      %v1575 = vadd.f32 0.0, %v1574
      %1576 = vmatmul.bf16.gmra.mxu0 %v1463
      %v1577 = vpop.f32.mrf.mxu0
      %v1578 = vadd.f32 0.0, %v1577
      %v1579 = vpop.f32.mrf.mxu0
      %v1580 = vadd.f32 0.0, %v1579
      %1581 = vmatmul.bf16.gmra.mxu0 %v1464
      %v1582 = vpop.f32.mrf.mxu0
      %v1583 = vadd.f32 0.0, %v1582
      %v1584 = vpop.f32.mrf.mxu0
      %v1585 = vadd.f32 0.0, %v1584
      %1586 = vmatmul.bf16.gmra.mxu0 %v1465
      %v1587 = vpop.f32.mrf.mxu0
      %v1588 = vadd.f32 0.0, %v1587
      %v1589 = vpop.f32.mrf.mxu0
      %v1590 = vadd.f32 0.0, %v1589
      %1591 = vmatmul.bf16.gmra.mxu0 %v1466
      %v1592 = vpop.f32.mrf.mxu0
      %v1593 = vadd.f32 0.0, %v1592
      %v1594 = vpop.f32.mrf.mxu0
      %v1595 = vadd.f32 0.0, %v1594
      %1596 = vmatmul.bf16.gmra.mxu0 %v1467
      %v1597 = vpop.f32.mrf.mxu0
      %v1598 = vadd.f32 0.0, %v1597
      %v1599 = vpop.f32.mrf.mxu0
      %v1600 = vadd.f32 0.0, %v1599
      %1601 = vmatmul.bf16.gmra.mxu0 %v1468
      %v1602 = vpop.f32.mrf.mxu0
      %v1603 = vadd.f32 0.0, %v1602
      %v1604 = vpop.f32.mrf.mxu0
      %v1605 = vadd.f32 0.0, %v1604
      %1606 = vmatmul.bf16.gmra.mxu0 %v1469
      %v1607 = vpop.f32.mrf.mxu0
      %v1608 = vadd.f32 0.0, %v1607
      %v1609 = vpop.f32.mrf.mxu0
      %v1610 = vadd.f32 0.0, %v1609
      %1611 = vmatmul.bf16.gmra.mxu0 %v1470
      %v1612 = vpop.f32.mrf.mxu0
      %v1613 = vadd.f32 0.0, %v1612
      %v1614 = vpop.f32.mrf.mxu0
      %v1615 = vadd.f32 0.0, %v1614
      %1616 = vmatmul.bf16.gmra.mxu0 %v1471
      %v1617 = vpop.f32.mrf.mxu0
      %v1618 = vadd.f32 0.0, %v1617
      %v1619 = vpop.f32.mrf.mxu0
      %v1620 = vadd.f32 0.0, %v1619
      %1621 = vmatmul.bf16.gmra.mxu0 %v1472
      %v1622 = vpop.f32.mrf.mxu0
      %v1623 = vadd.f32 0.0, %v1622
      %v1624 = vpop.f32.mrf.mxu0
      %v1625 = vadd.f32 0.0, %v1624
      %1626 = vmatmul.bf16.gmra.mxu0 %v1473
      %v1627 = vpop.f32.mrf.mxu0
      %v1628 = vadd.f32 0.0, %v1627
      %v1629 = vpop.f32.mrf.mxu0
      %v1630 = vadd.f32 0.0, %v1629
      %1631 = vmatmul.bf16.gmra.mxu0 %v1474
      %v1632 = vpop.f32.mrf.mxu0
      %v1633 = vadd.f32 0.0, %v1632
      %v1634 = vpop.f32.mrf.mxu0
      %v1635 = vadd.f32 0.0, %v1634
      %1636 = vmatmul.bf16.gmra.mxu0 %v1475
      %v1637 = vpop.f32.mrf.mxu0
      %v1638 = vadd.f32 0.0, %v1637
      %v1639 = vpop.f32.mrf.mxu0
      %v1640 = vadd.f32 0.0, %v1639
      %1641 = vmatmul.bf16.gmra.mxu0 %v1476
      %v1642 = vpop.f32.mrf.mxu0
      %v1643 = vadd.f32 0.0, %v1642
      %v1644 = vpop.f32.mrf.mxu0
      %v1645 = vadd.f32 0.0, %v1644
      %1646 = vmatmul.bf16.gmra.mxu0 %v1477
      %v1647 = vpop.f32.mrf.mxu0
      %v1648 = vadd.f32 0.0, %v1647
      %v1649 = vpop.f32.mrf.mxu0
      %v1650 = vadd.f32 0.0, %v1649
      %1651 = vmatmul.bf16.gmra.mxu0 %v1478
      %v1652 = vpop.f32.mrf.mxu0
      %v1653 = vadd.f32 0.0, %v1652
      %v1654 = vpop.f32.mrf.mxu0
      %v1655 = vadd.f32 0.0, %v1654
      %1656 = vmatmul.bf16.gmra.mxu0 %v1479
      %v1657 = vpop.f32.mrf.mxu0
      %v1658 = vadd.f32 0.0, %v1657
      %v1659 = vpop.f32.mrf.mxu0
      %v1660 = vadd.f32 0.0, %v1659
      %1661 = vmatmul.bf16.gmra.mxu0 %v1480
      %v1662 = vpop.f32.mrf.mxu0
      %v1663 = vadd.f32 0.0, %v1662
      %v1664 = vpop.f32.mrf.mxu0
      %v1665 = vadd.f32 0.0, %v1664
      %1666 = vmatmul.bf16.gmra.mxu0 %v1481
      %v1667 = vpop.f32.mrf.mxu0
      %v1668 = vadd.f32 0.0, %v1667
      %v1669 = vpop.f32.mrf.mxu0
      %v1670 = vadd.f32 0.0, %v1669
      %1671 = vmatmul.bf16.gmra.mxu0 %v1482
      %v1672 = vpop.f32.mrf.mxu0
      %v1673 = vadd.f32 0.0, %v1672
      %v1674 = vpop.f32.mrf.mxu0
      %v1675 = vadd.f32 0.0, %v1674
      %1676 = vdwg.mxu0
      %v1677 = vadd.f32 %v1363, %v1558
      %v1678 = vadd.f32 %v1364, %v1560
      %v1679 = vadd.f32 %v1365, %v1563
      %v1680 = vadd.f32 %v1366, %v1565
      %v1681 = vadd.f32 %v1367, %v1568
      %v1682 = vadd.f32 %v1368, %v1570
      %v1683 = vadd.f32 %v1369, %v1573
      %v1684 = vadd.f32 %v1370, %v1575
      %v1685 = vadd.f32 %v1371, %v1578
      %v1686 = vadd.f32 %v1372, %v1580
      %v1687 = vadd.f32 %v1373, %v1583
      %v1688 = vadd.f32 %v1374, %v1585
      %v1689 = vadd.f32 %v1375, %v1588
      %v1690 = vadd.f32 %v1376, %v1590
      %v1691 = vadd.f32 %v1377, %v1593
      %v1692 = vadd.f32 %v1378, %v1595
      %v1693 = vadd.f32 %v1379, %v1598
      %v1694 = vadd.f32 %v1380, %v1600
      %v1695 = vadd.f32 %v1381, %v1603
      %v1696 = vadd.f32 %v1382, %v1605
      %v1697 = vadd.f32 %v1383, %v1608
      %v1698 = vadd.f32 %v1384, %v1610
      %v1699 = vadd.f32 %v1385, %v1613
      %v1700 = vadd.f32 %v1386, %v1615
      %v1701 = vadd.f32 %v1387, %v1618
      %v1702 = vadd.f32 %v1388, %v1620
      %v1703 = vadd.f32 %v1389, %v1623
      %v1704 = vadd.f32 %v1390, %v1625
      %v1705 = vadd.f32 %v1391, %v1628
      %v1706 = vadd.f32 %v1392, %v1630
      %v1707 = vadd.f32 %v1393, %v1633
      %v1708 = vadd.f32 %v1394, %v1635
      %v1709 = vadd.f32 %v1395, %v1638
      %v1710 = vadd.f32 %v1396, %v1640
      %v1711 = vadd.f32 %v1397, %v1643
      %v1712 = vadd.f32 %v1398, %v1645
      %v1713 = vadd.f32 %v1399, %v1648
      %v1714 = vadd.f32 %v1400, %v1650
      %v1715 = vadd.f32 %v1401, %v1653
      %v1716 = vadd.f32 %v1402, %v1655
      %v1717 = vadd.f32 %v1403, %v1658
      %v1718 = vadd.f32 %v1404, %v1660
      %v1719 = vadd.f32 %v1405, %v1663
      %v1720 = vadd.f32 %v1406, %v1665
      %v1721 = vadd.f32 %v1407, %v1668
      %v1722 = vadd.f32 %v1408, %v1670
      %v1723 = vadd.f32 %v1409, %v1673
      %v1724 = vadd.f32 %v1410, %v1675
      %v1725 = vld [vmem:[%s246 + $0x1a] sm:$0xff]
      %v1726 = vld [vmem:[%s246 + $0x22] sm:$0xff]
      %v1727 = vld [vmem:[%s246 + $0x2a] sm:$0xff]
      %v1728 = vld [vmem:[%s246 + $0x32] sm:$0xff]
      %v1729 = vld [vmem:[%s246 + $0x3a] sm:$0xff]
      %v1730 = vld [vmem:[%s246 + $0x42] sm:$0xff]
      %v1731 = vld [vmem:[%s246 + $0x4a] sm:$0xff]
      %v1732 = vld [vmem:[%s246 + $0x52] sm:$0xff]
      %v1733 = vld [vmem:[%s246 + $0x5a] sm:$0xff]
      %v1734 = vld [vmem:[%s246 + $0x62] sm:$0xff]
      %v1735 = vld [vmem:[%s246 + $0x6a] sm:$0xff]
      %v1736 = vld [vmem:[%s246 + $0x72] sm:$0xff]
      %v1737 = vld [vmem:[%s246 + $0x7a] sm:$0xff]
      %v1738 = vld [vmem:[%s246 + $0x82] sm:$0xff]
      %v1739 = vld [vmem:[%s246 + $0x8a] sm:$0xff]
      %v1740 = vld [vmem:[%s246 + $0x92] sm:$0xff]
      %v1741 = vld [vmem:[%s246 + $0x9a] sm:$0xff]
      %v1742 = vld [vmem:[%s246 + $0xa2] sm:$0xff]
      %v1743 = vld [vmem:[%s246 + $0xaa] sm:$0xff]
      %v1744 = vld [vmem:[%s246 + $0xb2] sm:$0xff]
      %v1745 = vld [vmem:[%s246 + $0xba] sm:$0xff]
      %v1746 = vld [vmem:[%s246 + $0xc2] sm:$0xff]
      %v1747 = vld [vmem:[%s246 + $0xca] sm:$0xff]
      %v1748 = vld [vmem:[%s246 + $0xd2] sm:$0xff]
      %v1749 = vld [vmem:[%s246 + $0xda] sm:$0xff]
      %v1750 = vld [vmem:[%s246 + $0xe2] sm:$0xff]
      %v1751 = vld [vmem:[%s246 + $0xea] sm:$0xff]
      %v1752 = vld [vmem:[%s246 + $0xf2] sm:$0xff]
      %v1753 = vld [vmem:[%s246 + $0xfa] sm:$0xff]
      %v1754 = vld [vmem:[%s246 + $0x102] sm:$0xff]
      %v1755 = vld [vmem:[%s246 + $0x10a] sm:$0xff]
      %v1756 = vld [vmem:[%s246 + $0x112] sm:$0xff]
      %v1757 = vld [vmem:[%s246 + $0x11a] sm:$0xff]
      %v1758 = vld [vmem:[%s246 + $0x122] sm:$0xff]
      %v1759 = vld [vmem:[%s246 + $0x12a] sm:$0xff]
      %v1760 = vld [vmem:[%s246 + $0x132] sm:$0xff]
      %v1761 = vld [vmem:[%s246 + $0x13a] sm:$0xff]
      %v1762 = vld [vmem:[%s246 + $0x142] sm:$0xff]
      %v1763 = vld [vmem:[%s246 + $0x14a] sm:$0xff]
      %v1764 = vld [vmem:[%s246 + $0x152] sm:$0xff]
      %v1765 = vld [vmem:[%s246 + $0x15a] sm:$0xff]
      %v1766 = vld [vmem:[%s246 + $0x162] sm:$0xff]
      %v1767 = vld [vmem:[%s246 + $0x16a] sm:$0xff]
      %v1768 = vld [vmem:[%s246 + $0x172] sm:$0xff]
      %v1769 = vld [vmem:[%s246 + $0x17a] sm:$0xff]
      %v1770 = vld [vmem:[%s246 + $0x182] sm:$0xff]
      %v1771 = vld [vmem:[%s246 + $0x18a] sm:$0xff]
      %v1772 = vld [vmem:[%s246 + $0x192] sm:$0xff]
      %v1773 = vpack.c.bf16 %v1726, %v1725
      %v1774 = vpack.c.bf16 %v1728, %v1727
      %v1775 = vpack.c.bf16 %v1730, %v1729
      %v1776 = vpack.c.bf16 %v1732, %v1731
      %v1777 = vpack.c.bf16 %v1734, %v1733
      %v1778 = vpack.c.bf16 %v1736, %v1735
      %v1779 = vpack.c.bf16 %v1738, %v1737
      %v1780 = vpack.c.bf16 %v1740, %v1739
      %v1781 = vpack.c.bf16 %v1742, %v1741
      %v1782 = vpack.c.bf16 %v1744, %v1743
      %v1783 = vpack.c.bf16 %v1746, %v1745
      %v1784 = vpack.c.bf16 %v1748, %v1747
      %v1785 = vpack.c.bf16 %v1750, %v1749
      %v1786 = vpack.c.bf16 %v1752, %v1751
      %v1787 = vpack.c.bf16 %v1754, %v1753
      %v1788 = vpack.c.bf16 %v1756, %v1755
      %v1789 = vpack.c.bf16 %v1758, %v1757
      %v1790 = vpack.c.bf16 %v1760, %v1759
      %v1791 = vpack.c.bf16 %v1762, %v1761
      %v1792 = vpack.c.bf16 %v1764, %v1763
      %v1793 = vpack.c.bf16 %v1766, %v1765
      %v1794 = vpack.c.bf16 %v1768, %v1767
      %v1795 = vpack.c.bf16 %v1770, %v1769
      %v1796 = vpack.c.bf16 %v1772, %v1771
      %s1797 = scalar_lea.vmem %s1, 320
      %v1798 = vld [vmem:[%s1797] sm:$0xf]
      %v1799 = vld [vmem:[%s1797 + $0x4] sm:$0xf]
      %v1800 = vld [vmem:[%s1797 + $0x8] sm:$0xf]
      %v1801 = vld [vmem:[%s1797 + $0xc] sm:$0xf]
      %v1802 = vld [vmem:[%s1797 + $0x10] sm:$0xf]
      %v1803 = vld [vmem:[%s1797 + $0x14] sm:$0xf]
      %v1804 = vld [vmem:[%s1797 + $0x18] sm:$0xf]
      %v1805 = vld [vmem:[%s1797 + $0x1c] sm:$0xf]
      %v1806 = vld [vmem:[%s1797 + $0x20] sm:$0xf]
      %v1807 = vld [vmem:[%s1797 + $0x24] sm:$0xf]
      %v1808 = vld [vmem:[%s1797 + $0x28] sm:$0xf]
      %v1809 = vld [vmem:[%s1797 + $0x2c] sm:$0xf]
      %v1810 = vld [vmem:[%s1797 + $0x30] sm:$0xf]
      %v1811 = vld [vmem:[%s1797 + $0x34] sm:$0xf]
      %v1812 = vld [vmem:[%s1797 + $0x38] sm:$0xf]
      %v1813 = vld [vmem:[%s1797 + $0x3c] sm:$0xf]
      %v1830 = vunpack.c.l.b16 %v1798
      %v1831 = vunpack.c.l.b16 %v1799
      %v1832 = vunpack.c.l.b16 %v1800
      %v1833 = vunpack.c.l.b16 %v1801
      %v1834 = vunpack.c.l.b16 %v1802
      %v1835 = vunpack.c.l.b16 %v1803
      %v1836 = vunpack.c.l.b16 %v1804
      %v1837 = vunpack.c.l.b16 %v1805
      %v1838 = vunpack.c.l.b16 %v1806
      %v1839 = vunpack.c.l.b16 %v1807
      %v1840 = vunpack.c.l.b16 %v1808
      %v1841 = vunpack.c.l.b16 %v1809
      %v1842 = vunpack.c.l.b16 %v1810
      %v1843 = vunpack.c.l.b16 %v1811
      %v1844 = vunpack.c.l.b16 %v1812
      %v1845 = vunpack.c.l.b16 %v1813
      %v1846 = vpack.c.b16 %v1831, %v1830
      %v1847 = vpack.c.b16 %v1833, %v1832
      %v1848 = vpack.c.b16 %v1835, %v1834
      %v1849 = vpack.c.b16 %v1837, %v1836
      %v1850 = vpack.c.b16 %v1839, %v1838
      %v1851 = vpack.c.b16 %v1841, %v1840
      %v1852 = vpack.c.b16 %v1843, %v1842
      %v1853 = vpack.c.b16 %v1845, %v1844
      %1862 = vmatpush.bf16.msra.mxu0 %v1853
      %1863 = vmatpush.bf16.msra.mxu0 %v1852
      %1864 = vmatpush.bf16.msra.mxu0 %v1851
      %1865 = vmatpush.bf16.msra.mxu0 %v1850
      %1866 = vmatpush.bf16.msra.mxu0 %v1849
      %1867 = vmatpush.bf16.msra.mxu0 %v1848
      %1868 = vmatpush.bf16.msra.mxu0 %v1847
      %1869 = vmatpush.bf16.msra.mxu0 %v1846
      %1870 = vmatmul.bf16.gmra.mxu0 %v1773
      %v1871 = vpop.f32.mrf.mxu0
      %v1872 = vadd.f32 0.0, %v1871
      %v1873 = vpop.f32.mrf.mxu0
      %v1874 = vadd.f32 0.0, %v1873
      %1875 = vmatmul.bf16.gmra.mxu0 %v1774
      %v1876 = vpop.f32.mrf.mxu0
      %v1877 = vadd.f32 0.0, %v1876
      %v1878 = vpop.f32.mrf.mxu0
      %v1879 = vadd.f32 0.0, %v1878
      %1880 = vmatmul.bf16.gmra.mxu0 %v1775
      %v1881 = vpop.f32.mrf.mxu0
      %v1882 = vadd.f32 0.0, %v1881
      %v1883 = vpop.f32.mrf.mxu0
      %v1884 = vadd.f32 0.0, %v1883
      %1885 = vmatmul.bf16.gmra.mxu0 %v1776
      %v1886 = vpop.f32.mrf.mxu0
      %v1887 = vadd.f32 0.0, %v1886
      %v1888 = vpop.f32.mrf.mxu0
      %v1889 = vadd.f32 0.0, %v1888
      %1890 = vmatmul.bf16.gmra.mxu0 %v1777
      %v1891 = vpop.f32.mrf.mxu0
      %v1892 = vadd.f32 0.0, %v1891
      %v1893 = vpop.f32.mrf.mxu0
      %v1894 = vadd.f32 0.0, %v1893
      %1895 = vmatmul.bf16.gmra.mxu0 %v1778
      %v1896 = vpop.f32.mrf.mxu0
      %v1897 = vadd.f32 0.0, %v1896
      %v1898 = vpop.f32.mrf.mxu0
      %v1899 = vadd.f32 0.0, %v1898
      %1900 = vmatmul.bf16.gmra.mxu0 %v1779
      %v1901 = vpop.f32.mrf.mxu0
      %v1902 = vadd.f32 0.0, %v1901
      %v1903 = vpop.f32.mrf.mxu0
      %v1904 = vadd.f32 0.0, %v1903
      %1905 = vmatmul.bf16.gmra.mxu0 %v1780
      %v1906 = vpop.f32.mrf.mxu0
      %v1907 = vadd.f32 0.0, %v1906
      %v1908 = vpop.f32.mrf.mxu0
      %v1909 = vadd.f32 0.0, %v1908
      %1910 = vmatmul.bf16.gmra.mxu0 %v1781
      %v1911 = vpop.f32.mrf.mxu0
      %v1912 = vadd.f32 0.0, %v1911
      %v1913 = vpop.f32.mrf.mxu0
      %v1914 = vadd.f32 0.0, %v1913
      %1915 = vmatmul.bf16.gmra.mxu0 %v1782
      %v1916 = vpop.f32.mrf.mxu0
      %v1917 = vadd.f32 0.0, %v1916
      %v1918 = vpop.f32.mrf.mxu0
      %v1919 = vadd.f32 0.0, %v1918
      %1920 = vmatmul.bf16.gmra.mxu0 %v1783
      %v1921 = vpop.f32.mrf.mxu0
      %v1922 = vadd.f32 0.0, %v1921
      %v1923 = vpop.f32.mrf.mxu0
      %v1924 = vadd.f32 0.0, %v1923
      %1925 = vmatmul.bf16.gmra.mxu0 %v1784
      %v1926 = vpop.f32.mrf.mxu0
      %v1927 = vadd.f32 0.0, %v1926
      %v1928 = vpop.f32.mrf.mxu0
      %v1929 = vadd.f32 0.0, %v1928
      %1930 = vmatmul.bf16.gmra.mxu0 %v1785
      %v1931 = vpop.f32.mrf.mxu0
      %v1932 = vadd.f32 0.0, %v1931
      %v1933 = vpop.f32.mrf.mxu0
      %v1934 = vadd.f32 0.0, %v1933
      %1935 = vmatmul.bf16.gmra.mxu0 %v1786
      %v1936 = vpop.f32.mrf.mxu0
      %v1937 = vadd.f32 0.0, %v1936
      %v1938 = vpop.f32.mrf.mxu0
      %v1939 = vadd.f32 0.0, %v1938
      %1940 = vmatmul.bf16.gmra.mxu0 %v1787
      %v1941 = vpop.f32.mrf.mxu0
      %v1942 = vadd.f32 0.0, %v1941
      %v1943 = vpop.f32.mrf.mxu0
      %v1944 = vadd.f32 0.0, %v1943
      %1945 = vmatmul.bf16.gmra.mxu0 %v1788
      %v1946 = vpop.f32.mrf.mxu0
      %v1947 = vadd.f32 0.0, %v1946
      %v1948 = vpop.f32.mrf.mxu0
      %v1949 = vadd.f32 0.0, %v1948
      %1950 = vmatmul.bf16.gmra.mxu0 %v1789
      %v1951 = vpop.f32.mrf.mxu0
      %v1952 = vadd.f32 0.0, %v1951
      %v1953 = vpop.f32.mrf.mxu0
      %v1954 = vadd.f32 0.0, %v1953
      %1955 = vmatmul.bf16.gmra.mxu0 %v1790
      %v1956 = vpop.f32.mrf.mxu0
      %v1957 = vadd.f32 0.0, %v1956
      %v1958 = vpop.f32.mrf.mxu0
      %v1959 = vadd.f32 0.0, %v1958
      %1960 = vmatmul.bf16.gmra.mxu0 %v1791
      %v1961 = vpop.f32.mrf.mxu0
      %v1962 = vadd.f32 0.0, %v1961
      %v1963 = vpop.f32.mrf.mxu0
      %v1964 = vadd.f32 0.0, %v1963
      %1965 = vmatmul.bf16.gmra.mxu0 %v1792
      %v1966 = vpop.f32.mrf.mxu0
      %v1967 = vadd.f32 0.0, %v1966
      %v1968 = vpop.f32.mrf.mxu0
      %v1969 = vadd.f32 0.0, %v1968
      %1970 = vmatmul.bf16.gmra.mxu0 %v1793
      %v1971 = vpop.f32.mrf.mxu0
      %v1972 = vadd.f32 0.0, %v1971
      %v1973 = vpop.f32.mrf.mxu0
      %v1974 = vadd.f32 0.0, %v1973
      %1975 = vmatmul.bf16.gmra.mxu0 %v1794
      %v1976 = vpop.f32.mrf.mxu0
      %v1977 = vadd.f32 0.0, %v1976
      %v1978 = vpop.f32.mrf.mxu0
      %v1979 = vadd.f32 0.0, %v1978
      %1980 = vmatmul.bf16.gmra.mxu0 %v1795
      %v1981 = vpop.f32.mrf.mxu0
      %v1982 = vadd.f32 0.0, %v1981
      %v1983 = vpop.f32.mrf.mxu0
      %v1984 = vadd.f32 0.0, %v1983
      %1985 = vmatmul.bf16.gmra.mxu0 %v1796
      %v1986 = vpop.f32.mrf.mxu0
      %v1987 = vadd.f32 0.0, %v1986
      %v1988 = vpop.f32.mrf.mxu0
      %v1989 = vadd.f32 0.0, %v1988
      %1990 = vdwg.mxu0
      %v1991 = vadd.f32 %v1677, %v1872
      %v1992 = vadd.f32 %v1678, %v1874
      %v1993 = vadd.f32 %v1679, %v1877
      %v1994 = vadd.f32 %v1680, %v1879
      %v1995 = vadd.f32 %v1681, %v1882
      %v1996 = vadd.f32 %v1682, %v1884
      %v1997 = vadd.f32 %v1683, %v1887
      %v1998 = vadd.f32 %v1684, %v1889
      %v1999 = vadd.f32 %v1685, %v1892
      %v2000 = vadd.f32 %v1686, %v1894
      %v2001 = vadd.f32 %v1687, %v1897
      %v2002 = vadd.f32 %v1688, %v1899
      %v2003 = vadd.f32 %v1689, %v1902
      %v2004 = vadd.f32 %v1690, %v1904
      %v2005 = vadd.f32 %v1691, %v1907
      %v2006 = vadd.f32 %v1692, %v1909
      %v2007 = vadd.f32 %v1693, %v1912
      %v2008 = vadd.f32 %v1694, %v1914
      %v2009 = vadd.f32 %v1695, %v1917
      %v2010 = vadd.f32 %v1696, %v1919
      %v2011 = vadd.f32 %v1697, %v1922
      %v2012 = vadd.f32 %v1698, %v1924
      %v2013 = vadd.f32 %v1699, %v1927
      %v2014 = vadd.f32 %v1700, %v1929
      %v2015 = vadd.f32 %v1701, %v1932
      %v2016 = vadd.f32 %v1702, %v1934
      %v2017 = vadd.f32 %v1703, %v1937
      %v2018 = vadd.f32 %v1704, %v1939
      %v2019 = vadd.f32 %v1705, %v1942
      %v2020 = vadd.f32 %v1706, %v1944
      %v2021 = vadd.f32 %v1707, %v1947
      %v2022 = vadd.f32 %v1708, %v1949
      %v2023 = vadd.f32 %v1709, %v1952
      %v2024 = vadd.f32 %v1710, %v1954
      %v2025 = vadd.f32 %v1711, %v1957
      %v2026 = vadd.f32 %v1712, %v1959
      %v2027 = vadd.f32 %v1713, %v1962
      %v2028 = vadd.f32 %v1714, %v1964
      %v2029 = vadd.f32 %v1715, %v1967
      %v2030 = vadd.f32 %v1716, %v1969
      %v2031 = vadd.f32 %v1717, %v1972
      %v2032 = vadd.f32 %v1718, %v1974
      %v2033 = vadd.f32 %v1719, %v1977
      %v2034 = vadd.f32 %v1720, %v1979
      %v2035 = vadd.f32 %v1721, %v1982
      %v2036 = vadd.f32 %v1722, %v1984
      %v2037 = vadd.f32 %v1723, %v1987
      %v2038 = vadd.f32 %v1724, %v1989
      %v2039 = vld [vmem:[%s246 + $0x30] sm:$0xff]
      %v2040 = vld [vmem:[%s246 + $0x38] sm:$0xff]
      %v2041 = vld [vmem:[%s246 + $0x40] sm:$0xff]
      %v2042 = vld [vmem:[%s246 + $0x48] sm:$0xff]
      %v2043 = vld [vmem:[%s246 + $0x50] sm:$0xff]
      %v2044 = vld [vmem:[%s246 + $0x58] sm:$0xff]
      %v2045 = vld [vmem:[%s246 + $0x60] sm:$0xff]
      %v2046 = vld [vmem:[%s246 + $0x68] sm:$0xff]
      %v2047 = vld [vmem:[%s246 + $0x70] sm:$0xff]
      %v2048 = vld [vmem:[%s246 + $0x78] sm:$0xff]
      %v2049 = vld [vmem:[%s246 + $0x80] sm:$0xff]
      %v2050 = vld [vmem:[%s246 + $0x88] sm:$0xff]
      %v2051 = vld [vmem:[%s246 + $0x90] sm:$0xff]
      %v2052 = vld [vmem:[%s246 + $0x98] sm:$0xff]
      %v2053 = vld [vmem:[%s246 + $0xa0] sm:$0xff]
      %v2054 = vld [vmem:[%s246 + $0xa8] sm:$0xff]
      %v2055 = vld [vmem:[%s246 + $0xb0] sm:$0xff]
      %v2056 = vld [vmem:[%s246 + $0xb8] sm:$0xff]
      %v2057 = vld [vmem:[%s246 + $0xc0] sm:$0xff]
      %v2058 = vld [vmem:[%s246 + $0xc8] sm:$0xff]
      %v2059 = vld [vmem:[%s246 + $0xd0] sm:$0xff]
      %v2060 = vld [vmem:[%s246 + $0xd8] sm:$0xff]
      %v2061 = vld [vmem:[%s246 + $0xe0] sm:$0xff]
      %v2062 = vld [vmem:[%s246 + $0xe8] sm:$0xff]
      %v2063 = vld [vmem:[%s246 + $0xf0] sm:$0xff]
      %v2064 = vld [vmem:[%s246 + $0xf8] sm:$0xff]
      %v2065 = vld [vmem:[%s246 + $0x100] sm:$0xff]
      %v2066 = vld [vmem:[%s246 + $0x108] sm:$0xff]
      %v2067 = vld [vmem:[%s246 + $0x110] sm:$0xff]
      %v2068 = vld [vmem:[%s246 + $0x118] sm:$0xff]
      %v2069 = vld [vmem:[%s246 + $0x120] sm:$0xff]
      %v2070 = vld [vmem:[%s246 + $0x128] sm:$0xff]
      %v2071 = vld [vmem:[%s246 + $0x130] sm:$0xff]
      %v2072 = vld [vmem:[%s246 + $0x138] sm:$0xff]
      %v2073 = vld [vmem:[%s246 + $0x140] sm:$0xff]
      %v2074 = vld [vmem:[%s246 + $0x148] sm:$0xff]
      %v2075 = vld [vmem:[%s246 + $0x150] sm:$0xff]
      %v2076 = vld [vmem:[%s246 + $0x158] sm:$0xff]
      %v2077 = vld [vmem:[%s246 + $0x160] sm:$0xff]
      %v2078 = vld [vmem:[%s246 + $0x168] sm:$0xff]
      %v2079 = vld [vmem:[%s246 + $0x170] sm:$0xff]
      %v2080 = vld [vmem:[%s246 + $0x178] sm:$0xff]
      %v2081 = vld [vmem:[%s246 + $0x180] sm:$0xff]
      %v2082 = vld [vmem:[%s246 + $0x188] sm:$0xff]
      %v2083 = vld [vmem:[%s246 + $0x190] sm:$0xff]
      %v2084 = vld [vmem:[%s246 + $0x198] sm:$0xff]
      %v2085 = vld [vmem:[%s246 + $0x1a0] sm:$0xff]
      %v2086 = vld [vmem:[%s246 + $0x1a8] sm:$0xff]
      %v2087 = vpack.c.bf16 %v2040, %v2039
      %v2088 = vpack.c.bf16 %v2042, %v2041
      %v2089 = vpack.c.bf16 %v2044, %v2043
      %v2090 = vpack.c.bf16 %v2046, %v2045
      %v2091 = vpack.c.bf16 %v2048, %v2047
      %v2092 = vpack.c.bf16 %v2050, %v2049
      %v2093 = vpack.c.bf16 %v2052, %v2051
      %v2094 = vpack.c.bf16 %v2054, %v2053
      %v2095 = vpack.c.bf16 %v2056, %v2055
      %v2096 = vpack.c.bf16 %v2058, %v2057
      %v2097 = vpack.c.bf16 %v2060, %v2059
      %v2098 = vpack.c.bf16 %v2062, %v2061
      %v2099 = vpack.c.bf16 %v2064, %v2063
      %v2100 = vpack.c.bf16 %v2066, %v2065
      %v2101 = vpack.c.bf16 %v2068, %v2067
      %v2102 = vpack.c.bf16 %v2070, %v2069
      %v2103 = vpack.c.bf16 %v2072, %v2071
      %v2104 = vpack.c.bf16 %v2074, %v2073
      %v2105 = vpack.c.bf16 %v2076, %v2075
      %v2106 = vpack.c.bf16 %v2078, %v2077
      %v2107 = vpack.c.bf16 %v2080, %v2079
      %v2108 = vpack.c.bf16 %v2082, %v2081
      %v2109 = vpack.c.bf16 %v2084, %v2083
      %v2110 = vpack.c.bf16 %v2086, %v2085
      %s2111 = scalar_lea.vmem %s1, 384
      %v2112 = vld [vmem:[%s2111] sm:$0xf]
      %v2113 = vld [vmem:[%s2111 + $0x4] sm:$0xf]
      %v2114 = vld [vmem:[%s2111 + $0x8] sm:$0xf]
      %v2115 = vld [vmem:[%s2111 + $0xc] sm:$0xf]
      %v2116 = vld [vmem:[%s2111 + $0x10] sm:$0xf]
      %v2117 = vld [vmem:[%s2111 + $0x14] sm:$0xf]
      %v2118 = vld [vmem:[%s2111 + $0x18] sm:$0xf]
      %v2119 = vld [vmem:[%s2111 + $0x1c] sm:$0xf]
      %v2120 = vld [vmem:[%s2111 + $0x20] sm:$0xf]
      %v2121 = vld [vmem:[%s2111 + $0x24] sm:$0xf]
      %v2122 = vld [vmem:[%s2111 + $0x28] sm:$0xf]
      %v2123 = vld [vmem:[%s2111 + $0x2c] sm:$0xf]
      %v2124 = vld [vmem:[%s2111 + $0x30] sm:$0xf]
      %v2125 = vld [vmem:[%s2111 + $0x34] sm:$0xf]
      %v2126 = vld [vmem:[%s2111 + $0x38] sm:$0xf]
      %v2127 = vld [vmem:[%s2111 + $0x3c] sm:$0xf]
      %v2144 = vunpack.c.l.b16 %v2112
      %v2145 = vunpack.c.l.b16 %v2113
      %v2146 = vunpack.c.l.b16 %v2114
      %v2147 = vunpack.c.l.b16 %v2115
      %v2148 = vunpack.c.l.b16 %v2116
      %v2149 = vunpack.c.l.b16 %v2117
      %v2150 = vunpack.c.l.b16 %v2118
      %v2151 = vunpack.c.l.b16 %v2119
      %v2152 = vunpack.c.l.b16 %v2120
      %v2153 = vunpack.c.l.b16 %v2121
      %v2154 = vunpack.c.l.b16 %v2122
      %v2155 = vunpack.c.l.b16 %v2123
      %v2156 = vunpack.c.l.b16 %v2124
      %v2157 = vunpack.c.l.b16 %v2125
      %v2158 = vunpack.c.l.b16 %v2126
      %v2159 = vunpack.c.l.b16 %v2127
      %v2160 = vpack.c.b16 %v2145, %v2144
      %v2161 = vpack.c.b16 %v2147, %v2146
      %v2162 = vpack.c.b16 %v2149, %v2148
      %v2163 = vpack.c.b16 %v2151, %v2150
      %v2164 = vpack.c.b16 %v2153, %v2152
      %v2165 = vpack.c.b16 %v2155, %v2154
      %v2166 = vpack.c.b16 %v2157, %v2156
      %v2167 = vpack.c.b16 %v2159, %v2158
      %2176 = vmatpush.bf16.msra.mxu0 %v2167
      %2177 = vmatpush.bf16.msra.mxu0 %v2166
      %2178 = vmatpush.bf16.msra.mxu0 %v2165
      %2179 = vmatpush.bf16.msra.mxu0 %v2164
      %2180 = vmatpush.bf16.msra.mxu0 %v2163
      %2181 = vmatpush.bf16.msra.mxu0 %v2162
      %2182 = vmatpush.bf16.msra.mxu0 %v2161
      %2183 = vmatpush.bf16.msra.mxu0 %v2160
      %2184 = vmatmul.bf16.gmra.mxu0 %v2087
      %v2185 = vpop.f32.mrf.mxu0
      %v2186 = vadd.f32 0.0, %v2185
      %v2187 = vpop.f32.mrf.mxu0
      %v2188 = vadd.f32 0.0, %v2187
      %2189 = vmatmul.bf16.gmra.mxu0 %v2088
      %v2190 = vpop.f32.mrf.mxu0
      %v2191 = vadd.f32 0.0, %v2190
      %v2192 = vpop.f32.mrf.mxu0
      %v2193 = vadd.f32 0.0, %v2192
      %2194 = vmatmul.bf16.gmra.mxu0 %v2089
      %v2195 = vpop.f32.mrf.mxu0
      %v2196 = vadd.f32 0.0, %v2195
      %v2197 = vpop.f32.mrf.mxu0
      %v2198 = vadd.f32 0.0, %v2197
      %2199 = vmatmul.bf16.gmra.mxu0 %v2090
      %v2200 = vpop.f32.mrf.mxu0
      %v2201 = vadd.f32 0.0, %v2200
      %v2202 = vpop.f32.mrf.mxu0
      %v2203 = vadd.f32 0.0, %v2202
      %2204 = vmatmul.bf16.gmra.mxu0 %v2091
      %v2205 = vpop.f32.mrf.mxu0
      %v2206 = vadd.f32 0.0, %v2205
      %v2207 = vpop.f32.mrf.mxu0
      %v2208 = vadd.f32 0.0, %v2207
      %2209 = vmatmul.bf16.gmra.mxu0 %v2092
      %v2210 = vpop.f32.mrf.mxu0
      %v2211 = vadd.f32 0.0, %v2210
      %v2212 = vpop.f32.mrf.mxu0
      %v2213 = vadd.f32 0.0, %v2212
      %2214 = vmatmul.bf16.gmra.mxu0 %v2093
      %v2215 = vpop.f32.mrf.mxu0
      %v2216 = vadd.f32 0.0, %v2215
      %v2217 = vpop.f32.mrf.mxu0
      %v2218 = vadd.f32 0.0, %v2217
      %2219 = vmatmul.bf16.gmra.mxu0 %v2094
      %v2220 = vpop.f32.mrf.mxu0
      %v2221 = vadd.f32 0.0, %v2220
      %v2222 = vpop.f32.mrf.mxu0
      %v2223 = vadd.f32 0.0, %v2222
      %2224 = vmatmul.bf16.gmra.mxu0 %v2095
      %v2225 = vpop.f32.mrf.mxu0
      %v2226 = vadd.f32 0.0, %v2225
      %v2227 = vpop.f32.mrf.mxu0
      %v2228 = vadd.f32 0.0, %v2227
      %2229 = vmatmul.bf16.gmra.mxu0 %v2096
      %v2230 = vpop.f32.mrf.mxu0
      %v2231 = vadd.f32 0.0, %v2230
      %v2232 = vpop.f32.mrf.mxu0
      %v2233 = vadd.f32 0.0, %v2232
      %2234 = vmatmul.bf16.gmra.mxu0 %v2097
      %v2235 = vpop.f32.mrf.mxu0
      %v2236 = vadd.f32 0.0, %v2235
      %v2237 = vpop.f32.mrf.mxu0
      %v2238 = vadd.f32 0.0, %v2237
      %2239 = vmatmul.bf16.gmra.mxu0 %v2098
      %v2240 = vpop.f32.mrf.mxu0
      %v2241 = vadd.f32 0.0, %v2240
      %v2242 = vpop.f32.mrf.mxu0
      %v2243 = vadd.f32 0.0, %v2242
      %2244 = vmatmul.bf16.gmra.mxu0 %v2099
      %v2245 = vpop.f32.mrf.mxu0
      %v2246 = vadd.f32 0.0, %v2245
      %v2247 = vpop.f32.mrf.mxu0
      %v2248 = vadd.f32 0.0, %v2247
      %2249 = vmatmul.bf16.gmra.mxu0 %v2100
      %v2250 = vpop.f32.mrf.mxu0
      %v2251 = vadd.f32 0.0, %v2250
      %v2252 = vpop.f32.mrf.mxu0
      %v2253 = vadd.f32 0.0, %v2252
      %2254 = vmatmul.bf16.gmra.mxu0 %v2101
      %v2255 = vpop.f32.mrf.mxu0
      %v2256 = vadd.f32 0.0, %v2255
      %v2257 = vpop.f32.mrf.mxu0
      %v2258 = vadd.f32 0.0, %v2257
      %2259 = vmatmul.bf16.gmra.mxu0 %v2102
      %v2260 = vpop.f32.mrf.mxu0
      %v2261 = vadd.f32 0.0, %v2260
      %v2262 = vpop.f32.mrf.mxu0
      %v2263 = vadd.f32 0.0, %v2262
      %2264 = vmatmul.bf16.gmra.mxu0 %v2103
      %v2265 = vpop.f32.mrf.mxu0
      %v2266 = vadd.f32 0.0, %v2265
      %v2267 = vpop.f32.mrf.mxu0
      %v2268 = vadd.f32 0.0, %v2267
      %2269 = vmatmul.bf16.gmra.mxu0 %v2104
      %v2270 = vpop.f32.mrf.mxu0
      %v2271 = vadd.f32 0.0, %v2270
      %v2272 = vpop.f32.mrf.mxu0
      %v2273 = vadd.f32 0.0, %v2272
      %2274 = vmatmul.bf16.gmra.mxu0 %v2105
      %v2275 = vpop.f32.mrf.mxu0
      %v2276 = vadd.f32 0.0, %v2275
      %v2277 = vpop.f32.mrf.mxu0
      %v2278 = vadd.f32 0.0, %v2277
      %2279 = vmatmul.bf16.gmra.mxu0 %v2106
      %v2280 = vpop.f32.mrf.mxu0
      %v2281 = vadd.f32 0.0, %v2280
      %v2282 = vpop.f32.mrf.mxu0
      %v2283 = vadd.f32 0.0, %v2282
      %2284 = vmatmul.bf16.gmra.mxu0 %v2107
      %v2285 = vpop.f32.mrf.mxu0
      %v2286 = vadd.f32 0.0, %v2285
      %v2287 = vpop.f32.mrf.mxu0
      %v2288 = vadd.f32 0.0, %v2287
      %2289 = vmatmul.bf16.gmra.mxu0 %v2108
      %v2290 = vpop.f32.mrf.mxu0
      %v2291 = vadd.f32 0.0, %v2290
      %v2292 = vpop.f32.mrf.mxu0
      %v2293 = vadd.f32 0.0, %v2292
      %2294 = vmatmul.bf16.gmra.mxu0 %v2109
      %v2295 = vpop.f32.mrf.mxu0
      %v2296 = vadd.f32 0.0, %v2295
      %v2297 = vpop.f32.mrf.mxu0
      %v2298 = vadd.f32 0.0, %v2297
      %2299 = vmatmul.bf16.gmra.mxu0 %v2110
      %v2300 = vpop.f32.mrf.mxu0
      %v2301 = vadd.f32 0.0, %v2300
      %v2302 = vpop.f32.mrf.mxu0
      %v2303 = vadd.f32 0.0, %v2302
      %2304 = vdwg.mxu0
      %v2305 = vadd.f32 %v1991, %v2186
      %v2306 = vadd.f32 %v1992, %v2188
      %v2307 = vadd.f32 %v1993, %v2191
      %v2308 = vadd.f32 %v1994, %v2193
      %v2309 = vadd.f32 %v1995, %v2196
      %v2310 = vadd.f32 %v1996, %v2198
      %v2311 = vadd.f32 %v1997, %v2201
      %v2312 = vadd.f32 %v1998, %v2203
      %v2313 = vadd.f32 %v1999, %v2206
      %v2314 = vadd.f32 %v2000, %v2208
      %v2315 = vadd.f32 %v2001, %v2211
      %v2316 = vadd.f32 %v2002, %v2213
      %v2317 = vadd.f32 %v2003, %v2216
      %v2318 = vadd.f32 %v2004, %v2218
      %v2319 = vadd.f32 %v2005, %v2221
      %v2320 = vadd.f32 %v2006, %v2223
      %v2321 = vadd.f32 %v2007, %v2226
      %v2322 = vadd.f32 %v2008, %v2228
      %v2323 = vadd.f32 %v2009, %v2231
      %v2324 = vadd.f32 %v2010, %v2233
      %v2325 = vadd.f32 %v2011, %v2236
      %v2326 = vadd.f32 %v2012, %v2238
      %v2327 = vadd.f32 %v2013, %v2241
      %v2328 = vadd.f32 %v2014, %v2243
      %v2329 = vadd.f32 %v2015, %v2246
      %v2330 = vadd.f32 %v2016, %v2248
      %v2331 = vadd.f32 %v2017, %v2251
      %v2332 = vadd.f32 %v2018, %v2253
      %v2333 = vadd.f32 %v2019, %v2256
      %v2334 = vadd.f32 %v2020, %v2258
      %v2335 = vadd.f32 %v2021, %v2261
      %v2336 = vadd.f32 %v2022, %v2263
      %v2337 = vadd.f32 %v2023, %v2266
      %v2338 = vadd.f32 %v2024, %v2268
      %v2339 = vadd.f32 %v2025, %v2271
      %v2340 = vadd.f32 %v2026, %v2273
      %v2341 = vadd.f32 %v2027, %v2276
      %v2342 = vadd.f32 %v2028, %v2278
      %v2343 = vadd.f32 %v2029, %v2281
      %v2344 = vadd.f32 %v2030, %v2283
      %v2345 = vadd.f32 %v2031, %v2286
      %v2346 = vadd.f32 %v2032, %v2288
      %v2347 = vadd.f32 %v2033, %v2291
      %v2348 = vadd.f32 %v2034, %v2293
      %v2349 = vadd.f32 %v2035, %v2296
      %v2350 = vadd.f32 %v2036, %v2298
      %v2351 = vadd.f32 %v2037, %v2301
      %v2352 = vadd.f32 %v2038, %v2303
      %v2353 = vld [vmem:[%s246 + $0x31] sm:$0xff]
      %v2354 = vld [vmem:[%s246 + $0x39] sm:$0xff]
      %v2355 = vld [vmem:[%s246 + $0x41] sm:$0xff]
      %v2356 = vld [vmem:[%s246 + $0x49] sm:$0xff]
      %v2357 = vld [vmem:[%s246 + $0x51] sm:$0xff]
      %v2358 = vld [vmem:[%s246 + $0x59] sm:$0xff]
      %v2359 = vld [vmem:[%s246 + $0x61] sm:$0xff]
      %v2360 = vld [vmem:[%s246 + $0x69] sm:$0xff]
      %v2361 = vld [vmem:[%s246 + $0x71] sm:$0xff]
      %v2362 = vld [vmem:[%s246 + $0x79] sm:$0xff]
      %v2363 = vld [vmem:[%s246 + $0x81] sm:$0xff]
      %v2364 = vld [vmem:[%s246 + $0x89] sm:$0xff]
      %v2365 = vld [vmem:[%s246 + $0x91] sm:$0xff]
      %v2366 = vld [vmem:[%s246 + $0x99] sm:$0xff]
      %v2367 = vld [vmem:[%s246 + $0xa1] sm:$0xff]
      %v2368 = vld [vmem:[%s246 + $0xa9] sm:$0xff]
      %v2369 = vld [vmem:[%s246 + $0xb1] sm:$0xff]
      %v2370 = vld [vmem:[%s246 + $0xb9] sm:$0xff]
      %v2371 = vld [vmem:[%s246 + $0xc1] sm:$0xff]
      %v2372 = vld [vmem:[%s246 + $0xc9] sm:$0xff]
      %v2373 = vld [vmem:[%s246 + $0xd1] sm:$0xff]
      %v2374 = vld [vmem:[%s246 + $0xd9] sm:$0xff]
      %v2375 = vld [vmem:[%s246 + $0xe1] sm:$0xff]
      %v2376 = vld [vmem:[%s246 + $0xe9] sm:$0xff]
      %v2377 = vld [vmem:[%s246 + $0xf1] sm:$0xff]
      %v2378 = vld [vmem:[%s246 + $0xf9] sm:$0xff]
      %v2379 = vld [vmem:[%s246 + $0x101] sm:$0xff]
      %v2380 = vld [vmem:[%s246 + $0x109] sm:$0xff]
      %v2381 = vld [vmem:[%s246 + $0x111] sm:$0xff]
      %v2382 = vld [vmem:[%s246 + $0x119] sm:$0xff]
      %v2383 = vld [vmem:[%s246 + $0x121] sm:$0xff]
      %v2384 = vld [vmem:[%s246 + $0x129] sm:$0xff]
      %v2385 = vld [vmem:[%s246 + $0x131] sm:$0xff]
      %v2386 = vld [vmem:[%s246 + $0x139] sm:$0xff]
      %v2387 = vld [vmem:[%s246 + $0x141] sm:$0xff]
      %v2388 = vld [vmem:[%s246 + $0x149] sm:$0xff]
      %v2389 = vld [vmem:[%s246 + $0x151] sm:$0xff]
      %v2390 = vld [vmem:[%s246 + $0x159] sm:$0xff]
      %v2391 = vld [vmem:[%s246 + $0x161] sm:$0xff]
      %v2392 = vld [vmem:[%s246 + $0x169] sm:$0xff]
      %v2393 = vld [vmem:[%s246 + $0x171] sm:$0xff]
      %v2394 = vld [vmem:[%s246 + $0x179] sm:$0xff]
      %v2395 = vld [vmem:[%s246 + $0x181] sm:$0xff]
      %v2396 = vld [vmem:[%s246 + $0x189] sm:$0xff]
      %v2397 = vld [vmem:[%s246 + $0x191] sm:$0xff]
      %v2398 = vld [vmem:[%s246 + $0x199] sm:$0xff]
      %v2399 = vld [vmem:[%s246 + $0x1a1] sm:$0xff]
      %v2400 = vld [vmem:[%s246 + $0x1a9] sm:$0xff]
      %v2401 = vpack.c.bf16 %v2354, %v2353
      %v2402 = vpack.c.bf16 %v2356, %v2355
      %v2403 = vpack.c.bf16 %v2358, %v2357
      %v2404 = vpack.c.bf16 %v2360, %v2359
      %v2405 = vpack.c.bf16 %v2362, %v2361
      %v2406 = vpack.c.bf16 %v2364, %v2363
      %v2407 = vpack.c.bf16 %v2366, %v2365
      %v2408 = vpack.c.bf16 %v2368, %v2367
      %v2409 = vpack.c.bf16 %v2370, %v2369
      %v2410 = vpack.c.bf16 %v2372, %v2371
      %v2411 = vpack.c.bf16 %v2374, %v2373
      %v2412 = vpack.c.bf16 %v2376, %v2375
      %v2413 = vpack.c.bf16 %v2378, %v2377
      %v2414 = vpack.c.bf16 %v2380, %v2379
      %v2415 = vpack.c.bf16 %v2382, %v2381
      %v2416 = vpack.c.bf16 %v2384, %v2383
      %v2417 = vpack.c.bf16 %v2386, %v2385
      %v2418 = vpack.c.bf16 %v2388, %v2387
      %v2419 = vpack.c.bf16 %v2390, %v2389
      %v2420 = vpack.c.bf16 %v2392, %v2391
      %v2421 = vpack.c.bf16 %v2394, %v2393
      %v2422 = vpack.c.bf16 %v2396, %v2395
      %v2423 = vpack.c.bf16 %v2398, %v2397
      %v2424 = vpack.c.bf16 %v2400, %v2399
      %s2425 = scalar_lea.vmem %s1, 448
      %v2426 = vld [vmem:[%s2425] sm:$0xf]
      %v2427 = vld [vmem:[%s2425 + $0x4] sm:$0xf]
      %v2428 = vld [vmem:[%s2425 + $0x8] sm:$0xf]
      %v2429 = vld [vmem:[%s2425 + $0xc] sm:$0xf]
      %v2430 = vld [vmem:[%s2425 + $0x10] sm:$0xf]
      %v2431 = vld [vmem:[%s2425 + $0x14] sm:$0xf]
      %v2432 = vld [vmem:[%s2425 + $0x18] sm:$0xf]
      %v2433 = vld [vmem:[%s2425 + $0x1c] sm:$0xf]
      %v2434 = vld [vmem:[%s2425 + $0x20] sm:$0xf]
      %v2435 = vld [vmem:[%s2425 + $0x24] sm:$0xf]
      %v2436 = vld [vmem:[%s2425 + $0x28] sm:$0xf]
      %v2437 = vld [vmem:[%s2425 + $0x2c] sm:$0xf]
      %v2438 = vld [vmem:[%s2425 + $0x30] sm:$0xf]
      %v2439 = vld [vmem:[%s2425 + $0x34] sm:$0xf]
      %v2440 = vld [vmem:[%s2425 + $0x38] sm:$0xf]
      %v2441 = vld [vmem:[%s2425 + $0x3c] sm:$0xf]
      %v2458 = vunpack.c.l.b16 %v2426
      %v2459 = vunpack.c.l.b16 %v2427
      %v2460 = vunpack.c.l.b16 %v2428
      %v2461 = vunpack.c.l.b16 %v2429
      %v2462 = vunpack.c.l.b16 %v2430
      %v2463 = vunpack.c.l.b16 %v2431
      %v2464 = vunpack.c.l.b16 %v2432
      %v2465 = vunpack.c.l.b16 %v2433
      %v2466 = vunpack.c.l.b16 %v2434
      %v2467 = vunpack.c.l.b16 %v2435
      %v2468 = vunpack.c.l.b16 %v2436
      %v2469 = vunpack.c.l.b16 %v2437
      %v2470 = vunpack.c.l.b16 %v2438
      %v2471 = vunpack.c.l.b16 %v2439
      %v2472 = vunpack.c.l.b16 %v2440
      %v2473 = vunpack.c.l.b16 %v2441
      %v2474 = vpack.c.b16 %v2459, %v2458
      %v2475 = vpack.c.b16 %v2461, %v2460
      %v2476 = vpack.c.b16 %v2463, %v2462
      %v2477 = vpack.c.b16 %v2465, %v2464
      %v2478 = vpack.c.b16 %v2467, %v2466
      %v2479 = vpack.c.b16 %v2469, %v2468
      %v2480 = vpack.c.b16 %v2471, %v2470
      %v2481 = vpack.c.b16 %v2473, %v2472
      %2490 = vmatpush.bf16.msra.mxu0 %v2481
      %2491 = vmatpush.bf16.msra.mxu0 %v2480
      %2492 = vmatpush.bf16.msra.mxu0 %v2479
      %2493 = vmatpush.bf16.msra.mxu0 %v2478
      %2494 = vmatpush.bf16.msra.mxu0 %v2477
      %2495 = vmatpush.bf16.msra.mxu0 %v2476
      %2496 = vmatpush.bf16.msra.mxu0 %v2475
      %2497 = vmatpush.bf16.msra.mxu0 %v2474
      %2498 = vmatmul.bf16.gmra.mxu0 %v2401
      %v2499 = vpop.f32.mrf.mxu0
      %v2500 = vadd.f32 0.0, %v2499
      %v2501 = vpop.f32.mrf.mxu0
      %v2502 = vadd.f32 0.0, %v2501
      %2503 = vmatmul.bf16.gmra.mxu0 %v2402
      %v2504 = vpop.f32.mrf.mxu0
      %v2505 = vadd.f32 0.0, %v2504
      %v2506 = vpop.f32.mrf.mxu0
      %v2507 = vadd.f32 0.0, %v2506
      %2508 = vmatmul.bf16.gmra.mxu0 %v2403
      %v2509 = vpop.f32.mrf.mxu0
      %v2510 = vadd.f32 0.0, %v2509
      %v2511 = vpop.f32.mrf.mxu0
      %v2512 = vadd.f32 0.0, %v2511
      %2513 = vmatmul.bf16.gmra.mxu0 %v2404
      %v2514 = vpop.f32.mrf.mxu0
      %v2515 = vadd.f32 0.0, %v2514
      %v2516 = vpop.f32.mrf.mxu0
      %v2517 = vadd.f32 0.0, %v2516
      %2518 = vmatmul.bf16.gmra.mxu0 %v2405
      %v2519 = vpop.f32.mrf.mxu0
      %v2520 = vadd.f32 0.0, %v2519
      %v2521 = vpop.f32.mrf.mxu0
      %v2522 = vadd.f32 0.0, %v2521
      %2523 = vmatmul.bf16.gmra.mxu0 %v2406
      %v2524 = vpop.f32.mrf.mxu0
      %v2525 = vadd.f32 0.0, %v2524
      %v2526 = vpop.f32.mrf.mxu0
      %v2527 = vadd.f32 0.0, %v2526
      %2528 = vmatmul.bf16.gmra.mxu0 %v2407
      %v2529 = vpop.f32.mrf.mxu0
      %v2530 = vadd.f32 0.0, %v2529
      %v2531 = vpop.f32.mrf.mxu0
      %v2532 = vadd.f32 0.0, %v2531
      %2533 = vmatmul.bf16.gmra.mxu0 %v2408
      %v2534 = vpop.f32.mrf.mxu0
      %v2535 = vadd.f32 0.0, %v2534
      %v2536 = vpop.f32.mrf.mxu0
      %v2537 = vadd.f32 0.0, %v2536
      %2538 = vmatmul.bf16.gmra.mxu0 %v2409
      %v2539 = vpop.f32.mrf.mxu0
      %v2540 = vadd.f32 0.0, %v2539
      %v2541 = vpop.f32.mrf.mxu0
      %v2542 = vadd.f32 0.0, %v2541
      %2543 = vmatmul.bf16.gmra.mxu0 %v2410
      %v2544 = vpop.f32.mrf.mxu0
      %v2545 = vadd.f32 0.0, %v2544
      %v2546 = vpop.f32.mrf.mxu0
      %v2547 = vadd.f32 0.0, %v2546
      %2548 = vmatmul.bf16.gmra.mxu0 %v2411
      %v2549 = vpop.f32.mrf.mxu0
      %v2550 = vadd.f32 0.0, %v2549
      %v2551 = vpop.f32.mrf.mxu0
      %v2552 = vadd.f32 0.0, %v2551
      %2553 = vmatmul.bf16.gmra.mxu0 %v2412
      %v2554 = vpop.f32.mrf.mxu0
      %v2555 = vadd.f32 0.0, %v2554
      %v2556 = vpop.f32.mrf.mxu0
      %v2557 = vadd.f32 0.0, %v2556
      %2558 = vmatmul.bf16.gmra.mxu0 %v2413
      %v2559 = vpop.f32.mrf.mxu0
      %v2560 = vadd.f32 0.0, %v2559
      %v2561 = vpop.f32.mrf.mxu0
      %v2562 = vadd.f32 0.0, %v2561
      %2563 = vmatmul.bf16.gmra.mxu0 %v2414
      %v2564 = vpop.f32.mrf.mxu0
      %v2565 = vadd.f32 0.0, %v2564
      %v2566 = vpop.f32.mrf.mxu0
      %v2567 = vadd.f32 0.0, %v2566
      %2568 = vmatmul.bf16.gmra.mxu0 %v2415
      %v2569 = vpop.f32.mrf.mxu0
      %v2570 = vadd.f32 0.0, %v2569
      %v2571 = vpop.f32.mrf.mxu0
      %v2572 = vadd.f32 0.0, %v2571
      %2573 = vmatmul.bf16.gmra.mxu0 %v2416
      %v2574 = vpop.f32.mrf.mxu0
      %v2575 = vadd.f32 0.0, %v2574
      %v2576 = vpop.f32.mrf.mxu0
      %v2577 = vadd.f32 0.0, %v2576
      %2578 = vmatmul.bf16.gmra.mxu0 %v2417
      %v2579 = vpop.f32.mrf.mxu0
      %v2580 = vadd.f32 0.0, %v2579
      %v2581 = vpop.f32.mrf.mxu0
      %v2582 = vadd.f32 0.0, %v2581
      %2583 = vmatmul.bf16.gmra.mxu0 %v2418
      %v2584 = vpop.f32.mrf.mxu0
      %v2585 = vadd.f32 0.0, %v2584
      %v2586 = vpop.f32.mrf.mxu0
      %v2587 = vadd.f32 0.0, %v2586
      %2588 = vmatmul.bf16.gmra.mxu0 %v2419
      %v2589 = vpop.f32.mrf.mxu0
      %v2590 = vadd.f32 0.0, %v2589
      %v2591 = vpop.f32.mrf.mxu0
      %v2592 = vadd.f32 0.0, %v2591
      %2593 = vmatmul.bf16.gmra.mxu0 %v2420
      %v2594 = vpop.f32.mrf.mxu0
      %v2595 = vadd.f32 0.0, %v2594
      %v2596 = vpop.f32.mrf.mxu0
      %v2597 = vadd.f32 0.0, %v2596
      %2598 = vmatmul.bf16.gmra.mxu0 %v2421
      %v2599 = vpop.f32.mrf.mxu0
      %v2600 = vadd.f32 0.0, %v2599
      %v2601 = vpop.f32.mrf.mxu0
      %v2602 = vadd.f32 0.0, %v2601
      %2603 = vmatmul.bf16.gmra.mxu0 %v2422
      %v2604 = vpop.f32.mrf.mxu0
      %v2605 = vadd.f32 0.0, %v2604
      %v2606 = vpop.f32.mrf.mxu0
      %v2607 = vadd.f32 0.0, %v2606
      %2608 = vmatmul.bf16.gmra.mxu0 %v2423
      %v2609 = vpop.f32.mrf.mxu0
      %v2610 = vadd.f32 0.0, %v2609
      %v2611 = vpop.f32.mrf.mxu0
      %v2612 = vadd.f32 0.0, %v2611
      %2613 = vmatmul.bf16.gmra.mxu0 %v2424
      %v2614 = vpop.f32.mrf.mxu0
      %v2615 = vadd.f32 0.0, %v2614
      %v2616 = vpop.f32.mrf.mxu0
      %v2617 = vadd.f32 0.0, %v2616
      %2618 = vdwg.mxu0
      %v2619 = vadd.f32 %v2305, %v2500
      %v2620 = vadd.f32 %v2306, %v2502
      %v2621 = vadd.f32 %v2307, %v2505
      %v2622 = vadd.f32 %v2308, %v2507
      %v2623 = vadd.f32 %v2309, %v2510
      %v2624 = vadd.f32 %v2310, %v2512
      %v2625 = vadd.f32 %v2311, %v2515
      %v2626 = vadd.f32 %v2312, %v2517
      %v2627 = vadd.f32 %v2313, %v2520
      %v2628 = vadd.f32 %v2314, %v2522
      %v2629 = vadd.f32 %v2315, %v2525
      %v2630 = vadd.f32 %v2316, %v2527
      %v2631 = vadd.f32 %v2317, %v2530
      %v2632 = vadd.f32 %v2318, %v2532
      %v2633 = vadd.f32 %v2319, %v2535
      %v2634 = vadd.f32 %v2320, %v2537
      %v2635 = vadd.f32 %v2321, %v2540
      %v2636 = vadd.f32 %v2322, %v2542
      %v2637 = vadd.f32 %v2323, %v2545
      %v2638 = vadd.f32 %v2324, %v2547
      %v2639 = vadd.f32 %v2325, %v2550
      %v2640 = vadd.f32 %v2326, %v2552
      %v2641 = vadd.f32 %v2327, %v2555
      %v2642 = vadd.f32 %v2328, %v2557
      %v2643 = vadd.f32 %v2329, %v2560
      %v2644 = vadd.f32 %v2330, %v2562
      %v2645 = vadd.f32 %v2331, %v2565
      %v2646 = vadd.f32 %v2332, %v2567
      %v2647 = vadd.f32 %v2333, %v2570
      %v2648 = vadd.f32 %v2334, %v2572
      %v2649 = vadd.f32 %v2335, %v2575
      %v2650 = vadd.f32 %v2336, %v2577
      %v2651 = vadd.f32 %v2337, %v2580
      %v2652 = vadd.f32 %v2338, %v2582
      %v2653 = vadd.f32 %v2339, %v2585
      %v2654 = vadd.f32 %v2340, %v2587
      %v2655 = vadd.f32 %v2341, %v2590
      %v2656 = vadd.f32 %v2342, %v2592
      %v2657 = vadd.f32 %v2343, %v2595
      %v2658 = vadd.f32 %v2344, %v2597
      %v2659 = vadd.f32 %v2345, %v2600
      %v2660 = vadd.f32 %v2346, %v2602
      %v2661 = vadd.f32 %v2347, %v2605
      %v2662 = vadd.f32 %v2348, %v2607
      %v2663 = vadd.f32 %v2349, %v2610
      %v2664 = vadd.f32 %v2350, %v2612
      %v2665 = vadd.f32 %v2351, %v2615
      %v2666 = vadd.f32 %v2352, %v2617
      %v2667 = vld [vmem:[%s246 + $0x32] sm:$0xff]
      %v2668 = vld [vmem:[%s246 + $0x3a] sm:$0xff]
      %v2669 = vld [vmem:[%s246 + $0x42] sm:$0xff]
      %v2670 = vld [vmem:[%s246 + $0x4a] sm:$0xff]
      %v2671 = vld [vmem:[%s246 + $0x52] sm:$0xff]
      %v2672 = vld [vmem:[%s246 + $0x5a] sm:$0xff]
      %v2673 = vld [vmem:[%s246 + $0x62] sm:$0xff]
      %v2674 = vld [vmem:[%s246 + $0x6a] sm:$0xff]
      %v2675 = vld [vmem:[%s246 + $0x72] sm:$0xff]
      %v2676 = vld [vmem:[%s246 + $0x7a] sm:$0xff]
      %v2677 = vld [vmem:[%s246 + $0x82] sm:$0xff]
      %v2678 = vld [vmem:[%s246 + $0x8a] sm:$0xff]
      %v2679 = vld [vmem:[%s246 + $0x92] sm:$0xff]
      %v2680 = vld [vmem:[%s246 + $0x9a] sm:$0xff]
      %v2681 = vld [vmem:[%s246 + $0xa2] sm:$0xff]
      %v2682 = vld [vmem:[%s246 + $0xaa] sm:$0xff]
      %v2683 = vld [vmem:[%s246 + $0xb2] sm:$0xff]
      %v2684 = vld [vmem:[%s246 + $0xba] sm:$0xff]
      %v2685 = vld [vmem:[%s246 + $0xc2] sm:$0xff]
      %v2686 = vld [vmem:[%s246 + $0xca] sm:$0xff]
      %v2687 = vld [vmem:[%s246 + $0xd2] sm:$0xff]
      %v2688 = vld [vmem:[%s246 + $0xda] sm:$0xff]
      %v2689 = vld [vmem:[%s246 + $0xe2] sm:$0xff]
      %v2690 = vld [vmem:[%s246 + $0xea] sm:$0xff]
      %v2691 = vld [vmem:[%s246 + $0xf2] sm:$0xff]
      %v2692 = vld [vmem:[%s246 + $0xfa] sm:$0xff]
      %v2693 = vld [vmem:[%s246 + $0x102] sm:$0xff]
      %v2694 = vld [vmem:[%s246 + $0x10a] sm:$0xff]
      %v2695 = vld [vmem:[%s246 + $0x112] sm:$0xff]
      %v2696 = vld [vmem:[%s246 + $0x11a] sm:$0xff]
      %v2697 = vld [vmem:[%s246 + $0x122] sm:$0xff]
      %v2698 = vld [vmem:[%s246 + $0x12a] sm:$0xff]
      %v2699 = vld [vmem:[%s246 + $0x132] sm:$0xff]
      %v2700 = vld [vmem:[%s246 + $0x13a] sm:$0xff]
      %v2701 = vld [vmem:[%s246 + $0x142] sm:$0xff]
      %v2702 = vld [vmem:[%s246 + $0x14a] sm:$0xff]
      %v2703 = vld [vmem:[%s246 + $0x152] sm:$0xff]
      %v2704 = vld [vmem:[%s246 + $0x15a] sm:$0xff]
      %v2705 = vld [vmem:[%s246 + $0x162] sm:$0xff]
      %v2706 = vld [vmem:[%s246 + $0x16a] sm:$0xff]
      %v2707 = vld [vmem:[%s246 + $0x172] sm:$0xff]
      %v2708 = vld [vmem:[%s246 + $0x17a] sm:$0xff]
      %v2709 = vld [vmem:[%s246 + $0x182] sm:$0xff]
      %v2710 = vld [vmem:[%s246 + $0x18a] sm:$0xff]
      %v2711 = vld [vmem:[%s246 + $0x192] sm:$0xff]
      %v2712 = vld [vmem:[%s246 + $0x19a] sm:$0xff]
      %v2713 = vld [vmem:[%s246 + $0x1a2] sm:$0xff]
      %v2714 = vld [vmem:[%s246 + $0x1aa] sm:$0xff]
      %v2715 = vpack.c.bf16 %v2668, %v2667
      %v2716 = vpack.c.bf16 %v2670, %v2669
      %v2717 = vpack.c.bf16 %v2672, %v2671
      %v2718 = vpack.c.bf16 %v2674, %v2673
      %v2719 = vpack.c.bf16 %v2676, %v2675
      %v2720 = vpack.c.bf16 %v2678, %v2677
      %v2721 = vpack.c.bf16 %v2680, %v2679
      %v2722 = vpack.c.bf16 %v2682, %v2681
      %v2723 = vpack.c.bf16 %v2684, %v2683
      %v2724 = vpack.c.bf16 %v2686, %v2685
      %v2725 = vpack.c.bf16 %v2688, %v2687
      %v2726 = vpack.c.bf16 %v2690, %v2689
      %v2727 = vpack.c.bf16 %v2692, %v2691
      %v2728 = vpack.c.bf16 %v2694, %v2693
      %v2729 = vpack.c.bf16 %v2696, %v2695
      %v2730 = vpack.c.bf16 %v2698, %v2697
      %v2731 = vpack.c.bf16 %v2700, %v2699
      %v2732 = vpack.c.bf16 %v2702, %v2701
      %v2733 = vpack.c.bf16 %v2704, %v2703
      %v2734 = vpack.c.bf16 %v2706, %v2705
      %v2735 = vpack.c.bf16 %v2708, %v2707
      %v2736 = vpack.c.bf16 %v2710, %v2709
      %v2737 = vpack.c.bf16 %v2712, %v2711
      %v2738 = vpack.c.bf16 %v2714, %v2713
      %s2739 = scalar_lea.vmem %s1, 512
      %v2740 = vld [vmem:[%s2739] sm:$0xf]
      %v2741 = vld [vmem:[%s2739 + $0x4] sm:$0xf]
      %v2742 = vld [vmem:[%s2739 + $0x8] sm:$0xf]
      %v2743 = vld [vmem:[%s2739 + $0xc] sm:$0xf]
      %v2744 = vld [vmem:[%s2739 + $0x10] sm:$0xf]
      %v2745 = vld [vmem:[%s2739 + $0x14] sm:$0xf]
      %v2746 = vld [vmem:[%s2739 + $0x18] sm:$0xf]
      %v2747 = vld [vmem:[%s2739 + $0x1c] sm:$0xf]
      %v2748 = vld [vmem:[%s2739 + $0x20] sm:$0xf]
      %v2749 = vld [vmem:[%s2739 + $0x24] sm:$0xf]
      %v2750 = vld [vmem:[%s2739 + $0x28] sm:$0xf]
      %v2751 = vld [vmem:[%s2739 + $0x2c] sm:$0xf]
      %v2752 = vld [vmem:[%s2739 + $0x30] sm:$0xf]
      %v2753 = vld [vmem:[%s2739 + $0x34] sm:$0xf]
      %v2754 = vld [vmem:[%s2739 + $0x38] sm:$0xf]
      %v2755 = vld [vmem:[%s2739 + $0x3c] sm:$0xf]
      %v2772 = vunpack.c.l.b16 %v2740
      %v2773 = vunpack.c.l.b16 %v2741
      %v2774 = vunpack.c.l.b16 %v2742
      %v2775 = vunpack.c.l.b16 %v2743
      %v2776 = vunpack.c.l.b16 %v2744
      %v2777 = vunpack.c.l.b16 %v2745
      %v2778 = vunpack.c.l.b16 %v2746
      %v2779 = vunpack.c.l.b16 %v2747
      %v2780 = vunpack.c.l.b16 %v2748
      %v2781 = vunpack.c.l.b16 %v2749
      %v2782 = vunpack.c.l.b16 %v2750
      %v2783 = vunpack.c.l.b16 %v2751
      %v2784 = vunpack.c.l.b16 %v2752
      %v2785 = vunpack.c.l.b16 %v2753
      %v2786 = vunpack.c.l.b16 %v2754
      %v2787 = vunpack.c.l.b16 %v2755
      %v2788 = vpack.c.b16 %v2773, %v2772
      %v2789 = vpack.c.b16 %v2775, %v2774
      %v2790 = vpack.c.b16 %v2777, %v2776
      %v2791 = vpack.c.b16 %v2779, %v2778
      %v2792 = vpack.c.b16 %v2781, %v2780
      %v2793 = vpack.c.b16 %v2783, %v2782
      %v2794 = vpack.c.b16 %v2785, %v2784
      %v2795 = vpack.c.b16 %v2787, %v2786
      %2804 = vmatpush.bf16.msra.mxu0 %v2795
      %2805 = vmatpush.bf16.msra.mxu0 %v2794
      %2806 = vmatpush.bf16.msra.mxu0 %v2793
      %2807 = vmatpush.bf16.msra.mxu0 %v2792
      %2808 = vmatpush.bf16.msra.mxu0 %v2791
      %2809 = vmatpush.bf16.msra.mxu0 %v2790
      %2810 = vmatpush.bf16.msra.mxu0 %v2789
      %2811 = vmatpush.bf16.msra.mxu0 %v2788
      %2812 = vmatmul.bf16.gmra.mxu0 %v2715
      %v2813 = vpop.f32.mrf.mxu0
      %v2814 = vadd.f32 0.0, %v2813
      %v2815 = vpop.f32.mrf.mxu0
      %v2816 = vadd.f32 0.0, %v2815
      %2817 = vmatmul.bf16.gmra.mxu0 %v2716
      %v2818 = vpop.f32.mrf.mxu0
      %v2819 = vadd.f32 0.0, %v2818
      %v2820 = vpop.f32.mrf.mxu0
      %v2821 = vadd.f32 0.0, %v2820
      %2822 = vmatmul.bf16.gmra.mxu0 %v2717
      %v2823 = vpop.f32.mrf.mxu0
      %v2824 = vadd.f32 0.0, %v2823
      %v2825 = vpop.f32.mrf.mxu0
      %v2826 = vadd.f32 0.0, %v2825
      %2827 = vmatmul.bf16.gmra.mxu0 %v2718
      %v2828 = vpop.f32.mrf.mxu0
      %v2829 = vadd.f32 0.0, %v2828
      %v2830 = vpop.f32.mrf.mxu0
      %v2831 = vadd.f32 0.0, %v2830
      %2832 = vmatmul.bf16.gmra.mxu0 %v2719
      %v2833 = vpop.f32.mrf.mxu0
      %v2834 = vadd.f32 0.0, %v2833
      %v2835 = vpop.f32.mrf.mxu0
      %v2836 = vadd.f32 0.0, %v2835
      %2837 = vmatmul.bf16.gmra.mxu0 %v2720
      %v2838 = vpop.f32.mrf.mxu0
      %v2839 = vadd.f32 0.0, %v2838
      %v2840 = vpop.f32.mrf.mxu0
      %v2841 = vadd.f32 0.0, %v2840
      %2842 = vmatmul.bf16.gmra.mxu0 %v2721
      %v2843 = vpop.f32.mrf.mxu0
      %v2844 = vadd.f32 0.0, %v2843
      %v2845 = vpop.f32.mrf.mxu0
      %v2846 = vadd.f32 0.0, %v2845
      %2847 = vmatmul.bf16.gmra.mxu0 %v2722
      %v2848 = vpop.f32.mrf.mxu0
      %v2849 = vadd.f32 0.0, %v2848
      %v2850 = vpop.f32.mrf.mxu0
      %v2851 = vadd.f32 0.0, %v2850
      %2852 = vmatmul.bf16.gmra.mxu0 %v2723
      %v2853 = vpop.f32.mrf.mxu0
      %v2854 = vadd.f32 0.0, %v2853
      %v2855 = vpop.f32.mrf.mxu0
      %v2856 = vadd.f32 0.0, %v2855
      %2857 = vmatmul.bf16.gmra.mxu0 %v2724
      %v2858 = vpop.f32.mrf.mxu0
      %v2859 = vadd.f32 0.0, %v2858
      %v2860 = vpop.f32.mrf.mxu0
      %v2861 = vadd.f32 0.0, %v2860
      %2862 = vmatmul.bf16.gmra.mxu0 %v2725
      %v2863 = vpop.f32.mrf.mxu0
      %v2864 = vadd.f32 0.0, %v2863
      %v2865 = vpop.f32.mrf.mxu0
      %v2866 = vadd.f32 0.0, %v2865
      %2867 = vmatmul.bf16.gmra.mxu0 %v2726
      %v2868 = vpop.f32.mrf.mxu0
      %v2869 = vadd.f32 0.0, %v2868
      %v2870 = vpop.f32.mrf.mxu0
      %v2871 = vadd.f32 0.0, %v2870
      %2872 = vmatmul.bf16.gmra.mxu0 %v2727
      %v2873 = vpop.f32.mrf.mxu0
      %v2874 = vadd.f32 0.0, %v2873
      %v2875 = vpop.f32.mrf.mxu0
      %v2876 = vadd.f32 0.0, %v2875
      %2877 = vmatmul.bf16.gmra.mxu0 %v2728
      %v2878 = vpop.f32.mrf.mxu0
      %v2879 = vadd.f32 0.0, %v2878
      %v2880 = vpop.f32.mrf.mxu0
      %v2881 = vadd.f32 0.0, %v2880
      %2882 = vmatmul.bf16.gmra.mxu0 %v2729
      %v2883 = vpop.f32.mrf.mxu0
      %v2884 = vadd.f32 0.0, %v2883
      %v2885 = vpop.f32.mrf.mxu0
      %v2886 = vadd.f32 0.0, %v2885
      %2887 = vmatmul.bf16.gmra.mxu0 %v2730
      %v2888 = vpop.f32.mrf.mxu0
      %v2889 = vadd.f32 0.0, %v2888
      %v2890 = vpop.f32.mrf.mxu0
      %v2891 = vadd.f32 0.0, %v2890
      %2892 = vmatmul.bf16.gmra.mxu0 %v2731
      %v2893 = vpop.f32.mrf.mxu0
      %v2894 = vadd.f32 0.0, %v2893
      %v2895 = vpop.f32.mrf.mxu0
      %v2896 = vadd.f32 0.0, %v2895
      %2897 = vmatmul.bf16.gmra.mxu0 %v2732
      %v2898 = vpop.f32.mrf.mxu0
      %v2899 = vadd.f32 0.0, %v2898
      %v2900 = vpop.f32.mrf.mxu0
      %v2901 = vadd.f32 0.0, %v2900
      %2902 = vmatmul.bf16.gmra.mxu0 %v2733
      %v2903 = vpop.f32.mrf.mxu0
      %v2904 = vadd.f32 0.0, %v2903
      %v2905 = vpop.f32.mrf.mxu0
      %v2906 = vadd.f32 0.0, %v2905
      %2907 = vmatmul.bf16.gmra.mxu0 %v2734
      %v2908 = vpop.f32.mrf.mxu0
      %v2909 = vadd.f32 0.0, %v2908
      %v2910 = vpop.f32.mrf.mxu0
      %v2911 = vadd.f32 0.0, %v2910
      %2912 = vmatmul.bf16.gmra.mxu0 %v2735
      %v2913 = vpop.f32.mrf.mxu0
      %v2914 = vadd.f32 0.0, %v2913
      %v2915 = vpop.f32.mrf.mxu0
      %v2916 = vadd.f32 0.0, %v2915
      %2917 = vmatmul.bf16.gmra.mxu0 %v2736
      %v2918 = vpop.f32.mrf.mxu0
      %v2919 = vadd.f32 0.0, %v2918
      %v2920 = vpop.f32.mrf.mxu0
      %v2921 = vadd.f32 0.0, %v2920
      %2922 = vmatmul.bf16.gmra.mxu0 %v2737
      %v2923 = vpop.f32.mrf.mxu0
      %v2924 = vadd.f32 0.0, %v2923
      %v2925 = vpop.f32.mrf.mxu0
      %v2926 = vadd.f32 0.0, %v2925
      %2927 = vmatmul.bf16.gmra.mxu0 %v2738
      %v2928 = vpop.f32.mrf.mxu0
      %v2929 = vadd.f32 0.0, %v2928
      %v2930 = vpop.f32.mrf.mxu0
      %v2931 = vadd.f32 0.0, %v2930
      %2932 = vdwg.mxu0
      %v2933 = vadd.f32 %v2619, %v2814
      %v2934 = vadd.f32 %v2620, %v2816
      %v2935 = vadd.f32 %v2621, %v2819
      %v2936 = vadd.f32 %v2622, %v2821
      %v2937 = vadd.f32 %v2623, %v2824
      %v2938 = vadd.f32 %v2624, %v2826
      %v2939 = vadd.f32 %v2625, %v2829
      %v2940 = vadd.f32 %v2626, %v2831
      %v2941 = vadd.f32 %v2627, %v2834
      %v2942 = vadd.f32 %v2628, %v2836
      %v2943 = vadd.f32 %v2629, %v2839
      %v2944 = vadd.f32 %v2630, %v2841
      %v2945 = vadd.f32 %v2631, %v2844
      %v2946 = vadd.f32 %v2632, %v2846
      %v2947 = vadd.f32 %v2633, %v2849
      %v2948 = vadd.f32 %v2634, %v2851
      %v2949 = vadd.f32 %v2635, %v2854
      %v2950 = vadd.f32 %v2636, %v2856
      %v2951 = vadd.f32 %v2637, %v2859
      %v2952 = vadd.f32 %v2638, %v2861
      %v2953 = vadd.f32 %v2639, %v2864
      %v2954 = vadd.f32 %v2640, %v2866
      %v2955 = vadd.f32 %v2641, %v2869
      %v2956 = vadd.f32 %v2642, %v2871
      %v2957 = vadd.f32 %v2643, %v2874
      %v2958 = vadd.f32 %v2644, %v2876
      %v2959 = vadd.f32 %v2645, %v2879
      %v2960 = vadd.f32 %v2646, %v2881
      %v2961 = vadd.f32 %v2647, %v2884
      %v2962 = vadd.f32 %v2648, %v2886
      %v2963 = vadd.f32 %v2649, %v2889
      %v2964 = vadd.f32 %v2650, %v2891
      %v2965 = vadd.f32 %v2651, %v2894
      %v2966 = vadd.f32 %v2652, %v2896
      %v2967 = vadd.f32 %v2653, %v2899
      %v2968 = vadd.f32 %v2654, %v2901
      %v2969 = vadd.f32 %v2655, %v2904
      %v2970 = vadd.f32 %v2656, %v2906
      %v2971 = vadd.f32 %v2657, %v2909
      %v2972 = vadd.f32 %v2658, %v2911
      %v2973 = vadd.f32 %v2659, %v2914
      %v2974 = vadd.f32 %v2660, %v2916
      %v2975 = vadd.f32 %v2661, %v2919
      %v2976 = vadd.f32 %v2662, %v2921
      %v2977 = vadd.f32 %v2663, %v2924
      %v2978 = vadd.f32 %v2664, %v2926
      %v2979 = vadd.f32 %v2665, %v2929
      %v2980 = vadd.f32 %v2666, %v2931
      %v2981 = vld [vmem:[%s2] sm:$0x1]
      %v2983 = vperm.slane %v2981, 0
      %v2985 = vadd.f32 %v2933, %v2983
      %v2986 = vadd.f32 %v2934, %v2983
      %v2987 = vadd.f32 %v2935, %v2983
      %v2988 = vadd.f32 %v2936, %v2983
      %v2989 = vadd.f32 %v2937, %v2983
      %v2990 = vadd.f32 %v2938, %v2983
      %v2991 = vadd.f32 %v2939, %v2983
      %v2992 = vadd.f32 %v2940, %v2983
      %v2993 = vadd.f32 %v2941, %v2983
      %v2994 = vadd.f32 %v2942, %v2983
      %v2995 = vadd.f32 %v2943, %v2983
      %v2996 = vadd.f32 %v2944, %v2983
      %v2997 = vadd.f32 %v2945, %v2983
      %v2998 = vadd.f32 %v2946, %v2983
      %v2999 = vadd.f32 %v2947, %v2983
      %v3000 = vadd.f32 %v2948, %v2983
      %v3001 = vadd.f32 %v2949, %v2983
      %v3002 = vadd.f32 %v2950, %v2983
      %v3003 = vadd.f32 %v2951, %v2983
      %v3004 = vadd.f32 %v2952, %v2983
      %v3005 = vadd.f32 %v2953, %v2983
      %v3006 = vadd.f32 %v2954, %v2983
      %v3007 = vadd.f32 %v2955, %v2983
      %v3008 = vadd.f32 %v2956, %v2983
      %v3009 = vadd.f32 %v2957, %v2983
      %v3010 = vadd.f32 %v2958, %v2983
      %v3011 = vadd.f32 %v2959, %v2983
      %v3012 = vadd.f32 %v2960, %v2983
      %v3013 = vadd.f32 %v2961, %v2983
      %v3014 = vadd.f32 %v2962, %v2983
      %v3015 = vadd.f32 %v2963, %v2983
      %v3016 = vadd.f32 %v2964, %v2983
      %v3017 = vadd.f32 %v2965, %v2983
      %v3018 = vadd.f32 %v2966, %v2983
      %v3019 = vadd.f32 %v2967, %v2983
      %v3020 = vadd.f32 %v2968, %v2983
      %v3021 = vadd.f32 %v2969, %v2983
      %v3022 = vadd.f32 %v2970, %v2983
      %v3023 = vadd.f32 %v2971, %v2983
      %v3024 = vadd.f32 %v2972, %v2983
      %v3025 = vadd.f32 %v2973, %v2983
      %v3026 = vadd.f32 %v2974, %v2983
      %v3027 = vadd.f32 %v2975, %v2983
      %v3028 = vadd.f32 %v2976, %v2983
      %v3029 = vadd.f32 %v2977, %v2983
      %v3030 = vadd.f32 %v2978, %v2983
      %v3031 = vadd.f32 %v2979, %v2983
      %v3032 = vadd.f32 %v2980, %v2983
      %v3033 = vmax.f32 %v2985, 0.0
      %v3034 = vmax.f32 %v2986, 0.0
      %v3035 = vmax.f32 %v2987, 0.0
      %v3036 = vmax.f32 %v2988, 0.0
      %v3037 = vmax.f32 %v2989, 0.0
      %v3038 = vmax.f32 %v2990, 0.0
      %v3039 = vmax.f32 %v2991, 0.0
      %v3040 = vmax.f32 %v2992, 0.0
      %v3041 = vmax.f32 %v2993, 0.0
      %v3042 = vmax.f32 %v2994, 0.0
      %v3043 = vmax.f32 %v2995, 0.0
      %v3044 = vmax.f32 %v2996, 0.0
      %v3045 = vmax.f32 %v2997, 0.0
      %v3046 = vmax.f32 %v2998, 0.0
      %v3047 = vmax.f32 %v2999, 0.0
      %v3048 = vmax.f32 %v3000, 0.0
      %v3049 = vmax.f32 %v3001, 0.0
      %v3050 = vmax.f32 %v3002, 0.0
      %v3051 = vmax.f32 %v3003, 0.0
      %v3052 = vmax.f32 %v3004, 0.0
      %v3053 = vmax.f32 %v3005, 0.0
      %v3054 = vmax.f32 %v3006, 0.0
      %v3055 = vmax.f32 %v3007, 0.0
      %v3056 = vmax.f32 %v3008, 0.0
      %v3057 = vmax.f32 %v3009, 0.0
      %v3058 = vmax.f32 %v3010, 0.0
      %v3059 = vmax.f32 %v3011, 0.0
      %v3060 = vmax.f32 %v3012, 0.0
      %v3061 = vmax.f32 %v3013, 0.0
      %v3062 = vmax.f32 %v3014, 0.0
      %v3063 = vmax.f32 %v3015, 0.0
      %v3064 = vmax.f32 %v3016, 0.0
      %v3065 = vmax.f32 %v3017, 0.0
      %v3066 = vmax.f32 %v3018, 0.0
      %v3067 = vmax.f32 %v3019, 0.0
      %v3068 = vmax.f32 %v3020, 0.0
      %v3069 = vmax.f32 %v3021, 0.0
      %v3070 = vmax.f32 %v3022, 0.0
      %v3071 = vmax.f32 %v3023, 0.0
      %v3072 = vmax.f32 %v3024, 0.0
      %v3073 = vmax.f32 %v3025, 0.0
      %v3074 = vmax.f32 %v3026, 0.0
      %v3075 = vmax.f32 %v3027, 0.0
      %v3076 = vmax.f32 %v3028, 0.0
      %v3077 = vmax.f32 %v3029, 0.0
      %v3078 = vmax.f32 %v3030, 0.0
      %v3079 = vmax.f32 %v3031, 0.0
      %v3080 = vmax.f32 %v3032, 0.0
      %3081 = vst [vmem:[#allocation2] sm:$0xff] 0.0
      %3082 = vst [vmem:[#allocation2 + $0x8] sm:$0xff] 0.0
      %3083 = vst [vmem:[#allocation2 + $0x10] sm:$0xff] 0.0
      %3084 = vst [vmem:[#allocation2 + $0x18] sm:$0x1] 0.0
      %3085 = vst [vmem:[#allocation2 + $0x199] sm:$0xff] 0.0
      %3086 = vst [vmem:[#allocation2 + $0x1a1] sm:$0xff] 0.0
      %3087 = vst [vmem:[#allocation2 + $0x1a9] sm:$0xff] 0.0
      %3088 = vst [vmem:[#allocation2 + $0x1b1] sm:$0xff] 0.0
      %3089 = vst [vmem:[#allocation2 + $0x1b9] sm:$0xff] 0.0
      %3090 = vst [vmem:[#allocation2 + $0x1c1] sm:$0x7f] 0.0
      %v3091 = vld [vmem:[%s5] sm:$0xff]
      %v3092 = vld [vmem:[%s5 + $0x8] sm:$0xff]
      %v3093 = vld [vmem:[%s5 + $0x10] sm:$0xff]
      %v3094 = vld [vmem:[%s5 + $0x18] sm:$0xff]
      %v3095 = vld [vmem:[%s5 + $0x20] sm:$0xff]
      %v3096 = vld [vmem:[%s5 + $0x28] sm:$0xff]
      %v3097 = vld [vmem:[%s5 + $0x30] sm:$0xff]
      %v3098 = vld [vmem:[%s5 + $0x38] sm:$0xff]
      %v3099 = vld [vmem:[%s5 + $0x40] sm:$0xff]
      %v3100 = vld [vmem:[%s5 + $0x48] sm:$0xff]
      %v3101 = vld [vmem:[%s5 + $0x50] sm:$0xff]
      %v3102 = vld [vmem:[%s5 + $0x58] sm:$0xff]
      %v3103 = vld [vmem:[%s5 + $0x60] sm:$0xff]
      %v3104 = vld [vmem:[%s5 + $0x68] sm:$0xff]
      %v3105 = vld [vmem:[%s5 + $0x70] sm:$0xff]
      %v3106 = vld [vmem:[%s5 + $0x78] sm:$0xff]
      %v3107 = vld [vmem:[%s5 + $0x80] sm:$0xff]
      %v3108 = vld [vmem:[%s5 + $0x88] sm:$0xff]
      %v3109 = vld [vmem:[%s5 + $0x90] sm:$0xff]
      %v3110 = vld [vmem:[%s5 + $0x98] sm:$0xff]
      %v3111 = vld [vmem:[%s5 + $0xa0] sm:$0xff]
      %v3112 = vld [vmem:[%s5 + $0xa8] sm:$0xff]
      %v3113 = vld [vmem:[%s5 + $0xb0] sm:$0xff]
      %v3114 = vld [vmem:[%s5 + $0xb8] sm:$0xff]
      %v3115 = vld [vmem:[%s5 + $0xc0] sm:$0xff]
      %v3116 = vld [vmem:[%s5 + $0xc8] sm:$0xff]
      %v3117 = vld [vmem:[%s5 + $0xd0] sm:$0xff]
      %v3118 = vld [vmem:[%s5 + $0xd8] sm:$0xff]
      %v3119 = vld [vmem:[%s5 + $0xe0] sm:$0xff]
      %v3120 = vld [vmem:[%s5 + $0xe8] sm:$0xff]
      %v3121 = vld [vmem:[%s5 + $0xf0] sm:$0xff]
      %v3122 = vld [vmem:[%s5 + $0xf8] sm:$0xff]
      %v3123 = vld [vmem:[%s5 + $0x100] sm:$0xff]
      %v3124 = vld [vmem:[%s5 + $0x108] sm:$0xff]
      %v3125 = vld [vmem:[%s5 + $0x110] sm:$0xff]
      %v3126 = vld [vmem:[%s5 + $0x118] sm:$0xff]
      %v3127 = vld [vmem:[%s5 + $0x120] sm:$0xff]
      %v3128 = vld [vmem:[%s5 + $0x128] sm:$0xff]
      %v3129 = vld [vmem:[%s5 + $0x130] sm:$0xff]
      %v3130 = vld [vmem:[%s5 + $0x138] sm:$0xff]
      %v3131 = vld [vmem:[%s5 + $0x140] sm:$0xff]
      %v3132 = vld [vmem:[%s5 + $0x148] sm:$0xff]
      %v3133 = vld [vmem:[%s5 + $0x150] sm:$0xff]
      %v3134 = vld [vmem:[%s5 + $0x158] sm:$0xff]
      %v3135 = vld [vmem:[%s5 + $0x160] sm:$0xff]
      %v3136 = vld [vmem:[%s5 + $0x168] sm:$0xff]
      %v3137 = vld [vmem:[%s5 + $0x170] sm:$0xff]
      %v3138 = vld [vmem:[%s5 + $0x178] sm:$0xff]
      %3140 = vset.pattern.permute.xlu0 0
      %3141 = vperm.xlu0 %3140, %v3091
      %v3142 = vpop.permute.xlu0 %3141
      %3145 = vset.pattern.permute.xlu0 0
      %3146 = vperm.xlu0 %3145, %v3092
      %v3147 = vpop.permute.xlu0 %3146
      %3150 = vset.pattern.permute.xlu0 0
      %3151 = vperm.xlu0 %3150, %v3093
      %v3152 = vpop.permute.xlu0 %3151
      %3155 = vset.pattern.permute.xlu0 0
      %3156 = vperm.xlu0 %3155, %v3094
      %v3157 = vpop.permute.xlu0 %3156
      %3160 = vset.pattern.permute.xlu0 0
      %3161 = vperm.xlu0 %3160, %v3095
      %v3162 = vpop.permute.xlu0 %3161
      %3165 = vset.pattern.permute.xlu0 0
      %3166 = vperm.xlu0 %3165, %v3096
      %v3167 = vpop.permute.xlu0 %3166
      %3170 = vset.pattern.permute.xlu0 0
      %3171 = vperm.xlu0 %3170, %v3097
      %v3172 = vpop.permute.xlu0 %3171
      %3175 = vset.pattern.permute.xlu0 0
      %3176 = vperm.xlu0 %3175, %v3098
      %v3177 = vpop.permute.xlu0 %3176
      %3180 = vset.pattern.permute.xlu0 0
      %3181 = vperm.xlu0 %3180, %v3099
      %v3182 = vpop.permute.xlu0 %3181
      %3185 = vset.pattern.permute.xlu0 0
      %3186 = vperm.xlu0 %3185, %v3100
      %v3187 = vpop.permute.xlu0 %3186
      %3190 = vset.pattern.permute.xlu0 0
      %3191 = vperm.xlu0 %3190, %v3101
      %v3192 = vpop.permute.xlu0 %3191
      %3195 = vset.pattern.permute.xlu0 0
      %3196 = vperm.xlu0 %3195, %v3102
      %v3197 = vpop.permute.xlu0 %3196
      %3200 = vset.pattern.permute.xlu0 0
      %3201 = vperm.xlu0 %3200, %v3103
      %v3202 = vpop.permute.xlu0 %3201
      %3205 = vset.pattern.permute.xlu0 0
      %3206 = vperm.xlu0 %3205, %v3104
      %v3207 = vpop.permute.xlu0 %3206
      %3210 = vset.pattern.permute.xlu0 0
      %3211 = vperm.xlu0 %3210, %v3105
      %v3212 = vpop.permute.xlu0 %3211
      %3215 = vset.pattern.permute.xlu0 0
      %3216 = vperm.xlu0 %3215, %v3106
      %v3217 = vpop.permute.xlu0 %3216
      %3220 = vset.pattern.permute.xlu0 0
      %3221 = vperm.xlu0 %3220, %v3107
      %v3222 = vpop.permute.xlu0 %3221
      %3225 = vset.pattern.permute.xlu0 0
      %3226 = vperm.xlu0 %3225, %v3108
      %v3227 = vpop.permute.xlu0 %3226
      %3230 = vset.pattern.permute.xlu0 0
      %3231 = vperm.xlu0 %3230, %v3109
      %v3232 = vpop.permute.xlu0 %3231
      %3235 = vset.pattern.permute.xlu0 0
      %3236 = vperm.xlu0 %3235, %v3110
      %v3237 = vpop.permute.xlu0 %3236
      %3240 = vset.pattern.permute.xlu0 0
      %3241 = vperm.xlu0 %3240, %v3111
      %v3242 = vpop.permute.xlu0 %3241
      %3245 = vset.pattern.permute.xlu0 0
      %3246 = vperm.xlu0 %3245, %v3112
      %v3247 = vpop.permute.xlu0 %3246
      %3250 = vset.pattern.permute.xlu0 0
      %3251 = vperm.xlu0 %3250, %v3113
      %v3252 = vpop.permute.xlu0 %3251
      %3255 = vset.pattern.permute.xlu0 0
      %3256 = vperm.xlu0 %3255, %v3114
      %v3257 = vpop.permute.xlu0 %3256
      %3260 = vset.pattern.permute.xlu0 0
      %3261 = vperm.xlu0 %3260, %v3115
      %v3262 = vpop.permute.xlu0 %3261
      %3265 = vset.pattern.permute.xlu0 0
      %3266 = vperm.xlu0 %3265, %v3116
      %v3267 = vpop.permute.xlu0 %3266
      %3270 = vset.pattern.permute.xlu0 0
      %3271 = vperm.xlu0 %3270, %v3117
      %v3272 = vpop.permute.xlu0 %3271
      %3275 = vset.pattern.permute.xlu0 0
      %3276 = vperm.xlu0 %3275, %v3118
      %v3277 = vpop.permute.xlu0 %3276
      %3280 = vset.pattern.permute.xlu0 0
      %3281 = vperm.xlu0 %3280, %v3119
      %v3282 = vpop.permute.xlu0 %3281
      %3285 = vset.pattern.permute.xlu0 0
      %3286 = vperm.xlu0 %3285, %v3120
      %v3287 = vpop.permute.xlu0 %3286
      %3290 = vset.pattern.permute.xlu0 0
      %3291 = vperm.xlu0 %3290, %v3121
      %v3292 = vpop.permute.xlu0 %3291
      %3295 = vset.pattern.permute.xlu0 0
      %3296 = vperm.xlu0 %3295, %v3122
      %v3297 = vpop.permute.xlu0 %3296
      %3300 = vset.pattern.permute.xlu0 0
      %3301 = vperm.xlu0 %3300, %v3123
      %v3302 = vpop.permute.xlu0 %3301
      %3305 = vset.pattern.permute.xlu0 0
      %3306 = vperm.xlu0 %3305, %v3124
      %v3307 = vpop.permute.xlu0 %3306
      %3310 = vset.pattern.permute.xlu0 0
      %3311 = vperm.xlu0 %3310, %v3125
      %v3312 = vpop.permute.xlu0 %3311
      %3315 = vset.pattern.permute.xlu0 0
      %3316 = vperm.xlu0 %3315, %v3126
      %v3317 = vpop.permute.xlu0 %3316
      %3320 = vset.pattern.permute.xlu0 0
      %3321 = vperm.xlu0 %3320, %v3127
      %v3322 = vpop.permute.xlu0 %3321
      %3325 = vset.pattern.permute.xlu0 0
      %3326 = vperm.xlu0 %3325, %v3128
      %v3327 = vpop.permute.xlu0 %3326
      %3330 = vset.pattern.permute.xlu0 0
      %3331 = vperm.xlu0 %3330, %v3129
      %v3332 = vpop.permute.xlu0 %3331
      %3335 = vset.pattern.permute.xlu0 0
      %3336 = vperm.xlu0 %3335, %v3130
      %v3337 = vpop.permute.xlu0 %3336
      %3340 = vset.pattern.permute.xlu0 0
      %3341 = vperm.xlu0 %3340, %v3131
      %v3342 = vpop.permute.xlu0 %3341
      %3345 = vset.pattern.permute.xlu0 0
      %3346 = vperm.xlu0 %3345, %v3132
      %v3347 = vpop.permute.xlu0 %3346
      %3350 = vset.pattern.permute.xlu0 0
      %3351 = vperm.xlu0 %3350, %v3133
      %v3352 = vpop.permute.xlu0 %3351
      %3355 = vset.pattern.permute.xlu0 0
      %3356 = vperm.xlu0 %3355, %v3134
      %v3357 = vpop.permute.xlu0 %3356
      %3360 = vset.pattern.permute.xlu0 0
      %3361 = vperm.xlu0 %3360, %v3135
      %v3362 = vpop.permute.xlu0 %3361
      %3365 = vset.pattern.permute.xlu0 0
      %3366 = vperm.xlu0 %3365, %v3136
      %v3367 = vpop.permute.xlu0 %3366
      %3370 = vset.pattern.permute.xlu0 0
      %3371 = vperm.xlu0 %3370, %v3137
      %v3372 = vpop.permute.xlu0 %3371
      %3375 = vset.pattern.permute.xlu0 0
      %3376 = vperm.xlu0 %3375, %v3138
      %v3377 = vpop.permute.xlu0 %3376
      %v3379 = vmul.f32 %v3033, %v3142
      %v3380 = vmul.f32 %v3034, %v3147
      %v3381 = vmul.f32 %v3035, %v3152
      %v3382 = vmul.f32 %v3036, %v3157
      %v3383 = vmul.f32 %v3037, %v3162
      %v3384 = vmul.f32 %v3038, %v3167
      %v3385 = vmul.f32 %v3039, %v3172
      %v3386 = vmul.f32 %v3040, %v3177
      %v3387 = vmul.f32 %v3041, %v3182
      %v3388 = vmul.f32 %v3042, %v3187
      %v3389 = vmul.f32 %v3043, %v3192
      %v3390 = vmul.f32 %v3044, %v3197
      %v3391 = vmul.f32 %v3045, %v3202
      %v3392 = vmul.f32 %v3046, %v3207
      %v3393 = vmul.f32 %v3047, %v3212
      %v3394 = vmul.f32 %v3048, %v3217
      %v3395 = vmul.f32 %v3049, %v3222
      %v3396 = vmul.f32 %v3050, %v3227
      %v3397 = vmul.f32 %v3051, %v3232
      %v3398 = vmul.f32 %v3052, %v3237
      %v3399 = vmul.f32 %v3053, %v3242
      %v3400 = vmul.f32 %v3054, %v3247
      %v3401 = vmul.f32 %v3055, %v3252
      %v3402 = vmul.f32 %v3056, %v3257
      %v3403 = vmul.f32 %v3057, %v3262
      %v3404 = vmul.f32 %v3058, %v3267
      %v3405 = vmul.f32 %v3059, %v3272
      %v3406 = vmul.f32 %v3060, %v3277
      %v3407 = vmul.f32 %v3061, %v3282
      %v3408 = vmul.f32 %v3062, %v3287
      %v3409 = vmul.f32 %v3063, %v3292
      %v3410 = vmul.f32 %v3064, %v3297
      %v3411 = vmul.f32 %v3065, %v3302
      %v3412 = vmul.f32 %v3066, %v3307
      %v3413 = vmul.f32 %v3067, %v3312
      %v3414 = vmul.f32 %v3068, %v3317
      %v3415 = vmul.f32 %v3069, %v3322
      %v3416 = vmul.f32 %v3070, %v3327
      %v3417 = vmul.f32 %v3071, %v3332
      %v3418 = vmul.f32 %v3072, %v3337
      %v3419 = vmul.f32 %v3073, %v3342
      %v3420 = vmul.f32 %v3074, %v3347
      %v3421 = vmul.f32 %v3075, %v3352
      %v3422 = vmul.f32 %v3076, %v3357
      %v3423 = vmul.f32 %v3077, %v3362
      %v3424 = vmul.f32 %v3078, %v3367
      %v3425 = vmul.f32 %v3079, %v3372
      %v3426 = vmul.f32 %v3080, %v3377
      %3427 = vst [vmem:[#allocation2 + $0x19] sm:$0xff] %v3379
      %3428 = vst [vmem:[#allocation2 + $0x21] sm:$0xff] %v3380
      %3429 = vst [vmem:[#allocation2 + $0x29] sm:$0xff] %v3381
      %3430 = vst [vmem:[#allocation2 + $0x31] sm:$0xff] %v3382
      %3431 = vst [vmem:[#allocation2 + $0x39] sm:$0xff] %v3383
      %3432 = vst [vmem:[#allocation2 + $0x41] sm:$0xff] %v3384
      %3433 = vst [vmem:[#allocation2 + $0x49] sm:$0xff] %v3385
      %3434 = vst [vmem:[#allocation2 + $0x51] sm:$0xff] %v3386
      %3435 = vst [vmem:[#allocation2 + $0x59] sm:$0xff] %v3387
      %3436 = vst [vmem:[#allocation2 + $0x61] sm:$0xff] %v3388
      %3437 = vst [vmem:[#allocation2 + $0x69] sm:$0xff] %v3389
      %3438 = vst [vmem:[#allocation2 + $0x71] sm:$0xff] %v3390
      %3439 = vst [vmem:[#allocation2 + $0x79] sm:$0xff] %v3391
      %3440 = vst [vmem:[#allocation2 + $0x81] sm:$0xff] %v3392
      %3441 = vst [vmem:[#allocation2 + $0x89] sm:$0xff] %v3393
      %3442 = vst [vmem:[#allocation2 + $0x91] sm:$0xff] %v3394
      %3443 = vst [vmem:[#allocation2 + $0x99] sm:$0xff] %v3395
      %3444 = vst [vmem:[#allocation2 + $0xa1] sm:$0xff] %v3396
      %3445 = vst [vmem:[#allocation2 + $0xa9] sm:$0xff] %v3397
      %3446 = vst [vmem:[#allocation2 + $0xb1] sm:$0xff] %v3398
      %3447 = vst [vmem:[#allocation2 + $0xb9] sm:$0xff] %v3399
      %3448 = vst [vmem:[#allocation2 + $0xc1] sm:$0xff] %v3400
      %3449 = vst [vmem:[#allocation2 + $0xc9] sm:$0xff] %v3401
      %3450 = vst [vmem:[#allocation2 + $0xd1] sm:$0xff] %v3402
      %3451 = vst [vmem:[#allocation2 + $0xd9] sm:$0xff] %v3403
      %3452 = vst [vmem:[#allocation2 + $0xe1] sm:$0xff] %v3404
      %3453 = vst [vmem:[#allocation2 + $0xe9] sm:$0xff] %v3405
      %3454 = vst [vmem:[#allocation2 + $0xf1] sm:$0xff] %v3406
      %3455 = vst [vmem:[#allocation2 + $0xf9] sm:$0xff] %v3407
      %3456 = vst [vmem:[#allocation2 + $0x101] sm:$0xff] %v3408
      %3457 = vst [vmem:[#allocation2 + $0x109] sm:$0xff] %v3409
      %3458 = vst [vmem:[#allocation2 + $0x111] sm:$0xff] %v3410
      %3459 = vst [vmem:[#allocation2 + $0x119] sm:$0xff] %v3411
      %3460 = vst [vmem:[#allocation2 + $0x121] sm:$0xff] %v3412
      %3461 = vst [vmem:[#allocation2 + $0x129] sm:$0xff] %v3413
      %3462 = vst [vmem:[#allocation2 + $0x131] sm:$0xff] %v3414
      %3463 = vst [vmem:[#allocation2 + $0x139] sm:$0xff] %v3415
      %3464 = vst [vmem:[#allocation2 + $0x141] sm:$0xff] %v3416
      %3465 = vst [vmem:[#allocation2 + $0x149] sm:$0xff] %v3417
      %3466 = vst [vmem:[#allocation2 + $0x151] sm:$0xff] %v3418
      %3467 = vst [vmem:[#allocation2 + $0x159] sm:$0xff] %v3419
      %3468 = vst [vmem:[#allocation2 + $0x161] sm:$0xff] %v3420
      %3469 = vst [vmem:[#allocation2 + $0x169] sm:$0xff] %v3421
      %3470 = vst [vmem:[#allocation2 + $0x171] sm:$0xff] %v3422
      %3471 = vst [vmem:[#allocation2 + $0x179] sm:$0xff] %v3423
      %3472 = vst [vmem:[#allocation2 + $0x181] sm:$0xff] %v3424
      %3473 = vst [vmem:[#allocation2 + $0x189] sm:$0xff] %v3425
      %3474 = vst [vmem:[#allocation2 + $0x191] sm:$0xff] %v3426
      %v3475 = vld [vmem:[#allocation2] sm:$0xff]
      %v3476 = vld [vmem:[#allocation2 + $0x8] sm:$0xff]
      %v3477 = vld [vmem:[#allocation2 + $0x10] sm:$0xff]
      %v3478 = vld [vmem:[#allocation2 + $0x18] sm:$0xff]
      %v3479 = vld [vmem:[#allocation2 + $0x20] sm:$0xff]
      %v3480 = vld [vmem:[#allocation2 + $0x28] sm:$0xff]
      %v3481 = vld [vmem:[#allocation2 + $0x30] sm:$0xff]
      %v3482 = vld [vmem:[#allocation2 + $0x38] sm:$0xff]
      %v3483 = vld [vmem:[#allocation2 + $0x40] sm:$0xff]
      %v3484 = vld [vmem:[#allocation2 + $0x48] sm:$0xff]
      %v3485 = vld [vmem:[#allocation2 + $0x50] sm:$0xff]
      %v3486 = vld [vmem:[#allocation2 + $0x58] sm:$0xff]
      %v3487 = vld [vmem:[#allocation2 + $0x60] sm:$0xff]
      %v3488 = vld [vmem:[#allocation2 + $0x68] sm:$0xff]
      %v3489 = vld [vmem:[#allocation2 + $0x70] sm:$0xff]
      %v3490 = vld [vmem:[#allocation2 + $0x78] sm:$0xff]
      %v3491 = vld [vmem:[#allocation2 + $0x80] sm:$0xff]
      %v3492 = vld [vmem:[#allocation2 + $0x88] sm:$0xff]
      %v3493 = vld [vmem:[#allocation2 + $0x90] sm:$0xff]
      %v3494 = vld [vmem:[#allocation2 + $0x98] sm:$0xff]
      %v3495 = vld [vmem:[#allocation2 + $0xa0] sm:$0xff]
      %v3496 = vld [vmem:[#allocation2 + $0xa8] sm:$0xff]
      %v3497 = vld [vmem:[#allocation2 + $0xb0] sm:$0xff]
      %v3498 = vld [vmem:[#allocation2 + $0xb8] sm:$0xff]
      %v3499 = vld [vmem:[#allocation2 + $0xc0] sm:$0xff]
      %v3500 = vld [vmem:[#allocation2 + $0xc8] sm:$0xff]
      %v3501 = vld [vmem:[#allocation2 + $0xd0] sm:$0xff]
      %v3502 = vld [vmem:[#allocation2 + $0xd8] sm:$0xff]
      %v3503 = vld [vmem:[#allocation2 + $0xe0] sm:$0xff]
      %v3504 = vld [vmem:[#allocation2 + $0xe8] sm:$0xff]
      %v3505 = vld [vmem:[#allocation2 + $0xf0] sm:$0xff]
      %v3506 = vld [vmem:[#allocation2 + $0xf8] sm:$0xff]
      %v3507 = vld [vmem:[#allocation2 + $0x100] sm:$0xff]
      %v3508 = vld [vmem:[#allocation2 + $0x108] sm:$0xff]
      %v3509 = vld [vmem:[#allocation2 + $0x110] sm:$0xff]
      %v3510 = vld [vmem:[#allocation2 + $0x118] sm:$0xff]
      %v3511 = vld [vmem:[#allocation2 + $0x120] sm:$0xff]
      %v3512 = vld [vmem:[#allocation2 + $0x128] sm:$0xff]
      %v3513 = vld [vmem:[#allocation2 + $0x130] sm:$0xff]
      %v3514 = vld [vmem:[#allocation2 + $0x138] sm:$0xff]
      %v3515 = vld [vmem:[#allocation2 + $0x140] sm:$0xff]
      %v3516 = vld [vmem:[#allocation2 + $0x148] sm:$0xff]
      %v3517 = vld [vmem:[#allocation2 + $0x150] sm:$0xff]
      %v3518 = vld [vmem:[#allocation2 + $0x158] sm:$0xff]
      %v3519 = vld [vmem:[#allocation2 + $0x160] sm:$0xff]
      %v3520 = vld [vmem:[#allocation2 + $0x168] sm:$0xff]
      %v3521 = vld [vmem:[#allocation2 + $0x170] sm:$0xff]
      %v3522 = vld [vmem:[#allocation2 + $0x178] sm:$0xff]
      %v3523 = vpack.c.bf16 %v3476, %v3475
      %v3524 = vpack.c.bf16 %v3478, %v3477
      %v3525 = vpack.c.bf16 %v3480, %v3479
      %v3526 = vpack.c.bf16 %v3482, %v3481
      %v3527 = vpack.c.bf16 %v3484, %v3483
      %v3528 = vpack.c.bf16 %v3486, %v3485
      %v3529 = vpack.c.bf16 %v3488, %v3487
      %v3530 = vpack.c.bf16 %v3490, %v3489
      %v3531 = vpack.c.bf16 %v3492, %v3491
      %v3532 = vpack.c.bf16 %v3494, %v3493
      %v3533 = vpack.c.bf16 %v3496, %v3495
      %v3534 = vpack.c.bf16 %v3498, %v3497
      %v3535 = vpack.c.bf16 %v3500, %v3499
      %v3536 = vpack.c.bf16 %v3502, %v3501
      %v3537 = vpack.c.bf16 %v3504, %v3503
      %v3538 = vpack.c.bf16 %v3506, %v3505
      %v3539 = vpack.c.bf16 %v3508, %v3507
      %v3540 = vpack.c.bf16 %v3510, %v3509
      %v3541 = vpack.c.bf16 %v3512, %v3511
      %v3542 = vpack.c.bf16 %v3514, %v3513
      %v3543 = vpack.c.bf16 %v3516, %v3515
      %v3544 = vpack.c.bf16 %v3518, %v3517
      %v3545 = vpack.c.bf16 %v3520, %v3519
      %v3546 = vpack.c.bf16 %v3522, %v3521
      %v3547 = vld [vmem:[%s3] sm:$0xf]
      %v3548 = vld [vmem:[%s3 + $0x4] sm:$0xf]
      %v3549 = vld [vmem:[%s3 + $0x8] sm:$0xf]
      %v3550 = vld [vmem:[%s3 + $0xc] sm:$0xf]
      %v3551 = vld [vmem:[%s3 + $0x10] sm:$0xf]
      %v3552 = vld [vmem:[%s3 + $0x14] sm:$0xf]
      %v3553 = vld [vmem:[%s3 + $0x18] sm:$0xf]
      %v3554 = vld [vmem:[%s3 + $0x1c] sm:$0xf]
      %v3555 = vld [vmem:[%s3 + $0x20] sm:$0xf]
      %v3556 = vld [vmem:[%s3 + $0x24] sm:$0xf]
      %v3557 = vld [vmem:[%s3 + $0x28] sm:$0xf]
      %v3558 = vld [vmem:[%s3 + $0x2c] sm:$0xf]
      %v3559 = vld [vmem:[%s3 + $0x30] sm:$0xf]
      %v3560 = vld [vmem:[%s3 + $0x34] sm:$0xf]
      %v3561 = vld [vmem:[%s3 + $0x38] sm:$0xf]
      %v3562 = vld [vmem:[%s3 + $0x3c] sm:$0xf]
      %v3563 = vld [vmem:[#allocation2 + $0x1] sm:$0xff]
      %v3564 = vld [vmem:[#allocation2 + $0x9] sm:$0xff]
      %v3565 = vld [vmem:[#allocation2 + $0x11] sm:$0xff]
      %v3566 = vld [vmem:[#allocation2 + $0x19] sm:$0xff]
      %v3567 = vld [vmem:[#allocation2 + $0x21] sm:$0xff]
      %v3568 = vld [vmem:[#allocation2 + $0x29] sm:$0xff]
      %v3569 = vld [vmem:[#allocation2 + $0x31] sm:$0xff]
      %v3570 = vld [vmem:[#allocation2 + $0x39] sm:$0xff]
      %v3571 = vld [vmem:[#allocation2 + $0x41] sm:$0xff]
      %v3572 = vld [vmem:[#allocation2 + $0x49] sm:$0xff]
      %v3573 = vld [vmem:[#allocation2 + $0x51] sm:$0xff]
      %v3574 = vld [vmem:[#allocation2 + $0x59] sm:$0xff]
      %v3575 = vld [vmem:[#allocation2 + $0x61] sm:$0xff]
      %v3576 = vld [vmem:[#allocation2 + $0x69] sm:$0xff]
      %v3577 = vld [vmem:[#allocation2 + $0x71] sm:$0xff]
      %v3578 = vld [vmem:[#allocation2 + $0x79] sm:$0xff]
      %v3579 = vld [vmem:[#allocation2 + $0x81] sm:$0xff]
      %v3580 = vld [vmem:[#allocation2 + $0x89] sm:$0xff]
      %v3581 = vld [vmem:[#allocation2 + $0x91] sm:$0xff]
      %v3582 = vld [vmem:[#allocation2 + $0x99] sm:$0xff]
      %v3583 = vld [vmem:[#allocation2 + $0xa1] sm:$0xff]
      %v3584 = vld [vmem:[#allocation2 + $0xa9] sm:$0xff]
      %v3585 = vld [vmem:[#allocation2 + $0xb1] sm:$0xff]
      %v3586 = vld [vmem:[#allocation2 + $0xb9] sm:$0xff]
      %v3587 = vld [vmem:[#allocation2 + $0xc1] sm:$0xff]
      %v3588 = vld [vmem:[#allocation2 + $0xc9] sm:$0xff]
      %v3589 = vld [vmem:[#allocation2 + $0xd1] sm:$0xff]
      %v3590 = vld [vmem:[#allocation2 + $0xd9] sm:$0xff]
      %v3591 = vld [vmem:[#allocation2 + $0xe1] sm:$0xff]
      %v3592 = vld [vmem:[#allocation2 + $0xe9] sm:$0xff]
      %v3593 = vld [vmem:[#allocation2 + $0xf1] sm:$0xff]
      %v3594 = vld [vmem:[#allocation2 + $0xf9] sm:$0xff]
      %v3595 = vld [vmem:[#allocation2 + $0x101] sm:$0xff]
      %v3596 = vld [vmem:[#allocation2 + $0x109] sm:$0xff]
      %v3597 = vld [vmem:[#allocation2 + $0x111] sm:$0xff]
      %v3598 = vld [vmem:[#allocation2 + $0x119] sm:$0xff]
      %v3599 = vld [vmem:[#allocation2 + $0x121] sm:$0xff]
      %v3600 = vld [vmem:[#allocation2 + $0x129] sm:$0xff]
      %v3601 = vld [vmem:[#allocation2 + $0x131] sm:$0xff]
      %v3602 = vld [vmem:[#allocation2 + $0x139] sm:$0xff]
      %v3603 = vld [vmem:[#allocation2 + $0x141] sm:$0xff]
      %v3604 = vld [vmem:[#allocation2 + $0x149] sm:$0xff]
      %v3605 = vld [vmem:[#allocation2 + $0x151] sm:$0xff]
      %v3606 = vld [vmem:[#allocation2 + $0x159] sm:$0xff]
      %v3607 = vld [vmem:[#allocation2 + $0x161] sm:$0xff]
      %v3608 = vld [vmem:[#allocation2 + $0x169] sm:$0xff]
      %v3609 = vld [vmem:[#allocation2 + $0x171] sm:$0xff]
      %v3610 = vld [vmem:[#allocation2 + $0x179] sm:$0xff]
      %v3611 = vpack.c.bf16 %v3564, %v3563
      %v3612 = vpack.c.bf16 %v3566, %v3565
      %v3613 = vpack.c.bf16 %v3568, %v3567
      %v3614 = vpack.c.bf16 %v3570, %v3569
      %v3615 = vpack.c.bf16 %v3572, %v3571
      %v3616 = vpack.c.bf16 %v3574, %v3573
      %v3617 = vpack.c.bf16 %v3576, %v3575
      %v3618 = vpack.c.bf16 %v3578, %v3577
      %v3619 = vpack.c.bf16 %v3580, %v3579
      %v3620 = vpack.c.bf16 %v3582, %v3581
      %v3621 = vpack.c.bf16 %v3584, %v3583
      %v3622 = vpack.c.bf16 %v3586, %v3585
      %v3623 = vpack.c.bf16 %v3588, %v3587
      %v3624 = vpack.c.bf16 %v3590, %v3589
      %v3625 = vpack.c.bf16 %v3592, %v3591
      %v3626 = vpack.c.bf16 %v3594, %v3593
      %v3627 = vpack.c.bf16 %v3596, %v3595
      %v3628 = vpack.c.bf16 %v3598, %v3597
      %v3629 = vpack.c.bf16 %v3600, %v3599
      %v3630 = vpack.c.bf16 %v3602, %v3601
      %v3631 = vpack.c.bf16 %v3604, %v3603
      %v3632 = vpack.c.bf16 %v3606, %v3605
      %v3633 = vpack.c.bf16 %v3608, %v3607
      %v3634 = vpack.c.bf16 %v3610, %v3609
      %s3635 = scalar_lea.vmem %s3, 64
      %v3636 = vld [vmem:[%s3635] sm:$0xf]
      %v3637 = vld [vmem:[%s3635 + $0x4] sm:$0xf]
      %v3638 = vld [vmem:[%s3635 + $0x8] sm:$0xf]
      %v3639 = vld [vmem:[%s3635 + $0xc] sm:$0xf]
      %v3640 = vld [vmem:[%s3635 + $0x10] sm:$0xf]
      %v3641 = vld [vmem:[%s3635 + $0x14] sm:$0xf]
      %v3642 = vld [vmem:[%s3635 + $0x18] sm:$0xf]
      %v3643 = vld [vmem:[%s3635 + $0x1c] sm:$0xf]
      %v3644 = vld [vmem:[%s3635 + $0x20] sm:$0xf]
      %v3645 = vld [vmem:[%s3635 + $0x24] sm:$0xf]
      %v3646 = vld [vmem:[%s3635 + $0x28] sm:$0xf]
      %v3647 = vld [vmem:[%s3635 + $0x2c] sm:$0xf]
      %v3648 = vld [vmem:[%s3635 + $0x30] sm:$0xf]
      %v3649 = vld [vmem:[%s3635 + $0x34] sm:$0xf]
      %v3650 = vld [vmem:[%s3635 + $0x38] sm:$0xf]
      %v3651 = vld [vmem:[%s3635 + $0x3c] sm:$0xf]
      %v3668 = vunpack.c.l.b16 %v3636
      %v3669 = vunpack.c.l.b16 %v3637
      %v3670 = vunpack.c.l.b16 %v3638
      %v3671 = vunpack.c.l.b16 %v3639
      %v3672 = vunpack.c.l.b16 %v3640
      %v3673 = vunpack.c.l.b16 %v3641
      %v3674 = vunpack.c.l.b16 %v3642
      %v3675 = vunpack.c.l.b16 %v3643
      %v3676 = vunpack.c.l.b16 %v3644
      %v3677 = vunpack.c.l.b16 %v3645
      %v3678 = vunpack.c.l.b16 %v3646
      %v3679 = vunpack.c.l.b16 %v3647
      %v3680 = vunpack.c.l.b16 %v3648
      %v3681 = vunpack.c.l.b16 %v3649
      %v3682 = vunpack.c.l.b16 %v3650
      %v3683 = vunpack.c.l.b16 %v3651
      %v3684 = vpack.c.b16 %v3669, %v3668
      %v3685 = vpack.c.b16 %v3671, %v3670
      %v3686 = vpack.c.b16 %v3673, %v3672
      %v3687 = vpack.c.b16 %v3675, %v3674
      %v3688 = vpack.c.b16 %v3677, %v3676
      %v3689 = vpack.c.b16 %v3679, %v3678
      %v3690 = vpack.c.b16 %v3681, %v3680
      %v3691 = vpack.c.b16 %v3683, %v3682
      %3700 = vmatpush.bf16.msra.mxu0 %v3691
      %3701 = vmatpush.bf16.msra.mxu0 %v3690
      %3702 = vmatpush.bf16.msra.mxu0 %v3689
      %3703 = vmatpush.bf16.msra.mxu0 %v3688
      %3704 = vmatpush.bf16.msra.mxu0 %v3687
      %3705 = vmatpush.bf16.msra.mxu0 %v3686
      %3706 = vmatpush.bf16.msra.mxu0 %v3685
      %3707 = vmatpush.bf16.msra.mxu0 %v3684
      %3708 = vmatmul.bf16.gmra.mxu0 %v3611
      %v3709 = vpop.f32.mrf.mxu0
      %v3710 = vadd.f32 0.0, %v3709
      %v3711 = vpop.f32.mrf.mxu0
      %v3712 = vadd.f32 0.0, %v3711
      %3713 = vmatmul.bf16.gmra.mxu0 %v3612
      %v3714 = vpop.f32.mrf.mxu0
      %v3715 = vadd.f32 0.0, %v3714
      %v3716 = vpop.f32.mrf.mxu0
      %v3717 = vadd.f32 0.0, %v3716
      %3718 = vmatmul.bf16.gmra.mxu0 %v3613
      %v3719 = vpop.f32.mrf.mxu0
      %v3720 = vadd.f32 0.0, %v3719
      %v3721 = vpop.f32.mrf.mxu0
      %v3722 = vadd.f32 0.0, %v3721
      %3723 = vmatmul.bf16.gmra.mxu0 %v3614
      %v3724 = vpop.f32.mrf.mxu0
      %v3725 = vadd.f32 0.0, %v3724
      %v3726 = vpop.f32.mrf.mxu0
      %v3727 = vadd.f32 0.0, %v3726
      %3728 = vmatmul.bf16.gmra.mxu0 %v3615
      %v3729 = vpop.f32.mrf.mxu0
      %v3730 = vadd.f32 0.0, %v3729
      %v3731 = vpop.f32.mrf.mxu0
      %v3732 = vadd.f32 0.0, %v3731
      %3733 = vmatmul.bf16.gmra.mxu0 %v3616
      %v3734 = vpop.f32.mrf.mxu0
      %v3735 = vadd.f32 0.0, %v3734
      %v3736 = vpop.f32.mrf.mxu0
      %v3737 = vadd.f32 0.0, %v3736
      %3738 = vmatmul.bf16.gmra.mxu0 %v3617
      %v3739 = vpop.f32.mrf.mxu0
      %v3740 = vadd.f32 0.0, %v3739
      %v3741 = vpop.f32.mrf.mxu0
      %v3742 = vadd.f32 0.0, %v3741
      %3743 = vmatmul.bf16.gmra.mxu0 %v3618
      %v3744 = vpop.f32.mrf.mxu0
      %v3745 = vadd.f32 0.0, %v3744
      %v3746 = vpop.f32.mrf.mxu0
      %v3747 = vadd.f32 0.0, %v3746
      %3748 = vmatmul.bf16.gmra.mxu0 %v3619
      %v3749 = vpop.f32.mrf.mxu0
      %v3750 = vadd.f32 0.0, %v3749
      %v3751 = vpop.f32.mrf.mxu0
      %v3752 = vadd.f32 0.0, %v3751
      %3753 = vmatmul.bf16.gmra.mxu0 %v3620
      %v3754 = vpop.f32.mrf.mxu0
      %v3755 = vadd.f32 0.0, %v3754
      %v3756 = vpop.f32.mrf.mxu0
      %v3757 = vadd.f32 0.0, %v3756
      %3758 = vmatmul.bf16.gmra.mxu0 %v3621
      %v3759 = vpop.f32.mrf.mxu0
      %v3760 = vadd.f32 0.0, %v3759
      %v3761 = vpop.f32.mrf.mxu0
      %v3762 = vadd.f32 0.0, %v3761
      %3763 = vmatmul.bf16.gmra.mxu0 %v3622
      %v3764 = vpop.f32.mrf.mxu0
      %v3765 = vadd.f32 0.0, %v3764
      %v3766 = vpop.f32.mrf.mxu0
      %v3767 = vadd.f32 0.0, %v3766
      %3768 = vmatmul.bf16.gmra.mxu0 %v3623
      %v3769 = vpop.f32.mrf.mxu0
      %v3770 = vadd.f32 0.0, %v3769
      %v3771 = vpop.f32.mrf.mxu0
      %v3772 = vadd.f32 0.0, %v3771
      %3773 = vmatmul.bf16.gmra.mxu0 %v3624
      %v3774 = vpop.f32.mrf.mxu0
      %v3775 = vadd.f32 0.0, %v3774
      %v3776 = vpop.f32.mrf.mxu0
      %v3777 = vadd.f32 0.0, %v3776
      %3778 = vmatmul.bf16.gmra.mxu0 %v3625
      %v3779 = vpop.f32.mrf.mxu0
      %v3780 = vadd.f32 0.0, %v3779
      %v3781 = vpop.f32.mrf.mxu0
      %v3782 = vadd.f32 0.0, %v3781
      %3783 = vmatmul.bf16.gmra.mxu0 %v3626
      %v3784 = vpop.f32.mrf.mxu0
      %v3785 = vadd.f32 0.0, %v3784
      %v3786 = vpop.f32.mrf.mxu0
      %v3787 = vadd.f32 0.0, %v3786
      %3788 = vmatmul.bf16.gmra.mxu0 %v3627
      %v3789 = vpop.f32.mrf.mxu0
      %v3790 = vadd.f32 0.0, %v3789
      %v3791 = vpop.f32.mrf.mxu0
      %v3792 = vadd.f32 0.0, %v3791
      %3793 = vmatmul.bf16.gmra.mxu0 %v3628
      %v3794 = vpop.f32.mrf.mxu0
      %v3795 = vadd.f32 0.0, %v3794
      %v3796 = vpop.f32.mrf.mxu0
      %v3797 = vadd.f32 0.0, %v3796
      %3798 = vmatmul.bf16.gmra.mxu0 %v3629
      %v3799 = vpop.f32.mrf.mxu0
      %v3800 = vadd.f32 0.0, %v3799
      %v3801 = vpop.f32.mrf.mxu0
      %v3802 = vadd.f32 0.0, %v3801
      %3803 = vmatmul.bf16.gmra.mxu0 %v3630
      %v3804 = vpop.f32.mrf.mxu0
      %v3805 = vadd.f32 0.0, %v3804
      %v3806 = vpop.f32.mrf.mxu0
      %v3807 = vadd.f32 0.0, %v3806
      %3808 = vmatmul.bf16.gmra.mxu0 %v3631
      %v3809 = vpop.f32.mrf.mxu0
      %v3810 = vadd.f32 0.0, %v3809
      %v3811 = vpop.f32.mrf.mxu0
      %v3812 = vadd.f32 0.0, %v3811
      %3813 = vmatmul.bf16.gmra.mxu0 %v3632
      %v3814 = vpop.f32.mrf.mxu0
      %v3815 = vadd.f32 0.0, %v3814
      %v3816 = vpop.f32.mrf.mxu0
      %v3817 = vadd.f32 0.0, %v3816
      %3818 = vmatmul.bf16.gmra.mxu0 %v3633
      %v3819 = vpop.f32.mrf.mxu0
      %v3820 = vadd.f32 0.0, %v3819
      %v3821 = vpop.f32.mrf.mxu0
      %v3822 = vadd.f32 0.0, %v3821
      %3823 = vmatmul.bf16.gmra.mxu0 %v3634
      %v3824 = vpop.f32.mrf.mxu0
      %v3825 = vadd.f32 0.0, %v3824
      %v3826 = vpop.f32.mrf.mxu0
      %v3827 = vadd.f32 0.0, %v3826
      %3828 = vdwg.mxu0
      %v3845 = vunpack.c.l.b16 %v3547
      %v3846 = vunpack.c.l.b16 %v3548
      %v3847 = vunpack.c.l.b16 %v3549
      %v3848 = vunpack.c.l.b16 %v3550
      %v3849 = vunpack.c.l.b16 %v3551
      %v3850 = vunpack.c.l.b16 %v3552
      %v3851 = vunpack.c.l.b16 %v3553
      %v3852 = vunpack.c.l.b16 %v3554
      %v3853 = vunpack.c.l.b16 %v3555
      %v3854 = vunpack.c.l.b16 %v3556
      %v3855 = vunpack.c.l.b16 %v3557
      %v3856 = vunpack.c.l.b16 %v3558
      %v3857 = vunpack.c.l.b16 %v3559
      %v3858 = vunpack.c.l.b16 %v3560
      %v3859 = vunpack.c.l.b16 %v3561
      %v3860 = vunpack.c.l.b16 %v3562
      %v3861 = vpack.c.b16 %v3846, %v3845
      %v3862 = vpack.c.b16 %v3848, %v3847
      %v3863 = vpack.c.b16 %v3850, %v3849
      %v3864 = vpack.c.b16 %v3852, %v3851
      %v3865 = vpack.c.b16 %v3854, %v3853
      %v3866 = vpack.c.b16 %v3856, %v3855
      %v3867 = vpack.c.b16 %v3858, %v3857
      %v3868 = vpack.c.b16 %v3860, %v3859
      %3877 = vmatpush.bf16.msra.mxu0 %v3868
      %3878 = vmatpush.bf16.msra.mxu0 %v3867
      %3879 = vmatpush.bf16.msra.mxu0 %v3866
      %3880 = vmatpush.bf16.msra.mxu0 %v3865
      %3881 = vmatpush.bf16.msra.mxu0 %v3864
      %3882 = vmatpush.bf16.msra.mxu0 %v3863
      %3883 = vmatpush.bf16.msra.mxu0 %v3862
      %3884 = vmatpush.bf16.msra.mxu0 %v3861
      %3885 = vmatmul.bf16.gmra.mxu0 %v3523
      %v3886 = vpop.f32.mrf.mxu0
      %v3887 = vadd.f32 %v3710, %v3886
      %v3888 = vpop.f32.mrf.mxu0
      %v3889 = vadd.f32 %v3712, %v3888
      %3890 = vmatmul.bf16.gmra.mxu0 %v3524
      %v3891 = vpop.f32.mrf.mxu0
      %v3892 = vadd.f32 %v3715, %v3891
      %v3893 = vpop.f32.mrf.mxu0
      %v3894 = vadd.f32 %v3717, %v3893
      %3895 = vmatmul.bf16.gmra.mxu0 %v3525
      %v3896 = vpop.f32.mrf.mxu0
      %v3897 = vadd.f32 %v3720, %v3896
      %v3898 = vpop.f32.mrf.mxu0
      %v3899 = vadd.f32 %v3722, %v3898
      %3900 = vmatmul.bf16.gmra.mxu0 %v3526
      %v3901 = vpop.f32.mrf.mxu0
      %v3902 = vadd.f32 %v3725, %v3901
      %v3903 = vpop.f32.mrf.mxu0
      %v3904 = vadd.f32 %v3727, %v3903
      %3905 = vmatmul.bf16.gmra.mxu0 %v3527
      %v3906 = vpop.f32.mrf.mxu0
      %v3907 = vadd.f32 %v3730, %v3906
      %v3908 = vpop.f32.mrf.mxu0
      %v3909 = vadd.f32 %v3732, %v3908
      %3910 = vmatmul.bf16.gmra.mxu0 %v3528
      %v3911 = vpop.f32.mrf.mxu0
      %v3912 = vadd.f32 %v3735, %v3911
      %v3913 = vpop.f32.mrf.mxu0
      %v3914 = vadd.f32 %v3737, %v3913
      %3915 = vmatmul.bf16.gmra.mxu0 %v3529
      %v3916 = vpop.f32.mrf.mxu0
      %v3917 = vadd.f32 %v3740, %v3916
      %v3918 = vpop.f32.mrf.mxu0
      %v3919 = vadd.f32 %v3742, %v3918
      %3920 = vmatmul.bf16.gmra.mxu0 %v3530
      %v3921 = vpop.f32.mrf.mxu0
      %v3922 = vadd.f32 %v3745, %v3921
      %v3923 = vpop.f32.mrf.mxu0
      %v3924 = vadd.f32 %v3747, %v3923
      %3925 = vmatmul.bf16.gmra.mxu0 %v3531
      %v3926 = vpop.f32.mrf.mxu0
      %v3927 = vadd.f32 %v3750, %v3926
      %v3928 = vpop.f32.mrf.mxu0
      %v3929 = vadd.f32 %v3752, %v3928
      %3930 = vmatmul.bf16.gmra.mxu0 %v3532
      %v3931 = vpop.f32.mrf.mxu0
      %v3932 = vadd.f32 %v3755, %v3931
      %v3933 = vpop.f32.mrf.mxu0
      %v3934 = vadd.f32 %v3757, %v3933
      %3935 = vmatmul.bf16.gmra.mxu0 %v3533
      %v3936 = vpop.f32.mrf.mxu0
      %v3937 = vadd.f32 %v3760, %v3936
      %v3938 = vpop.f32.mrf.mxu0
      %v3939 = vadd.f32 %v3762, %v3938
      %3940 = vmatmul.bf16.gmra.mxu0 %v3534
      %v3941 = vpop.f32.mrf.mxu0
      %v3942 = vadd.f32 %v3765, %v3941
      %v3943 = vpop.f32.mrf.mxu0
      %v3944 = vadd.f32 %v3767, %v3943
      %3945 = vmatmul.bf16.gmra.mxu0 %v3535
      %v3946 = vpop.f32.mrf.mxu0
      %v3947 = vadd.f32 %v3770, %v3946
      %v3948 = vpop.f32.mrf.mxu0
      %v3949 = vadd.f32 %v3772, %v3948
      %3950 = vmatmul.bf16.gmra.mxu0 %v3536
      %v3951 = vpop.f32.mrf.mxu0
      %v3952 = vadd.f32 %v3775, %v3951
      %v3953 = vpop.f32.mrf.mxu0
      %v3954 = vadd.f32 %v3777, %v3953
      %3955 = vmatmul.bf16.gmra.mxu0 %v3537
      %v3956 = vpop.f32.mrf.mxu0
      %v3957 = vadd.f32 %v3780, %v3956
      %v3958 = vpop.f32.mrf.mxu0
      %v3959 = vadd.f32 %v3782, %v3958
      %3960 = vmatmul.bf16.gmra.mxu0 %v3538
      %v3961 = vpop.f32.mrf.mxu0
      %v3962 = vadd.f32 %v3785, %v3961
      %v3963 = vpop.f32.mrf.mxu0
      %v3964 = vadd.f32 %v3787, %v3963
      %3965 = vmatmul.bf16.gmra.mxu0 %v3539
      %v3966 = vpop.f32.mrf.mxu0
      %v3967 = vadd.f32 %v3790, %v3966
      %v3968 = vpop.f32.mrf.mxu0
      %v3969 = vadd.f32 %v3792, %v3968
      %3970 = vmatmul.bf16.gmra.mxu0 %v3540
      %v3971 = vpop.f32.mrf.mxu0
      %v3972 = vadd.f32 %v3795, %v3971
      %v3973 = vpop.f32.mrf.mxu0
      %v3974 = vadd.f32 %v3797, %v3973
      %3975 = vmatmul.bf16.gmra.mxu0 %v3541
      %v3976 = vpop.f32.mrf.mxu0
      %v3977 = vadd.f32 %v3800, %v3976
      %v3978 = vpop.f32.mrf.mxu0
      %v3979 = vadd.f32 %v3802, %v3978
      %3980 = vmatmul.bf16.gmra.mxu0 %v3542
      %v3981 = vpop.f32.mrf.mxu0
      %v3982 = vadd.f32 %v3805, %v3981
      %v3983 = vpop.f32.mrf.mxu0
      %v3984 = vadd.f32 %v3807, %v3983
      %3985 = vmatmul.bf16.gmra.mxu0 %v3543
      %v3986 = vpop.f32.mrf.mxu0
      %v3987 = vadd.f32 %v3810, %v3986
      %v3988 = vpop.f32.mrf.mxu0
      %v3989 = vadd.f32 %v3812, %v3988
      %3990 = vmatmul.bf16.gmra.mxu0 %v3544
      %v3991 = vpop.f32.mrf.mxu0
      %v3992 = vadd.f32 %v3815, %v3991
      %v3993 = vpop.f32.mrf.mxu0
      %v3994 = vadd.f32 %v3817, %v3993
      %3995 = vmatmul.bf16.gmra.mxu0 %v3545
      %v3996 = vpop.f32.mrf.mxu0
      %v3997 = vadd.f32 %v3820, %v3996
      %v3998 = vpop.f32.mrf.mxu0
      %v3999 = vadd.f32 %v3822, %v3998
      %4000 = vmatmul.bf16.gmra.mxu0 %v3546
      %v4001 = vpop.f32.mrf.mxu0
      %v4002 = vadd.f32 %v3825, %v4001
      %v4003 = vpop.f32.mrf.mxu0
      %v4004 = vadd.f32 %v3827, %v4003
      %4005 = vdwg.mxu0
      %v4006 = vld [vmem:[#allocation2 + $0x2] sm:$0xff]
      %v4007 = vld [vmem:[#allocation2 + $0xa] sm:$0xff]
      %v4008 = vld [vmem:[#allocation2 + $0x12] sm:$0xff]
      %v4009 = vld [vmem:[#allocation2 + $0x1a] sm:$0xff]
      %v4010 = vld [vmem:[#allocation2 + $0x22] sm:$0xff]
      %v4011 = vld [vmem:[#allocation2 + $0x2a] sm:$0xff]
      %v4012 = vld [vmem:[#allocation2 + $0x32] sm:$0xff]
      %v4013 = vld [vmem:[#allocation2 + $0x3a] sm:$0xff]
      %v4014 = vld [vmem:[#allocation2 + $0x42] sm:$0xff]
      %v4015 = vld [vmem:[#allocation2 + $0x4a] sm:$0xff]
      %v4016 = vld [vmem:[#allocation2 + $0x52] sm:$0xff]
      %v4017 = vld [vmem:[#allocation2 + $0x5a] sm:$0xff]
      %v4018 = vld [vmem:[#allocation2 + $0x62] sm:$0xff]
      %v4019 = vld [vmem:[#allocation2 + $0x6a] sm:$0xff]
      %v4020 = vld [vmem:[#allocation2 + $0x72] sm:$0xff]
      %v4021 = vld [vmem:[#allocation2 + $0x7a] sm:$0xff]
      %v4022 = vld [vmem:[#allocation2 + $0x82] sm:$0xff]
      %v4023 = vld [vmem:[#allocation2 + $0x8a] sm:$0xff]
      %v4024 = vld [vmem:[#allocation2 + $0x92] sm:$0xff]
      %v4025 = vld [vmem:[#allocation2 + $0x9a] sm:$0xff]
      %v4026 = vld [vmem:[#allocation2 + $0xa2] sm:$0xff]
      %v4027 = vld [vmem:[#allocation2 + $0xaa] sm:$0xff]
      %v4028 = vld [vmem:[#allocation2 + $0xb2] sm:$0xff]
      %v4029 = vld [vmem:[#allocation2 + $0xba] sm:$0xff]
      %v4030 = vld [vmem:[#allocation2 + $0xc2] sm:$0xff]
      %v4031 = vld [vmem:[#allocation2 + $0xca] sm:$0xff]
      %v4032 = vld [vmem:[#allocation2 + $0xd2] sm:$0xff]
      %v4033 = vld [vmem:[#allocation2 + $0xda] sm:$0xff]
      %v4034 = vld [vmem:[#allocation2 + $0xe2] sm:$0xff]
      %v4035 = vld [vmem:[#allocation2 + $0xea] sm:$0xff]
      %v4036 = vld [vmem:[#allocation2 + $0xf2] sm:$0xff]
      %v4037 = vld [vmem:[#allocation2 + $0xfa] sm:$0xff]
      %v4038 = vld [vmem:[#allocation2 + $0x102] sm:$0xff]
      %v4039 = vld [vmem:[#allocation2 + $0x10a] sm:$0xff]
      %v4040 = vld [vmem:[#allocation2 + $0x112] sm:$0xff]
      %v4041 = vld [vmem:[#allocation2 + $0x11a] sm:$0xff]
      %v4042 = vld [vmem:[#allocation2 + $0x122] sm:$0xff]
      %v4043 = vld [vmem:[#allocation2 + $0x12a] sm:$0xff]
      %v4044 = vld [vmem:[#allocation2 + $0x132] sm:$0xff]
      %v4045 = vld [vmem:[#allocation2 + $0x13a] sm:$0xff]
      %v4046 = vld [vmem:[#allocation2 + $0x142] sm:$0xff]
      %v4047 = vld [vmem:[#allocation2 + $0x14a] sm:$0xff]
      %v4048 = vld [vmem:[#allocation2 + $0x152] sm:$0xff]
      %v4049 = vld [vmem:[#allocation2 + $0x15a] sm:$0xff]
      %v4050 = vld [vmem:[#allocation2 + $0x162] sm:$0xff]
      %v4051 = vld [vmem:[#allocation2 + $0x16a] sm:$0xff]
      %v4052 = vld [vmem:[#allocation2 + $0x172] sm:$0xff]
      %v4053 = vld [vmem:[#allocation2 + $0x17a] sm:$0xff]
      %v4054 = vpack.c.bf16 %v4007, %v4006
      %v4055 = vpack.c.bf16 %v4009, %v4008
      %v4056 = vpack.c.bf16 %v4011, %v4010
      %v4057 = vpack.c.bf16 %v4013, %v4012
      %v4058 = vpack.c.bf16 %v4015, %v4014
      %v4059 = vpack.c.bf16 %v4017, %v4016
      %v4060 = vpack.c.bf16 %v4019, %v4018
      %v4061 = vpack.c.bf16 %v4021, %v4020
      %v4062 = vpack.c.bf16 %v4023, %v4022
      %v4063 = vpack.c.bf16 %v4025, %v4024
      %v4064 = vpack.c.bf16 %v4027, %v4026
      %v4065 = vpack.c.bf16 %v4029, %v4028
      %v4066 = vpack.c.bf16 %v4031, %v4030
      %v4067 = vpack.c.bf16 %v4033, %v4032
      %v4068 = vpack.c.bf16 %v4035, %v4034
      %v4069 = vpack.c.bf16 %v4037, %v4036
      %v4070 = vpack.c.bf16 %v4039, %v4038
      %v4071 = vpack.c.bf16 %v4041, %v4040
      %v4072 = vpack.c.bf16 %v4043, %v4042
      %v4073 = vpack.c.bf16 %v4045, %v4044
      %v4074 = vpack.c.bf16 %v4047, %v4046
      %v4075 = vpack.c.bf16 %v4049, %v4048
      %v4076 = vpack.c.bf16 %v4051, %v4050
      %v4077 = vpack.c.bf16 %v4053, %v4052
      %s4078 = scalar_lea.vmem %s3, 128
      %v4079 = vld [vmem:[%s4078] sm:$0xf]
      %v4080 = vld [vmem:[%s4078 + $0x4] sm:$0xf]
      %v4081 = vld [vmem:[%s4078 + $0x8] sm:$0xf]
      %v4082 = vld [vmem:[%s4078 + $0xc] sm:$0xf]
      %v4083 = vld [vmem:[%s4078 + $0x10] sm:$0xf]
      %v4084 = vld [vmem:[%s4078 + $0x14] sm:$0xf]
      %v4085 = vld [vmem:[%s4078 + $0x18] sm:$0xf]
      %v4086 = vld [vmem:[%s4078 + $0x1c] sm:$0xf]
      %v4087 = vld [vmem:[%s4078 + $0x20] sm:$0xf]
      %v4088 = vld [vmem:[%s4078 + $0x24] sm:$0xf]
      %v4089 = vld [vmem:[%s4078 + $0x28] sm:$0xf]
      %v4090 = vld [vmem:[%s4078 + $0x2c] sm:$0xf]
      %v4091 = vld [vmem:[%s4078 + $0x30] sm:$0xf]
      %v4092 = vld [vmem:[%s4078 + $0x34] sm:$0xf]
      %v4093 = vld [vmem:[%s4078 + $0x38] sm:$0xf]
      %v4094 = vld [vmem:[%s4078 + $0x3c] sm:$0xf]
      %v4111 = vunpack.c.l.b16 %v4079
      %v4112 = vunpack.c.l.b16 %v4080
      %v4113 = vunpack.c.l.b16 %v4081
      %v4114 = vunpack.c.l.b16 %v4082
      %v4115 = vunpack.c.l.b16 %v4083
      %v4116 = vunpack.c.l.b16 %v4084
      %v4117 = vunpack.c.l.b16 %v4085
      %v4118 = vunpack.c.l.b16 %v4086
      %v4119 = vunpack.c.l.b16 %v4087
      %v4120 = vunpack.c.l.b16 %v4088
      %v4121 = vunpack.c.l.b16 %v4089
      %v4122 = vunpack.c.l.b16 %v4090
      %v4123 = vunpack.c.l.b16 %v4091
      %v4124 = vunpack.c.l.b16 %v4092
      %v4125 = vunpack.c.l.b16 %v4093
      %v4126 = vunpack.c.l.b16 %v4094
      %v4127 = vpack.c.b16 %v4112, %v4111
      %v4128 = vpack.c.b16 %v4114, %v4113
      %v4129 = vpack.c.b16 %v4116, %v4115
      %v4130 = vpack.c.b16 %v4118, %v4117
      %v4131 = vpack.c.b16 %v4120, %v4119
      %v4132 = vpack.c.b16 %v4122, %v4121
      %v4133 = vpack.c.b16 %v4124, %v4123
      %v4134 = vpack.c.b16 %v4126, %v4125
      %4143 = vmatpush.bf16.msra.mxu0 %v4134
      %4144 = vmatpush.bf16.msra.mxu0 %v4133
      %4145 = vmatpush.bf16.msra.mxu0 %v4132
      %4146 = vmatpush.bf16.msra.mxu0 %v4131
      %4147 = vmatpush.bf16.msra.mxu0 %v4130
      %4148 = vmatpush.bf16.msra.mxu0 %v4129
      %4149 = vmatpush.bf16.msra.mxu0 %v4128
      %4150 = vmatpush.bf16.msra.mxu0 %v4127
      %4151 = vmatmul.bf16.gmra.mxu0 %v4054
      %v4152 = vpop.f32.mrf.mxu0
      %v4153 = vadd.f32 0.0, %v4152
      %v4154 = vpop.f32.mrf.mxu0
      %v4155 = vadd.f32 0.0, %v4154
      %4156 = vmatmul.bf16.gmra.mxu0 %v4055
      %v4157 = vpop.f32.mrf.mxu0
      %v4158 = vadd.f32 0.0, %v4157
      %v4159 = vpop.f32.mrf.mxu0
      %v4160 = vadd.f32 0.0, %v4159
      %4161 = vmatmul.bf16.gmra.mxu0 %v4056
      %v4162 = vpop.f32.mrf.mxu0
      %v4163 = vadd.f32 0.0, %v4162
      %v4164 = vpop.f32.mrf.mxu0
      %v4165 = vadd.f32 0.0, %v4164
      %4166 = vmatmul.bf16.gmra.mxu0 %v4057
      %v4167 = vpop.f32.mrf.mxu0
      %v4168 = vadd.f32 0.0, %v4167
      %v4169 = vpop.f32.mrf.mxu0
      %v4170 = vadd.f32 0.0, %v4169
      %4171 = vmatmul.bf16.gmra.mxu0 %v4058
      %v4172 = vpop.f32.mrf.mxu0
      %v4173 = vadd.f32 0.0, %v4172
      %v4174 = vpop.f32.mrf.mxu0
      %v4175 = vadd.f32 0.0, %v4174
      %4176 = vmatmul.bf16.gmra.mxu0 %v4059
      %v4177 = vpop.f32.mrf.mxu0
      %v4178 = vadd.f32 0.0, %v4177
      %v4179 = vpop.f32.mrf.mxu0
      %v4180 = vadd.f32 0.0, %v4179
      %4181 = vmatmul.bf16.gmra.mxu0 %v4060
      %v4182 = vpop.f32.mrf.mxu0
      %v4183 = vadd.f32 0.0, %v4182
      %v4184 = vpop.f32.mrf.mxu0
      %v4185 = vadd.f32 0.0, %v4184
      %4186 = vmatmul.bf16.gmra.mxu0 %v4061
      %v4187 = vpop.f32.mrf.mxu0
      %v4188 = vadd.f32 0.0, %v4187
      %v4189 = vpop.f32.mrf.mxu0
      %v4190 = vadd.f32 0.0, %v4189
      %4191 = vmatmul.bf16.gmra.mxu0 %v4062
      %v4192 = vpop.f32.mrf.mxu0
      %v4193 = vadd.f32 0.0, %v4192
      %v4194 = vpop.f32.mrf.mxu0
      %v4195 = vadd.f32 0.0, %v4194
      %4196 = vmatmul.bf16.gmra.mxu0 %v4063
      %v4197 = vpop.f32.mrf.mxu0
      %v4198 = vadd.f32 0.0, %v4197
      %v4199 = vpop.f32.mrf.mxu0
      %v4200 = vadd.f32 0.0, %v4199
      %4201 = vmatmul.bf16.gmra.mxu0 %v4064
      %v4202 = vpop.f32.mrf.mxu0
      %v4203 = vadd.f32 0.0, %v4202
      %v4204 = vpop.f32.mrf.mxu0
      %v4205 = vadd.f32 0.0, %v4204
      %4206 = vmatmul.bf16.gmra.mxu0 %v4065
      %v4207 = vpop.f32.mrf.mxu0
      %v4208 = vadd.f32 0.0, %v4207
      %v4209 = vpop.f32.mrf.mxu0
      %v4210 = vadd.f32 0.0, %v4209
      %4211 = vmatmul.bf16.gmra.mxu0 %v4066
      %v4212 = vpop.f32.mrf.mxu0
      %v4213 = vadd.f32 0.0, %v4212
      %v4214 = vpop.f32.mrf.mxu0
      %v4215 = vadd.f32 0.0, %v4214
      %4216 = vmatmul.bf16.gmra.mxu0 %v4067
      %v4217 = vpop.f32.mrf.mxu0
      %v4218 = vadd.f32 0.0, %v4217
      %v4219 = vpop.f32.mrf.mxu0
      %v4220 = vadd.f32 0.0, %v4219
      %4221 = vmatmul.bf16.gmra.mxu0 %v4068
      %v4222 = vpop.f32.mrf.mxu0
      %v4223 = vadd.f32 0.0, %v4222
      %v4224 = vpop.f32.mrf.mxu0
      %v4225 = vadd.f32 0.0, %v4224
      %4226 = vmatmul.bf16.gmra.mxu0 %v4069
      %v4227 = vpop.f32.mrf.mxu0
      %v4228 = vadd.f32 0.0, %v4227
      %v4229 = vpop.f32.mrf.mxu0
      %v4230 = vadd.f32 0.0, %v4229
      %4231 = vmatmul.bf16.gmra.mxu0 %v4070
      %v4232 = vpop.f32.mrf.mxu0
      %v4233 = vadd.f32 0.0, %v4232
      %v4234 = vpop.f32.mrf.mxu0
      %v4235 = vadd.f32 0.0, %v4234
      %4236 = vmatmul.bf16.gmra.mxu0 %v4071
      %v4237 = vpop.f32.mrf.mxu0
      %v4238 = vadd.f32 0.0, %v4237
      %v4239 = vpop.f32.mrf.mxu0
      %v4240 = vadd.f32 0.0, %v4239
      %4241 = vmatmul.bf16.gmra.mxu0 %v4072
      %v4242 = vpop.f32.mrf.mxu0
      %v4243 = vadd.f32 0.0, %v4242
      %v4244 = vpop.f32.mrf.mxu0
      %v4245 = vadd.f32 0.0, %v4244
      %4246 = vmatmul.bf16.gmra.mxu0 %v4073
      %v4247 = vpop.f32.mrf.mxu0
      %v4248 = vadd.f32 0.0, %v4247
      %v4249 = vpop.f32.mrf.mxu0
      %v4250 = vadd.f32 0.0, %v4249
      %4251 = vmatmul.bf16.gmra.mxu0 %v4074
      %v4252 = vpop.f32.mrf.mxu0
      %v4253 = vadd.f32 0.0, %v4252
      %v4254 = vpop.f32.mrf.mxu0
      %v4255 = vadd.f32 0.0, %v4254
      %4256 = vmatmul.bf16.gmra.mxu0 %v4075
      %v4257 = vpop.f32.mrf.mxu0
      %v4258 = vadd.f32 0.0, %v4257
      %v4259 = vpop.f32.mrf.mxu0
      %v4260 = vadd.f32 0.0, %v4259
      %4261 = vmatmul.bf16.gmra.mxu0 %v4076
      %v4262 = vpop.f32.mrf.mxu0
      %v4263 = vadd.f32 0.0, %v4262
      %v4264 = vpop.f32.mrf.mxu0
      %v4265 = vadd.f32 0.0, %v4264
      %4266 = vmatmul.bf16.gmra.mxu0 %v4077
      %v4267 = vpop.f32.mrf.mxu0
      %v4268 = vadd.f32 0.0, %v4267
      %v4269 = vpop.f32.mrf.mxu0
      %v4270 = vadd.f32 0.0, %v4269
      %4271 = vdwg.mxu0
      %v4272 = vadd.f32 %v3887, %v4153
      %v4273 = vadd.f32 %v3889, %v4155
      %v4274 = vadd.f32 %v3892, %v4158
      %v4275 = vadd.f32 %v3894, %v4160
      %v4276 = vadd.f32 %v3897, %v4163
      %v4277 = vadd.f32 %v3899, %v4165
      %v4278 = vadd.f32 %v3902, %v4168
      %v4279 = vadd.f32 %v3904, %v4170
      %v4280 = vadd.f32 %v3907, %v4173
      %v4281 = vadd.f32 %v3909, %v4175
      %v4282 = vadd.f32 %v3912, %v4178
      %v4283 = vadd.f32 %v3914, %v4180
      %v4284 = vadd.f32 %v3917, %v4183
      %v4285 = vadd.f32 %v3919, %v4185
      %v4286 = vadd.f32 %v3922, %v4188
      %v4287 = vadd.f32 %v3924, %v4190
      %v4288 = vadd.f32 %v3927, %v4193
      %v4289 = vadd.f32 %v3929, %v4195
      %v4290 = vadd.f32 %v3932, %v4198
      %v4291 = vadd.f32 %v3934, %v4200
      %v4292 = vadd.f32 %v3937, %v4203
      %v4293 = vadd.f32 %v3939, %v4205
      %v4294 = vadd.f32 %v3942, %v4208
      %v4295 = vadd.f32 %v3944, %v4210
      %v4296 = vadd.f32 %v3947, %v4213
      %v4297 = vadd.f32 %v3949, %v4215
      %v4298 = vadd.f32 %v3952, %v4218
      %v4299 = vadd.f32 %v3954, %v4220
      %v4300 = vadd.f32 %v3957, %v4223
      %v4301 = vadd.f32 %v3959, %v4225
      %v4302 = vadd.f32 %v3962, %v4228
      %v4303 = vadd.f32 %v3964, %v4230
      %v4304 = vadd.f32 %v3967, %v4233
      %v4305 = vadd.f32 %v3969, %v4235
      %v4306 = vadd.f32 %v3972, %v4238
      %v4307 = vadd.f32 %v3974, %v4240
      %v4308 = vadd.f32 %v3977, %v4243
      %v4309 = vadd.f32 %v3979, %v4245
      %v4310 = vadd.f32 %v3982, %v4248
      %v4311 = vadd.f32 %v3984, %v4250
      %v4312 = vadd.f32 %v3987, %v4253
      %v4313 = vadd.f32 %v3989, %v4255
      %v4314 = vadd.f32 %v3992, %v4258
      %v4315 = vadd.f32 %v3994, %v4260
      %v4316 = vadd.f32 %v3997, %v4263
      %v4317 = vadd.f32 %v3999, %v4265
      %v4318 = vadd.f32 %v4002, %v4268
      %v4319 = vadd.f32 %v4004, %v4270
      %v4320 = vld [vmem:[#allocation2 + $0x18] sm:$0xff]
      %v4321 = vld [vmem:[#allocation2 + $0x20] sm:$0xff]
      %v4322 = vld [vmem:[#allocation2 + $0x28] sm:$0xff]
      %v4323 = vld [vmem:[#allocation2 + $0x30] sm:$0xff]
      %v4324 = vld [vmem:[#allocation2 + $0x38] sm:$0xff]
      %v4325 = vld [vmem:[#allocation2 + $0x40] sm:$0xff]
      %v4326 = vld [vmem:[#allocation2 + $0x48] sm:$0xff]
      %v4327 = vld [vmem:[#allocation2 + $0x50] sm:$0xff]
      %v4328 = vld [vmem:[#allocation2 + $0x58] sm:$0xff]
      %v4329 = vld [vmem:[#allocation2 + $0x60] sm:$0xff]
      %v4330 = vld [vmem:[#allocation2 + $0x68] sm:$0xff]
      %v4331 = vld [vmem:[#allocation2 + $0x70] sm:$0xff]
      %v4332 = vld [vmem:[#allocation2 + $0x78] sm:$0xff]
      %v4333 = vld [vmem:[#allocation2 + $0x80] sm:$0xff]
      %v4334 = vld [vmem:[#allocation2 + $0x88] sm:$0xff]
      %v4335 = vld [vmem:[#allocation2 + $0x90] sm:$0xff]
      %v4336 = vld [vmem:[#allocation2 + $0x98] sm:$0xff]
      %v4337 = vld [vmem:[#allocation2 + $0xa0] sm:$0xff]
      %v4338 = vld [vmem:[#allocation2 + $0xa8] sm:$0xff]
      %v4339 = vld [vmem:[#allocation2 + $0xb0] sm:$0xff]
      %v4340 = vld [vmem:[#allocation2 + $0xb8] sm:$0xff]
      %v4341 = vld [vmem:[#allocation2 + $0xc0] sm:$0xff]
      %v4342 = vld [vmem:[#allocation2 + $0xc8] sm:$0xff]
      %v4343 = vld [vmem:[#allocation2 + $0xd0] sm:$0xff]
      %v4344 = vld [vmem:[#allocation2 + $0xd8] sm:$0xff]
      %v4345 = vld [vmem:[#allocation2 + $0xe0] sm:$0xff]
      %v4346 = vld [vmem:[#allocation2 + $0xe8] sm:$0xff]
      %v4347 = vld [vmem:[#allocation2 + $0xf0] sm:$0xff]
      %v4348 = vld [vmem:[#allocation2 + $0xf8] sm:$0xff]
      %v4349 = vld [vmem:[#allocation2 + $0x100] sm:$0xff]
      %v4350 = vld [vmem:[#allocation2 + $0x108] sm:$0xff]
      %v4351 = vld [vmem:[#allocation2 + $0x110] sm:$0xff]
      %v4352 = vld [vmem:[#allocation2 + $0x118] sm:$0xff]
      %v4353 = vld [vmem:[#allocation2 + $0x120] sm:$0xff]
      %v4354 = vld [vmem:[#allocation2 + $0x128] sm:$0xff]
      %v4355 = vld [vmem:[#allocation2 + $0x130] sm:$0xff]
      %v4356 = vld [vmem:[#allocation2 + $0x138] sm:$0xff]
      %v4357 = vld [vmem:[#allocation2 + $0x140] sm:$0xff]
      %v4358 = vld [vmem:[#allocation2 + $0x148] sm:$0xff]
      %v4359 = vld [vmem:[#allocation2 + $0x150] sm:$0xff]
      %v4360 = vld [vmem:[#allocation2 + $0x158] sm:$0xff]
      %v4361 = vld [vmem:[#allocation2 + $0x160] sm:$0xff]
      %v4362 = vld [vmem:[#allocation2 + $0x168] sm:$0xff]
      %v4363 = vld [vmem:[#allocation2 + $0x170] sm:$0xff]
      %v4364 = vld [vmem:[#allocation2 + $0x178] sm:$0xff]
      %v4365 = vld [vmem:[#allocation2 + $0x180] sm:$0xff]
      %v4366 = vld [vmem:[#allocation2 + $0x188] sm:$0xff]
      %v4367 = vld [vmem:[#allocation2 + $0x190] sm:$0xff]
      %v4368 = vpack.c.bf16 %v4321, %v4320
      %v4369 = vpack.c.bf16 %v4323, %v4322
      %v4370 = vpack.c.bf16 %v4325, %v4324
      %v4371 = vpack.c.bf16 %v4327, %v4326
      %v4372 = vpack.c.bf16 %v4329, %v4328
      %v4373 = vpack.c.bf16 %v4331, %v4330
      %v4374 = vpack.c.bf16 %v4333, %v4332
      %v4375 = vpack.c.bf16 %v4335, %v4334
      %v4376 = vpack.c.bf16 %v4337, %v4336
      %v4377 = vpack.c.bf16 %v4339, %v4338
      %v4378 = vpack.c.bf16 %v4341, %v4340
      %v4379 = vpack.c.bf16 %v4343, %v4342
      %v4380 = vpack.c.bf16 %v4345, %v4344
      %v4381 = vpack.c.bf16 %v4347, %v4346
      %v4382 = vpack.c.bf16 %v4349, %v4348
      %v4383 = vpack.c.bf16 %v4351, %v4350
      %v4384 = vpack.c.bf16 %v4353, %v4352
      %v4385 = vpack.c.bf16 %v4355, %v4354
      %v4386 = vpack.c.bf16 %v4357, %v4356
      %v4387 = vpack.c.bf16 %v4359, %v4358
      %v4388 = vpack.c.bf16 %v4361, %v4360
      %v4389 = vpack.c.bf16 %v4363, %v4362
      %v4390 = vpack.c.bf16 %v4365, %v4364
      %v4391 = vpack.c.bf16 %v4367, %v4366
      %s4392 = scalar_lea.vmem %s3, 192
      %v4393 = vld [vmem:[%s4392] sm:$0xf]
      %v4394 = vld [vmem:[%s4392 + $0x4] sm:$0xf]
      %v4395 = vld [vmem:[%s4392 + $0x8] sm:$0xf]
      %v4396 = vld [vmem:[%s4392 + $0xc] sm:$0xf]
      %v4397 = vld [vmem:[%s4392 + $0x10] sm:$0xf]
      %v4398 = vld [vmem:[%s4392 + $0x14] sm:$0xf]
      %v4399 = vld [vmem:[%s4392 + $0x18] sm:$0xf]
      %v4400 = vld [vmem:[%s4392 + $0x1c] sm:$0xf]
      %v4401 = vld [vmem:[%s4392 + $0x20] sm:$0xf]
      %v4402 = vld [vmem:[%s4392 + $0x24] sm:$0xf]
      %v4403 = vld [vmem:[%s4392 + $0x28] sm:$0xf]
      %v4404 = vld [vmem:[%s4392 + $0x2c] sm:$0xf]
      %v4405 = vld [vmem:[%s4392 + $0x30] sm:$0xf]
      %v4406 = vld [vmem:[%s4392 + $0x34] sm:$0xf]
      %v4407 = vld [vmem:[%s4392 + $0x38] sm:$0xf]
      %v4408 = vld [vmem:[%s4392 + $0x3c] sm:$0xf]
      %v4425 = vunpack.c.l.b16 %v4393
      %v4426 = vunpack.c.l.b16 %v4394
      %v4427 = vunpack.c.l.b16 %v4395
      %v4428 = vunpack.c.l.b16 %v4396
      %v4429 = vunpack.c.l.b16 %v4397
      %v4430 = vunpack.c.l.b16 %v4398
      %v4431 = vunpack.c.l.b16 %v4399
      %v4432 = vunpack.c.l.b16 %v4400
      %v4433 = vunpack.c.l.b16 %v4401
      %v4434 = vunpack.c.l.b16 %v4402
      %v4435 = vunpack.c.l.b16 %v4403
      %v4436 = vunpack.c.l.b16 %v4404
      %v4437 = vunpack.c.l.b16 %v4405
      %v4438 = vunpack.c.l.b16 %v4406
      %v4439 = vunpack.c.l.b16 %v4407
      %v4440 = vunpack.c.l.b16 %v4408
      %v4441 = vpack.c.b16 %v4426, %v4425
      %v4442 = vpack.c.b16 %v4428, %v4427
      %v4443 = vpack.c.b16 %v4430, %v4429
      %v4444 = vpack.c.b16 %v4432, %v4431
      %v4445 = vpack.c.b16 %v4434, %v4433
      %v4446 = vpack.c.b16 %v4436, %v4435
      %v4447 = vpack.c.b16 %v4438, %v4437
      %v4448 = vpack.c.b16 %v4440, %v4439
      %4457 = vmatpush.bf16.msra.mxu0 %v4448
      %4458 = vmatpush.bf16.msra.mxu0 %v4447
      %4459 = vmatpush.bf16.msra.mxu0 %v4446
      %4460 = vmatpush.bf16.msra.mxu0 %v4445
      %4461 = vmatpush.bf16.msra.mxu0 %v4444
      %4462 = vmatpush.bf16.msra.mxu0 %v4443
      %4463 = vmatpush.bf16.msra.mxu0 %v4442
      %4464 = vmatpush.bf16.msra.mxu0 %v4441
      %4465 = vmatmul.bf16.gmra.mxu0 %v4368
      %v4466 = vpop.f32.mrf.mxu0
      %v4467 = vadd.f32 0.0, %v4466
      %v4468 = vpop.f32.mrf.mxu0
      %v4469 = vadd.f32 0.0, %v4468
      %4470 = vmatmul.bf16.gmra.mxu0 %v4369
      %v4471 = vpop.f32.mrf.mxu0
      %v4472 = vadd.f32 0.0, %v4471
      %v4473 = vpop.f32.mrf.mxu0
      %v4474 = vadd.f32 0.0, %v4473
      %4475 = vmatmul.bf16.gmra.mxu0 %v4370
      %v4476 = vpop.f32.mrf.mxu0
      %v4477 = vadd.f32 0.0, %v4476
      %v4478 = vpop.f32.mrf.mxu0
      %v4479 = vadd.f32 0.0, %v4478
      %4480 = vmatmul.bf16.gmra.mxu0 %v4371
      %v4481 = vpop.f32.mrf.mxu0
      %v4482 = vadd.f32 0.0, %v4481
      %v4483 = vpop.f32.mrf.mxu0
      %v4484 = vadd.f32 0.0, %v4483
      %4485 = vmatmul.bf16.gmra.mxu0 %v4372
      %v4486 = vpop.f32.mrf.mxu0
      %v4487 = vadd.f32 0.0, %v4486
      %v4488 = vpop.f32.mrf.mxu0
      %v4489 = vadd.f32 0.0, %v4488
      %4490 = vmatmul.bf16.gmra.mxu0 %v4373
      %v4491 = vpop.f32.mrf.mxu0
      %v4492 = vadd.f32 0.0, %v4491
      %v4493 = vpop.f32.mrf.mxu0
      %v4494 = vadd.f32 0.0, %v4493
      %4495 = vmatmul.bf16.gmra.mxu0 %v4374
      %v4496 = vpop.f32.mrf.mxu0
      %v4497 = vadd.f32 0.0, %v4496
      %v4498 = vpop.f32.mrf.mxu0
      %v4499 = vadd.f32 0.0, %v4498
      %4500 = vmatmul.bf16.gmra.mxu0 %v4375
      %v4501 = vpop.f32.mrf.mxu0
      %v4502 = vadd.f32 0.0, %v4501
      %v4503 = vpop.f32.mrf.mxu0
      %v4504 = vadd.f32 0.0, %v4503
      %4505 = vmatmul.bf16.gmra.mxu0 %v4376
      %v4506 = vpop.f32.mrf.mxu0
      %v4507 = vadd.f32 0.0, %v4506
      %v4508 = vpop.f32.mrf.mxu0
      %v4509 = vadd.f32 0.0, %v4508
      %4510 = vmatmul.bf16.gmra.mxu0 %v4377
      %v4511 = vpop.f32.mrf.mxu0
      %v4512 = vadd.f32 0.0, %v4511
      %v4513 = vpop.f32.mrf.mxu0
      %v4514 = vadd.f32 0.0, %v4513
      %4515 = vmatmul.bf16.gmra.mxu0 %v4378
      %v4516 = vpop.f32.mrf.mxu0
      %v4517 = vadd.f32 0.0, %v4516
      %v4518 = vpop.f32.mrf.mxu0
      %v4519 = vadd.f32 0.0, %v4518
      %4520 = vmatmul.bf16.gmra.mxu0 %v4379
      %v4521 = vpop.f32.mrf.mxu0
      %v4522 = vadd.f32 0.0, %v4521
      %v4523 = vpop.f32.mrf.mxu0
      %v4524 = vadd.f32 0.0, %v4523
      %4525 = vmatmul.bf16.gmra.mxu0 %v4380
      %v4526 = vpop.f32.mrf.mxu0
      %v4527 = vadd.f32 0.0, %v4526
      %v4528 = vpop.f32.mrf.mxu0
      %v4529 = vadd.f32 0.0, %v4528
      %4530 = vmatmul.bf16.gmra.mxu0 %v4381
      %v4531 = vpop.f32.mrf.mxu0
      %v4532 = vadd.f32 0.0, %v4531
      %v4533 = vpop.f32.mrf.mxu0
      %v4534 = vadd.f32 0.0, %v4533
      %4535 = vmatmul.bf16.gmra.mxu0 %v4382
      %v4536 = vpop.f32.mrf.mxu0
      %v4537 = vadd.f32 0.0, %v4536
      %v4538 = vpop.f32.mrf.mxu0
      %v4539 = vadd.f32 0.0, %v4538
      %4540 = vmatmul.bf16.gmra.mxu0 %v4383
      %v4541 = vpop.f32.mrf.mxu0
      %v4542 = vadd.f32 0.0, %v4541
      %v4543 = vpop.f32.mrf.mxu0
      %v4544 = vadd.f32 0.0, %v4543
      %4545 = vmatmul.bf16.gmra.mxu0 %v4384
      %v4546 = vpop.f32.mrf.mxu0
      %v4547 = vadd.f32 0.0, %v4546
      %v4548 = vpop.f32.mrf.mxu0
      %v4549 = vadd.f32 0.0, %v4548
      %4550 = vmatmul.bf16.gmra.mxu0 %v4385
      %v4551 = vpop.f32.mrf.mxu0
      %v4552 = vadd.f32 0.0, %v4551
      %v4553 = vpop.f32.mrf.mxu0
      %v4554 = vadd.f32 0.0, %v4553
      %4555 = vmatmul.bf16.gmra.mxu0 %v4386
      %v4556 = vpop.f32.mrf.mxu0
      %v4557 = vadd.f32 0.0, %v4556
      %v4558 = vpop.f32.mrf.mxu0
      %v4559 = vadd.f32 0.0, %v4558
      %4560 = vmatmul.bf16.gmra.mxu0 %v4387
      %v4561 = vpop.f32.mrf.mxu0
      %v4562 = vadd.f32 0.0, %v4561
      %v4563 = vpop.f32.mrf.mxu0
      %v4564 = vadd.f32 0.0, %v4563
      %4565 = vmatmul.bf16.gmra.mxu0 %v4388
      %v4566 = vpop.f32.mrf.mxu0
      %v4567 = vadd.f32 0.0, %v4566
      %v4568 = vpop.f32.mrf.mxu0
      %v4569 = vadd.f32 0.0, %v4568
      %4570 = vmatmul.bf16.gmra.mxu0 %v4389
      %v4571 = vpop.f32.mrf.mxu0
      %v4572 = vadd.f32 0.0, %v4571
      %v4573 = vpop.f32.mrf.mxu0
      %v4574 = vadd.f32 0.0, %v4573
      %4575 = vmatmul.bf16.gmra.mxu0 %v4390
      %v4576 = vpop.f32.mrf.mxu0
      %v4577 = vadd.f32 0.0, %v4576
      %v4578 = vpop.f32.mrf.mxu0
      %v4579 = vadd.f32 0.0, %v4578
      %4580 = vmatmul.bf16.gmra.mxu0 %v4391
      %v4581 = vpop.f32.mrf.mxu0
      %v4582 = vadd.f32 0.0, %v4581
      %v4583 = vpop.f32.mrf.mxu0
      %v4584 = vadd.f32 0.0, %v4583
      %4585 = vdwg.mxu0
      %v4586 = vadd.f32 %v4272, %v4467
      %v4587 = vadd.f32 %v4273, %v4469
      %v4588 = vadd.f32 %v4274, %v4472
      %v4589 = vadd.f32 %v4275, %v4474
      %v4590 = vadd.f32 %v4276, %v4477
      %v4591 = vadd.f32 %v4277, %v4479
      %v4592 = vadd.f32 %v4278, %v4482
      %v4593 = vadd.f32 %v4279, %v4484
      %v4594 = vadd.f32 %v4280, %v4487
      %v4595 = vadd.f32 %v4281, %v4489
      %v4596 = vadd.f32 %v4282, %v4492
      %v4597 = vadd.f32 %v4283, %v4494
      %v4598 = vadd.f32 %v4284, %v4497
      %v4599 = vadd.f32 %v4285, %v4499
      %v4600 = vadd.f32 %v4286, %v4502
      %v4601 = vadd.f32 %v4287, %v4504
      %v4602 = vadd.f32 %v4288, %v4507
      %v4603 = vadd.f32 %v4289, %v4509
      %v4604 = vadd.f32 %v4290, %v4512
      %v4605 = vadd.f32 %v4291, %v4514
      %v4606 = vadd.f32 %v4292, %v4517
      %v4607 = vadd.f32 %v4293, %v4519
      %v4608 = vadd.f32 %v4294, %v4522
      %v4609 = vadd.f32 %v4295, %v4524
      %v4610 = vadd.f32 %v4296, %v4527
      %v4611 = vadd.f32 %v4297, %v4529
      %v4612 = vadd.f32 %v4298, %v4532
      %v4613 = vadd.f32 %v4299, %v4534
      %v4614 = vadd.f32 %v4300, %v4537
      %v4615 = vadd.f32 %v4301, %v4539
      %v4616 = vadd.f32 %v4302, %v4542
      %v4617 = vadd.f32 %v4303, %v4544
      %v4618 = vadd.f32 %v4304, %v4547
      %v4619 = vadd.f32 %v4305, %v4549
      %v4620 = vadd.f32 %v4306, %v4552
      %v4621 = vadd.f32 %v4307, %v4554
      %v4622 = vadd.f32 %v4308, %v4557
      %v4623 = vadd.f32 %v4309, %v4559
      %v4624 = vadd.f32 %v4310, %v4562
      %v4625 = vadd.f32 %v4311, %v4564
      %v4626 = vadd.f32 %v4312, %v4567
      %v4627 = vadd.f32 %v4313, %v4569
      %v4628 = vadd.f32 %v4314, %v4572
      %v4629 = vadd.f32 %v4315, %v4574
      %v4630 = vadd.f32 %v4316, %v4577
      %v4631 = vadd.f32 %v4317, %v4579
      %v4632 = vadd.f32 %v4318, %v4582
      %v4633 = vadd.f32 %v4319, %v4584
      %v4634 = vld [vmem:[#allocation2 + $0x19] sm:$0xff]
      %v4635 = vld [vmem:[#allocation2 + $0x21] sm:$0xff]
      %v4636 = vld [vmem:[#allocation2 + $0x29] sm:$0xff]
      %v4637 = vld [vmem:[#allocation2 + $0x31] sm:$0xff]
      %v4638 = vld [vmem:[#allocation2 + $0x39] sm:$0xff]
      %v4639 = vld [vmem:[#allocation2 + $0x41] sm:$0xff]
      %v4640 = vld [vmem:[#allocation2 + $0x49] sm:$0xff]
      %v4641 = vld [vmem:[#allocation2 + $0x51] sm:$0xff]
      %v4642 = vld [vmem:[#allocation2 + $0x59] sm:$0xff]
      %v4643 = vld [vmem:[#allocation2 + $0x61] sm:$0xff]
      %v4644 = vld [vmem:[#allocation2 + $0x69] sm:$0xff]
      %v4645 = vld [vmem:[#allocation2 + $0x71] sm:$0xff]
      %v4646 = vld [vmem:[#allocation2 + $0x79] sm:$0xff]
      %v4647 = vld [vmem:[#allocation2 + $0x81] sm:$0xff]
      %v4648 = vld [vmem:[#allocation2 + $0x89] sm:$0xff]
      %v4649 = vld [vmem:[#allocation2 + $0x91] sm:$0xff]
      %v4650 = vld [vmem:[#allocation2 + $0x99] sm:$0xff]
      %v4651 = vld [vmem:[#allocation2 + $0xa1] sm:$0xff]
      %v4652 = vld [vmem:[#allocation2 + $0xa9] sm:$0xff]
      %v4653 = vld [vmem:[#allocation2 + $0xb1] sm:$0xff]
      %v4654 = vld [vmem:[#allocation2 + $0xb9] sm:$0xff]
      %v4655 = vld [vmem:[#allocation2 + $0xc1] sm:$0xff]
      %v4656 = vld [vmem:[#allocation2 + $0xc9] sm:$0xff]
      %v4657 = vld [vmem:[#allocation2 + $0xd1] sm:$0xff]
      %v4658 = vld [vmem:[#allocation2 + $0xd9] sm:$0xff]
      %v4659 = vld [vmem:[#allocation2 + $0xe1] sm:$0xff]
      %v4660 = vld [vmem:[#allocation2 + $0xe9] sm:$0xff]
      %v4661 = vld [vmem:[#allocation2 + $0xf1] sm:$0xff]
      %v4662 = vld [vmem:[#allocation2 + $0xf9] sm:$0xff]
      %v4663 = vld [vmem:[#allocation2 + $0x101] sm:$0xff]
      %v4664 = vld [vmem:[#allocation2 + $0x109] sm:$0xff]
      %v4665 = vld [vmem:[#allocation2 + $0x111] sm:$0xff]
      %v4666 = vld [vmem:[#allocation2 + $0x119] sm:$0xff]
      %v4667 = vld [vmem:[#allocation2 + $0x121] sm:$0xff]
      %v4668 = vld [vmem:[#allocation2 + $0x129] sm:$0xff]
      %v4669 = vld [vmem:[#allocation2 + $0x131] sm:$0xff]
      %v4670 = vld [vmem:[#allocation2 + $0x139] sm:$0xff]
      %v4671 = vld [vmem:[#allocation2 + $0x141] sm:$0xff]
      %v4672 = vld [vmem:[#allocation2 + $0x149] sm:$0xff]
      %v4673 = vld [vmem:[#allocation2 + $0x151] sm:$0xff]
      %v4674 = vld [vmem:[#allocation2 + $0x159] sm:$0xff]
      %v4675 = vld [vmem:[#allocation2 + $0x161] sm:$0xff]
      %v4676 = vld [vmem:[#allocation2 + $0x169] sm:$0xff]
      %v4677 = vld [vmem:[#allocation2 + $0x171] sm:$0xff]
      %v4678 = vld [vmem:[#allocation2 + $0x179] sm:$0xff]
      %v4679 = vld [vmem:[#allocation2 + $0x181] sm:$0xff]
      %v4680 = vld [vmem:[#allocation2 + $0x189] sm:$0xff]
      %v4681 = vld [vmem:[#allocation2 + $0x191] sm:$0xff]
      %v4682 = vpack.c.bf16 %v4635, %v4634
      %v4683 = vpack.c.bf16 %v4637, %v4636
      %v4684 = vpack.c.bf16 %v4639, %v4638
      %v4685 = vpack.c.bf16 %v4641, %v4640
      %v4686 = vpack.c.bf16 %v4643, %v4642
      %v4687 = vpack.c.bf16 %v4645, %v4644
      %v4688 = vpack.c.bf16 %v4647, %v4646
      %v4689 = vpack.c.bf16 %v4649, %v4648
      %v4690 = vpack.c.bf16 %v4651, %v4650
      %v4691 = vpack.c.bf16 %v4653, %v4652
      %v4692 = vpack.c.bf16 %v4655, %v4654
      %v4693 = vpack.c.bf16 %v4657, %v4656
      %v4694 = vpack.c.bf16 %v4659, %v4658
      %v4695 = vpack.c.bf16 %v4661, %v4660
      %v4696 = vpack.c.bf16 %v4663, %v4662
      %v4697 = vpack.c.bf16 %v4665, %v4664
      %v4698 = vpack.c.bf16 %v4667, %v4666
      %v4699 = vpack.c.bf16 %v4669, %v4668
      %v4700 = vpack.c.bf16 %v4671, %v4670
      %v4701 = vpack.c.bf16 %v4673, %v4672
      %v4702 = vpack.c.bf16 %v4675, %v4674
      %v4703 = vpack.c.bf16 %v4677, %v4676
      %v4704 = vpack.c.bf16 %v4679, %v4678
      %v4705 = vpack.c.bf16 %v4681, %v4680
      %s4706 = scalar_lea.vmem %s3, 256
      %v4707 = vld [vmem:[%s4706] sm:$0xf]
      %v4708 = vld [vmem:[%s4706 + $0x4] sm:$0xf]
      %v4709 = vld [vmem:[%s4706 + $0x8] sm:$0xf]
      %v4710 = vld [vmem:[%s4706 + $0xc] sm:$0xf]
      %v4711 = vld [vmem:[%s4706 + $0x10] sm:$0xf]
      %v4712 = vld [vmem:[%s4706 + $0x14] sm:$0xf]
      %v4713 = vld [vmem:[%s4706 + $0x18] sm:$0xf]
      %v4714 = vld [vmem:[%s4706 + $0x1c] sm:$0xf]
      %v4715 = vld [vmem:[%s4706 + $0x20] sm:$0xf]
      %v4716 = vld [vmem:[%s4706 + $0x24] sm:$0xf]
      %v4717 = vld [vmem:[%s4706 + $0x28] sm:$0xf]
      %v4718 = vld [vmem:[%s4706 + $0x2c] sm:$0xf]
      %v4719 = vld [vmem:[%s4706 + $0x30] sm:$0xf]
      %v4720 = vld [vmem:[%s4706 + $0x34] sm:$0xf]
      %v4721 = vld [vmem:[%s4706 + $0x38] sm:$0xf]
      %v4722 = vld [vmem:[%s4706 + $0x3c] sm:$0xf]
      %v4739 = vunpack.c.l.b16 %v4707
      %v4740 = vunpack.c.l.b16 %v4708
      %v4741 = vunpack.c.l.b16 %v4709
      %v4742 = vunpack.c.l.b16 %v4710
      %v4743 = vunpack.c.l.b16 %v4711
      %v4744 = vunpack.c.l.b16 %v4712
      %v4745 = vunpack.c.l.b16 %v4713
      %v4746 = vunpack.c.l.b16 %v4714
      %v4747 = vunpack.c.l.b16 %v4715
      %v4748 = vunpack.c.l.b16 %v4716
      %v4749 = vunpack.c.l.b16 %v4717
      %v4750 = vunpack.c.l.b16 %v4718
      %v4751 = vunpack.c.l.b16 %v4719
      %v4752 = vunpack.c.l.b16 %v4720
      %v4753 = vunpack.c.l.b16 %v4721
      %v4754 = vunpack.c.l.b16 %v4722
      %v4755 = vpack.c.b16 %v4740, %v4739
      %v4756 = vpack.c.b16 %v4742, %v4741
      %v4757 = vpack.c.b16 %v4744, %v4743
      %v4758 = vpack.c.b16 %v4746, %v4745
      %v4759 = vpack.c.b16 %v4748, %v4747
      %v4760 = vpack.c.b16 %v4750, %v4749
      %v4761 = vpack.c.b16 %v4752, %v4751
      %v4762 = vpack.c.b16 %v4754, %v4753
      %4771 = vmatpush.bf16.msra.mxu0 %v4762
      %4772 = vmatpush.bf16.msra.mxu0 %v4761
      %4773 = vmatpush.bf16.msra.mxu0 %v4760
      %4774 = vmatpush.bf16.msra.mxu0 %v4759
      %4775 = vmatpush.bf16.msra.mxu0 %v4758
      %4776 = vmatpush.bf16.msra.mxu0 %v4757
      %4777 = vmatpush.bf16.msra.mxu0 %v4756
      %4778 = vmatpush.bf16.msra.mxu0 %v4755
      %4779 = vmatmul.bf16.gmra.mxu0 %v4682
      %v4780 = vpop.f32.mrf.mxu0
      %v4781 = vadd.f32 0.0, %v4780
      %v4782 = vpop.f32.mrf.mxu0
      %v4783 = vadd.f32 0.0, %v4782
      %4784 = vmatmul.bf16.gmra.mxu0 %v4683
      %v4785 = vpop.f32.mrf.mxu0
      %v4786 = vadd.f32 0.0, %v4785
      %v4787 = vpop.f32.mrf.mxu0
      %v4788 = vadd.f32 0.0, %v4787
      %4789 = vmatmul.bf16.gmra.mxu0 %v4684
      %v4790 = vpop.f32.mrf.mxu0
      %v4791 = vadd.f32 0.0, %v4790
      %v4792 = vpop.f32.mrf.mxu0
      %v4793 = vadd.f32 0.0, %v4792
      %4794 = vmatmul.bf16.gmra.mxu0 %v4685
      %v4795 = vpop.f32.mrf.mxu0
      %v4796 = vadd.f32 0.0, %v4795
      %v4797 = vpop.f32.mrf.mxu0
      %v4798 = vadd.f32 0.0, %v4797
      %4799 = vmatmul.bf16.gmra.mxu0 %v4686
      %v4800 = vpop.f32.mrf.mxu0
      %v4801 = vadd.f32 0.0, %v4800
      %v4802 = vpop.f32.mrf.mxu0
      %v4803 = vadd.f32 0.0, %v4802
      %4804 = vmatmul.bf16.gmra.mxu0 %v4687
      %v4805 = vpop.f32.mrf.mxu0
      %v4806 = vadd.f32 0.0, %v4805
      %v4807 = vpop.f32.mrf.mxu0
      %v4808 = vadd.f32 0.0, %v4807
      %4809 = vmatmul.bf16.gmra.mxu0 %v4688
      %v4810 = vpop.f32.mrf.mxu0
      %v4811 = vadd.f32 0.0, %v4810
      %v4812 = vpop.f32.mrf.mxu0
      %v4813 = vadd.f32 0.0, %v4812
      %4814 = vmatmul.bf16.gmra.mxu0 %v4689
      %v4815 = vpop.f32.mrf.mxu0
      %v4816 = vadd.f32 0.0, %v4815
      %v4817 = vpop.f32.mrf.mxu0
      %v4818 = vadd.f32 0.0, %v4817
      %4819 = vmatmul.bf16.gmra.mxu0 %v4690
      %v4820 = vpop.f32.mrf.mxu0
      %v4821 = vadd.f32 0.0, %v4820
      %v4822 = vpop.f32.mrf.mxu0
      %v4823 = vadd.f32 0.0, %v4822
      %4824 = vmatmul.bf16.gmra.mxu0 %v4691
      %v4825 = vpop.f32.mrf.mxu0
      %v4826 = vadd.f32 0.0, %v4825
      %v4827 = vpop.f32.mrf.mxu0
      %v4828 = vadd.f32 0.0, %v4827
      %4829 = vmatmul.bf16.gmra.mxu0 %v4692
      %v4830 = vpop.f32.mrf.mxu0
      %v4831 = vadd.f32 0.0, %v4830
      %v4832 = vpop.f32.mrf.mxu0
      %v4833 = vadd.f32 0.0, %v4832
      %4834 = vmatmul.bf16.gmra.mxu0 %v4693
      %v4835 = vpop.f32.mrf.mxu0
      %v4836 = vadd.f32 0.0, %v4835
      %v4837 = vpop.f32.mrf.mxu0
      %v4838 = vadd.f32 0.0, %v4837
      %4839 = vmatmul.bf16.gmra.mxu0 %v4694
      %v4840 = vpop.f32.mrf.mxu0
      %v4841 = vadd.f32 0.0, %v4840
      %v4842 = vpop.f32.mrf.mxu0
      %v4843 = vadd.f32 0.0, %v4842
      %4844 = vmatmul.bf16.gmra.mxu0 %v4695
      %v4845 = vpop.f32.mrf.mxu0
      %v4846 = vadd.f32 0.0, %v4845
      %v4847 = vpop.f32.mrf.mxu0
      %v4848 = vadd.f32 0.0, %v4847
      %4849 = vmatmul.bf16.gmra.mxu0 %v4696
      %v4850 = vpop.f32.mrf.mxu0
      %v4851 = vadd.f32 0.0, %v4850
      %v4852 = vpop.f32.mrf.mxu0
      %v4853 = vadd.f32 0.0, %v4852
      %4854 = vmatmul.bf16.gmra.mxu0 %v4697
      %v4855 = vpop.f32.mrf.mxu0
      %v4856 = vadd.f32 0.0, %v4855
      %v4857 = vpop.f32.mrf.mxu0
      %v4858 = vadd.f32 0.0, %v4857
      %4859 = vmatmul.bf16.gmra.mxu0 %v4698
      %v4860 = vpop.f32.mrf.mxu0
      %v4861 = vadd.f32 0.0, %v4860
      %v4862 = vpop.f32.mrf.mxu0
      %v4863 = vadd.f32 0.0, %v4862
      %4864 = vmatmul.bf16.gmra.mxu0 %v4699
      %v4865 = vpop.f32.mrf.mxu0
      %v4866 = vadd.f32 0.0, %v4865
      %v4867 = vpop.f32.mrf.mxu0
      %v4868 = vadd.f32 0.0, %v4867
      %4869 = vmatmul.bf16.gmra.mxu0 %v4700
      %v4870 = vpop.f32.mrf.mxu0
      %v4871 = vadd.f32 0.0, %v4870
      %v4872 = vpop.f32.mrf.mxu0
      %v4873 = vadd.f32 0.0, %v4872
      %4874 = vmatmul.bf16.gmra.mxu0 %v4701
      %v4875 = vpop.f32.mrf.mxu0
      %v4876 = vadd.f32 0.0, %v4875
      %v4877 = vpop.f32.mrf.mxu0
      %v4878 = vadd.f32 0.0, %v4877
      %4879 = vmatmul.bf16.gmra.mxu0 %v4702
      %v4880 = vpop.f32.mrf.mxu0
      %v4881 = vadd.f32 0.0, %v4880
      %v4882 = vpop.f32.mrf.mxu0
      %v4883 = vadd.f32 0.0, %v4882
      %4884 = vmatmul.bf16.gmra.mxu0 %v4703
      %v4885 = vpop.f32.mrf.mxu0
      %v4886 = vadd.f32 0.0, %v4885
      %v4887 = vpop.f32.mrf.mxu0
      %v4888 = vadd.f32 0.0, %v4887
      %4889 = vmatmul.bf16.gmra.mxu0 %v4704
      %v4890 = vpop.f32.mrf.mxu0
      %v4891 = vadd.f32 0.0, %v4890
      %v4892 = vpop.f32.mrf.mxu0
      %v4893 = vadd.f32 0.0, %v4892
      %4894 = vmatmul.bf16.gmra.mxu0 %v4705
      %v4895 = vpop.f32.mrf.mxu0
      %v4896 = vadd.f32 0.0, %v4895
      %v4897 = vpop.f32.mrf.mxu0
      %v4898 = vadd.f32 0.0, %v4897
      %4899 = vdwg.mxu0
      %v4900 = vadd.f32 %v4586, %v4781
      %v4901 = vadd.f32 %v4587, %v4783
      %v4902 = vadd.f32 %v4588, %v4786
      %v4903 = vadd.f32 %v4589, %v4788
      %v4904 = vadd.f32 %v4590, %v4791
      %v4905 = vadd.f32 %v4591, %v4793
      %v4906 = vadd.f32 %v4592, %v4796
      %v4907 = vadd.f32 %v4593, %v4798
      %v4908 = vadd.f32 %v4594, %v4801
      %v4909 = vadd.f32 %v4595, %v4803
      %v4910 = vadd.f32 %v4596, %v4806
      %v4911 = vadd.f32 %v4597, %v4808
      %v4912 = vadd.f32 %v4598, %v4811
      %v4913 = vadd.f32 %v4599, %v4813
      %v4914 = vadd.f32 %v4600, %v4816
      %v4915 = vadd.f32 %v4601, %v4818
      %v4916 = vadd.f32 %v4602, %v4821
      %v4917 = vadd.f32 %v4603, %v4823
      %v4918 = vadd.f32 %v4604, %v4826
      %v4919 = vadd.f32 %v4605, %v4828
      %v4920 = vadd.f32 %v4606, %v4831
      %v4921 = vadd.f32 %v4607, %v4833
      %v4922 = vadd.f32 %v4608, %v4836
      %v4923 = vadd.f32 %v4609, %v4838
      %v4924 = vadd.f32 %v4610, %v4841
      %v4925 = vadd.f32 %v4611, %v4843
      %v4926 = vadd.f32 %v4612, %v4846
      %v4927 = vadd.f32 %v4613, %v4848
      %v4928 = vadd.f32 %v4614, %v4851
      %v4929 = vadd.f32 %v4615, %v4853
      %v4930 = vadd.f32 %v4616, %v4856
      %v4931 = vadd.f32 %v4617, %v4858
      %v4932 = vadd.f32 %v4618, %v4861
      %v4933 = vadd.f32 %v4619, %v4863
      %v4934 = vadd.f32 %v4620, %v4866
      %v4935 = vadd.f32 %v4621, %v4868
      %v4936 = vadd.f32 %v4622, %v4871
      %v4937 = vadd.f32 %v4623, %v4873
      %v4938 = vadd.f32 %v4624, %v4876
      %v4939 = vadd.f32 %v4625, %v4878
      %v4940 = vadd.f32 %v4626, %v4881
      %v4941 = vadd.f32 %v4627, %v4883
      %v4942 = vadd.f32 %v4628, %v4886
      %v4943 = vadd.f32 %v4629, %v4888
      %v4944 = vadd.f32 %v4630, %v4891
      %v4945 = vadd.f32 %v4631, %v4893
      %v4946 = vadd.f32 %v4632, %v4896
      %v4947 = vadd.f32 %v4633, %v4898
      %v4948 = vld [vmem:[#allocation2 + $0x1a] sm:$0xff]
      %v4949 = vld [vmem:[#allocation2 + $0x22] sm:$0xff]
      %v4950 = vld [vmem:[#allocation2 + $0x2a] sm:$0xff]
      %v4951 = vld [vmem:[#allocation2 + $0x32] sm:$0xff]
      %v4952 = vld [vmem:[#allocation2 + $0x3a] sm:$0xff]
      %v4953 = vld [vmem:[#allocation2 + $0x42] sm:$0xff]
      %v4954 = vld [vmem:[#allocation2 + $0x4a] sm:$0xff]
      %v4955 = vld [vmem:[#allocation2 + $0x52] sm:$0xff]
      %v4956 = vld [vmem:[#allocation2 + $0x5a] sm:$0xff]
      %v4957 = vld [vmem:[#allocation2 + $0x62] sm:$0xff]
      %v4958 = vld [vmem:[#allocation2 + $0x6a] sm:$0xff]
      %v4959 = vld [vmem:[#allocation2 + $0x72] sm:$0xff]
      %v4960 = vld [vmem:[#allocation2 + $0x7a] sm:$0xff]
      %v4961 = vld [vmem:[#allocation2 + $0x82] sm:$0xff]
      %v4962 = vld [vmem:[#allocation2 + $0x8a] sm:$0xff]
      %v4963 = vld [vmem:[#allocation2 + $0x92] sm:$0xff]
      %v4964 = vld [vmem:[#allocation2 + $0x9a] sm:$0xff]
      %v4965 = vld [vmem:[#allocation2 + $0xa2] sm:$0xff]
      %v4966 = vld [vmem:[#allocation2 + $0xaa] sm:$0xff]
      %v4967 = vld [vmem:[#allocation2 + $0xb2] sm:$0xff]
      %v4968 = vld [vmem:[#allocation2 + $0xba] sm:$0xff]
      %v4969 = vld [vmem:[#allocation2 + $0xc2] sm:$0xff]
      %v4970 = vld [vmem:[#allocation2 + $0xca] sm:$0xff]
      %v4971 = vld [vmem:[#allocation2 + $0xd2] sm:$0xff]
      %v4972 = vld [vmem:[#allocation2 + $0xda] sm:$0xff]
      %v4973 = vld [vmem:[#allocation2 + $0xe2] sm:$0xff]
      %v4974 = vld [vmem:[#allocation2 + $0xea] sm:$0xff]
      %v4975 = vld [vmem:[#allocation2 + $0xf2] sm:$0xff]
      %v4976 = vld [vmem:[#allocation2 + $0xfa] sm:$0xff]
      %v4977 = vld [vmem:[#allocation2 + $0x102] sm:$0xff]
      %v4978 = vld [vmem:[#allocation2 + $0x10a] sm:$0xff]
      %v4979 = vld [vmem:[#allocation2 + $0x112] sm:$0xff]
      %v4980 = vld [vmem:[#allocation2 + $0x11a] sm:$0xff]
      %v4981 = vld [vmem:[#allocation2 + $0x122] sm:$0xff]
      %v4982 = vld [vmem:[#allocation2 + $0x12a] sm:$0xff]
      %v4983 = vld [vmem:[#allocation2 + $0x132] sm:$0xff]
      %v4984 = vld [vmem:[#allocation2 + $0x13a] sm:$0xff]
      %v4985 = vld [vmem:[#allocation2 + $0x142] sm:$0xff]
      %v4986 = vld [vmem:[#allocation2 + $0x14a] sm:$0xff]
      %v4987 = vld [vmem:[#allocation2 + $0x152] sm:$0xff]
      %v4988 = vld [vmem:[#allocation2 + $0x15a] sm:$0xff]
      %v4989 = vld [vmem:[#allocation2 + $0x162] sm:$0xff]
      %v4990 = vld [vmem:[#allocation2 + $0x16a] sm:$0xff]
      %v4991 = vld [vmem:[#allocation2 + $0x172] sm:$0xff]
      %v4992 = vld [vmem:[#allocation2 + $0x17a] sm:$0xff]
      %v4993 = vld [vmem:[#allocation2 + $0x182] sm:$0xff]
      %v4994 = vld [vmem:[#allocation2 + $0x18a] sm:$0xff]
      %v4995 = vld [vmem:[#allocation2 + $0x192] sm:$0xff]
      %v4996 = vpack.c.bf16 %v4949, %v4948
      %v4997 = vpack.c.bf16 %v4951, %v4950
      %v4998 = vpack.c.bf16 %v4953, %v4952
      %v4999 = vpack.c.bf16 %v4955, %v4954
      %v5000 = vpack.c.bf16 %v4957, %v4956
      %v5001 = vpack.c.bf16 %v4959, %v4958
      %v5002 = vpack.c.bf16 %v4961, %v4960
      %v5003 = vpack.c.bf16 %v4963, %v4962
      %v5004 = vpack.c.bf16 %v4965, %v4964
      %v5005 = vpack.c.bf16 %v4967, %v4966
      %v5006 = vpack.c.bf16 %v4969, %v4968
      %v5007 = vpack.c.bf16 %v4971, %v4970
      %v5008 = vpack.c.bf16 %v4973, %v4972
      %v5009 = vpack.c.bf16 %v4975, %v4974
      %v5010 = vpack.c.bf16 %v4977, %v4976
      %v5011 = vpack.c.bf16 %v4979, %v4978
      %v5012 = vpack.c.bf16 %v4981, %v4980
      %v5013 = vpack.c.bf16 %v4983, %v4982
      %v5014 = vpack.c.bf16 %v4985, %v4984
      %v5015 = vpack.c.bf16 %v4987, %v4986
      %v5016 = vpack.c.bf16 %v4989, %v4988
      %v5017 = vpack.c.bf16 %v4991, %v4990
      %v5018 = vpack.c.bf16 %v4993, %v4992
      %v5019 = vpack.c.bf16 %v4995, %v4994
      %s5020 = scalar_lea.vmem %s3, 320
      %v5021 = vld [vmem:[%s5020] sm:$0xf]
      %v5022 = vld [vmem:[%s5020 + $0x4] sm:$0xf]
      %v5023 = vld [vmem:[%s5020 + $0x8] sm:$0xf]
      %v5024 = vld [vmem:[%s5020 + $0xc] sm:$0xf]
      %v5025 = vld [vmem:[%s5020 + $0x10] sm:$0xf]
      %v5026 = vld [vmem:[%s5020 + $0x14] sm:$0xf]
      %v5027 = vld [vmem:[%s5020 + $0x18] sm:$0xf]
      %v5028 = vld [vmem:[%s5020 + $0x1c] sm:$0xf]
      %v5029 = vld [vmem:[%s5020 + $0x20] sm:$0xf]
      %v5030 = vld [vmem:[%s5020 + $0x24] sm:$0xf]
      %v5031 = vld [vmem:[%s5020 + $0x28] sm:$0xf]
      %v5032 = vld [vmem:[%s5020 + $0x2c] sm:$0xf]
      %v5033 = vld [vmem:[%s5020 + $0x30] sm:$0xf]
      %v5034 = vld [vmem:[%s5020 + $0x34] sm:$0xf]
      %v5035 = vld [vmem:[%s5020 + $0x38] sm:$0xf]
      %v5036 = vld [vmem:[%s5020 + $0x3c] sm:$0xf]
      %v5053 = vunpack.c.l.b16 %v5021
      %v5054 = vunpack.c.l.b16 %v5022
      %v5055 = vunpack.c.l.b16 %v5023
      %v5056 = vunpack.c.l.b16 %v5024
      %v5057 = vunpack.c.l.b16 %v5025
      %v5058 = vunpack.c.l.b16 %v5026
      %v5059 = vunpack.c.l.b16 %v5027
      %v5060 = vunpack.c.l.b16 %v5028
      %v5061 = vunpack.c.l.b16 %v5029
      %v5062 = vunpack.c.l.b16 %v5030
      %v5063 = vunpack.c.l.b16 %v5031
      %v5064 = vunpack.c.l.b16 %v5032
      %v5065 = vunpack.c.l.b16 %v5033
      %v5066 = vunpack.c.l.b16 %v5034
      %v5067 = vunpack.c.l.b16 %v5035
      %v5068 = vunpack.c.l.b16 %v5036
      %v5069 = vpack.c.b16 %v5054, %v5053
      %v5070 = vpack.c.b16 %v5056, %v5055
      %v5071 = vpack.c.b16 %v5058, %v5057
      %v5072 = vpack.c.b16 %v5060, %v5059
      %v5073 = vpack.c.b16 %v5062, %v5061
      %v5074 = vpack.c.b16 %v5064, %v5063
      %v5075 = vpack.c.b16 %v5066, %v5065
      %v5076 = vpack.c.b16 %v5068, %v5067
      %5085 = vmatpush.bf16.msra.mxu0 %v5076
      %5086 = vmatpush.bf16.msra.mxu0 %v5075
      %5087 = vmatpush.bf16.msra.mxu0 %v5074
      %5088 = vmatpush.bf16.msra.mxu0 %v5073
      %5089 = vmatpush.bf16.msra.mxu0 %v5072
      %5090 = vmatpush.bf16.msra.mxu0 %v5071
      %5091 = vmatpush.bf16.msra.mxu0 %v5070
      %5092 = vmatpush.bf16.msra.mxu0 %v5069
      %5093 = vmatmul.bf16.gmra.mxu0 %v4996
      %v5094 = vpop.f32.mrf.mxu0
      %v5095 = vadd.f32 0.0, %v5094
      %v5096 = vpop.f32.mrf.mxu0
      %v5097 = vadd.f32 0.0, %v5096
      %5098 = vmatmul.bf16.gmra.mxu0 %v4997
      %v5099 = vpop.f32.mrf.mxu0
      %v5100 = vadd.f32 0.0, %v5099
      %v5101 = vpop.f32.mrf.mxu0
      %v5102 = vadd.f32 0.0, %v5101
      %5103 = vmatmul.bf16.gmra.mxu0 %v4998
      %v5104 = vpop.f32.mrf.mxu0
      %v5105 = vadd.f32 0.0, %v5104
      %v5106 = vpop.f32.mrf.mxu0
      %v5107 = vadd.f32 0.0, %v5106
      %5108 = vmatmul.bf16.gmra.mxu0 %v4999
      %v5109 = vpop.f32.mrf.mxu0
      %v5110 = vadd.f32 0.0, %v5109
      %v5111 = vpop.f32.mrf.mxu0
      %v5112 = vadd.f32 0.0, %v5111
      %5113 = vmatmul.bf16.gmra.mxu0 %v5000
      %v5114 = vpop.f32.mrf.mxu0
      %v5115 = vadd.f32 0.0, %v5114
      %v5116 = vpop.f32.mrf.mxu0
      %v5117 = vadd.f32 0.0, %v5116
      %5118 = vmatmul.bf16.gmra.mxu0 %v5001
      %v5119 = vpop.f32.mrf.mxu0
      %v5120 = vadd.f32 0.0, %v5119
      %v5121 = vpop.f32.mrf.mxu0
      %v5122 = vadd.f32 0.0, %v5121
      %5123 = vmatmul.bf16.gmra.mxu0 %v5002
      %v5124 = vpop.f32.mrf.mxu0
      %v5125 = vadd.f32 0.0, %v5124
      %v5126 = vpop.f32.mrf.mxu0
      %v5127 = vadd.f32 0.0, %v5126
      %5128 = vmatmul.bf16.gmra.mxu0 %v5003
      %v5129 = vpop.f32.mrf.mxu0
      %v5130 = vadd.f32 0.0, %v5129
      %v5131 = vpop.f32.mrf.mxu0
      %v5132 = vadd.f32 0.0, %v5131
      %5133 = vmatmul.bf16.gmra.mxu0 %v5004
      %v5134 = vpop.f32.mrf.mxu0
      %v5135 = vadd.f32 0.0, %v5134
      %v5136 = vpop.f32.mrf.mxu0
      %v5137 = vadd.f32 0.0, %v5136
      %5138 = vmatmul.bf16.gmra.mxu0 %v5005
      %v5139 = vpop.f32.mrf.mxu0
      %v5140 = vadd.f32 0.0, %v5139
      %v5141 = vpop.f32.mrf.mxu0
      %v5142 = vadd.f32 0.0, %v5141
      %5143 = vmatmul.bf16.gmra.mxu0 %v5006
      %v5144 = vpop.f32.mrf.mxu0
      %v5145 = vadd.f32 0.0, %v5144
      %v5146 = vpop.f32.mrf.mxu0
      %v5147 = vadd.f32 0.0, %v5146
      %5148 = vmatmul.bf16.gmra.mxu0 %v5007
      %v5149 = vpop.f32.mrf.mxu0
      %v5150 = vadd.f32 0.0, %v5149
      %v5151 = vpop.f32.mrf.mxu0
      %v5152 = vadd.f32 0.0, %v5151
      %5153 = vmatmul.bf16.gmra.mxu0 %v5008
      %v5154 = vpop.f32.mrf.mxu0
      %v5155 = vadd.f32 0.0, %v5154
      %v5156 = vpop.f32.mrf.mxu0
      %v5157 = vadd.f32 0.0, %v5156
      %5158 = vmatmul.bf16.gmra.mxu0 %v5009
      %v5159 = vpop.f32.mrf.mxu0
      %v5160 = vadd.f32 0.0, %v5159
      %v5161 = vpop.f32.mrf.mxu0
      %v5162 = vadd.f32 0.0, %v5161
      %5163 = vmatmul.bf16.gmra.mxu0 %v5010
      %v5164 = vpop.f32.mrf.mxu0
      %v5165 = vadd.f32 0.0, %v5164
      %v5166 = vpop.f32.mrf.mxu0
      %v5167 = vadd.f32 0.0, %v5166
      %5168 = vmatmul.bf16.gmra.mxu0 %v5011
      %v5169 = vpop.f32.mrf.mxu0
      %v5170 = vadd.f32 0.0, %v5169
      %v5171 = vpop.f32.mrf.mxu0
      %v5172 = vadd.f32 0.0, %v5171
      %5173 = vmatmul.bf16.gmra.mxu0 %v5012
      %v5174 = vpop.f32.mrf.mxu0
      %v5175 = vadd.f32 0.0, %v5174
      %v5176 = vpop.f32.mrf.mxu0
      %v5177 = vadd.f32 0.0, %v5176
      %5178 = vmatmul.bf16.gmra.mxu0 %v5013
      %v5179 = vpop.f32.mrf.mxu0
      %v5180 = vadd.f32 0.0, %v5179
      %v5181 = vpop.f32.mrf.mxu0
      %v5182 = vadd.f32 0.0, %v5181
      %5183 = vmatmul.bf16.gmra.mxu0 %v5014
      %v5184 = vpop.f32.mrf.mxu0
      %v5185 = vadd.f32 0.0, %v5184
      %v5186 = vpop.f32.mrf.mxu0
      %v5187 = vadd.f32 0.0, %v5186
      %5188 = vmatmul.bf16.gmra.mxu0 %v5015
      %v5189 = vpop.f32.mrf.mxu0
      %v5190 = vadd.f32 0.0, %v5189
      %v5191 = vpop.f32.mrf.mxu0
      %v5192 = vadd.f32 0.0, %v5191
      %5193 = vmatmul.bf16.gmra.mxu0 %v5016
      %v5194 = vpop.f32.mrf.mxu0
      %v5195 = vadd.f32 0.0, %v5194
      %v5196 = vpop.f32.mrf.mxu0
      %v5197 = vadd.f32 0.0, %v5196
      %5198 = vmatmul.bf16.gmra.mxu0 %v5017
      %v5199 = vpop.f32.mrf.mxu0
      %v5200 = vadd.f32 0.0, %v5199
      %v5201 = vpop.f32.mrf.mxu0
      %v5202 = vadd.f32 0.0, %v5201
      %5203 = vmatmul.bf16.gmra.mxu0 %v5018
      %v5204 = vpop.f32.mrf.mxu0
      %v5205 = vadd.f32 0.0, %v5204
      %v5206 = vpop.f32.mrf.mxu0
      %v5207 = vadd.f32 0.0, %v5206
      %5208 = vmatmul.bf16.gmra.mxu0 %v5019
      %v5209 = vpop.f32.mrf.mxu0
      %v5210 = vadd.f32 0.0, %v5209
      %v5211 = vpop.f32.mrf.mxu0
      %v5212 = vadd.f32 0.0, %v5211
      %5213 = vdwg.mxu0
      %v5214 = vadd.f32 %v4900, %v5095
      %v5215 = vadd.f32 %v4901, %v5097
      %v5216 = vadd.f32 %v4902, %v5100
      %v5217 = vadd.f32 %v4903, %v5102
      %v5218 = vadd.f32 %v4904, %v5105
      %v5219 = vadd.f32 %v4905, %v5107
      %v5220 = vadd.f32 %v4906, %v5110
      %v5221 = vadd.f32 %v4907, %v5112
      %v5222 = vadd.f32 %v4908, %v5115
      %v5223 = vadd.f32 %v4909, %v5117
      %v5224 = vadd.f32 %v4910, %v5120
      %v5225 = vadd.f32 %v4911, %v5122
      %v5226 = vadd.f32 %v4912, %v5125
      %v5227 = vadd.f32 %v4913, %v5127
      %v5228 = vadd.f32 %v4914, %v5130
      %v5229 = vadd.f32 %v4915, %v5132
      %v5230 = vadd.f32 %v4916, %v5135
      %v5231 = vadd.f32 %v4917, %v5137
      %v5232 = vadd.f32 %v4918, %v5140
      %v5233 = vadd.f32 %v4919, %v5142
      %v5234 = vadd.f32 %v4920, %v5145
      %v5235 = vadd.f32 %v4921, %v5147
      %v5236 = vadd.f32 %v4922, %v5150
      %v5237 = vadd.f32 %v4923, %v5152
      %v5238 = vadd.f32 %v4924, %v5155
      %v5239 = vadd.f32 %v4925, %v5157
      %v5240 = vadd.f32 %v4926, %v5160
      %v5241 = vadd.f32 %v4927, %v5162
      %v5242 = vadd.f32 %v4928, %v5165
      %v5243 = vadd.f32 %v4929, %v5167
      %v5244 = vadd.f32 %v4930, %v5170
      %v5245 = vadd.f32 %v4931, %v5172
      %v5246 = vadd.f32 %v4932, %v5175
      %v5247 = vadd.f32 %v4933, %v5177
      %v5248 = vadd.f32 %v4934, %v5180
      %v5249 = vadd.f32 %v4935, %v5182
      %v5250 = vadd.f32 %v4936, %v5185
      %v5251 = vadd.f32 %v4937, %v5187
      %v5252 = vadd.f32 %v4938, %v5190
      %v5253 = vadd.f32 %v4939, %v5192
      %v5254 = vadd.f32 %v4940, %v5195
      %v5255 = vadd.f32 %v4941, %v5197
      %v5256 = vadd.f32 %v4942, %v5200
      %v5257 = vadd.f32 %v4943, %v5202
      %v5258 = vadd.f32 %v4944, %v5205
      %v5259 = vadd.f32 %v4945, %v5207
      %v5260 = vadd.f32 %v4946, %v5210
      %v5261 = vadd.f32 %v4947, %v5212
      %v5262 = vld [vmem:[#allocation2 + $0x30] sm:$0xff]
      %v5263 = vld [vmem:[#allocation2 + $0x38] sm:$0xff]
      %v5264 = vld [vmem:[#allocation2 + $0x40] sm:$0xff]
      %v5265 = vld [vmem:[#allocation2 + $0x48] sm:$0xff]
      %v5266 = vld [vmem:[#allocation2 + $0x50] sm:$0xff]
      %v5267 = vld [vmem:[#allocation2 + $0x58] sm:$0xff]
      %v5268 = vld [vmem:[#allocation2 + $0x60] sm:$0xff]
      %v5269 = vld [vmem:[#allocation2 + $0x68] sm:$0xff]
      %v5270 = vld [vmem:[#allocation2 + $0x70] sm:$0xff]
      %v5271 = vld [vmem:[#allocation2 + $0x78] sm:$0xff]
      %v5272 = vld [vmem:[#allocation2 + $0x80] sm:$0xff]
      %v5273 = vld [vmem:[#allocation2 + $0x88] sm:$0xff]
      %v5274 = vld [vmem:[#allocation2 + $0x90] sm:$0xff]
      %v5275 = vld [vmem:[#allocation2 + $0x98] sm:$0xff]
      %v5276 = vld [vmem:[#allocation2 + $0xa0] sm:$0xff]
      %v5277 = vld [vmem:[#allocation2 + $0xa8] sm:$0xff]
      %v5278 = vld [vmem:[#allocation2 + $0xb0] sm:$0xff]
      %v5279 = vld [vmem:[#allocation2 + $0xb8] sm:$0xff]
      %v5280 = vld [vmem:[#allocation2 + $0xc0] sm:$0xff]
      %v5281 = vld [vmem:[#allocation2 + $0xc8] sm:$0xff]
      %v5282 = vld [vmem:[#allocation2 + $0xd0] sm:$0xff]
      %v5283 = vld [vmem:[#allocation2 + $0xd8] sm:$0xff]
      %v5284 = vld [vmem:[#allocation2 + $0xe0] sm:$0xff]
      %v5285 = vld [vmem:[#allocation2 + $0xe8] sm:$0xff]
      %v5286 = vld [vmem:[#allocation2 + $0xf0] sm:$0xff]
      %v5287 = vld [vmem:[#allocation2 + $0xf8] sm:$0xff]
      %v5288 = vld [vmem:[#allocation2 + $0x100] sm:$0xff]
      %v5289 = vld [vmem:[#allocation2 + $0x108] sm:$0xff]
      %v5290 = vld [vmem:[#allocation2 + $0x110] sm:$0xff]
      %v5291 = vld [vmem:[#allocation2 + $0x118] sm:$0xff]
      %v5292 = vld [vmem:[#allocation2 + $0x120] sm:$0xff]
      %v5293 = vld [vmem:[#allocation2 + $0x128] sm:$0xff]
      %v5294 = vld [vmem:[#allocation2 + $0x130] sm:$0xff]
      %v5295 = vld [vmem:[#allocation2 + $0x138] sm:$0xff]
      %v5296 = vld [vmem:[#allocation2 + $0x140] sm:$0xff]
      %v5297 = vld [vmem:[#allocation2 + $0x148] sm:$0xff]
      %v5298 = vld [vmem:[#allocation2 + $0x150] sm:$0xff]
      %v5299 = vld [vmem:[#allocation2 + $0x158] sm:$0xff]
      %v5300 = vld [vmem:[#allocation2 + $0x160] sm:$0xff]
      %v5301 = vld [vmem:[#allocation2 + $0x168] sm:$0xff]
      %v5302 = vld [vmem:[#allocation2 + $0x170] sm:$0xff]
      %v5303 = vld [vmem:[#allocation2 + $0x178] sm:$0xff]
      %v5304 = vld [vmem:[#allocation2 + $0x180] sm:$0xff]
      %v5305 = vld [vmem:[#allocation2 + $0x188] sm:$0xff]
      %v5306 = vld [vmem:[#allocation2 + $0x190] sm:$0xff]
      %v5307 = vld [vmem:[#allocation2 + $0x198] sm:$0xff]
      %v5308 = vld [vmem:[#allocation2 + $0x1a0] sm:$0xff]
      %v5309 = vld [vmem:[#allocation2 + $0x1a8] sm:$0xff]
      %v5310 = vpack.c.bf16 %v5263, %v5262
      %v5311 = vpack.c.bf16 %v5265, %v5264
      %v5312 = vpack.c.bf16 %v5267, %v5266
      %v5313 = vpack.c.bf16 %v5269, %v5268
      %v5314 = vpack.c.bf16 %v5271, %v5270
      %v5315 = vpack.c.bf16 %v5273, %v5272
      %v5316 = vpack.c.bf16 %v5275, %v5274
      %v5317 = vpack.c.bf16 %v5277, %v5276
      %v5318 = vpack.c.bf16 %v5279, %v5278
      %v5319 = vpack.c.bf16 %v5281, %v5280
      %v5320 = vpack.c.bf16 %v5283, %v5282
      %v5321 = vpack.c.bf16 %v5285, %v5284
      %v5322 = vpack.c.bf16 %v5287, %v5286
      %v5323 = vpack.c.bf16 %v5289, %v5288
      %v5324 = vpack.c.bf16 %v5291, %v5290
      %v5325 = vpack.c.bf16 %v5293, %v5292
      %v5326 = vpack.c.bf16 %v5295, %v5294
      %v5327 = vpack.c.bf16 %v5297, %v5296
      %v5328 = vpack.c.bf16 %v5299, %v5298
      %v5329 = vpack.c.bf16 %v5301, %v5300
      %v5330 = vpack.c.bf16 %v5303, %v5302
      %v5331 = vpack.c.bf16 %v5305, %v5304
      %v5332 = vpack.c.bf16 %v5307, %v5306
      %v5333 = vpack.c.bf16 %v5309, %v5308
      %s5334 = scalar_lea.vmem %s3, 384
      %v5335 = vld [vmem:[%s5334] sm:$0xf]
      %v5336 = vld [vmem:[%s5334 + $0x4] sm:$0xf]
      %v5337 = vld [vmem:[%s5334 + $0x8] sm:$0xf]
      %v5338 = vld [vmem:[%s5334 + $0xc] sm:$0xf]
      %v5339 = vld [vmem:[%s5334 + $0x10] sm:$0xf]
      %v5340 = vld [vmem:[%s5334 + $0x14] sm:$0xf]
      %v5341 = vld [vmem:[%s5334 + $0x18] sm:$0xf]
      %v5342 = vld [vmem:[%s5334 + $0x1c] sm:$0xf]
      %v5343 = vld [vmem:[%s5334 + $0x20] sm:$0xf]
      %v5344 = vld [vmem:[%s5334 + $0x24] sm:$0xf]
      %v5345 = vld [vmem:[%s5334 + $0x28] sm:$0xf]
      %v5346 = vld [vmem:[%s5334 + $0x2c] sm:$0xf]
      %v5347 = vld [vmem:[%s5334 + $0x30] sm:$0xf]
      %v5348 = vld [vmem:[%s5334 + $0x34] sm:$0xf]
      %v5349 = vld [vmem:[%s5334 + $0x38] sm:$0xf]
      %v5350 = vld [vmem:[%s5334 + $0x3c] sm:$0xf]
      %v5367 = vunpack.c.l.b16 %v5335
      %v5368 = vunpack.c.l.b16 %v5336
      %v5369 = vunpack.c.l.b16 %v5337
      %v5370 = vunpack.c.l.b16 %v5338
      %v5371 = vunpack.c.l.b16 %v5339
      %v5372 = vunpack.c.l.b16 %v5340
      %v5373 = vunpack.c.l.b16 %v5341
      %v5374 = vunpack.c.l.b16 %v5342
      %v5375 = vunpack.c.l.b16 %v5343
      %v5376 = vunpack.c.l.b16 %v5344
      %v5377 = vunpack.c.l.b16 %v5345
      %v5378 = vunpack.c.l.b16 %v5346
      %v5379 = vunpack.c.l.b16 %v5347
      %v5380 = vunpack.c.l.b16 %v5348
      %v5381 = vunpack.c.l.b16 %v5349
      %v5382 = vunpack.c.l.b16 %v5350
      %v5383 = vpack.c.b16 %v5368, %v5367
      %v5384 = vpack.c.b16 %v5370, %v5369
      %v5385 = vpack.c.b16 %v5372, %v5371
      %v5386 = vpack.c.b16 %v5374, %v5373
      %v5387 = vpack.c.b16 %v5376, %v5375
      %v5388 = vpack.c.b16 %v5378, %v5377
      %v5389 = vpack.c.b16 %v5380, %v5379
      %v5390 = vpack.c.b16 %v5382, %v5381
      %5399 = vmatpush.bf16.msra.mxu0 %v5390
      %5400 = vmatpush.bf16.msra.mxu0 %v5389
      %5401 = vmatpush.bf16.msra.mxu0 %v5388
      %5402 = vmatpush.bf16.msra.mxu0 %v5387
      %5403 = vmatpush.bf16.msra.mxu0 %v5386
      %5404 = vmatpush.bf16.msra.mxu0 %v5385
      %5405 = vmatpush.bf16.msra.mxu0 %v5384
      %5406 = vmatpush.bf16.msra.mxu0 %v5383
      %5407 = vmatmul.bf16.gmra.mxu0 %v5310
      %v5408 = vpop.f32.mrf.mxu0
      %v5409 = vadd.f32 0.0, %v5408
      %v5410 = vpop.f32.mrf.mxu0
      %v5411 = vadd.f32 0.0, %v5410
      %5412 = vmatmul.bf16.gmra.mxu0 %v5311
      %v5413 = vpop.f32.mrf.mxu0
      %v5414 = vadd.f32 0.0, %v5413
      %v5415 = vpop.f32.mrf.mxu0
      %v5416 = vadd.f32 0.0, %v5415
      %5417 = vmatmul.bf16.gmra.mxu0 %v5312
      %v5418 = vpop.f32.mrf.mxu0
      %v5419 = vadd.f32 0.0, %v5418
      %v5420 = vpop.f32.mrf.mxu0
      %v5421 = vadd.f32 0.0, %v5420
      %5422 = vmatmul.bf16.gmra.mxu0 %v5313
      %v5423 = vpop.f32.mrf.mxu0
      %v5424 = vadd.f32 0.0, %v5423
      %v5425 = vpop.f32.mrf.mxu0
      %v5426 = vadd.f32 0.0, %v5425
      %5427 = vmatmul.bf16.gmra.mxu0 %v5314
      %v5428 = vpop.f32.mrf.mxu0
      %v5429 = vadd.f32 0.0, %v5428
      %v5430 = vpop.f32.mrf.mxu0
      %v5431 = vadd.f32 0.0, %v5430
      %5432 = vmatmul.bf16.gmra.mxu0 %v5315
      %v5433 = vpop.f32.mrf.mxu0
      %v5434 = vadd.f32 0.0, %v5433
      %v5435 = vpop.f32.mrf.mxu0
      %v5436 = vadd.f32 0.0, %v5435
      %5437 = vmatmul.bf16.gmra.mxu0 %v5316
      %v5438 = vpop.f32.mrf.mxu0
      %v5439 = vadd.f32 0.0, %v5438
      %v5440 = vpop.f32.mrf.mxu0
      %v5441 = vadd.f32 0.0, %v5440
      %5442 = vmatmul.bf16.gmra.mxu0 %v5317
      %v5443 = vpop.f32.mrf.mxu0
      %v5444 = vadd.f32 0.0, %v5443
      %v5445 = vpop.f32.mrf.mxu0
      %v5446 = vadd.f32 0.0, %v5445
      %5447 = vmatmul.bf16.gmra.mxu0 %v5318
      %v5448 = vpop.f32.mrf.mxu0
      %v5449 = vadd.f32 0.0, %v5448
      %v5450 = vpop.f32.mrf.mxu0
      %v5451 = vadd.f32 0.0, %v5450
      %5452 = vmatmul.bf16.gmra.mxu0 %v5319
      %v5453 = vpop.f32.mrf.mxu0
      %v5454 = vadd.f32 0.0, %v5453
      %v5455 = vpop.f32.mrf.mxu0
      %v5456 = vadd.f32 0.0, %v5455
      %5457 = vmatmul.bf16.gmra.mxu0 %v5320
      %v5458 = vpop.f32.mrf.mxu0
      %v5459 = vadd.f32 0.0, %v5458
      %v5460 = vpop.f32.mrf.mxu0
      %v5461 = vadd.f32 0.0, %v5460
      %5462 = vmatmul.bf16.gmra.mxu0 %v5321
      %v5463 = vpop.f32.mrf.mxu0
      %v5464 = vadd.f32 0.0, %v5463
      %v5465 = vpop.f32.mrf.mxu0
      %v5466 = vadd.f32 0.0, %v5465
      %5467 = vmatmul.bf16.gmra.mxu0 %v5322
      %v5468 = vpop.f32.mrf.mxu0
      %v5469 = vadd.f32 0.0, %v5468
      %v5470 = vpop.f32.mrf.mxu0
      %v5471 = vadd.f32 0.0, %v5470
      %5472 = vmatmul.bf16.gmra.mxu0 %v5323
      %v5473 = vpop.f32.mrf.mxu0
      %v5474 = vadd.f32 0.0, %v5473
      %v5475 = vpop.f32.mrf.mxu0
      %v5476 = vadd.f32 0.0, %v5475
      %5477 = vmatmul.bf16.gmra.mxu0 %v5324
      %v5478 = vpop.f32.mrf.mxu0
      %v5479 = vadd.f32 0.0, %v5478
      %v5480 = vpop.f32.mrf.mxu0
      %v5481 = vadd.f32 0.0, %v5480
      %5482 = vmatmul.bf16.gmra.mxu0 %v5325
      %v5483 = vpop.f32.mrf.mxu0
      %v5484 = vadd.f32 0.0, %v5483
      %v5485 = vpop.f32.mrf.mxu0
      %v5486 = vadd.f32 0.0, %v5485
      %5487 = vmatmul.bf16.gmra.mxu0 %v5326
      %v5488 = vpop.f32.mrf.mxu0
      %v5489 = vadd.f32 0.0, %v5488
      %v5490 = vpop.f32.mrf.mxu0
      %v5491 = vadd.f32 0.0, %v5490
      %5492 = vmatmul.bf16.gmra.mxu0 %v5327
      %v5493 = vpop.f32.mrf.mxu0
      %v5494 = vadd.f32 0.0, %v5493
      %v5495 = vpop.f32.mrf.mxu0
      %v5496 = vadd.f32 0.0, %v5495
      %5497 = vmatmul.bf16.gmra.mxu0 %v5328
      %v5498 = vpop.f32.mrf.mxu0
      %v5499 = vadd.f32 0.0, %v5498
      %v5500 = vpop.f32.mrf.mxu0
      %v5501 = vadd.f32 0.0, %v5500
      %5502 = vmatmul.bf16.gmra.mxu0 %v5329
      %v5503 = vpop.f32.mrf.mxu0
      %v5504 = vadd.f32 0.0, %v5503
      %v5505 = vpop.f32.mrf.mxu0
      %v5506 = vadd.f32 0.0, %v5505
      %5507 = vmatmul.bf16.gmra.mxu0 %v5330
      %v5508 = vpop.f32.mrf.mxu0
      %v5509 = vadd.f32 0.0, %v5508
      %v5510 = vpop.f32.mrf.mxu0
      %v5511 = vadd.f32 0.0, %v5510
      %5512 = vmatmul.bf16.gmra.mxu0 %v5331
      %v5513 = vpop.f32.mrf.mxu0
      %v5514 = vadd.f32 0.0, %v5513
      %v5515 = vpop.f32.mrf.mxu0
      %v5516 = vadd.f32 0.0, %v5515
      %5517 = vmatmul.bf16.gmra.mxu0 %v5332
      %v5518 = vpop.f32.mrf.mxu0
      %v5519 = vadd.f32 0.0, %v5518
      %v5520 = vpop.f32.mrf.mxu0
      %v5521 = vadd.f32 0.0, %v5520
      %5522 = vmatmul.bf16.gmra.mxu0 %v5333
      %v5523 = vpop.f32.mrf.mxu0
      %v5524 = vadd.f32 0.0, %v5523
      %v5525 = vpop.f32.mrf.mxu0
      %v5526 = vadd.f32 0.0, %v5525
      %5527 = vdwg.mxu0
      %v5528 = vadd.f32 %v5214, %v5409
      %v5529 = vadd.f32 %v5215, %v5411
      %v5530 = vadd.f32 %v5216, %v5414
      %v5531 = vadd.f32 %v5217, %v5416
      %v5532 = vadd.f32 %v5218, %v5419
      %v5533 = vadd.f32 %v5219, %v5421
      %v5534 = vadd.f32 %v5220, %v5424
      %v5535 = vadd.f32 %v5221, %v5426
      %v5536 = vadd.f32 %v5222, %v5429
      %v5537 = vadd.f32 %v5223, %v5431
      %v5538 = vadd.f32 %v5224, %v5434
      %v5539 = vadd.f32 %v5225, %v5436
      %v5540 = vadd.f32 %v5226, %v5439
      %v5541 = vadd.f32 %v5227, %v5441
      %v5542 = vadd.f32 %v5228, %v5444
      %v5543 = vadd.f32 %v5229, %v5446
      %v5544 = vadd.f32 %v5230, %v5449
      %v5545 = vadd.f32 %v5231, %v5451
      %v5546 = vadd.f32 %v5232, %v5454
      %v5547 = vadd.f32 %v5233, %v5456
      %v5548 = vadd.f32 %v5234, %v5459
      %v5549 = vadd.f32 %v5235, %v5461
      %v5550 = vadd.f32 %v5236, %v5464
      %v5551 = vadd.f32 %v5237, %v5466
      %v5552 = vadd.f32 %v5238, %v5469
      %v5553 = vadd.f32 %v5239, %v5471
      %v5554 = vadd.f32 %v5240, %v5474
      %v5555 = vadd.f32 %v5241, %v5476
      %v5556 = vadd.f32 %v5242, %v5479
      %v5557 = vadd.f32 %v5243, %v5481
      %v5558 = vadd.f32 %v5244, %v5484
      %v5559 = vadd.f32 %v5245, %v5486
      %v5560 = vadd.f32 %v5246, %v5489
      %v5561 = vadd.f32 %v5247, %v5491
      %v5562 = vadd.f32 %v5248, %v5494
      %v5563 = vadd.f32 %v5249, %v5496
      %v5564 = vadd.f32 %v5250, %v5499
      %v5565 = vadd.f32 %v5251, %v5501
      %v5566 = vadd.f32 %v5252, %v5504
      %v5567 = vadd.f32 %v5253, %v5506
      %v5568 = vadd.f32 %v5254, %v5509
      %v5569 = vadd.f32 %v5255, %v5511
      %v5570 = vadd.f32 %v5256, %v5514
      %v5571 = vadd.f32 %v5257, %v5516
      %v5572 = vadd.f32 %v5258, %v5519
      %v5573 = vadd.f32 %v5259, %v5521
      %v5574 = vadd.f32 %v5260, %v5524
      %v5575 = vadd.f32 %v5261, %v5526
      %v5576 = vld [vmem:[#allocation2 + $0x31] sm:$0xff]
      %v5577 = vld [vmem:[#allocation2 + $0x39] sm:$0xff]
      %v5578 = vld [vmem:[#allocation2 + $0x41] sm:$0xff]
      %v5579 = vld [vmem:[#allocation2 + $0x49] sm:$0xff]
      %v5580 = vld [vmem:[#allocation2 + $0x51] sm:$0xff]
      %v5581 = vld [vmem:[#allocation2 + $0x59] sm:$0xff]
      %v5582 = vld [vmem:[#allocation2 + $0x61] sm:$0xff]
      %v5583 = vld [vmem:[#allocation2 + $0x69] sm:$0xff]
      %v5584 = vld [vmem:[#allocation2 + $0x71] sm:$0xff]
      %v5585 = vld [vmem:[#allocation2 + $0x79] sm:$0xff]
      %v5586 = vld [vmem:[#allocation2 + $0x81] sm:$0xff]
      %v5587 = vld [vmem:[#allocation2 + $0x89] sm:$0xff]
      %v5588 = vld [vmem:[#allocation2 + $0x91] sm:$0xff]
      %v5589 = vld [vmem:[#allocation2 + $0x99] sm:$0xff]
      %v5590 = vld [vmem:[#allocation2 + $0xa1] sm:$0xff]
      %v5591 = vld [vmem:[#allocation2 + $0xa9] sm:$0xff]
      %v5592 = vld [vmem:[#allocation2 + $0xb1] sm:$0xff]
      %v5593 = vld [vmem:[#allocation2 + $0xb9] sm:$0xff]
      %v5594 = vld [vmem:[#allocation2 + $0xc1] sm:$0xff]
      %v5595 = vld [vmem:[#allocation2 + $0xc9] sm:$0xff]
      %v5596 = vld [vmem:[#allocation2 + $0xd1] sm:$0xff]
      %v5597 = vld [vmem:[#allocation2 + $0xd9] sm:$0xff]
      %v5598 = vld [vmem:[#allocation2 + $0xe1] sm:$0xff]
      %v5599 = vld [vmem:[#allocation2 + $0xe9] sm:$0xff]
      %v5600 = vld [vmem:[#allocation2 + $0xf1] sm:$0xff]
      %v5601 = vld [vmem:[#allocation2 + $0xf9] sm:$0xff]
      %v5602 = vld [vmem:[#allocation2 + $0x101] sm:$0xff]
      %v5603 = vld [vmem:[#allocation2 + $0x109] sm:$0xff]
      %v5604 = vld [vmem:[#allocation2 + $0x111] sm:$0xff]
      %v5605 = vld [vmem:[#allocation2 + $0x119] sm:$0xff]
      %v5606 = vld [vmem:[#allocation2 + $0x121] sm:$0xff]
      %v5607 = vld [vmem:[#allocation2 + $0x129] sm:$0xff]
      %v5608 = vld [vmem:[#allocation2 + $0x131] sm:$0xff]
      %v5609 = vld [vmem:[#allocation2 + $0x139] sm:$0xff]
      %v5610 = vld [vmem:[#allocation2 + $0x141] sm:$0xff]
      %v5611 = vld [vmem:[#allocation2 + $0x149] sm:$0xff]
      %v5612 = vld [vmem:[#allocation2 + $0x151] sm:$0xff]
      %v5613 = vld [vmem:[#allocation2 + $0x159] sm:$0xff]
      %v5614 = vld [vmem:[#allocation2 + $0x161] sm:$0xff]
      %v5615 = vld [vmem:[#allocation2 + $0x169] sm:$0xff]
      %v5616 = vld [vmem:[#allocation2 + $0x171] sm:$0xff]
      %v5617 = vld [vmem:[#allocation2 + $0x179] sm:$0xff]
      %v5618 = vld [vmem:[#allocation2 + $0x181] sm:$0xff]
      %v5619 = vld [vmem:[#allocation2 + $0x189] sm:$0xff]
      %v5620 = vld [vmem:[#allocation2 + $0x191] sm:$0xff]
      %v5621 = vld [vmem:[#allocation2 + $0x199] sm:$0xff]
      %v5622 = vld [vmem:[#allocation2 + $0x1a1] sm:$0xff]
      %v5623 = vld [vmem:[#allocation2 + $0x1a9] sm:$0xff]
      %v5624 = vpack.c.bf16 %v5577, %v5576
      %v5625 = vpack.c.bf16 %v5579, %v5578
      %v5626 = vpack.c.bf16 %v5581, %v5580
      %v5627 = vpack.c.bf16 %v5583, %v5582
      %v5628 = vpack.c.bf16 %v5585, %v5584
      %v5629 = vpack.c.bf16 %v5587, %v5586
      %v5630 = vpack.c.bf16 %v5589, %v5588
      %v5631 = vpack.c.bf16 %v5591, %v5590
      %v5632 = vpack.c.bf16 %v5593, %v5592
      %v5633 = vpack.c.bf16 %v5595, %v5594
      %v5634 = vpack.c.bf16 %v5597, %v5596
      %v5635 = vpack.c.bf16 %v5599, %v5598
      %v5636 = vpack.c.bf16 %v5601, %v5600
      %v5637 = vpack.c.bf16 %v5603, %v5602
      %v5638 = vpack.c.bf16 %v5605, %v5604
      %v5639 = vpack.c.bf16 %v5607, %v5606
      %v5640 = vpack.c.bf16 %v5609, %v5608
      %v5641 = vpack.c.bf16 %v5611, %v5610
      %v5642 = vpack.c.bf16 %v5613, %v5612
      %v5643 = vpack.c.bf16 %v5615, %v5614
      %v5644 = vpack.c.bf16 %v5617, %v5616
      %v5645 = vpack.c.bf16 %v5619, %v5618
      %v5646 = vpack.c.bf16 %v5621, %v5620
      %v5647 = vpack.c.bf16 %v5623, %v5622
      %s5648 = scalar_lea.vmem %s3, 448
      %v5649 = vld [vmem:[%s5648] sm:$0xf]
      %v5650 = vld [vmem:[%s5648 + $0x4] sm:$0xf]
      %v5651 = vld [vmem:[%s5648 + $0x8] sm:$0xf]
      %v5652 = vld [vmem:[%s5648 + $0xc] sm:$0xf]
      %v5653 = vld [vmem:[%s5648 + $0x10] sm:$0xf]
      %v5654 = vld [vmem:[%s5648 + $0x14] sm:$0xf]
      %v5655 = vld [vmem:[%s5648 + $0x18] sm:$0xf]
      %v5656 = vld [vmem:[%s5648 + $0x1c] sm:$0xf]
      %v5657 = vld [vmem:[%s5648 + $0x20] sm:$0xf]
      %v5658 = vld [vmem:[%s5648 + $0x24] sm:$0xf]
      %v5659 = vld [vmem:[%s5648 + $0x28] sm:$0xf]
      %v5660 = vld [vmem:[%s5648 + $0x2c] sm:$0xf]
      %v5661 = vld [vmem:[%s5648 + $0x30] sm:$0xf]
      %v5662 = vld [vmem:[%s5648 + $0x34] sm:$0xf]
      %v5663 = vld [vmem:[%s5648 + $0x38] sm:$0xf]
      %v5664 = vld [vmem:[%s5648 + $0x3c] sm:$0xf]
      %v5681 = vunpack.c.l.b16 %v5649
      %v5682 = vunpack.c.l.b16 %v5650
      %v5683 = vunpack.c.l.b16 %v5651
      %v5684 = vunpack.c.l.b16 %v5652
      %v5685 = vunpack.c.l.b16 %v5653
      %v5686 = vunpack.c.l.b16 %v5654
      %v5687 = vunpack.c.l.b16 %v5655
      %v5688 = vunpack.c.l.b16 %v5656
      %v5689 = vunpack.c.l.b16 %v5657
      %v5690 = vunpack.c.l.b16 %v5658
      %v5691 = vunpack.c.l.b16 %v5659
      %v5692 = vunpack.c.l.b16 %v5660
      %v5693 = vunpack.c.l.b16 %v5661
      %v5694 = vunpack.c.l.b16 %v5662
      %v5695 = vunpack.c.l.b16 %v5663
      %v5696 = vunpack.c.l.b16 %v5664
      %v5697 = vpack.c.b16 %v5682, %v5681
      %v5698 = vpack.c.b16 %v5684, %v5683
      %v5699 = vpack.c.b16 %v5686, %v5685
      %v5700 = vpack.c.b16 %v5688, %v5687
      %v5701 = vpack.c.b16 %v5690, %v5689
      %v5702 = vpack.c.b16 %v5692, %v5691
      %v5703 = vpack.c.b16 %v5694, %v5693
      %v5704 = vpack.c.b16 %v5696, %v5695
      %5713 = vmatpush.bf16.msra.mxu0 %v5704
      %5714 = vmatpush.bf16.msra.mxu0 %v5703
      %5715 = vmatpush.bf16.msra.mxu0 %v5702
      %5716 = vmatpush.bf16.msra.mxu0 %v5701
      %5717 = vmatpush.bf16.msra.mxu0 %v5700
      %5718 = vmatpush.bf16.msra.mxu0 %v5699
      %5719 = vmatpush.bf16.msra.mxu0 %v5698
      %5720 = vmatpush.bf16.msra.mxu0 %v5697
      %5721 = vmatmul.bf16.gmra.mxu0 %v5624
      %v5722 = vpop.f32.mrf.mxu0
      %v5723 = vadd.f32 0.0, %v5722
      %v5724 = vpop.f32.mrf.mxu0
      %v5725 = vadd.f32 0.0, %v5724
      %5726 = vmatmul.bf16.gmra.mxu0 %v5625
      %v5727 = vpop.f32.mrf.mxu0
      %v5728 = vadd.f32 0.0, %v5727
      %v5729 = vpop.f32.mrf.mxu0
      %v5730 = vadd.f32 0.0, %v5729
      %5731 = vmatmul.bf16.gmra.mxu0 %v5626
      %v5732 = vpop.f32.mrf.mxu0
      %v5733 = vadd.f32 0.0, %v5732
      %v5734 = vpop.f32.mrf.mxu0
      %v5735 = vadd.f32 0.0, %v5734
      %5736 = vmatmul.bf16.gmra.mxu0 %v5627
      %v5737 = vpop.f32.mrf.mxu0
      %v5738 = vadd.f32 0.0, %v5737
      %v5739 = vpop.f32.mrf.mxu0
      %v5740 = vadd.f32 0.0, %v5739
      %5741 = vmatmul.bf16.gmra.mxu0 %v5628
      %v5742 = vpop.f32.mrf.mxu0
      %v5743 = vadd.f32 0.0, %v5742
      %v5744 = vpop.f32.mrf.mxu0
      %v5745 = vadd.f32 0.0, %v5744
      %5746 = vmatmul.bf16.gmra.mxu0 %v5629
      %v5747 = vpop.f32.mrf.mxu0
      %v5748 = vadd.f32 0.0, %v5747
      %v5749 = vpop.f32.mrf.mxu0
      %v5750 = vadd.f32 0.0, %v5749
      %5751 = vmatmul.bf16.gmra.mxu0 %v5630
      %v5752 = vpop.f32.mrf.mxu0
      %v5753 = vadd.f32 0.0, %v5752
      %v5754 = vpop.f32.mrf.mxu0
      %v5755 = vadd.f32 0.0, %v5754
      %5756 = vmatmul.bf16.gmra.mxu0 %v5631
      %v5757 = vpop.f32.mrf.mxu0
      %v5758 = vadd.f32 0.0, %v5757
      %v5759 = vpop.f32.mrf.mxu0
      %v5760 = vadd.f32 0.0, %v5759
      %5761 = vmatmul.bf16.gmra.mxu0 %v5632
      %v5762 = vpop.f32.mrf.mxu0
      %v5763 = vadd.f32 0.0, %v5762
      %v5764 = vpop.f32.mrf.mxu0
      %v5765 = vadd.f32 0.0, %v5764
      %5766 = vmatmul.bf16.gmra.mxu0 %v5633
      %v5767 = vpop.f32.mrf.mxu0
      %v5768 = vadd.f32 0.0, %v5767
      %v5769 = vpop.f32.mrf.mxu0
      %v5770 = vadd.f32 0.0, %v5769
      %5771 = vmatmul.bf16.gmra.mxu0 %v5634
      %v5772 = vpop.f32.mrf.mxu0
      %v5773 = vadd.f32 0.0, %v5772
      %v5774 = vpop.f32.mrf.mxu0
      %v5775 = vadd.f32 0.0, %v5774
      %5776 = vmatmul.bf16.gmra.mxu0 %v5635
      %v5777 = vpop.f32.mrf.mxu0
      %v5778 = vadd.f32 0.0, %v5777
      %v5779 = vpop.f32.mrf.mxu0
      %v5780 = vadd.f32 0.0, %v5779
      %5781 = vmatmul.bf16.gmra.mxu0 %v5636
      %v5782 = vpop.f32.mrf.mxu0
      %v5783 = vadd.f32 0.0, %v5782
      %v5784 = vpop.f32.mrf.mxu0
      %v5785 = vadd.f32 0.0, %v5784
      %5786 = vmatmul.bf16.gmra.mxu0 %v5637
      %v5787 = vpop.f32.mrf.mxu0
      %v5788 = vadd.f32 0.0, %v5787
      %v5789 = vpop.f32.mrf.mxu0
      %v5790 = vadd.f32 0.0, %v5789
      %5791 = vmatmul.bf16.gmra.mxu0 %v5638
      %v5792 = vpop.f32.mrf.mxu0
      %v5793 = vadd.f32 0.0, %v5792
      %v5794 = vpop.f32.mrf.mxu0
      %v5795 = vadd.f32 0.0, %v5794
      %5796 = vmatmul.bf16.gmra.mxu0 %v5639
      %v5797 = vpop.f32.mrf.mxu0
      %v5798 = vadd.f32 0.0, %v5797
      %v5799 = vpop.f32.mrf.mxu0
      %v5800 = vadd.f32 0.0, %v5799
      %5801 = vmatmul.bf16.gmra.mxu0 %v5640
      %v5802 = vpop.f32.mrf.mxu0
      %v5803 = vadd.f32 0.0, %v5802
      %v5804 = vpop.f32.mrf.mxu0
      %v5805 = vadd.f32 0.0, %v5804
      %5806 = vmatmul.bf16.gmra.mxu0 %v5641
      %v5807 = vpop.f32.mrf.mxu0
      %v5808 = vadd.f32 0.0, %v5807
      %v5809 = vpop.f32.mrf.mxu0
      %v5810 = vadd.f32 0.0, %v5809
      %5811 = vmatmul.bf16.gmra.mxu0 %v5642
      %v5812 = vpop.f32.mrf.mxu0
      %v5813 = vadd.f32 0.0, %v5812
      %v5814 = vpop.f32.mrf.mxu0
      %v5815 = vadd.f32 0.0, %v5814
      %5816 = vmatmul.bf16.gmra.mxu0 %v5643
      %v5817 = vpop.f32.mrf.mxu0
      %v5818 = vadd.f32 0.0, %v5817
      %v5819 = vpop.f32.mrf.mxu0
      %v5820 = vadd.f32 0.0, %v5819
      %5821 = vmatmul.bf16.gmra.mxu0 %v5644
      %v5822 = vpop.f32.mrf.mxu0
      %v5823 = vadd.f32 0.0, %v5822
      %v5824 = vpop.f32.mrf.mxu0
      %v5825 = vadd.f32 0.0, %v5824
      %5826 = vmatmul.bf16.gmra.mxu0 %v5645
      %v5827 = vpop.f32.mrf.mxu0
      %v5828 = vadd.f32 0.0, %v5827
      %v5829 = vpop.f32.mrf.mxu0
      %v5830 = vadd.f32 0.0, %v5829
      %5831 = vmatmul.bf16.gmra.mxu0 %v5646
      %v5832 = vpop.f32.mrf.mxu0
      %v5833 = vadd.f32 0.0, %v5832
      %v5834 = vpop.f32.mrf.mxu0
      %v5835 = vadd.f32 0.0, %v5834
      %5836 = vmatmul.bf16.gmra.mxu0 %v5647
      %v5837 = vpop.f32.mrf.mxu0
      %v5838 = vadd.f32 0.0, %v5837
      %v5839 = vpop.f32.mrf.mxu0
      %v5840 = vadd.f32 0.0, %v5839
      %5841 = vdwg.mxu0
      %v5842 = vadd.f32 %v5528, %v5723
      %v5843 = vadd.f32 %v5529, %v5725
      %v5844 = vadd.f32 %v5530, %v5728
      %v5845 = vadd.f32 %v5531, %v5730
      %v5846 = vadd.f32 %v5532, %v5733
      %v5847 = vadd.f32 %v5533, %v5735
      %v5848 = vadd.f32 %v5534, %v5738
      %v5849 = vadd.f32 %v5535, %v5740
      %v5850 = vadd.f32 %v5536, %v5743
      %v5851 = vadd.f32 %v5537, %v5745
      %v5852 = vadd.f32 %v5538, %v5748
      %v5853 = vadd.f32 %v5539, %v5750
      %v5854 = vadd.f32 %v5540, %v5753
      %v5855 = vadd.f32 %v5541, %v5755
      %v5856 = vadd.f32 %v5542, %v5758
      %v5857 = vadd.f32 %v5543, %v5760
      %v5858 = vadd.f32 %v5544, %v5763
      %v5859 = vadd.f32 %v5545, %v5765
      %v5860 = vadd.f32 %v5546, %v5768
      %v5861 = vadd.f32 %v5547, %v5770
      %v5862 = vadd.f32 %v5548, %v5773
      %v5863 = vadd.f32 %v5549, %v5775
      %v5864 = vadd.f32 %v5550, %v5778
      %v5865 = vadd.f32 %v5551, %v5780
      %v5866 = vadd.f32 %v5552, %v5783
      %v5867 = vadd.f32 %v5553, %v5785
      %v5868 = vadd.f32 %v5554, %v5788
      %v5869 = vadd.f32 %v5555, %v5790
      %v5870 = vadd.f32 %v5556, %v5793
      %v5871 = vadd.f32 %v5557, %v5795
      %v5872 = vadd.f32 %v5558, %v5798
      %v5873 = vadd.f32 %v5559, %v5800
      %v5874 = vadd.f32 %v5560, %v5803
      %v5875 = vadd.f32 %v5561, %v5805
      %v5876 = vadd.f32 %v5562, %v5808
      %v5877 = vadd.f32 %v5563, %v5810
      %v5878 = vadd.f32 %v5564, %v5813
      %v5879 = vadd.f32 %v5565, %v5815
      %v5880 = vadd.f32 %v5566, %v5818
      %v5881 = vadd.f32 %v5567, %v5820
      %v5882 = vadd.f32 %v5568, %v5823
      %v5883 = vadd.f32 %v5569, %v5825
      %v5884 = vadd.f32 %v5570, %v5828
      %v5885 = vadd.f32 %v5571, %v5830
      %v5886 = vadd.f32 %v5572, %v5833
      %v5887 = vadd.f32 %v5573, %v5835
      %v5888 = vadd.f32 %v5574, %v5838
      %v5889 = vadd.f32 %v5575, %v5840
      %v5890 = vld [vmem:[#allocation2 + $0x32] sm:$0xff]
      %v5891 = vld [vmem:[#allocation2 + $0x3a] sm:$0xff]
      %v5892 = vld [vmem:[#allocation2 + $0x42] sm:$0xff]
      %v5893 = vld [vmem:[#allocation2 + $0x4a] sm:$0xff]
      %v5894 = vld [vmem:[#allocation2 + $0x52] sm:$0xff]
      %v5895 = vld [vmem:[#allocation2 + $0x5a] sm:$0xff]
      %v5896 = vld [vmem:[#allocation2 + $0x62] sm:$0xff]
      %v5897 = vld [vmem:[#allocation2 + $0x6a] sm:$0xff]
      %v5898 = vld [vmem:[#allocation2 + $0x72] sm:$0xff]
      %v5899 = vld [vmem:[#allocation2 + $0x7a] sm:$0xff]
      %v5900 = vld [vmem:[#allocation2 + $0x82] sm:$0xff]
      %v5901 = vld [vmem:[#allocation2 + $0x8a] sm:$0xff]
      %v5902 = vld [vmem:[#allocation2 + $0x92] sm:$0xff]
      %v5903 = vld [vmem:[#allocation2 + $0x9a] sm:$0xff]
      %v5904 = vld [vmem:[#allocation2 + $0xa2] sm:$0xff]
      %v5905 = vld [vmem:[#allocation2 + $0xaa] sm:$0xff]
      %v5906 = vld [vmem:[#allocation2 + $0xb2] sm:$0xff]
      %v5907 = vld [vmem:[#allocation2 + $0xba] sm:$0xff]
      %v5908 = vld [vmem:[#allocation2 + $0xc2] sm:$0xff]
      %v5909 = vld [vmem:[#allocation2 + $0xca] sm:$0xff]
      %v5910 = vld [vmem:[#allocation2 + $0xd2] sm:$0xff]
      %v5911 = vld [vmem:[#allocation2 + $0xda] sm:$0xff]
      %v5912 = vld [vmem:[#allocation2 + $0xe2] sm:$0xff]
      %v5913 = vld [vmem:[#allocation2 + $0xea] sm:$0xff]
      %v5914 = vld [vmem:[#allocation2 + $0xf2] sm:$0xff]
      %v5915 = vld [vmem:[#allocation2 + $0xfa] sm:$0xff]
      %v5916 = vld [vmem:[#allocation2 + $0x102] sm:$0xff]
      %v5917 = vld [vmem:[#allocation2 + $0x10a] sm:$0xff]
      %v5918 = vld [vmem:[#allocation2 + $0x112] sm:$0xff]
      %v5919 = vld [vmem:[#allocation2 + $0x11a] sm:$0xff]
      %v5920 = vld [vmem:[#allocation2 + $0x122] sm:$0xff]
      %v5921 = vld [vmem:[#allocation2 + $0x12a] sm:$0xff]
      %v5922 = vld [vmem:[#allocation2 + $0x132] sm:$0xff]
      %v5923 = vld [vmem:[#allocation2 + $0x13a] sm:$0xff]
      %v5924 = vld [vmem:[#allocation2 + $0x142] sm:$0xff]
      %v5925 = vld [vmem:[#allocation2 + $0x14a] sm:$0xff]
      %v5926 = vld [vmem:[#allocation2 + $0x152] sm:$0xff]
      %v5927 = vld [vmem:[#allocation2 + $0x15a] sm:$0xff]
      %v5928 = vld [vmem:[#allocation2 + $0x162] sm:$0xff]
      %v5929 = vld [vmem:[#allocation2 + $0x16a] sm:$0xff]
      %v5930 = vld [vmem:[#allocation2 + $0x172] sm:$0xff]
      %v5931 = vld [vmem:[#allocation2 + $0x17a] sm:$0xff]
      %v5932 = vld [vmem:[#allocation2 + $0x182] sm:$0xff]
      %v5933 = vld [vmem:[#allocation2 + $0x18a] sm:$0xff]
      %v5934 = vld [vmem:[#allocation2 + $0x192] sm:$0xff]
      %v5935 = vld [vmem:[#allocation2 + $0x19a] sm:$0xff]
      %v5936 = vld [vmem:[#allocation2 + $0x1a2] sm:$0xff]
      %v5937 = vld [vmem:[#allocation2 + $0x1aa] sm:$0xff]
      %v5938 = vpack.c.bf16 %v5891, %v5890
      %v5939 = vpack.c.bf16 %v5893, %v5892
      %v5940 = vpack.c.bf16 %v5895, %v5894
      %v5941 = vpack.c.bf16 %v5897, %v5896
      %v5942 = vpack.c.bf16 %v5899, %v5898
      %v5943 = vpack.c.bf16 %v5901, %v5900
      %v5944 = vpack.c.bf16 %v5903, %v5902
      %v5945 = vpack.c.bf16 %v5905, %v5904
      %v5946 = vpack.c.bf16 %v5907, %v5906
      %v5947 = vpack.c.bf16 %v5909, %v5908
      %v5948 = vpack.c.bf16 %v5911, %v5910
      %v5949 = vpack.c.bf16 %v5913, %v5912
      %v5950 = vpack.c.bf16 %v5915, %v5914
      %v5951 = vpack.c.bf16 %v5917, %v5916
      %v5952 = vpack.c.bf16 %v5919, %v5918
      %v5953 = vpack.c.bf16 %v5921, %v5920
      %v5954 = vpack.c.bf16 %v5923, %v5922
      %v5955 = vpack.c.bf16 %v5925, %v5924
      %v5956 = vpack.c.bf16 %v5927, %v5926
      %v5957 = vpack.c.bf16 %v5929, %v5928
      %v5958 = vpack.c.bf16 %v5931, %v5930
      %v5959 = vpack.c.bf16 %v5933, %v5932
      %v5960 = vpack.c.bf16 %v5935, %v5934
      %v5961 = vpack.c.bf16 %v5937, %v5936
      %s5962 = scalar_lea.vmem %s3, 512
      %v5963 = vld [vmem:[%s5962] sm:$0xf]
      %v5964 = vld [vmem:[%s5962 + $0x4] sm:$0xf]
      %v5965 = vld [vmem:[%s5962 + $0x8] sm:$0xf]
      %v5966 = vld [vmem:[%s5962 + $0xc] sm:$0xf]
      %v5967 = vld [vmem:[%s5962 + $0x10] sm:$0xf]
      %v5968 = vld [vmem:[%s5962 + $0x14] sm:$0xf]
      %v5969 = vld [vmem:[%s5962 + $0x18] sm:$0xf]
      %v5970 = vld [vmem:[%s5962 + $0x1c] sm:$0xf]
      %v5971 = vld [vmem:[%s5962 + $0x20] sm:$0xf]
      %v5972 = vld [vmem:[%s5962 + $0x24] sm:$0xf]
      %v5973 = vld [vmem:[%s5962 + $0x28] sm:$0xf]
      %v5974 = vld [vmem:[%s5962 + $0x2c] sm:$0xf]
      %v5975 = vld [vmem:[%s5962 + $0x30] sm:$0xf]
      %v5976 = vld [vmem:[%s5962 + $0x34] sm:$0xf]
      %v5977 = vld [vmem:[%s5962 + $0x38] sm:$0xf]
      %v5978 = vld [vmem:[%s5962 + $0x3c] sm:$0xf]
      %v5995 = vunpack.c.l.b16 %v5963
      %v5996 = vunpack.c.l.b16 %v5964
      %v5997 = vunpack.c.l.b16 %v5965
      %v5998 = vunpack.c.l.b16 %v5966
      %v5999 = vunpack.c.l.b16 %v5967
      %v6000 = vunpack.c.l.b16 %v5968
      %v6001 = vunpack.c.l.b16 %v5969
      %v6002 = vunpack.c.l.b16 %v5970
      %v6003 = vunpack.c.l.b16 %v5971
      %v6004 = vunpack.c.l.b16 %v5972
      %v6005 = vunpack.c.l.b16 %v5973
      %v6006 = vunpack.c.l.b16 %v5974
      %v6007 = vunpack.c.l.b16 %v5975
      %v6008 = vunpack.c.l.b16 %v5976
      %v6009 = vunpack.c.l.b16 %v5977
      %v6010 = vunpack.c.l.b16 %v5978
      %v6011 = vpack.c.b16 %v5996, %v5995
      %v6012 = vpack.c.b16 %v5998, %v5997
      %v6013 = vpack.c.b16 %v6000, %v5999
      %v6014 = vpack.c.b16 %v6002, %v6001
      %v6015 = vpack.c.b16 %v6004, %v6003
      %v6016 = vpack.c.b16 %v6006, %v6005
      %v6017 = vpack.c.b16 %v6008, %v6007
      %v6018 = vpack.c.b16 %v6010, %v6009
      %6027 = vmatpush.bf16.msra.mxu0 %v6018
      %6028 = vmatpush.bf16.msra.mxu0 %v6017
      %6029 = vmatpush.bf16.msra.mxu0 %v6016
      %6030 = vmatpush.bf16.msra.mxu0 %v6015
      %6031 = vmatpush.bf16.msra.mxu0 %v6014
      %6032 = vmatpush.bf16.msra.mxu0 %v6013
      %6033 = vmatpush.bf16.msra.mxu0 %v6012
      %6034 = vmatpush.bf16.msra.mxu0 %v6011
      %6035 = vmatmul.bf16.gmra.mxu0 %v5938
      %v6036 = vpop.f32.mrf.mxu0
      %v6037 = vadd.f32 0.0, %v6036
      %v6038 = vpop.f32.mrf.mxu0
      %v6039 = vadd.f32 0.0, %v6038
      %6040 = vmatmul.bf16.gmra.mxu0 %v5939
      %v6041 = vpop.f32.mrf.mxu0
      %v6042 = vadd.f32 0.0, %v6041
      %v6043 = vpop.f32.mrf.mxu0
      %v6044 = vadd.f32 0.0, %v6043
      %6045 = vmatmul.bf16.gmra.mxu0 %v5940
      %v6046 = vpop.f32.mrf.mxu0
      %v6047 = vadd.f32 0.0, %v6046
      %v6048 = vpop.f32.mrf.mxu0
      %v6049 = vadd.f32 0.0, %v6048
      %6050 = vmatmul.bf16.gmra.mxu0 %v5941
      %v6051 = vpop.f32.mrf.mxu0
      %v6052 = vadd.f32 0.0, %v6051
      %v6053 = vpop.f32.mrf.mxu0
      %v6054 = vadd.f32 0.0, %v6053
      %6055 = vmatmul.bf16.gmra.mxu0 %v5942
      %v6056 = vpop.f32.mrf.mxu0
      %v6057 = vadd.f32 0.0, %v6056
      %v6058 = vpop.f32.mrf.mxu0
      %v6059 = vadd.f32 0.0, %v6058
      %6060 = vmatmul.bf16.gmra.mxu0 %v5943
      %v6061 = vpop.f32.mrf.mxu0
      %v6062 = vadd.f32 0.0, %v6061
      %v6063 = vpop.f32.mrf.mxu0
      %v6064 = vadd.f32 0.0, %v6063
      %6065 = vmatmul.bf16.gmra.mxu0 %v5944
      %v6066 = vpop.f32.mrf.mxu0
      %v6067 = vadd.f32 0.0, %v6066
      %v6068 = vpop.f32.mrf.mxu0
      %v6069 = vadd.f32 0.0, %v6068
      %6070 = vmatmul.bf16.gmra.mxu0 %v5945
      %v6071 = vpop.f32.mrf.mxu0
      %v6072 = vadd.f32 0.0, %v6071
      %v6073 = vpop.f32.mrf.mxu0
      %v6074 = vadd.f32 0.0, %v6073
      %6075 = vmatmul.bf16.gmra.mxu0 %v5946
      %v6076 = vpop.f32.mrf.mxu0
      %v6077 = vadd.f32 0.0, %v6076
      %v6078 = vpop.f32.mrf.mxu0
      %v6079 = vadd.f32 0.0, %v6078
      %6080 = vmatmul.bf16.gmra.mxu0 %v5947
      %v6081 = vpop.f32.mrf.mxu0
      %v6082 = vadd.f32 0.0, %v6081
      %v6083 = vpop.f32.mrf.mxu0
      %v6084 = vadd.f32 0.0, %v6083
      %6085 = vmatmul.bf16.gmra.mxu0 %v5948
      %v6086 = vpop.f32.mrf.mxu0
      %v6087 = vadd.f32 0.0, %v6086
      %v6088 = vpop.f32.mrf.mxu0
      %v6089 = vadd.f32 0.0, %v6088
      %6090 = vmatmul.bf16.gmra.mxu0 %v5949
      %v6091 = vpop.f32.mrf.mxu0
      %v6092 = vadd.f32 0.0, %v6091
      %v6093 = vpop.f32.mrf.mxu0
      %v6094 = vadd.f32 0.0, %v6093
      %6095 = vmatmul.bf16.gmra.mxu0 %v5950
      %v6096 = vpop.f32.mrf.mxu0
      %v6097 = vadd.f32 0.0, %v6096
      %v6098 = vpop.f32.mrf.mxu0
      %v6099 = vadd.f32 0.0, %v6098
      %6100 = vmatmul.bf16.gmra.mxu0 %v5951
      %v6101 = vpop.f32.mrf.mxu0
      %v6102 = vadd.f32 0.0, %v6101
      %v6103 = vpop.f32.mrf.mxu0
      %v6104 = vadd.f32 0.0, %v6103
      %6105 = vmatmul.bf16.gmra.mxu0 %v5952
      %v6106 = vpop.f32.mrf.mxu0
      %v6107 = vadd.f32 0.0, %v6106
      %v6108 = vpop.f32.mrf.mxu0
      %v6109 = vadd.f32 0.0, %v6108
      %6110 = vmatmul.bf16.gmra.mxu0 %v5953
      %v6111 = vpop.f32.mrf.mxu0
      %v6112 = vadd.f32 0.0, %v6111
      %v6113 = vpop.f32.mrf.mxu0
      %v6114 = vadd.f32 0.0, %v6113
      %6115 = vmatmul.bf16.gmra.mxu0 %v5954
      %v6116 = vpop.f32.mrf.mxu0
      %v6117 = vadd.f32 0.0, %v6116
      %v6118 = vpop.f32.mrf.mxu0
      %v6119 = vadd.f32 0.0, %v6118
      %6120 = vmatmul.bf16.gmra.mxu0 %v5955
      %v6121 = vpop.f32.mrf.mxu0
      %v6122 = vadd.f32 0.0, %v6121
      %v6123 = vpop.f32.mrf.mxu0
      %v6124 = vadd.f32 0.0, %v6123
      %6125 = vmatmul.bf16.gmra.mxu0 %v5956
      %v6126 = vpop.f32.mrf.mxu0
      %v6127 = vadd.f32 0.0, %v6126
      %v6128 = vpop.f32.mrf.mxu0
      %v6129 = vadd.f32 0.0, %v6128
      %6130 = vmatmul.bf16.gmra.mxu0 %v5957
      %v6131 = vpop.f32.mrf.mxu0
      %v6132 = vadd.f32 0.0, %v6131
      %v6133 = vpop.f32.mrf.mxu0
      %v6134 = vadd.f32 0.0, %v6133
      %6135 = vmatmul.bf16.gmra.mxu0 %v5958
      %v6136 = vpop.f32.mrf.mxu0
      %v6137 = vadd.f32 0.0, %v6136
      %v6138 = vpop.f32.mrf.mxu0
      %v6139 = vadd.f32 0.0, %v6138
      %6140 = vmatmul.bf16.gmra.mxu0 %v5959
      %v6141 = vpop.f32.mrf.mxu0
      %v6142 = vadd.f32 0.0, %v6141
      %v6143 = vpop.f32.mrf.mxu0
      %v6144 = vadd.f32 0.0, %v6143
      %6145 = vmatmul.bf16.gmra.mxu0 %v5960
      %v6146 = vpop.f32.mrf.mxu0
      %v6147 = vadd.f32 0.0, %v6146
      %v6148 = vpop.f32.mrf.mxu0
      %v6149 = vadd.f32 0.0, %v6148
      %6150 = vmatmul.bf16.gmra.mxu0 %v5961
      %v6151 = vpop.f32.mrf.mxu0
      %v6152 = vadd.f32 0.0, %v6151
      %v6153 = vpop.f32.mrf.mxu0
      %v6154 = vadd.f32 0.0, %v6153
      %6155 = vdwg.mxu0
      %v6156 = vadd.f32 %v5842, %v6037
      %v6157 = vadd.f32 %v5843, %v6039
      %v6158 = vadd.f32 %v5844, %v6042
      %v6159 = vadd.f32 %v5845, %v6044
      %v6160 = vadd.f32 %v5846, %v6047
      %v6161 = vadd.f32 %v5847, %v6049
      %v6162 = vadd.f32 %v5848, %v6052
      %v6163 = vadd.f32 %v5849, %v6054
      %v6164 = vadd.f32 %v5850, %v6057
      %v6165 = vadd.f32 %v5851, %v6059
      %v6166 = vadd.f32 %v5852, %v6062
      %v6167 = vadd.f32 %v5853, %v6064
      %v6168 = vadd.f32 %v5854, %v6067
      %v6169 = vadd.f32 %v5855, %v6069
      %v6170 = vadd.f32 %v5856, %v6072
      %v6171 = vadd.f32 %v5857, %v6074
      %v6172 = vadd.f32 %v5858, %v6077
      %v6173 = vadd.f32 %v5859, %v6079
      %v6174 = vadd.f32 %v5860, %v6082
      %v6175 = vadd.f32 %v5861, %v6084
      %v6176 = vadd.f32 %v5862, %v6087
      %v6177 = vadd.f32 %v5863, %v6089
      %v6178 = vadd.f32 %v5864, %v6092
      %v6179 = vadd.f32 %v5865, %v6094
      %v6180 = vadd.f32 %v5866, %v6097
      %v6181 = vadd.f32 %v5867, %v6099
      %v6182 = vadd.f32 %v5868, %v6102
      %v6183 = vadd.f32 %v5869, %v6104
      %v6184 = vadd.f32 %v5870, %v6107
      %v6185 = vadd.f32 %v5871, %v6109
      %v6186 = vadd.f32 %v5872, %v6112
      %v6187 = vadd.f32 %v5873, %v6114
      %v6188 = vadd.f32 %v5874, %v6117
      %v6189 = vadd.f32 %v5875, %v6119
      %v6190 = vadd.f32 %v5876, %v6122
      %v6191 = vadd.f32 %v5877, %v6124
      %v6192 = vadd.f32 %v5878, %v6127
      %v6193 = vadd.f32 %v5879, %v6129
      %v6194 = vadd.f32 %v5880, %v6132
      %v6195 = vadd.f32 %v5881, %v6134
      %v6196 = vadd.f32 %v5882, %v6137
      %v6197 = vadd.f32 %v5883, %v6139
      %v6198 = vadd.f32 %v5884, %v6142
      %v6199 = vadd.f32 %v5885, %v6144
      %v6200 = vadd.f32 %v5886, %v6147
      %v6201 = vadd.f32 %v5887, %v6149
      %v6202 = vadd.f32 %v5888, %v6152
      %v6203 = vadd.f32 %v5889, %v6154
      %v6204 = vld [vmem:[%s4] sm:$0x1]
      %v6206 = vperm.slane %v6204, 0
      %v6208 = vadd.f32 %v6156, %v6206
      %v6209 = vadd.f32 %v6157, %v6206
      %v6210 = vadd.f32 %v6158, %v6206
      %v6211 = vadd.f32 %v6159, %v6206
      %v6212 = vadd.f32 %v6160, %v6206
      %v6213 = vadd.f32 %v6161, %v6206
      %v6214 = vadd.f32 %v6162, %v6206
      %v6215 = vadd.f32 %v6163, %v6206
      %v6216 = vadd.f32 %v6164, %v6206
      %v6217 = vadd.f32 %v6165, %v6206
      %v6218 = vadd.f32 %v6166, %v6206
      %v6219 = vadd.f32 %v6167, %v6206
      %v6220 = vadd.f32 %v6168, %v6206
      %v6221 = vadd.f32 %v6169, %v6206
      %v6222 = vadd.f32 %v6170, %v6206
      %v6223 = vadd.f32 %v6171, %v6206
      %v6224 = vadd.f32 %v6172, %v6206
      %v6225 = vadd.f32 %v6173, %v6206
      %v6226 = vadd.f32 %v6174, %v6206
      %v6227 = vadd.f32 %v6175, %v6206
      %v6228 = vadd.f32 %v6176, %v6206
      %v6229 = vadd.f32 %v6177, %v6206
      %v6230 = vadd.f32 %v6178, %v6206
      %v6231 = vadd.f32 %v6179, %v6206
      %v6232 = vadd.f32 %v6180, %v6206
      %v6233 = vadd.f32 %v6181, %v6206
      %v6234 = vadd.f32 %v6182, %v6206
      %v6235 = vadd.f32 %v6183, %v6206
      %v6236 = vadd.f32 %v6184, %v6206
      %v6237 = vadd.f32 %v6185, %v6206
      %v6238 = vadd.f32 %v6186, %v6206
      %v6239 = vadd.f32 %v6187, %v6206
      %v6240 = vadd.f32 %v6188, %v6206
      %v6241 = vadd.f32 %v6189, %v6206
      %v6242 = vadd.f32 %v6190, %v6206
      %v6243 = vadd.f32 %v6191, %v6206
      %v6244 = vadd.f32 %v6192, %v6206
      %v6245 = vadd.f32 %v6193, %v6206
      %v6246 = vadd.f32 %v6194, %v6206
      %v6247 = vadd.f32 %v6195, %v6206
      %v6248 = vadd.f32 %v6196, %v6206
      %v6249 = vadd.f32 %v6197, %v6206
      %v6250 = vadd.f32 %v6198, %v6206
      %v6251 = vadd.f32 %v6199, %v6206
      %v6252 = vadd.f32 %v6200, %v6206
      %v6253 = vadd.f32 %v6201, %v6206
      %v6254 = vadd.f32 %v6202, %v6206
      %v6255 = vadd.f32 %v6203, %v6206
      %v6256 = vmax.f32 %v6208, 0.0
      %v6257 = vmax.f32 %v6209, 0.0
      %v6258 = vmax.f32 %v6210, 0.0
      %v6259 = vmax.f32 %v6211, 0.0
      %v6260 = vmax.f32 %v6212, 0.0
      %v6261 = vmax.f32 %v6213, 0.0
      %v6262 = vmax.f32 %v6214, 0.0
      %v6263 = vmax.f32 %v6215, 0.0
      %v6264 = vmax.f32 %v6216, 0.0
      %v6265 = vmax.f32 %v6217, 0.0
      %v6266 = vmax.f32 %v6218, 0.0
      %v6267 = vmax.f32 %v6219, 0.0
      %v6268 = vmax.f32 %v6220, 0.0
      %v6269 = vmax.f32 %v6221, 0.0
      %v6270 = vmax.f32 %v6222, 0.0
      %v6271 = vmax.f32 %v6223, 0.0
      %v6272 = vmax.f32 %v6224, 0.0
      %v6273 = vmax.f32 %v6225, 0.0
      %v6274 = vmax.f32 %v6226, 0.0
      %v6275 = vmax.f32 %v6227, 0.0
      %v6276 = vmax.f32 %v6228, 0.0
      %v6277 = vmax.f32 %v6229, 0.0
      %v6278 = vmax.f32 %v6230, 0.0
      %v6279 = vmax.f32 %v6231, 0.0
      %v6280 = vmax.f32 %v6232, 0.0
      %v6281 = vmax.f32 %v6233, 0.0
      %v6282 = vmax.f32 %v6234, 0.0
      %v6283 = vmax.f32 %v6235, 0.0
      %v6284 = vmax.f32 %v6236, 0.0
      %v6285 = vmax.f32 %v6237, 0.0
      %v6286 = vmax.f32 %v6238, 0.0
      %v6287 = vmax.f32 %v6239, 0.0
      %v6288 = vmax.f32 %v6240, 0.0
      %v6289 = vmax.f32 %v6241, 0.0
      %v6290 = vmax.f32 %v6242, 0.0
      %v6291 = vmax.f32 %v6243, 0.0
      %v6292 = vmax.f32 %v6244, 0.0
      %v6293 = vmax.f32 %v6245, 0.0
      %v6294 = vmax.f32 %v6246, 0.0
      %v6295 = vmax.f32 %v6247, 0.0
      %v6296 = vmax.f32 %v6248, 0.0
      %v6297 = vmax.f32 %v6249, 0.0
      %v6298 = vmax.f32 %v6250, 0.0
      %v6299 = vmax.f32 %v6251, 0.0
      %v6300 = vmax.f32 %v6252, 0.0
      %v6301 = vmax.f32 %v6253, 0.0
      %v6302 = vmax.f32 %v6254, 0.0
      %v6303 = vmax.f32 %v6255, 0.0
      %6304 = vst [vmem:[%s251] sm:$0xff] %v6256
      %6305 = vst [vmem:[%s251 + $0x8] sm:$0xff] %v6257
      %6306 = vst [vmem:[%s251 + $0x10] sm:$0xff] %v6258
      %6307 = vst [vmem:[%s251 + $0x18] sm:$0xff] %v6259
      %6308 = vst [vmem:[%s251 + $0x20] sm:$0xff] %v6260
      %6309 = vst [vmem:[%s251 + $0x28] sm:$0xff] %v6261
      %6310 = vst [vmem:[%s251 + $0x30] sm:$0xff] %v6262
      %6311 = vst [vmem:[%s251 + $0x38] sm:$0xff] %v6263
      %6312 = vst [vmem:[%s251 + $0x40] sm:$0xff] %v6264
      %6313 = vst [vmem:[%s251 + $0x48] sm:$0xff] %v6265
      %6314 = vst [vmem:[%s251 + $0x50] sm:$0xff] %v6266
      %6315 = vst [vmem:[%s251 + $0x58] sm:$0xff] %v6267
      %6316 = vst [vmem:[%s251 + $0x60] sm:$0xff] %v6268
      %6317 = vst [vmem:[%s251 + $0x68] sm:$0xff] %v6269
      %6318 = vst [vmem:[%s251 + $0x70] sm:$0xff] %v6270
      %6319 = vst [vmem:[%s251 + $0x78] sm:$0xff] %v6271
      %6320 = vst [vmem:[%s251 + $0x80] sm:$0xff] %v6272
      %6321 = vst [vmem:[%s251 + $0x88] sm:$0xff] %v6273
      %6322 = vst [vmem:[%s251 + $0x90] sm:$0xff] %v6274
      %6323 = vst [vmem:[%s251 + $0x98] sm:$0xff] %v6275
      %6324 = vst [vmem:[%s251 + $0xa0] sm:$0xff] %v6276
      %6325 = vst [vmem:[%s251 + $0xa8] sm:$0xff] %v6277
      %6326 = vst [vmem:[%s251 + $0xb0] sm:$0xff] %v6278
      %6327 = vst [vmem:[%s251 + $0xb8] sm:$0xff] %v6279
      %6328 = vst [vmem:[%s251 + $0xc0] sm:$0xff] %v6280
      %6329 = vst [vmem:[%s251 + $0xc8] sm:$0xff] %v6281
      %6330 = vst [vmem:[%s251 + $0xd0] sm:$0xff] %v6282
      %6331 = vst [vmem:[%s251 + $0xd8] sm:$0xff] %v6283
      %6332 = vst [vmem:[%s251 + $0xe0] sm:$0xff] %v6284
      %6333 = vst [vmem:[%s251 + $0xe8] sm:$0xff] %v6285
      %6334 = vst [vmem:[%s251 + $0xf0] sm:$0xff] %v6286
      %6335 = vst [vmem:[%s251 + $0xf8] sm:$0xff] %v6287
      %6336 = vst [vmem:[%s251 + $0x100] sm:$0xff] %v6288
      %6337 = vst [vmem:[%s251 + $0x108] sm:$0xff] %v6289
      %6338 = vst [vmem:[%s251 + $0x110] sm:$0xff] %v6290
      %6339 = vst [vmem:[%s251 + $0x118] sm:$0xff] %v6291
      %6340 = vst [vmem:[%s251 + $0x120] sm:$0xff] %v6292
      %6341 = vst [vmem:[%s251 + $0x128] sm:$0xff] %v6293
      %6342 = vst [vmem:[%s251 + $0x130] sm:$0xff] %v6294
      %6343 = vst [vmem:[%s251 + $0x138] sm:$0xff] %v6295
      %6344 = vst [vmem:[%s251 + $0x140] sm:$0xff] %v6296
      %6345 = vst [vmem:[%s251 + $0x148] sm:$0xff] %v6297
      %6346 = vst [vmem:[%s251 + $0x150] sm:$0xff] %v6298
      %6347 = vst [vmem:[%s251 + $0x158] sm:$0xff] %v6299
      %6348 = vst [vmem:[%s251 + $0x160] sm:$0xff] %v6300
      %6349 = vst [vmem:[%s251 + $0x168] sm:$0xff] %v6301
      %6350 = vst [vmem:[%s251 + $0x170] sm:$0xff] %v6302
      %6351 = vst [vmem:[%s251 + $0x178] sm:$0xff] %v6303
      %p6352 = scmp.lt.s32.totalorder %s17, 1
      %s6353 = scalar_select %p6352, %s17, 1
      %s6354 = smul.addr %s6353, 48
      %s6355 = smul.addr %s6354, 8
      %s6356 = scalar_lea.vmem %s6, %s6355
      // Predicated region
      $region45: #{double_conv.1} parent=43 // pred_check
        %p6357 = pneg %p166
      $region46: #{double_conv.1} parent=43 // pred_check_branch
        %6359 = sbr.rel (%p6357) target = $region48
      $region47: #{double_conv.1} parent=43 // pred_region
        _
      $region48: #{double_conv.1} parent=43 // pred_fallthru
        _
    $region44: #{double_conv.1} parent=5 // pred_fallthru
      _
    %p6360 = scmp.le.s32.totalorder 2, %s12
    // Predicated region
    $region49: #{double_conv.1} parent=5 // pred_check
      %p6361 = pneg %p6360
    $region50: #{double_conv.1} parent=5 // pred_check_branch
      %6363 = sbr.rel (%p6361) target = $region52
    $region51: #{double_conv.1} parent=5 // pred_region
      %s6364 = ssub.s32 %s12, 2
      // Predicated region
      $region53: #{double_conv.1} parent=51 // pred_check
        %p6365 = pneg %p172
      $region54: #{double_conv.1} parent=51 // pred_check_branch
        %6367 = sbr.rel (%p6365) target = $region56
      $region55: #{double_conv.1} parent=51 // pred_region
        %p6368 = scmp.lt.s32.totalorder %s18, 1
        %s6369 = scalar_select %p6368, %s18, 1
        %s6370 = smul.addr %s6369, 48
        %s6371 = smul.addr %s6370, 8
        %s6372 = scalar_lea.vmem %s6, %s6371
      $region56: #{double_conv.1} parent=51 // pred_fallthru
        _
    $region52: #{double_conv.1} parent=5 // pred_fallthru
      _
  $region6: #{double_conv.1} parent=0 // loop_footer
    %s16 = sadd.s32 1, %s12
  $region7: #{double_conv.1} parent=0 // loop_footer_branch
    %11 = sbr.rel target = $region3
  $region8: #{double_conv.1} parent=0 // loop_exit
    _

</llo_original>
